<compile_context>
chip_gen: v7x
topology: tpu7x:2x2x1
jax: 0.10.0
libtpu: 0.0.40
codegen_flags: <defaults>
</compile_context>

<pallas_src>
import math

import jax
import jax.numpy as jnp
from jax import lax
from jax.experimental import pallas as pl
from jax.experimental.pallas import tpu as pltpu

HIDDEN_DIM = 128                 # module: self.hidden_dim = 128
NUM_LAYERS = 3                   # module: num_layers=3
NUM_HEADS = 8
HEAD_DIM = HIDDEN_DIM // NUM_HEADS
FFN_DIM = 2 * HIDDEN_DIM
MAX_LENGTH = 128 - len('[W]')    # 125
SEQ_BUCKETS = (32, 64, 128)      # padded-length buckets (one compile per bucket)
PAD_TOKEN_ID = 0
VOCAB_SIZE = 100
NEG_INF = -1e9


# ----------------------------------------------------------------------------
# Fused encoder + masked-mean kernel
# ----------------------------------------------------------------------------
def _layernorm(x, g, b, eps=1e-5):
    # single pass: E[x], E[x^2] computed from the same sweep, one rsqrt
    mu = jnp.mean(x, axis=-1, keepdims=True)
    msq = jnp.mean(x * x, axis=-1, keepdims=True)
    var = msq - mu * mu
    return (x - mu) * lax.rsqrt(var + eps) * g + b


def encoder_kernel(x_ref, neg_ref, mcol_ref, invlen_ref,
                   wqkv_ref, bqkv_ref, wo_ref, w1_ref, b1_ref, w2_ref, bvec_ref,
                   o_ref, ctx_ref):
    """3 post-LN transformer encoder layers + masked mean for a batch block.

    x_ref      : (Bt*S, D) f32   activations (Bt sequences flattened along rows)
    neg_ref    : (Bt, 1, S) f32  additive key-padding mask (0 / -1e9)
    mcol_ref   : (Bt*S, 1) f32   valid-token column mask (1 = real token)
    invlen_ref : (Bt, 1, 1) f32  precomputed 1/max(len, 1)
    w*_ref     : stacked per-layer weights (bf16 matmul operands, f32 the rest)
    bvec_ref   : (L, 6, D) f32   fused [bo, b2, ln1g, ln1b, ln2g, ln2b]
    o_ref      : (Bt, 1, D) f32  per-sequence masked-mean embedding
    ctx_ref    : (Bt, S, D) f32  VMEM scratch for per-head attention contexts
    """
    Bt = neg_ref.shape[0]
    S = neg_ref.shape[2]
    D = HIDDEN_DIM
    dh = HEAD_DIM

    x = x_ref[...]                                   # (Bt*S, D) f32
    neg = neg_ref[...]                               # (Bt, 1, S) f32

    for l in range(NUM_LAYERS):
        bo = bvec_ref[l, 0:1, :]
        b2 = bvec_ref[l, 1:2, :]
        ln1g = bvec_ref[l, 2:3, :]
        ln1b = bvec_ref[l, 3:4, :]
        ln2g = bvec_ref[l, 4:5, :]
        ln2b = bvec_ref[l, 5:6, :]

        # ---- fused QKV projection (attention scale pre-folded into Q weights) ----
        qkv = jnp.dot(x.astype(jnp.bfloat16), wqkv_ref[l],
                      preferred_element_type=jnp.float32) + bqkv_ref[l]  # (Bt*S, 3D)
        q = qkv[:, :D].reshape(Bt, S, D)
        k = qkv[:, D:2 * D].reshape(Bt, S, D)
        v = qkv[:, 2 * D:].reshape(Bt, S, D)

        # ---- attention: per head, batched over the Bt sequences ----
        for h in range(NUM_HEADS):                   # static loop, 8 iterations
            lo = h * dh
            qh = q[:, :, lo:lo + dh].astype(jnp.bfloat16)   # (Bt, S, dh)
            kh = k[:, :, lo:lo + dh].astype(jnp.bfloat16)
            vh = v[:, :, lo:lo + dh].astype(jnp.bfloat16)
            s = jnp.einsum('bqd,bkd->bqk', qh, kh,
                           preferred_element_type=jnp.float32)           # (Bt, S, S)
            s = s + neg                              # key-padding mask (f32)
            s = s - jnp.max(s, axis=-1, keepdims=True)
            e = jnp.exp(s)                           # f32 exp (v5e-safe)
            p = e * pl.reciprocal(jnp.sum(e, axis=-1, keepdims=True),
                                  approx=True)
            ctx = jnp.einsum('bqk,bkd->bqd', p.astype(jnp.bfloat16), vh,
                             preferred_element_type=jnp.float32)         # (Bt, S, dh)
            ctx_ref[:, :, lo:lo + dh] = ctx          # lane-offset store, no concat

        # ---- out projection with full K=128 contraction ----
        ctx_all = ctx_ref[...].reshape(Bt * S, D).astype(jnp.bfloat16)
        attn = jnp.dot(ctx_all, wo_ref[l],
                       preferred_element_type=jnp.float32) + bo          # (Bt*S, D)

        # NOTE: pad-query rows carry garbage through the residual/LN path; they
        # are discarded by the masked mean below, so this is harmless.
        h1 = _layernorm(x + attn, ln1g, ln1b)

        # ---- feed-forward (flattened over all Bt sequences) ----
        f = jnp.dot(h1.astype(jnp.bfloat16), w1_ref[l],
                    preferred_element_type=jnp.float32) + b1_ref[l]
        f = jnp.maximum(f, 0.0)                      # ReLU (f32)
        f = jnp.dot(f.astype(jnp.bfloat16), w2_ref[l],
                    preferred_element_type=jnp.float32) + b2
        x = _layernorm(h1 + f, ln2g, ln2b)

    # ---- masked mean: one multiply + one sublane reduce + precomputed 1/len ----
    xm = (x * mcol_ref[...]).reshape(Bt, S, D)       # zero pad rows
    ssum = jnp.sum(xm, axis=1, keepdims=True)        # (Bt, 1, D)
    o_ref[...] = ssum * invlen_ref[...]


# ----------------------------------------------------------------------------
# Wrapper
# ----------------------------------------------------------------------------
_WEIGHT_NAMES = ("wqkv", "bqkv", "wo", "w1", "b1", "w2", "bvec")


def _pick_batch_block(B):
    """>= 2 grid steps when B >= 2 (v7x dual-TC), capped at 8 sequences/block."""
    if B <= 1:
        return 1
    return min(8, (B + 1) // 2)


def encoder_forward(x, valid, lengths, stacked):
    """x: (B, S, D) f32, valid: (B, S) f32, lengths: (B,) i32. Returns (B, D)."""
    B, S, D = x.shape
    Bt = _pick_batch_block(B)
    Bp = -(-B // Bt) * Bt
    if Bp != B:
        x = jnp.pad(x, ((0, Bp - B), (0, 0), (0, 0)))
        valid = jnp.pad(valid, ((0, Bp - B), (0, 0)))
        lengths = jnp.pad(lengths, (0, Bp - B))

    x_flat = x.reshape(Bp * S, D)
    neg = ((1.0 - valid) * NEG_INF).reshape(Bp, 1, S)        # additive key mask
    mask_col = valid.reshape(Bp * S, 1)                      # valid-token column mask
    inv_len = (1.0 / jnp.maximum(lengths.astype(jnp.float32), 1.0)).reshape(Bp, 1, 1)

    weights = [stacked[n] for n in _WEIGHT_NAMES]
    # full-array, constant index map -> weights stay resident across grid steps
    w_specs = [pl.BlockSpec(w.shape, lambda i, _nd=w.ndim: (0,) * _nd)
               for w in weights]

    out = pl.pallas_call(
        encoder_kernel,
        out_shape=jax.ShapeDtypeStruct((Bp, 1, D), jnp.float32),
        grid=(Bp // Bt,),
        in_specs=[pl.BlockSpec((Bt * S, D), lambda i: (i, 0)),
                  pl.BlockSpec((Bt, 1, S), lambda i: (i, 0, 0)),
                  pl.BlockSpec((Bt * S, 1), lambda i: (i, 0)),
                  pl.BlockSpec((Bt, 1, 1), lambda i: (i, 0, 0))] + w_specs,
        out_specs=pl.BlockSpec((Bt, 1, D), lambda i: (i, 0, 0)),
        scratch_shapes=[pltpu.VMEM((Bt, S, D), jnp.float32)],
        compiler_params=pltpu.CompilerParams(
            dimension_semantics=("parallel",)),      # v7x: shard batch over 2 TCs
    )(x_flat, neg, mask_col, inv_len, *weights)
    return out.reshape(Bp, D)[:B]


# ----------------------------------------------------------------------------
# Deterministic parameters (synthetic init; no checkpoint loading)
# ----------------------------------------------------------------------------
def init_params(key):
    D, F = HIDDEN_DIM, FFN_DIM
    keys = jax.random.split(key, 2 + NUM_LAYERS)
    tok_emb = 0.02 * jax.random.normal(keys[0], (VOCAB_SIZE, D), jnp.float32)
    tok_emb = tok_emb.at[PAD_TOKEN_ID].set(0.0)      # nn.Embedding(padding_idx=...)
    pos_emb = 0.02 * jax.random.normal(keys[1], (MAX_LENGTH, D), jnp.float32)

    layers = []
    for l in range(NUM_LAYERS):
        ks = jax.random.split(keys[2 + l], 8)
        layers.append(dict(
            wq=0.02 * jax.random.normal(ks[0], (D, D), jnp.float32),
            bq=jnp.zeros((1, D), jnp.float32),
            wk=0.02 * jax.random.normal(ks[1], (D, D), jnp.float32),
            bk=jnp.zeros((1, D), jnp.float32),
            wv=0.02 * jax.random.normal(ks[2], (D, D), jnp.float32),
            bv=jnp.zeros((1, D), jnp.float32),
            wo=0.02 * jax.random.normal(ks[3], (D, D), jnp.float32),
            bo=jnp.zeros((1, D), jnp.float32),
            w1=0.02 * jax.random.normal(ks[4], (D, F), jnp.float32),
            b1=jnp.zeros((1, F), jnp.float32),
            w2=0.02 * jax.random.normal(ks[5], (F, D), jnp.float32),
            b2=jnp.zeros((1, D), jnp.float32),
            ln1g=jnp.ones((1, D), jnp.float32),
            ln1b=jnp.zeros((1, D), jnp.float32),
            ln2g=jnp.ones((1, D), jnp.float32),
            ln2b=jnp.zeros((1, D), jnp.float32),
        ))
    return tok_emb, pos_emb, layers


def prepare_encoder_params(layers):
    """Stack per-layer params, fuse QKV, fold 1/sqrt(dh), fuse small f32 params,
    cast matmul weights to bf16."""
    scale = 1.0 / math.sqrt(HEAD_DIM)

    def stack(fn, dtype=None):
        a = jnp.stack([fn(p) for p in layers], axis=0)
        return a.astype(dtype) if dtype is not None else a

    return dict(
        wqkv=stack(lambda p: jnp.concatenate(
            [p["wq"] * scale, p["wk"], p["wv"]], axis=1), jnp.bfloat16),
        bqkv=stack(lambda p: jnp.concatenate(
            [p["bq"] * scale, p["bk"], p["bv"]], axis=1)),
        wo=stack(lambda p: p["wo"], jnp.bfloat16),
        w1=stack(lambda p: p["w1"], jnp.bfloat16),
        b1=stack(lambda p: p["b1"]),
        w2=stack(lambda p: p["w2"], jnp.bfloat16),
        # fused small f32 params: rows = [bo, b2, ln1g, ln1b, ln2g, ln2b]
        bvec=stack(lambda p: jnp.concatenate(
            [p["bo"], p["b2"], p["ln1g"], p["ln1b"], p["ln2g"], p["ln2b"]], axis=0)),
    )


# ----------------------------------------------------------------------------
# Glue: char tokenization (bucketed padding), embedding lookup
# ----------------------------------------------------------------------------
def tokenize_batch(strings, seq_len):
    """Deterministic char tokenizer (stand-in for tokenization.CharTokenizer)."""
    # TODO(synk): real CharTokenizer vocab/ids; modulo-hash chars used here.
    token_ids, lengths = [], []
    for s in strings:
        s = s[:MAX_LENGTH]
        ids = [(ord(c) % (VOCAB_SIZE - 1)) + 1 for c in s]   # 0 reserved for PAD
        lengths.append(len(ids))
        token_ids.append(ids + [PAD_TOKEN_ID] * (seq_len - len(ids)))
    return jnp.asarray(token_ids, jnp.int32), jnp.asarray(lengths, jnp.int32)


def char_transformer_forward(strings, tok_emb, pos_emb, stacked):
    # sequence-length bucketing: pad to the smallest bucket covering the batch
    max_len = max([min(len(s), MAX_LENGTH) for s in strings] + [1])
    S = next(b for b in SEQ_BUCKETS if b >= max_len)         # MAX_LENGTH <= 128
    token_ids, lengths = tokenize_batch(strings, S)
    B = token_ids.shape[0]
    valid = (jnp.arange(S)[None, :] < lengths[:, None]).astype(jnp.float32)  # (B, S)

    # positional table sliced/zero-padded to the bucket length
    if S <= pos_emb.shape[0]:
        pos = pos_emb[:S]
    else:
        pos = jnp.concatenate(
            [pos_emb, jnp.zeros((S - pos_emb.shape[0], HIDDEN_DIM), jnp.float32)],
            axis=0)

    # embedding (dropout disabled at inference)
    x = jnp.take(tok_emb, token_ids, axis=0) + pos[None, :, :]
    # fused 3-layer encoder + masked mean (Pallas kernel)
    return encoder_forward(x.astype(jnp.float32), valid, lengths, stacked)  # (B, D)


# ----------------------------------------------------------------------------
if __name__ == "__main__":
    key = jax.random.PRNGKey(0)
    tok_emb, pos_emb, layers = init_params(key)
    stacked = prepare_encoder_params(layers)

    # small deterministic inputs: batch=2, seq bucketed to 32, hidden=128
    inputs = ["pallas tpu kern!", "transformer"]
    out = char_transformer_forward(inputs, tok_emb, pos_emb, stacked)
    out = jax.block_until_ready(out)

    assert out.shape == (2, HIDDEN_DIM)
    assert bool(jnp.all(jnp.isfinite(out)))
    print("KERNEL_OK")
</pallas_src>

<mosaic_0001>
module attributes {stable_mosaic.version = 11 : i64} {
  func.func @encoder_kernel(%arg0: i32, %arg1: memref<32x128xf32, #tpu.memory_space<vmem>>, %arg2: memref<1x1x32xf32, #tpu.memory_space<vmem>>, %arg3: memref<32x1xf32, #tpu.memory_space<vmem>>, %arg4: memref<1x1x1xf32, #tpu.memory_space<vmem>>, %arg5: memref<3x128x384xbf16, #tpu.memory_space<vmem>>, %arg6: memref<3x1x384xf32, #tpu.memory_space<vmem>>, %arg7: memref<3x128x128xbf16, #tpu.memory_space<vmem>>, %arg8: memref<3x128x256xbf16, #tpu.memory_space<vmem>>, %arg9: memref<3x1x256xf32, #tpu.memory_space<vmem>>, %arg10: memref<3x256x128xbf16, #tpu.memory_space<vmem>>, %arg11: memref<3x6x128xf32, #tpu.memory_space<vmem>>, %arg12: memref<1x1x128xf32, #tpu.memory_space<vmem>>, %arg13: memref<1x32x128xf32, #tpu.memory_space<vmem>>) attributes {dimension_semantics = [#tpu.dimension_semantics<parallel>], iteration_bounds = array<i64: 2>, scalar_prefetch = 0 : i64, scratch_operands = 1 : i64, tpu.core_type = #tpu.core_type<tc>, window_params = [{transform_indices = @transform_0, window_bounds = array<i64: 32, 128>}, {transform_indices = @transform_1, window_bounds = array<i64: 1, 1, 32>}, {transform_indices = @transform_2, window_bounds = array<i64: 32, 1>}, {transform_indices = @transform_3, window_bounds = array<i64: 1, 1, 1>}, {pipeline_mode = #tpu.pipeline_mode<synchronous>, transform_indices = @transform_4, window_bounds = array<i64: 3, 128, 384>}, {pipeline_mode = #tpu.pipeline_mode<synchronous>, transform_indices = @transform_5, window_bounds = array<i64: 3, 1, 384>}, {pipeline_mode = #tpu.pipeline_mode<synchronous>, transform_indices = @transform_6, window_bounds = array<i64: 3, 128, 128>}, {pipeline_mode = #tpu.pipeline_mode<synchronous>, transform_indices = @transform_7, window_bounds = array<i64: 3, 128, 256>}, {pipeline_mode = #tpu.pipeline_mode<synchronous>, transform_indices = @transform_8, window_bounds = array<i64: 3, 1, 256>}, {pipeline_mode = #tpu.pipeline_mode<synchronous>, transform_indices = @transform_9, window_bounds = array<i64: 3, 256, 128>}, {pipeline_mode = #tpu.pipeline_mode<synchronous>, transform_indices = @transform_10, window_bounds = array<i64: 3, 6, 128>}, {transform_indices = @transform_11, window_bounds = array<i64: 1, 1, 128>}]} {
    %c0 = arith.constant 0 : index
    %c0_0 = arith.constant 0 : index
    %0 = vector.load %arg1[%c0, %c0_0] : memref<32x128xf32, #tpu.memory_space<vmem>>, vector<32x128xf32>
    %c0_1 = arith.constant 0 : index
    %c0_2 = arith.constant 0 : index
    %c0_3 = arith.constant 0 : index
    %1 = vector.load %arg2[%c0_1, %c0_2, %c0_3] : memref<1x1x32xf32, #tpu.memory_space<vmem>>, vector<1x1x32xf32>
    %c0_4 = arith.constant 0 : index
    %c0_5 = arith.constant 0 : index
    %c0_6 = arith.constant 0 : index
    %2 = vector.load %arg11[%c0_4, %c0_5, %c0_6] : memref<3x6x128xf32, #tpu.memory_space<vmem>>, vector<1x1x128xf32>
    %3 = vector.shape_cast %2 : vector<1x1x128xf32> to vector<1x128xf32>
    %c0_7 = arith.constant 0 : index
    %c1 = arith.constant 1 : index
    %c0_8 = arith.constant 0 : index
    %4 = vector.load %arg11[%c0_7, %c1, %c0_8] : memref<3x6x128xf32, #tpu.memory_space<vmem>>, vector<1x1x128xf32>
    %5 = vector.shape_cast %4 : vector<1x1x128xf32> to vector<1x128xf32>
    %c0_9 = arith.constant 0 : index
    %c2 = arith.constant 2 : index
    %c0_10 = arith.constant 0 : index
    %6 = vector.load %arg11[%c0_9, %c2, %c0_10] : memref<3x6x128xf32, #tpu.memory_space<vmem>>, vector<1x1x128xf32>
    %7 = vector.shape_cast %6 : vector<1x1x128xf32> to vector<1x128xf32>
    %c0_11 = arith.constant 0 : index
    %c3 = arith.constant 3 : index
    %c0_12 = arith.constant 0 : index
    %8 = vector.load %arg11[%c0_11, %c3, %c0_12] : memref<3x6x128xf32, #tpu.memory_space<vmem>>, vector<1x1x128xf32>
    %9 = vector.shape_cast %8 : vector<1x1x128xf32> to vector<1x128xf32>
    %c0_13 = arith.constant 0 : index
    %c4 = arith.constant 4 : index
    %c0_14 = arith.constant 0 : index
    %10 = vector.load %arg11[%c0_13, %c4, %c0_14] : memref<3x6x128xf32, #tpu.memory_space<vmem>>, vector<1x1x128xf32>
    %11 = vector.shape_cast %10 : vector<1x1x128xf32> to vector<1x128xf32>
    %c0_15 = arith.constant 0 : index
    %c5 = arith.constant 5 : index
    %c0_16 = arith.constant 0 : index
    %12 = vector.load %arg11[%c0_15, %c5, %c0_16] : memref<3x6x128xf32, #tpu.memory_space<vmem>>, vector<1x1x128xf32>
    %13 = vector.shape_cast %12 : vector<1x1x128xf32> to vector<1x128xf32>
    %14 = arith.truncf %0 : vector<32x128xf32> to vector<32x128xbf16>
    %c0_17 = arith.constant 0 : index
    %c0_18 = arith.constant 0 : index
    %c0_19 = arith.constant 0 : index
    %15 = vector.load %arg5[%c0_17, %c0_18, %c0_19] : memref<3x128x384xbf16, #tpu.memory_space<vmem>>, vector<1x128x384xbf16>
    %16 = vector.shape_cast %15 : vector<1x128x384xbf16> to vector<128x384xbf16>
    %cst = arith.constant dense<0.000000e+00> : vector<32x384xf32>
    %17 = tpu.matmul %14, %16, %cst {dimension_numbers = #tpu.dot_dimension_numbers<[1], [0], [0], [1], [0, 0, 1, 1], [], []>} : vector<32x128xbf16>, vector<128x384xbf16>, vector<32x384xf32> -> vector<32x384xf32>
    %c0_20 = arith.constant 0 : index
    %c0_21 = arith.constant 0 : index
    %c0_22 = arith.constant 0 : index
    %18 = vector.load %arg6[%c0_20, %c0_21, %c0_22] : memref<3x1x384xf32, #tpu.memory_space<vmem>>, vector<1x1x384xf32>
    %19 = vector.shape_cast %18 : vector<1x1x384xf32> to vector<1x384xf32>
    %20 = vector.broadcast %19 : vector<1x384xf32> to vector<32x384xf32>
    %21 = arith.addf %17, %20 : vector<32x384xf32>
    %22 = vector.extract_strided_slice %21 {offsets = [0, 0], sizes = [32, 128], strides = [1, 1]} : vector<32x384xf32> to vector<32x128xf32>
    %23 = vector.shape_cast %22 : vector<32x128xf32> to vector<1x32x128xf32>
    %24 = vector.extract_strided_slice %21 {offsets = [0, 128], sizes = [32, 128], strides = [1, 1]} : vector<32x384xf32> to vector<32x128xf32>
    %25 = vector.shape_cast %24 : vector<32x128xf32> to vector<1x32x128xf32>
    %26 = vector.extract_strided_slice %21 {offsets = [0, 256], sizes = [32, 128], strides = [1, 1]} : vector<32x384xf32> to vector<32x128xf32>
    %27 = vector.shape_cast %26 : vector<32x128xf32> to vector<1x32x128xf32>
    %28 = vector.extract_strided_slice %23 {offsets = [0, 0, 0], sizes = [1, 32, 16], strides = [1, 1, 1]} : vector<1x32x128xf32> to vector<1x32x16xf32>
    %29 = arith.truncf %28 : vector<1x32x16xf32> to vector<1x32x16xbf16>
    %30 = vector.extract_strided_slice %25 {offsets = [0, 0, 0], sizes = [1, 32, 16], strides = [1, 1, 1]} : vector<1x32x128xf32> to vector<1x32x16xf32>
    %31 = arith.truncf %30 : vector<1x32x16xf32> to vector<1x32x16xbf16>
    %32 = vector.extract_strided_slice %27 {offsets = [0, 0, 0], sizes = [1, 32, 16], strides = [1, 1, 1]} : vector<1x32x128xf32> to vector<1x32x16xf32>
    %33 = arith.truncf %32 : vector<1x32x16xf32> to vector<1x32x16xbf16>
    "tpu.trace_start"() <{level = 10 : i32, message = "bqd,bkd->bqk"}> : () -> ()
    %cst_23 = arith.constant dense<0.000000e+00> : vector<1x32x32xf32>
    %34 = tpu.matmul %29, %31, %cst_23 {dimension_numbers = #tpu.dot_dimension_numbers<[2], [2], [1], [1], [0, 0, 0, 1, 1, 1], [0], [0]>} : vector<1x32x16xbf16>, vector<1x32x16xbf16>, vector<1x32x32xf32> -> vector<1x32x32xf32>
    "tpu.trace_stop"() : () -> ()
    %35 = vector.broadcast %1 : vector<1x1x32xf32> to vector<1x32x32xf32>
    %36 = arith.addf %34, %35 : vector<1x32x32xf32>
    %cst_24 = arith.constant dense<0xFF800000> : vector<1x32xf32>
    %37 = vector.multi_reduction <maximumf>, %36, %cst_24 [2] : vector<1x32x32xf32> to vector<1x32xf32>
    %38 = vector.shape_cast %37 : vector<1x32xf32> to vector<1x32x1xf32>
    %39 = vector.broadcast %38 : vector<1x32x1xf32> to vector<1x32x32xf32>
    %40 = arith.subf %36, %39 : vector<1x32x32xf32>
    %41 = math.exp %40 : vector<1x32x32xf32>
    %cst_25 = arith.constant dense<0.000000e+00> : vector<1x32xf32>
    %42 = vector.multi_reduction <add>, %41, %cst_25 [2] : vector<1x32x32xf32> to vector<1x32xf32>
    %43 = vector.shape_cast %42 : vector<1x32xf32> to vector<1x32x1xf32>
    %44 = tpu.reciprocal %43 {approx = true} : vector<1x32x1xf32> -> vector<1x32x1xf32>
    %45 = vector.broadcast %44 : vector<1x32x1xf32> to vector<1x32x32xf32>
    %46 = arith.mulf %41, %45 : vector<1x32x32xf32>
    %47 = arith.truncf %46 : vector<1x32x32xf32> to vector<1x32x32xbf16>
    "tpu.trace_start"() <{level = 10 : i32, message = "bqk,bkd->bqd"}> : () -> ()
    %cst_26 = arith.constant dense<0.000000e+00> : vector<1x32x16xf32>
    %48 = tpu.matmul %47, %33, %cst_26 {dimension_numbers = #tpu.dot_dimension_numbers<[2], [1], [1], [2], [0, 0, 0, 1, 1, 2], [0], [0]>} : vector<1x32x32xbf16>, vector<1x32x16xbf16>, vector<1x32x16xf32> -> vector<1x32x16xf32>
    "tpu.trace_stop"() : () -> ()
    %c0_27 = arith.constant 0 : index
    %c0_28 = arith.constant 0 : index
    %c0_29 = arith.constant 0 : index
    %49 = vector.load %arg13[%c0_27, %c0_28, %c0_29] : memref<1x32x128xf32, #tpu.memory_space<vmem>>, vector<1x32x16xf32>
    tpu.vector_store %arg13[%c0_27, %c0_28, %c0_29], %48 {strides = array<i32>} : memref<1x32x128xf32, #tpu.memory_space<vmem>>, vector<1x32x16xf32>,
    %50 = vector.extract_strided_slice %23 {offsets = [0, 0, 16], sizes = [1, 32, 16], strides = [1, 1, 1]} : vector<1x32x128xf32> to vector<1x32x16xf32>
    %51 = arith.truncf %50 : vector<1x32x16xf32> to vector<1x32x16xbf16>
    %52 = vector.extract_strided_slice %25 {offsets = [0, 0, 16], sizes = [1, 32, 16], strides = [1, 1, 1]} : vector<1x32x128xf32> to vector<1x32x16xf32>
    %53 = arith.truncf %52 : vector<1x32x16xf32> to vector<1x32x16xbf16>
    %54 = vector.extract_strided_slice %27 {offsets = [0, 0, 16], sizes = [1, 32, 16], strides = [1, 1, 1]} : vector<1x32x128xf32> to vector<1x32x16xf32>
    %55 = arith.truncf %54 : vector<1x32x16xf32> to vector<1x32x16xbf16>
    "tpu.trace_start"() <{level = 10 : i32, message = "bqd,bkd->bqk"}> : () -> ()
    %cst_30 = arith.constant dense<0.000000e+00> : vector<1x32x32xf32>
    %56 = tpu.matmul %51, %53, %cst_30 {dimension_numbers = #tpu.dot_dimension_numbers<[2], [2], [1], [1], [0, 0, 0, 1, 1, 1], [0], [0]>} : vector<1x32x16xbf16>, vector<1x32x16xbf16>, vector<1x32x32xf32> -> vector<1x32x32xf32>
    "tpu.trace_stop"() : () -> ()
    %57 = vector.broadcast %1 : vector<1x1x32xf32> to vector<1x32x32xf32>
    %58 = arith.addf %56, %57 : vector<1x32x32xf32>
    %cst_31 = arith.constant dense<0xFF800000> : vector<1x32xf32>
    %59 = vector.multi_reduction <maximumf>, %58, %cst_31 [2] : vector<1x32x32xf32> to vector<1x32xf32>
    %60 = vector.shape_cast %59 : vector<1x32xf32> to vector<1x32x1xf32>
    %61 = vector.broadcast %60 : vector<1x32x1xf32> to vector<1x32x32xf32>
    %62 = arith.subf %58, %61 : vector<1x32x32xf32>
    %63 = math.exp %62 : vector<1x32x32xf32>
    %cst_32 = arith.constant dense<0.000000e+00> : vector<1x32xf32>
    %64 = vector.multi_reduction <add>, %63, %cst_32 [2] : vector<1x32x32xf32> to vector<1x32xf32>
    %65 = vector.shape_cast %64 : vector<1x32xf32> to vector<1x32x1xf32>
    %66 = tpu.reciprocal %65 {approx = true} : vector<1x32x1xf32> -> vector<1x32x1xf32>
    %67 = vector.broadcast %66 : vector<1x32x1xf32> to vector<1x32x32xf32>
    %68 = arith.mulf %63, %67 : vector<1x32x32xf32>
    %69 = arith.truncf %68 : vector<1x32x32xf32> to vector<1x32x32xbf16>
    "tpu.trace_start"() <{level = 10 : i32, message = "bqk,bkd->bqd"}> : () -> ()
    %cst_33 = arith.constant dense<0.000000e+00> : vector<1x32x16xf32>
    %70 = tpu.matmul %69, %55, %cst_33 {dimension_numbers = #tpu.dot_dimension_numbers<[2], [1], [1], [2], [0, 0, 0, 1, 1, 2], [0], [0]>} : vector<1x32x32xbf16>, vector<1x32x16xbf16>, vector<1x32x16xf32> -> vector<1x32x16xf32>
    "tpu.trace_stop"() : () -> ()
    %c0_34 = arith.constant 0 : index
    %c0_35 = arith.constant 0 : index
    %c16 = arith.constant 16 : index
    %71 = vector.load %arg13[%c0_34, %c0_35, %c16] : memref<1x32x128xf32, #tpu.memory_space<vmem>>, vector<1x32x16xf32>
    tpu.vector_store %arg13[%c0_34, %c0_35, %c16], %70 {strides = array<i32>} : memref<1x32x128xf32, #tpu.memory_space<vmem>>, vector<1x32x16xf32>,
    %72 = vector.extract_strided_slice %23 {offsets = [0, 0, 32], sizes = [1, 32, 16], strides = [1, 1, 1]} : vector<1x32x128xf32> to vector<1x32x16xf32>
    %73 = arith.truncf %72 : vector<1x32x16xf32> to vector<1x32x16xbf16>
    %74 = vector.extract_strided_slice %25 {offsets = [0, 0, 32], sizes = [1, 32, 16], strides = [1, 1, 1]} : vector<1x32x128xf32> to vector<1x32x16xf32>
    %75 = arith.truncf %74 : vector<1x32x16xf32> to vector<1x32x16xbf16>
    %76 = vector.extract_strided_slice %27 {offsets = [0, 0, 32], sizes = [1, 32, 16], strides = [1, 1, 1]} : vector<1x32x128xf32> to vector<1x32x16xf32>
    %77 = arith.truncf %76 : vector<1x32x16xf32> to vector<1x32x16xbf16>
    "tpu.trace_start"() <{level = 10 : i32, message = "bqd,bkd->bqk"}> : () -> ()
    %cst_36 = arith.constant dense<0.000000e+00> : vector<1x32x32xf32>
    %78 = tpu.matmul %73, %75, %cst_36 {dimension_numbers = #tpu.dot_dimension_numbers<[2], [2], [1], [1], [0, 0, 0, 1, 1, 1], [0], [0]>} : vector<1x32x16xbf16>, vector<1x32x16xbf16>, vector<1x32x32xf32> -> vector<1x32x32xf32>
    "tpu.trace_stop"() : () -> ()
    %79 = vector.broadcast %1 : vector<1x1x32xf32> to vector<1x32x32xf32>
    %80 = arith.addf %78, %79 : vector<1x32x32xf32>
    %cst_37 = arith.constant dense<0xFF800000> : vector<1x32xf32>
    %81 = vector.multi_reduction <maximumf>, %80, %cst_37 [2] : vector<1x32x32xf32> to vector<1x32xf32>
    %82 = vector.shape_cast %81 : vector<1x32xf32> to vector<1x32x1xf32>
    %83 = vector.broadcast %82 : vector<1x32x1xf32> to vector<1x32x32xf32>
    %84 = arith.subf %80, %83 : vector<1x32x32xf32>
    %85 = math.exp %84 : vector<1x32x32xf32>
    %cst_38 = arith.constant dense<0.000000e+00> : vector<1x32xf32>
    %86 = vector.multi_reduction <add>, %85, %cst_38 [2] : vector<1x32x32xf32> to vector<1x32xf32>
    %87 = vector.shape_cast %86 : vector<1x32xf32> to vector<1x32x1xf32>
    %88 = tpu.reciprocal %87 {approx = true} : vector<1x32x1xf32> -> vector<1x32x1xf32>
    %89 = vector.broadcast %88 : vector<1x32x1xf32> to vector<1x32x32xf32>
    %90 = arith.mulf %85, %89 : vector<1x32x32xf32>
    %91 = arith.truncf %90 : vector<1x32x32xf32> to vector<1x32x32xbf16>
    "tpu.trace_start"() <{level = 10 : i32, message = "bqk,bkd->bqd"}> : () -> ()
    %cst_39 = arith.constant dense<0.000000e+00> : vector<1x32x16xf32>
    %92 = tpu.matmul %91, %77, %cst_39 {dimension_numbers = #tpu.dot_dimension_numbers<[2], [1], [1], [2], [0, 0, 0, 1, 1, 2], [0], [0]>} : vector<1x32x32xbf16>, vector<1x32x16xbf16>, vector<1x32x16xf32> -> vector<1x32x16xf32>
    "tpu.trace_stop"() : () -> ()
    %c0_40 = arith.constant 0 : index
    %c0_41 = arith.constant 0 : index
    %c32 = arith.constant 32 : index
    %93 = vector.load %arg13[%c0_40, %c0_41, %c32] : memref<1x32x128xf32, #tpu.memory_space<vmem>>, vector<1x32x16xf32>
    tpu.vector_store %arg13[%c0_40, %c0_41, %c32], %92 {strides = array<i32>} : memref<1x32x128xf32, #tpu.memory_space<vmem>>, vector<1x32x16xf32>,
    %94 = vector.extract_strided_slice %23 {offsets = [0, 0, 48], sizes = [1, 32, 16], strides = [1, 1, 1]} : vector<1x32x128xf32> to vector<1x32x16xf32>
    %95 = arith.truncf %94 : vector<1x32x16xf32> to vector<1x32x16xbf16>
    %96 = vector.extract_strided_slice %25 {offsets = [0, 0, 48], sizes = [1, 32, 16], strides = [1, 1, 1]} : vector<1x32x128xf32> to vector<1x32x16xf32>
    %97 = arith.truncf %96 : vector<1x32x16xf32> to vector<1x32x16xbf16>
    %98 = vector.extract_strided_slice %27 {offsets = [0, 0, 48], sizes = [1, 32, 16], strides = [1, 1, 1]} : vector<1x32x128xf32> to vector<1x32x16xf32>
    %99 = arith.truncf %98 : vector<1x32x16xf32> to vector<1x32x16xbf16>
    "tpu.trace_start"() <{level = 10 : i32, message = "bqd,bkd->bqk"}> : () -> ()
    %cst_42 = arith.constant dense<0.000000e+00> : vector<1x32x32xf32>
    %100 = tpu.matmul %95, %97, %cst_42 {dimension_numbers = #tpu.dot_dimension_numbers<[2], [2], [1], [1], [0, 0, 0, 1, 1, 1], [0], [0]>} : vector<1x32x16xbf16>, vector<1x32x16xbf16>, vector<1x32x32xf32> -> vector<1x32x32xf32>
    "tpu.trace_stop"() : () -> ()
    %101 = vector.broadcast %1 : vector<1x1x32xf32> to vector<1x32x32xf32>
    %102 = arith.addf %100, %101 : vector<1x32x32xf32>
    %cst_43 = arith.constant dense<0xFF800000> : vector<1x32xf32>
    %103 = vector.multi_reduction <maximumf>, %102, %cst_43 [2] : vector<1x32x32xf32> to vector<1x32xf32>
    %104 = vector.shape_cast %103 : vector<1x32xf32> to vector<1x32x1xf32>
    %105 = vector.broadcast %104 : vector<1x32x1xf32> to vector<1x32x32xf32>
    %106 = arith.subf %102, %105 : vector<1x32x32xf32>
    %107 = math.exp %106 : vector<1x32x32xf32>
    %cst_44 = arith.constant dense<0.000000e+00> : vector<1x32xf32>
    %108 = vector.multi_reduction <add>, %107, %cst_44 [2] : vector<1x32x32xf32> to vector<1x32xf32>
    %109 = vector.shape_cast %108 : vector<1x32xf32> to vector<1x32x1xf32>
    %110 = tpu.reciprocal %109 {approx = true} : vector<1x32x1xf32> -> vector<1x32x1xf32>
    %111 = vector.broadcast %110 : vector<1x32x1xf32> to vector<1x32x32xf32>
    %112 = arith.mulf %107, %111 : vector<1x32x32xf32>
    %113 = arith.truncf %112 : vector<1x32x32xf32> to vector<1x32x32xbf16>
    "tpu.trace_start"() <{level = 10 : i32, message = "bqk,bkd->bqd"}> : () -> ()
    %cst_45 = arith.constant dense<0.000000e+00> : vector<1x32x16xf32>
    %114 = tpu.matmul %113, %99, %cst_45 {dimension_numbers = #tpu.dot_dimension_numbers<[2], [1], [1], [2], [0, 0, 0, 1, 1, 2], [0], [0]>} : vector<1x32x32xbf16>, vector<1x32x16xbf16>, vector<1x32x16xf32> -> vector<1x32x16xf32>
    "tpu.trace_stop"() : () -> ()
    %c0_46 = arith.constant 0 : index
    %c0_47 = arith.constant 0 : index
    %c48 = arith.constant 48 : index
    %115 = vector.load %arg13[%c0_46, %c0_47, %c48] : memref<1x32x128xf32, #tpu.memory_space<vmem>>, vector<1x32x16xf32>
    tpu.vector_store %arg13[%c0_46, %c0_47, %c48], %114 {strides = array<i32>} : memref<1x32x128xf32, #tpu.memory_space<vmem>>, vector<1x32x16xf32>,
    %116 = vector.extract_strided_slice %23 {offsets = [0, 0, 64], sizes = [1, 32, 16], strides = [1, 1, 1]} : vector<1x32x128xf32> to vector<1x32x16xf32>
    %117 = arith.truncf %116 : vector<1x32x16xf32> to vector<1x32x16xbf16>
    %118 = vector.extract_strided_slice %25 {offsets = [0, 0, 64], sizes = [1, 32, 16], strides = [1, 1, 1]} : vector<1x32x128xf32> to vector<1x32x16xf32>
    %119 = arith.truncf %118 : vector<1x32x16xf32> to vector<1x32x16xbf16>
    %120 = vector.extract_strided_slice %27 {offsets = [0, 0, 64], sizes = [1, 32, 16], strides = [1, 1, 1]} : vector<1x32x128xf32> to vector<1x32x16xf32>
    %121 = arith.truncf %120 : vector<1x32x16xf32> to vector<1x32x16xbf16>
    "tpu.trace_start"() <{level = 10 : i32, message = "bqd,bkd->bqk"}> : () -> ()
    %cst_48 = arith.constant dense<0.000000e+00> : vector<1x32x32xf32>
    %122 = tpu.matmul %117, %119, %cst_48 {dimension_numbers = #tpu.dot_dimension_numbers<[2], [2], [1], [1], [0, 0, 0, 1, 1, 1], [0], [0]>} : vector<1x32x16xbf16>, vector<1x32x16xbf16>, vector<1x32x32xf32> -> vector<1x32x32xf32>
    "tpu.trace_stop"() : () -> ()
    %123 = vector.broadcast %1 : vector<1x1x32xf32> to vector<1x32x32xf32>
    %124 = arith.addf %122, %123 : vector<1x32x32xf32>
    %cst_49 = arith.constant dense<0xFF800000> : vector<1x32xf32>
    %125 = vector.multi_reduction <maximumf>, %124, %cst_49 [2] : vector<1x32x32xf32> to vector<1x32xf32>
    %126 = vector.shape_cast %125 : vector<1x32xf32> to vector<1x32x1xf32>
    %127 = vector.broadcast %126 : vector<1x32x1xf32> to vector<1x32x32xf32>
    %128 = arith.subf %124, %127 : vector<1x32x32xf32>
    %129 = math.exp %128 : vector<1x32x32xf32>
    %cst_50 = arith.constant dense<0.000000e+00> : vector<1x32xf32>
    %130 = vector.multi_reduction <add>, %129, %cst_50 [2] : vector<1x32x32xf32> to vector<1x32xf32>
    %131 = vector.shape_cast %130 : vector<1x32xf32> to vector<1x32x1xf32>
    %132 = tpu.reciprocal %131 {approx = true} : vector<1x32x1xf32> -> vector<1x32x1xf32>
    %133 = vector.broadcast %132 : vector<1x32x1xf32> to vector<1x32x32xf32>
    %134 = arith.mulf %129, %133 : vector<1x32x32xf32>
    %135 = arith.truncf %134 : vector<1x32x32xf32> to vector<1x32x32xbf16>
    "tpu.trace_start"() <{level = 10 : i32, message = "bqk,bkd->bqd"}> : () -> ()
    %cst_51 = arith.constant dense<0.000000e+00> : vector<1x32x16xf32>
    %136 = tpu.matmul %135, %121, %cst_51 {dimension_numbers = #tpu.dot_dimension_numbers<[2], [1], [1], [2], [0, 0, 0, 1, 1, 2], [0], [0]>} : vector<1x32x32xbf16>, vector<1x32x16xbf16>, vector<1x32x16xf32> -> vector<1x32x16xf32>
    "tpu.trace_stop"() : () -> ()
    %c0_52 = arith.constant 0 : index
    %c0_53 = arith.constant 0 : index
    %c64 = arith.constant 64 : index
    %137 = vector.load %arg13[%c0_52, %c0_53, %c64] : memref<1x32x128xf32, #tpu.memory_space<vmem>>, vector<1x32x16xf32>
    tpu.vector_store %arg13[%c0_52, %c0_53, %c64], %136 {strides = array<i32>} : memref<1x32x128xf32, #tpu.memory_space<vmem>>, vector<1x32x16xf32>,
    %138 = vector.extract_strided_slice %23 {offsets = [0, 0, 80], sizes = [1, 32, 16], strides = [1, 1, 1]} : vector<1x32x128xf32> to vector<1x32x16xf32>
    %139 = arith.truncf %138 : vector<1x32x16xf32> to vector<1x32x16xbf16>
    %140 = vector.extract_strided_slice %25 {offsets = [0, 0, 80], sizes = [1, 32, 16], strides = [1, 1, 1]} : vector<1x32x128xf32> to vector<1x32x16xf32>
    %141 = arith.truncf %140 : vector<1x32x16xf32> to vector<1x32x16xbf16>
    %142 = vector.extract_strided_slice %27 {offsets = [0, 0, 80], sizes = [1, 32, 16], strides = [1, 1, 1]} : vector<1x32x128xf32> to vector<1x32x16xf32>
    %143 = arith.truncf %142 : vector<1x32x16xf32> to vector<1x32x16xbf16>
    "tpu.trace_start"() <{level = 10 : i32, message = "bqd,bkd->bqk"}> : () -> ()
    %cst_54 = arith.constant dense<0.000000e+00> : vector<1x32x32xf32>
    %144 = tpu.matmul %139, %141, %cst_54 {dimension_numbers = #tpu.dot_dimension_numbers<[2], [2], [1], [1], [0, 0, 0, 1, 1, 1], [0], [0]>} : vector<1x32x16xbf16>, vector<1x32x16xbf16>, vector<1x32x32xf32> -> vector<1x32x32xf32>
    "tpu.trace_stop"() : () -> ()
    %145 = vector.broadcast %1 : vector<1x1x32xf32> to vector<1x32x32xf32>
    %146 = arith.addf %144, %145 : vector<1x32x32xf32>
    %cst_55 = arith.constant dense<0xFF800000> : vector<1x32xf32>
    %147 = vector.multi_reduction <maximumf>, %146, %cst_55 [2] : vector<1x32x32xf32> to vector<1x32xf32>
    %148 = vector.shape_cast %147 : vector<1x32xf32> to vector<1x32x1xf32>
    %149 = vector.broadcast %148 : vector<1x32x1xf32> to vector<1x32x32xf32>
    %150 = arith.subf %146, %149 : vector<1x32x32xf32>
    %151 = math.exp %150 : vector<1x32x32xf32>
    %cst_56 = arith.constant dense<0.000000e+00> : vector<1x32xf32>
    %152 = vector.multi_reduction <add>, %151, %cst_56 [2] : vector<1x32x32xf32> to vector<1x32xf32>
    %153 = vector.shape_cast %152 : vector<1x32xf32> to vector<1x32x1xf32>
    %154 = tpu.reciprocal %153 {approx = true} : vector<1x32x1xf32> -> vector<1x32x1xf32>
    %155 = vector.broadcast %154 : vector<1x32x1xf32> to vector<1x32x32xf32>
    %156 = arith.mulf %151, %155 : vector<1x32x32xf32>
    %157 = arith.truncf %156 : vector<1x32x32xf32> to vector<1x32x32xbf16>
    "tpu.trace_start"() <{level = 10 : i32, message = "bqk,bkd->bqd"}> : () -> ()
    %cst_57 = arith.constant dense<0.000000e+00> : vector<1x32x16xf32>
    %158 = tpu.matmul %157, %143, %cst_57 {dimension_numbers = #tpu.dot_dimension_numbers<[2], [1], [1], [2], [0, 0, 0, 1, 1, 2], [0], [0]>} : vector<1x32x32xbf16>, vector<1x32x16xbf16>, vector<1x32x16xf32> -> vector<1x32x16xf32>
    "tpu.trace_stop"() : () -> ()
    %c0_58 = arith.constant 0 : index
    %c0_59 = arith.constant 0 : index
    %c80 = arith.constant 80 : index
    %159 = vector.load %arg13[%c0_58, %c0_59, %c80] : memref<1x32x128xf32, #tpu.memory_space<vmem>>, vector<1x32x16xf32>
    tpu.vector_store %arg13[%c0_58, %c0_59, %c80], %158 {strides = array<i32>} : memref<1x32x128xf32, #tpu.memory_space<vmem>>, vector<1x32x16xf32>,
    %160 = vector.extract_strided_slice %23 {offsets = [0, 0, 96], sizes = [1, 32, 16], strides = [1, 1, 1]} : vector<1x32x128xf32> to vector<1x32x16xf32>
    %161 = arith.truncf %160 : vector<1x32x16xf32> to vector<1x32x16xbf16>
    %162 = vector.extract_strided_slice %25 {offsets = [0, 0, 96], sizes = [1, 32, 16], strides = [1, 1, 1]} : vector<1x32x128xf32> to vector<1x32x16xf32>
    %163 = arith.truncf %162 : vector<1x32x16xf32> to vector<1x32x16xbf16>
    %164 = vector.extract_strided_slice %27 {offsets = [0, 0, 96], sizes = [1, 32, 16], strides = [1, 1, 1]} : vector<1x32x128xf32> to vector<1x32x16xf32>
    %165 = arith.truncf %164 : vector<1x32x16xf32> to vector<1x32x16xbf16>
    "tpu.trace_start"() <{level = 10 : i32, message = "bqd,bkd->bqk"}> : () -> ()
    %cst_60 = arith.constant dense<0.000000e+00> : vector<1x32x32xf32>
    %166 = tpu.matmul %161, %163, %cst_60 {dimension_numbers = #tpu.dot_dimension_numbers<[2], [2], [1], [1], [0, 0, 0, 1, 1, 1], [0], [0]>} : vector<1x32x16xbf16>, vector<1x32x16xbf16>, vector<1x32x32xf32> -> vector<1x32x32xf32>
    "tpu.trace_stop"() : () -> ()
    %167 = vector.broadcast %1 : vector<1x1x32xf32> to vector<1x32x32xf32>
    %168 = arith.addf %166, %167 : vector<1x32x32xf32>
    %cst_61 = arith.constant dense<0xFF800000> : vector<1x32xf32>
    %169 = vector.multi_reduction <maximumf>, %168, %cst_61 [2] : vector<1x32x32xf32> to vector<1x32xf32>
    %170 = vector.shape_cast %169 : vector<1x32xf32> to vector<1x32x1xf32>
    %171 = vector.broadcast %170 : vector<1x32x1xf32> to vector<1x32x32xf32>
    %172 = arith.subf %168, %171 : vector<1x32x32xf32>
    %173 = math.exp %172 : vector<1x32x32xf32>
    %cst_62 = arith.constant dense<0.000000e+00> : vector<1x32xf32>
    %174 = vector.multi_reduction <add>, %173, %cst_62 [2] : vector<1x32x32xf32> to vector<1x32xf32>
    %175 = vector.shape_cast %174 : vector<1x32xf32> to vector<1x32x1xf32>
    %176 = tpu.reciprocal %175 {approx = true} : vector<1x32x1xf32> -> vector<1x32x1xf32>
    %177 = vector.broadcast %176 : vector<1x32x1xf32> to vector<1x32x32xf32>
    %178 = arith.mulf %173, %177 : vector<1x32x32xf32>
    %179 = arith.truncf %178 : vector<1x32x32xf32> to vector<1x32x32xbf16>
    "tpu.trace_start"() <{level = 10 : i32, message = "bqk,bkd->bqd"}> : () -> ()
    %cst_63 = arith.constant dense<0.000000e+00> : vector<1x32x16xf32>
    %180 = tpu.matmul %179, %165, %cst_63 {dimension_numbers = #tpu.dot_dimension_numbers<[2], [1], [1], [2], [0, 0, 0, 1, 1, 2], [0], [0]>} : vector<1x32x32xbf16>, vector<1x32x16xbf16>, vector<1x32x16xf32> -> vector<1x32x16xf32>
    "tpu.trace_stop"() : () -> ()
    %c0_64 = arith.constant 0 : index
    %c0_65 = arith.constant 0 : index
    %c96 = arith.constant 96 : index
    %181 = vector.load %arg13[%c0_64, %c0_65, %c96] : memref<1x32x128xf32, #tpu.memory_space<vmem>>, vector<1x32x16xf32>
    tpu.vector_store %arg13[%c0_64, %c0_65, %c96], %180 {strides = array<i32>} : memref<1x32x128xf32, #tpu.memory_space<vmem>>, vector<1x32x16xf32>,
    %182 = vector.extract_strided_slice %23 {offsets = [0, 0, 112], sizes = [1, 32, 16], strides = [1, 1, 1]} : vector<1x32x128xf32> to vector<1x32x16xf32>
    %183 = arith.truncf %182 : vector<1x32x16xf32> to vector<1x32x16xbf16>
    %184 = vector.extract_strided_slice %25 {offsets = [0, 0, 112], sizes = [1, 32, 16], strides = [1, 1, 1]} : vector<1x32x128xf32> to vector<1x32x16xf32>
    %185 = arith.truncf %184 : vector<1x32x16xf32> to vector<1x32x16xbf16>
    %186 = vector.extract_strided_slice %27 {offsets = [0, 0, 112], sizes = [1, 32, 16], strides = [1, 1, 1]} : vector<1x32x128xf32> to vector<1x32x16xf32>
    %187 = arith.truncf %186 : vector<1x32x16xf32> to vector<1x32x16xbf16>
    "tpu.trace_start"() <{level = 10 : i32, message = "bqd,bkd->bqk"}> : () -> ()
    %cst_66 = arith.constant dense<0.000000e+00> : vector<1x32x32xf32>
    %188 = tpu.matmul %183, %185, %cst_66 {dimension_numbers = #tpu.dot_dimension_numbers<[2], [2], [1], [1], [0, 0, 0, 1, 1, 1], [0], [0]>} : vector<1x32x16xbf16>, vector<1x32x16xbf16>, vector<1x32x32xf32> -> vector<1x32x32xf32>
    "tpu.trace_stop"() : () -> ()
    %189 = vector.broadcast %1 : vector<1x1x32xf32> to vector<1x32x32xf32>
    %190 = arith.addf %188, %189 : vector<1x32x32xf32>
    %cst_67 = arith.constant dense<0xFF800000> : vector<1x32xf32>
    %191 = vector.multi_reduction <maximumf>, %190, %cst_67 [2] : vector<1x32x32xf32> to vector<1x32xf32>
    %192 = vector.shape_cast %191 : vector<1x32xf32> to vector<1x32x1xf32>
    %193 = vector.broadcast %192 : vector<1x32x1xf32> to vector<1x32x32xf32>
    %194 = arith.subf %190, %193 : vector<1x32x32xf32>
    %195 = math.exp %194 : vector<1x32x32xf32>
    %cst_68 = arith.constant dense<0.000000e+00> : vector<1x32xf32>
    %196 = vector.multi_reduction <add>, %195, %cst_68 [2] : vector<1x32x32xf32> to vector<1x32xf32>
    %197 = vector.shape_cast %196 : vector<1x32xf32> to vector<1x32x1xf32>
    %198 = tpu.reciprocal %197 {approx = true} : vector<1x32x1xf32> -> vector<1x32x1xf32>
    %199 = vector.broadcast %198 : vector<1x32x1xf32> to vector<1x32x32xf32>
    %200 = arith.mulf %195, %199 : vector<1x32x32xf32>
    %201 = arith.truncf %200 : vector<1x32x32xf32> to vector<1x32x32xbf16>
    "tpu.trace_start"() <{level = 10 : i32, message = "bqk,bkd->bqd"}> : () -> ()
    %cst_69 = arith.constant dense<0.000000e+00> : vector<1x32x16xf32>
    %202 = tpu.matmul %201, %187, %cst_69 {dimension_numbers = #tpu.dot_dimension_numbers<[2], [1], [1], [2], [0, 0, 0, 1, 1, 2], [0], [0]>} : vector<1x32x32xbf16>, vector<1x32x16xbf16>, vector<1x32x16xf32> -> vector<1x32x16xf32>
    "tpu.trace_stop"() : () -> ()
    %c0_70 = arith.constant 0 : index
    %c0_71 = arith.constant 0 : index
    %c112 = arith.constant 112 : index
    %203 = vector.load %arg13[%c0_70, %c0_71, %c112] : memref<1x32x128xf32, #tpu.memory_space<vmem>>, vector<1x32x16xf32>
    tpu.vector_store %arg13[%c0_70, %c0_71, %c112], %202 {strides = array<i32>} : memref<1x32x128xf32, #tpu.memory_space<vmem>>, vector<1x32x16xf32>,
    %c0_72 = arith.constant 0 : index
    %c0_73 = arith.constant 0 : index
    %c0_74 = arith.constant 0 : index
    %204 = vector.load %arg13[%c0_72, %c0_73, %c0_74] : memref<1x32x128xf32, #tpu.memory_space<vmem>>, vector<1x32x128xf32>
    %205 = vector.shape_cast %204 : vector<1x32x128xf32> to vector<32x128xf32>
    %206 = arith.truncf %205 : vector<32x128xf32> to vector<32x128xbf16>
    %c0_75 = arith.constant 0 : index
    %c0_76 = arith.constant 0 : index
    %c0_77 = arith.constant 0 : index
    %207 = vector.load %arg7[%c0_75, %c0_76, %c0_77] : memref<3x128x128xbf16, #tpu.memory_space<vmem>>, vector<1x128x128xbf16>
    %208 = vector.shape_cast %207 : vector<1x128x128xbf16> to vector<128x128xbf16>
    %cst_78 = arith.constant dense<0.000000e+00> : vector<32x128xf32>
    %209 = tpu.matmul %206, %208, %cst_78 {dimension_numbers = #tpu.dot_dimension_numbers<[1], [0], [0], [1], [0, 0, 1, 1], [], []>} : vector<32x128xbf16>, vector<128x128xbf16>, vector<32x128xf32> -> vector<32x128xf32>
    %210 = vector.broadcast %3 : vector<1x128xf32> to vector<32x128xf32>
    %211 = arith.addf %209, %210 : vector<32x128xf32>
    %212 = arith.addf %0, %211 : vector<32x128xf32>
    %cst_79 = arith.constant dense<0.000000e+00> : vector<32xf32>
    %213 = vector.multi_reduction <add>, %212, %cst_79 [1] : vector<32x128xf32> to vector<32xf32>
    %214 = vector.shape_cast %213 : vector<32xf32> to vector<32x1xf32>
    %cst_80 = arith.constant 1.280000e+02 : f32
    %215 = vector.broadcast %cst_80 : f32 to vector<32x1xf32>
    %216 = arith.divf %214, %215 : vector<32x1xf32>
    %217 = arith.mulf %212, %212 : vector<32x128xf32>
    %cst_81 = arith.constant dense<0.000000e+00> : vector<32xf32>
    %218 = vector.multi_reduction <add>, %217, %cst_81 [1] : vector<32x128xf32> to vector<32xf32>
    %219 = vector.shape_cast %218 : vector<32xf32> to vector<32x1xf32>
    %cst_82 = arith.constant 1.280000e+02 : f32
    %220 = vector.broadcast %cst_82 : f32 to vector<32x1xf32>
    %221 = arith.divf %219, %220 : vector<32x1xf32>
    %222 = arith.mulf %216, %216 : vector<32x1xf32>
    %223 = arith.subf %221, %222 : vector<32x1xf32>
    %224 = vector.broadcast %216 : vector<32x1xf32> to vector<32x128xf32>
    %225 = arith.subf %212, %224 : vector<32x128xf32>
    %cst_83 = arith.constant 9.99999974E-6 : f32
    %226 = vector.broadcast %cst_83 : f32 to vector<32x1xf32>
    %227 = arith.addf %223, %226 : vector<32x1xf32>
    %228 = math.rsqrt %227 : vector<32x1xf32>
    %229 = vector.broadcast %228 : vector<32x1xf32> to vector<32x128xf32>
    %230 = arith.mulf %225, %229 : vector<32x128xf32>
    %231 = vector.broadcast %7 : vector<1x128xf32> to vector<32x128xf32>
    %232 = arith.mulf %230, %231 : vector<32x128xf32>
    %233 = vector.broadcast %9 : vector<1x128xf32> to vector<32x128xf32>
    %234 = arith.addf %232, %233 : vector<32x128xf32>
    %235 = arith.truncf %234 : vector<32x128xf32> to vector<32x128xbf16>
    %c0_84 = arith.constant 0 : index
    %c0_85 = arith.constant 0 : index
    %c0_86 = arith.constant 0 : index
    %236 = vector.load %arg8[%c0_84, %c0_85, %c0_86] : memref<3x128x256xbf16, #tpu.memory_space<vmem>>, vector<1x128x256xbf16>
    %237 = vector.shape_cast %236 : vector<1x128x256xbf16> to vector<128x256xbf16>
    %cst_87 = arith.constant dense<0.000000e+00> : vector<32x256xf32>
    %238 = tpu.matmul %235, %237, %cst_87 {dimension_numbers = #tpu.dot_dimension_numbers<[1], [0], [0], [1], [0, 0, 1, 1], [], []>} : vector<32x128xbf16>, vector<128x256xbf16>, vector<32x256xf32> -> vector<32x256xf32>
    %c0_88 = arith.constant 0 : index
    %c0_89 = arith.constant 0 : index
    %c0_90 = arith.constant 0 : index
    %239 = vector.load %arg9[%c0_88, %c0_89, %c0_90] : memref<3x1x256xf32, #tpu.memory_space<vmem>>, vector<1x1x256xf32>
    %240 = vector.shape_cast %239 : vector<1x1x256xf32> to vector<1x256xf32>
    %241 = vector.broadcast %240 : vector<1x256xf32> to vector<32x256xf32>
    %242 = arith.addf %238, %241 : vector<32x256xf32>
    %cst_91 = arith.constant 0.000000e+00 : f32
    %243 = vector.broadcast %cst_91 : f32 to vector<32x256xf32>
    %244 = arith.maximumf %242, %243 : vector<32x256xf32>
    %245 = arith.truncf %244 : vector<32x256xf32> to vector<32x256xbf16>
    %c0_92 = arith.constant 0 : index
    %c0_93 = arith.constant 0 : index
    %c0_94 = arith.constant 0 : index
    %246 = vector.load %arg10[%c0_92, %c0_93, %c0_94] : memref<3x256x128xbf16, #tpu.memory_space<vmem>>, vector<1x256x128xbf16>
    %247 = vector.shape_cast %246 : vector<1x256x128xbf16> to vector<256x128xbf16>
    %cst_95 = arith.constant dense<0.000000e+00> : vector<32x128xf32>
    %248 = tpu.matmul %245, %247, %cst_95 {dimension_numbers = #tpu.dot_dimension_numbers<[1], [0], [0], [1], [0, 0, 1, 1], [], []>} : vector<32x256xbf16>, vector<256x128xbf16>, vector<32x128xf32> -> vector<32x128xf32>
    %249 = vector.broadcast %5 : vector<1x128xf32> to vector<32x128xf32>
    %250 = arith.addf %248, %249 : vector<32x128xf32>
    %251 = arith.addf %234, %250 : vector<32x128xf32>
    %cst_96 = arith.constant dense<0.000000e+00> : vector<32xf32>
    %252 = vector.multi_reduction <add>, %251, %cst_96 [1] : vector<32x128xf32> to vector<32xf32>
    %253 = vector.shape_cast %252 : vector<32xf32> to vector<32x1xf32>
    %cst_97 = arith.constant 1.280000e+02 : f32
    %254 = vector.broadcast %cst_97 : f32 to vector<32x1xf32>
    %255 = arith.divf %253, %254 : vector<32x1xf32>
    %256 = arith.mulf %251, %251 : vector<32x128xf32>
    %cst_98 = arith.constant dense<0.000000e+00> : vector<32xf32>
    %257 = vector.multi_reduction <add>, %256, %cst_98 [1] : vector<32x128xf32> to vector<32xf32>
    %258 = vector.shape_cast %257 : vector<32xf32> to vector<32x1xf32>
    %cst_99 = arith.constant 1.280000e+02 : f32
    %259 = vector.broadcast %cst_99 : f32 to vector<32x1xf32>
    %260 = arith.divf %258, %259 : vector<32x1xf32>
    %261 = arith.mulf %255, %255 : vector<32x1xf32>
    %262 = arith.subf %260, %261 : vector<32x1xf32>
    %263 = vector.broadcast %255 : vector<32x1xf32> to vector<32x128xf32>
    %264 = arith.subf %251, %263 : vector<32x128xf32>
    %cst_100 = arith.constant 9.99999974E-6 : f32
    %265 = vector.broadcast %cst_100 : f32 to vector<32x1xf32>
    %266 = arith.addf %262, %265 : vector<32x1xf32>
    %267 = math.rsqrt %266 : vector<32x1xf32>
    %268 = vector.broadcast %267 : vector<32x1xf32> to vector<32x128xf32>
    %269 = arith.mulf %264, %268 : vector<32x128xf32>
    %270 = vector.broadcast %11 : vector<1x128xf32> to vector<32x128xf32>
    %271 = arith.mulf %269, %270 : vector<32x128xf32>
    %272 = vector.broadcast %13 : vector<1x128xf32> to vector<32x128xf32>
    %273 = arith.addf %271, %272 : vector<32x128xf32>
    %c1_101 = arith.constant 1 : index
    %c0_102 = arith.constant 0 : index
    %c0_103 = arith.constant 0 : index
    %274 = vector.load %arg11[%c1_101, %c0_102, %c0_103] : memref<3x6x128xf32, #tpu.memory_space<vmem>>, vector<1x1x128xf32>
    %275 = vector.shape_cast %274 : vector<1x1x128xf32> to vector<1x128xf32>
    %c1_104 = arith.constant 1 : index
    %c1_105 = arith.constant 1 : index
    %c0_106 = arith.constant 0 : index
    %276 = vector.load %arg11[%c1_104, %c1_105, %c0_106] : memref<3x6x128xf32, #tpu.memory_space<vmem>>, vector<1x1x128xf32>
    %277 = vector.shape_cast %276 : vector<1x1x128xf32> to vector<1x128xf32>
    %c1_107 = arith.constant 1 : index
    %c2_108 = arith.constant 2 : index
    %c0_109 = arith.constant 0 : index
    %278 = vector.load %arg11[%c1_107, %c2_108, %c0_109] : memref<3x6x128xf32, #tpu.memory_space<vmem>>, vector<1x1x128xf32>
    %279 = vector.shape_cast %278 : vector<1x1x128xf32> to vector<1x128xf32>
    %c1_110 = arith.constant 1 : index
    %c3_111 = arith.constant 3 : index
    %c0_112 = arith.constant 0 : index
    %280 = vector.load %arg11[%c1_110, %c3_111, %c0_112] : memref<3x6x128xf32, #tpu.memory_space<vmem>>, vector<1x1x128xf32>
    %281 = vector.shape_cast %280 : vector<1x1x128xf32> to vector<1x128xf32>
    %c1_113 = arith.constant 1 : index
    %c4_114 = arith.constant 4 : index
    %c0_115 = arith.constant 0 : index
    %282 = vector.load %arg11[%c1_113, %c4_114, %c0_115] : memref<3x6x128xf32, #tpu.memory_space<vmem>>, vector<1x1x128xf32>
    %283 = vector.shape_cast %282 : vector<1x1x128xf32> to vector<1x128xf32>
    %c1_116 = arith.constant 1 : index
    %c5_117 = arith.constant 5 : index
    %c0_118 = arith.constant 0 : index
    %284 = vector.load %arg11[%c1_116, %c5_117, %c0_118] : memref<3x6x128xf32, #tpu.memory_space<vmem>>, vector<1x1x128xf32>
    %285 = vector.shape_cast %284 : vector<1x1x128xf32> to vector<1x128xf32>
    %286 = arith.truncf %273 : vector<32x128xf32> to vector<32x128xbf16>
    %c1_119 = arith.constant 1 : index
    %c0_120 = arith.constant 0 : index
    %c0_121 = arith.constant 0 : index
    %287 = vector.load %arg5[%c1_119, %c0_120, %c0_121] : memref<3x128x384xbf16, #tpu.memory_space<vmem>>, vector<1x128x384xbf16>
    %288 = vector.shape_cast %287 : vector<1x128x384xbf16> to vector<128x384xbf16>
    %cst_122 = arith.constant dense<0.000000e+00> : vector<32x384xf32>
    %289 = tpu.matmul %286, %288, %cst_122 {dimension_numbers = #tpu.dot_dimension_numbers<[1], [0], [0], [1], [0, 0, 1, 1], [], []>} : vector<32x128xbf16>, vector<128x384xbf16>, vector<32x384xf32> -> vector<32x384xf32>
    %c1_123 = arith.constant 1 : index
    %c0_124 = arith.constant 0 : index
    %c0_125 = arith.constant 0 : index
    %290 = vector.load %arg6[%c1_123, %c0_124, %c0_125] : memref<3x1x384xf32, #tpu.memory_space<vmem>>, vector<1x1x384xf32>
    %291 = vector.shape_cast %290 : vector<1x1x384xf32> to vector<1x384xf32>
    %292 = vector.broadcast %291 : vector<1x384xf32> to vector<32x384xf32>
    %293 = arith.addf %289, %292 : vector<32x384xf32>
    %294 = vector.extract_strided_slice %293 {offsets = [0, 0], sizes = [32, 128], strides = [1, 1]} : vector<32x384xf32> to vector<32x128xf32>
    %295 = vector.shape_cast %294 : vector<32x128xf32> to vector<1x32x128xf32>
    %296 = vector.extract_strided_slice %293 {offsets = [0, 128], sizes = [32, 128], strides = [1, 1]} : vector<32x384xf32> to vector<32x128xf32>
    %297 = vector.shape_cast %296 : vector<32x128xf32> to vector<1x32x128xf32>
    %298 = vector.extract_strided_slice %293 {offsets = [0, 256], sizes = [32, 128], strides = [1, 1]} : vector<32x384xf32> to vector<32x128xf32>
    %299 = vector.shape_cast %298 : vector<32x128xf32> to vector<1x32x128xf32>
    %300 = vector.extract_strided_slice %295 {offsets = [0, 0, 0], sizes = [1, 32, 16], strides = [1, 1, 1]} : vector<1x32x128xf32> to vector<1x32x16xf32>
    %301 = arith.truncf %300 : vector<1x32x16xf32> to vector<1x32x16xbf16>
    %302 = vector.extract_strided_slice %297 {offsets = [0, 0, 0], sizes = [1, 32, 16], strides = [1, 1, 1]} : vector<1x32x128xf32> to vector<1x32x16xf32>
    %303 = arith.truncf %302 : vector<1x32x16xf32> to vector<1x32x16xbf16>
    %304 = vector.extract_strided_slice %299 {offsets = [0, 0, 0], sizes = [1, 32, 16], strides = [1, 1, 1]} : vector<1x32x128xf32> to vector<1x32x16xf32>
    %305 = arith.truncf %304 : vector<1x32x16xf32> to vector<1x32x16xbf16>
    "tpu.trace_start"() <{level = 10 : i32, message = "bqd,bkd->bqk"}> : () -> ()
    %cst_126 = arith.constant dense<0.000000e+00> : vector<1x32x32xf32>
    %306 = tpu.matmul %301, %303, %cst_126 {dimension_numbers = #tpu.dot_dimension_numbers<[2], [2], [1], [1], [0, 0, 0, 1, 1, 1], [0], [0]>} : vector<1x32x16xbf16>, vector<1x32x16xbf16>, vector<1x32x32xf32> -> vector<1x32x32xf32>
    "tpu.trace_stop"() : () -> ()
    %307 = vector.broadcast %1 : vector<1x1x32xf32> to vector<1x32x32xf32>
    %308 = arith.addf %306, %307 : vector<1x32x32xf32>
    %cst_127 = arith.constant dense<0xFF800000> : vector<1x32xf32>
    %309 = vector.multi_reduction <maximumf>, %308, %cst_127 [2] : vector<1x32x32xf32> to vector<1x32xf32>
    %310 = vector.shape_cast %309 : vector<1x32xf32> to vector<1x32x1xf32>
    %311 = vector.broadcast %310 : vector<1x32x1xf32> to vector<1x32x32xf32>
    %312 = arith.subf %308, %311 : vector<1x32x32xf32>
    %313 = math.exp %312 : vector<1x32x32xf32>
    %cst_128 = arith.constant dense<0.000000e+00> : vector<1x32xf32>
    %314 = vector.multi_reduction <add>, %313, %cst_128 [2] : vector<1x32x32xf32> to vector<1x32xf32>
    %315 = vector.shape_cast %314 : vector<1x32xf32> to vector<1x32x1xf32>
    %316 = tpu.reciprocal %315 {approx = true} : vector<1x32x1xf32> -> vector<1x32x1xf32>
    %317 = vector.broadcast %316 : vector<1x32x1xf32> to vector<1x32x32xf32>
    %318 = arith.mulf %313, %317 : vector<1x32x32xf32>
    %319 = arith.truncf %318 : vector<1x32x32xf32> to vector<1x32x32xbf16>
    "tpu.trace_start"() <{level = 10 : i32, message = "bqk,bkd->bqd"}> : () -> ()
    %cst_129 = arith.constant dense<0.000000e+00> : vector<1x32x16xf32>
    %320 = tpu.matmul %319, %305, %cst_129 {dimension_numbers = #tpu.dot_dimension_numbers<[2], [1], [1], [2], [0, 0, 0, 1, 1, 2], [0], [0]>} : vector<1x32x32xbf16>, vector<1x32x16xbf16>, vector<1x32x16xf32> -> vector<1x32x16xf32>
    "tpu.trace_stop"() : () -> ()
    %c0_130 = arith.constant 0 : index
    %c0_131 = arith.constant 0 : index
    %c0_132 = arith.constant 0 : index
    %321 = vector.load %arg13[%c0_130, %c0_131, %c0_132] : memref<1x32x128xf32, #tpu.memory_space<vmem>>, vector<1x32x16xf32>
    tpu.vector_store %arg13[%c0_130, %c0_131, %c0_132], %320 {strides = array<i32>} : memref<1x32x128xf32, #tpu.memory_space<vmem>>, vector<1x32x16xf32>,
    %322 = vector.extract_strided_slice %295 {offsets = [0, 0, 16], sizes = [1, 32, 16], strides = [1, 1, 1]} : vector<1x32x128xf32> to vector<1x32x16xf32>
    %323 = arith.truncf %322 : vector<1x32x16xf32> to vector<1x32x16xbf16>
    %324 = vector.extract_strided_slice %297 {offsets = [0, 0, 16], sizes = [1, 32, 16], strides = [1, 1, 1]} : vector<1x32x128xf32> to vector<1x32x16xf32>
    %325 = arith.truncf %324 : vector<1x32x16xf32> to vector<1x32x16xbf16>
    %326 = vector.extract_strided_slice %299 {offsets = [0, 0, 16], sizes = [1, 32, 16], strides = [1, 1, 1]} : vector<1x32x128xf32> to vector<1x32x16xf32>
    %327 = arith.truncf %326 : vector<1x32x16xf32> to vector<1x32x16xbf16>
    "tpu.trace_start"() <{level = 10 : i32, message = "bqd,bkd->bqk"}> : () -> ()
    %cst_133 = arith.constant dense<0.000000e+00> : vector<1x32x32xf32>
    %328 = tpu.matmul %323, %325, %cst_133 {dimension_numbers = #tpu.dot_dimension_numbers<[2], [2], [1], [1], [0, 0, 0, 1, 1, 1], [0], [0]>} : vector<1x32x16xbf16>, vector<1x32x16xbf16>, vector<1x32x32xf32> -> vector<1x32x32xf32>
    "tpu.trace_stop"() : () -> ()
    %329 = vector.broadcast %1 : vector<1x1x32xf32> to vector<1x32x32xf32>
    %330 = arith.addf %328, %329 : vector<1x32x32xf32>
    %cst_134 = arith.constant dense<0xFF800000> : vector<1x32xf32>
    %331 = vector.multi_reduction <maximumf>, %330, %cst_134 [2] : vector<1x32x32xf32> to vector<1x32xf32>
    %332 = vector.shape_cast %331 : vector<1x32xf32> to vector<1x32x1xf32>
    %333 = vector.broadcast %332 : vector<1x32x1xf32> to vector<1x32x32xf32>
    %334 = arith.subf %330, %333 : vector<1x32x32xf32>
    %335 = math.exp %334 : vector<1x32x32xf32>
    %cst_135 = arith.constant dense<0.000000e+00> : vector<1x32xf32>
    %336 = vector.multi_reduction <add>, %335, %cst_135 [2] : vector<1x32x32xf32> to vector<1x32xf32>
    %337 = vector.shape_cast %336 : vector<1x32xf32> to vector<1x32x1xf32>
    %338 = tpu.reciprocal %337 {approx = true} : vector<1x32x1xf32> -> vector<1x32x1xf32>
    %339 = vector.broadcast %338 : vector<1x32x1xf32> to vector<1x32x32xf32>
    %340 = arith.mulf %335, %339 : vector<1x32x32xf32>
    %341 = arith.truncf %340 : vector<1x32x32xf32> to vector<1x32x32xbf16>
    "tpu.trace_start"() <{level = 10 : i32, message = "bqk,bkd->bqd"}> : () -> ()
    %cst_136 = arith.constant dense<0.000000e+00> : vector<1x32x16xf32>
    %342 = tpu.matmul %341, %327, %cst_136 {dimension_numbers = #tpu.dot_dimension_numbers<[2], [1], [1], [2], [0, 0, 0, 1, 1, 2], [0], [0]>} : vector<1x32x32xbf16>, vector<1x32x16xbf16>, vector<1x32x16xf32> -> vector<1x32x16xf32>
    "tpu.trace_stop"() : () -> ()
    %c0_137 = arith.constant 0 : index
    %c0_138 = arith.constant 0 : index
    %c16_139 = arith.constant 16 : index
    %343 = vector.load %arg13[%c0_137, %c0_138, %c16_139] : memref<1x32x128xf32, #tpu.memory_space<vmem>>, vector<1x32x16xf32>
    tpu.vector_store %arg13[%c0_137, %c0_138, %c16_139], %342 {strides = array<i32>} : memref<1x32x128xf32, #tpu.memory_space<vmem>>, vector<1x32x16xf32>,
    %344 = vector.extract_strided_slice %295 {offsets = [0, 0, 32], sizes = [1, 32, 16], strides = [1, 1, 1]} : vector<1x32x128xf32> to vector<1x32x16xf32>
    %345 = arith.truncf %344 : vector<1x32x16xf32> to vector<1x32x16xbf16>
    %346 = vector.extract_strided_slice %297 {offsets = [0, 0, 32], sizes = [1, 32, 16], strides = [1, 1, 1]} : vector<1x32x128xf32> to vector<1x32x16xf32>
    %347 = arith.truncf %346 : vector<1x32x16xf32> to vector<1x32x16xbf16>
    %348 = vector.extract_strided_slice %299 {offsets = [0, 0, 32], sizes = [1, 32, 16], strides = [1, 1, 1]} : vector<1x32x128xf32> to vector<1x32x16xf32>
    %349 = arith.truncf %348 : vector<1x32x16xf32> to vector<1x32x16xbf16>
    "tpu.trace_start"() <{level = 10 : i32, message = "bqd,bkd->bqk"}> : () -> ()
    %cst_140 = arith.constant dense<0.000000e+00> : vector<1x32x32xf32>
    %350 = tpu.matmul %345, %347, %cst_140 {dimension_numbers = #tpu.dot_dimension_numbers<[2], [2], [1], [1], [0, 0, 0, 1, 1, 1], [0], [0]>} : vector<1x32x16xbf16>, vector<1x32x16xbf16>, vector<1x32x32xf32> -> vector<1x32x32xf32>
    "tpu.trace_stop"() : () -> ()
    %351 = vector.broadcast %1 : vector<1x1x32xf32> to vector<1x32x32xf32>
    %352 = arith.addf %350, %351 : vector<1x32x32xf32>
    %cst_141 = arith.constant dense<0xFF800000> : vector<1x32xf32>
    %353 = vector.multi_reduction <maximumf>, %352, %cst_141 [2] : vector<1x32x32xf32> to vector<1x32xf32>
    %354 = vector.shape_cast %353 : vector<1x32xf32> to vector<1x32x1xf32>
    %355 = vector.broadcast %354 : vector<1x32x1xf32> to vector<1x32x32xf32>
    %356 = arith.subf %352, %355 : vector<1x32x32xf32>
    %357 = math.exp %356 : vector<1x32x32xf32>
    %cst_142 = arith.constant dense<0.000000e+00> : vector<1x32xf32>
    %358 = vector.multi_reduction <add>, %357, %cst_142 [2] : vector<1x32x32xf32> to vector<1x32xf32>
    %359 = vector.shape_cast %358 : vector<1x32xf32> to vector<1x32x1xf32>
    %360 = tpu.reciprocal %359 {approx = true} : vector<1x32x1xf32> -> vector<1x32x1xf32>
    %361 = vector.broadcast %360 : vector<1x32x1xf32> to vector<1x32x32xf32>
    %362 = arith.mulf %357, %361 : vector<1x32x32xf32>
    %363 = arith.truncf %362 : vector<1x32x32xf32> to vector<1x32x32xbf16>
    "tpu.trace_start"() <{level = 10 : i32, message = "bqk,bkd->bqd"}> : () -> ()
    %cst_143 = arith.constant dense<0.000000e+00> : vector<1x32x16xf32>
    %364 = tpu.matmul %363, %349, %cst_143 {dimension_numbers = #tpu.dot_dimension_numbers<[2], [1], [1], [2], [0, 0, 0, 1, 1, 2], [0], [0]>} : vector<1x32x32xbf16>, vector<1x32x16xbf16>, vector<1x32x16xf32> -> vector<1x32x16xf32>
    "tpu.trace_stop"() : () -> ()
    %c0_144 = arith.constant 0 : index
    %c0_145 = arith.constant 0 : index
    %c32_146 = arith.constant 32 : index
    %365 = vector.load %arg13[%c0_144, %c0_145, %c32_146] : memref<1x32x128xf32, #tpu.memory_space<vmem>>, vector<1x32x16xf32>
    tpu.vector_store %arg13[%c0_144, %c0_145, %c32_146], %364 {strides = array<i32>} : memref<1x32x128xf32, #tpu.memory_space<vmem>>, vector<1x32x16xf32>,
    %366 = vector.extract_strided_slice %295 {offsets = [0, 0, 48], sizes = [1, 32, 16], strides = [1, 1, 1]} : vector<1x32x128xf32> to vector<1x32x16xf32>
    %367 = arith.truncf %366 : vector<1x32x16xf32> to vector<1x32x16xbf16>
    %368 = vector.extract_strided_slice %297 {offsets = [0, 0, 48], sizes = [1, 32, 16], strides = [1, 1, 1]} : vector<1x32x128xf32> to vector<1x32x16xf32>
    %369 = arith.truncf %368 : vector<1x32x16xf32> to vector<1x32x16xbf16>
    %370 = vector.extract_strided_slice %299 {offsets = [0, 0, 48], sizes = [1, 32, 16], strides = [1, 1, 1]} : vector<1x32x128xf32> to vector<1x32x16xf32>
    %371 = arith.truncf %370 : vector<1x32x16xf32> to vector<1x32x16xbf16>
    "tpu.trace_start"() <{level = 10 : i32, message = "bqd,bkd->bqk"}> : () -> ()
    %cst_147 = arith.constant dense<0.000000e+00> : vector<1x32x32xf32>
    %372 = tpu.matmul %367, %369, %cst_147 {dimension_numbers = #tpu.dot_dimension_numbers<[2], [2], [1], [1], [0, 0, 0, 1, 1, 1], [0], [0]>} : vector<1x32x16xbf16>, vector<1x32x16xbf16>, vector<1x32x32xf32> -> vector<1x32x32xf32>
    "tpu.trace_stop"() : () -> ()
    %373 = vector.broadcast %1 : vector<1x1x32xf32> to vector<1x32x32xf32>
    %374 = arith.addf %372, %373 : vector<1x32x32xf32>
    %cst_148 = arith.constant dense<0xFF800000> : vector<1x32xf32>
    %375 = vector.multi_reduction <maximumf>, %374, %cst_148 [2] : vector<1x32x32xf32> to vector<1x32xf32>
    %376 = vector.shape_cast %375 : vector<1x32xf32> to vector<1x32x1xf32>
    %377 = vector.broadcast %376 : vector<1x32x1xf32> to vector<1x32x32xf32>
    %378 = arith.subf %374, %377 : vector<1x32x32xf32>
    %379 = math.exp %378 : vector<1x32x32xf32>
    %cst_149 = arith.constant dense<0.000000e+00> : vector<1x32xf32>
    %380 = vector.multi_reduction <add>, %379, %cst_149 [2] : vector<1x32x32xf32> to vector<1x32xf32>
    %381 = vector.shape_cast %380 : vector<1x32xf32> to vector<1x32x1xf32>
    %382 = tpu.reciprocal %381 {approx = true} : vector<1x32x1xf32> -> vector<1x32x1xf32>
    %383 = vector.broadcast %382 : vector<1x32x1xf32> to vector<1x32x32xf32>
    %384 = arith.mulf %379, %383 : vector<1x32x32xf32>
    %385 = arith.truncf %384 : vector<1x32x32xf32> to vector<1x32x32xbf16>
    "tpu.trace_start"() <{level = 10 : i32, message = "bqk,bkd->bqd"}> : () -> ()
    %cst_150 = arith.constant dense<0.000000e+00> : vector<1x32x16xf32>
    %386 = tpu.matmul %385, %371, %cst_150 {dimension_numbers = #tpu.dot_dimension_numbers<[2], [1], [1], [2], [0, 0, 0, 1, 1, 2], [0], [0]>} : vector<1x32x32xbf16>, vector<1x32x16xbf16>, vector<1x32x16xf32> -> vector<1x32x16xf32>
    "tpu.trace_stop"() : () -> ()
    %c0_151 = arith.constant 0 : index
    %c0_152 = arith.constant 0 : index
    %c48_153 = arith.constant 48 : index
    %387 = vector.load %arg13[%c0_151, %c0_152, %c48_153] : memref<1x32x128xf32, #tpu.memory_space<vmem>>, vector<1x32x16xf32>
    tpu.vector_store %arg13[%c0_151, %c0_152, %c48_153], %386 {strides = array<i32>} : memref<1x32x128xf32, #tpu.memory_space<vmem>>, vector<1x32x16xf32>,
    %388 = vector.extract_strided_slice %295 {offsets = [0, 0, 64], sizes = [1, 32, 16], strides = [1, 1, 1]} : vector<1x32x128xf32> to vector<1x32x16xf32>
    %389 = arith.truncf %388 : vector<1x32x16xf32> to vector<1x32x16xbf16>
    %390 = vector.extract_strided_slice %297 {offsets = [0, 0, 64], sizes = [1, 32, 16], strides = [1, 1, 1]} : vector<1x32x128xf32> to vector<1x32x16xf32>
    %391 = arith.truncf %390 : vector<1x32x16xf32> to vector<1x32x16xbf16>
    %392 = vector.extract_strided_slice %299 {offsets = [0, 0, 64], sizes = [1, 32, 16], strides = [1, 1, 1]} : vector<1x32x128xf32> to vector<1x32x16xf32>
    %393 = arith.truncf %392 : vector<1x32x16xf32> to vector<1x32x16xbf16>
    "tpu.trace_start"() <{level = 10 : i32, message = "bqd,bkd->bqk"}> : () -> ()
    %cst_154 = arith.constant dense<0.000000e+00> : vector<1x32x32xf32>
    %394 = tpu.matmul %389, %391, %cst_154 {dimension_numbers = #tpu.dot_dimension_numbers<[2], [2], [1], [1], [0, 0, 0, 1, 1, 1], [0], [0]>} : vector<1x32x16xbf16>, vector<1x32x16xbf16>, vector<1x32x32xf32> -> vector<1x32x32xf32>
    "tpu.trace_stop"() : () -> ()
    %395 = vector.broadcast %1 : vector<1x1x32xf32> to vector<1x32x32xf32>
    %396 = arith.addf %394, %395 : vector<1x32x32xf32>
    %cst_155 = arith.constant dense<0xFF800000> : vector<1x32xf32>
    %397 = vector.multi_reduction <maximumf>, %396, %cst_155 [2] : vector<1x32x32xf32> to vector<1x32xf32>
    %398 = vector.shape_cast %397 : vector<1x32xf32> to vector<1x32x1xf32>
    %399 = vector.broadcast %398 : vector<1x32x1xf32> to vector<1x32x32xf32>
    %400 = arith.subf %396, %399 : vector<1x32x32xf32>
    %401 = math.exp %400 : vector<1x32x32xf32>
    %cst_156 = arith.constant dense<0.000000e+00> : vector<1x32xf32>
    %402 = vector.multi_reduction <add>, %401, %cst_156 [2] : vector<1x32x32xf32> to vector<1x32xf32>
    %403 = vector.shape_cast %402 : vector<1x32xf32> to vector<1x32x1xf32>
    %404 = tpu.reciprocal %403 {approx = true} : vector<1x32x1xf32> -> vector<1x32x1xf32>
    %405 = vector.broadcast %404 : vector<1x32x1xf32> to vector<1x32x32xf32>
    %406 = arith.mulf %401, %405 : vector<1x32x32xf32>
    %407 = arith.truncf %406 : vector<1x32x32xf32> to vector<1x32x32xbf16>
    "tpu.trace_start"() <{level = 10 : i32, message = "bqk,bkd->bqd"}> : () -> ()
    %cst_157 = arith.constant dense<0.000000e+00> : vector<1x32x16xf32>
    %408 = tpu.matmul %407, %393, %cst_157 {dimension_numbers = #tpu.dot_dimension_numbers<[2], [1], [1], [2], [0, 0, 0, 1, 1, 2], [0], [0]>} : vector<1x32x32xbf16>, vector<1x32x16xbf16>, vector<1x32x16xf32> -> vector<1x32x16xf32>
    "tpu.trace_stop"() : () -> ()
    %c0_158 = arith.constant 0 : index
    %c0_159 = arith.constant 0 : index
    %c64_160 = arith.constant 64 : index
    %409 = vector.load %arg13[%c0_158, %c0_159, %c64_160] : memref<1x32x128xf32, #tpu.memory_space<vmem>>, vector<1x32x16xf32>
    tpu.vector_store %arg13[%c0_158, %c0_159, %c64_160], %408 {strides = array<i32>} : memref<1x32x128xf32, #tpu.memory_space<vmem>>, vector<1x32x16xf32>,
    %410 = vector.extract_strided_slice %295 {offsets = [0, 0, 80], sizes = [1, 32, 16], strides = [1, 1, 1]} : vector<1x32x128xf32> to vector<1x32x16xf32>
    %411 = arith.truncf %410 : vector<1x32x16xf32> to vector<1x32x16xbf16>
    %412 = vector.extract_strided_slice %297 {offsets = [0, 0, 80], sizes = [1, 32, 16], strides = [1, 1, 1]} : vector<1x32x128xf32> to vector<1x32x16xf32>
    %413 = arith.truncf %412 : vector<1x32x16xf32> to vector<1x32x16xbf16>
    %414 = vector.extract_strided_slice %299 {offsets = [0, 0, 80], sizes = [1, 32, 16], strides = [1, 1, 1]} : vector<1x32x128xf32> to vector<1x32x16xf32>
    %415 = arith.truncf %414 : vector<1x32x16xf32> to vector<1x32x16xbf16>
    "tpu.trace_start"() <{level = 10 : i32, message = "bqd,bkd->bqk"}> : () -> ()
    %cst_161 = arith.constant dense<0.000000e+00> : vector<1x32x32xf32>
    %416 = tpu.matmul %411, %413, %cst_161 {dimension_numbers = #tpu.dot_dimension_numbers<[2], [2], [1], [1], [0, 0, 0, 1, 1, 1], [0], [0]>} : vector<1x32x16xbf16>, vector<1x32x16xbf16>, vector<1x32x32xf32> -> vector<1x32x32xf32>
    "tpu.trace_stop"() : () -> ()
    %417 = vector.broadcast %1 : vector<1x1x32xf32> to vector<1x32x32xf32>
    %418 = arith.addf %416, %417 : vector<1x32x32xf32>
    %cst_162 = arith.constant dense<0xFF800000> : vector<1x32xf32>
    %419 = vector.multi_reduction <maximumf>, %418, %cst_162 [2] : vector<1x32x32xf32> to vector<1x32xf32>
    %420 = vector.shape_cast %419 : vector<1x32xf32> to vector<1x32x1xf32>
    %421 = vector.broadcast %420 : vector<1x32x1xf32> to vector<1x32x32xf32>
    %422 = arith.subf %418, %421 : vector<1x32x32xf32>
    %423 = math.exp %422 : vector<1x32x32xf32>
    %cst_163 = arith.constant dense<0.000000e+00> : vector<1x32xf32>
    %424 = vector.multi_reduction <add>, %423, %cst_163 [2] : vector<1x32x32xf32> to vector<1x32xf32>
    %425 = vector.shape_cast %424 : vector<1x32xf32> to vector<1x32x1xf32>
    %426 = tpu.reciprocal %425 {approx = true} : vector<1x32x1xf32> -> vector<1x32x1xf32>
    %427 = vector.broadcast %426 : vector<1x32x1xf32> to vector<1x32x32xf32>
    %428 = arith.mulf %423, %427 : vector<1x32x32xf32>
    %429 = arith.truncf %428 : vector<1x32x32xf32> to vector<1x32x32xbf16>
    "tpu.trace_start"() <{level = 10 : i32, message = "bqk,bkd->bqd"}> : () -> ()
    %cst_164 = arith.constant dense<0.000000e+00> : vector<1x32x16xf32>
    %430 = tpu.matmul %429, %415, %cst_164 {dimension_numbers = #tpu.dot_dimension_numbers<[2], [1], [1], [2], [0, 0, 0, 1, 1, 2], [0], [0]>} : vector<1x32x32xbf16>, vector<1x32x16xbf16>, vector<1x32x16xf32> -> vector<1x32x16xf32>
    "tpu.trace_stop"() : () -> ()
    %c0_165 = arith.constant 0 : index
    %c0_166 = arith.constant 0 : index
    %c80_167 = arith.constant 80 : index
    %431 = vector.load %arg13[%c0_165, %c0_166, %c80_167] : memref<1x32x128xf32, #tpu.memory_space<vmem>>, vector<1x32x16xf32>
    tpu.vector_store %arg13[%c0_165, %c0_166, %c80_167], %430 {strides = array<i32>} : memref<1x32x128xf32, #tpu.memory_space<vmem>>, vector<1x32x16xf32>,
    %432 = vector.extract_strided_slice %295 {offsets = [0, 0, 96], sizes = [1, 32, 16], strides = [1, 1, 1]} : vector<1x32x128xf32> to vector<1x32x16xf32>
    %433 = arith.truncf %432 : vector<1x32x16xf32> to vector<1x32x16xbf16>
    %434 = vector.extract_strided_slice %297 {offsets = [0, 0, 96], sizes = [1, 32, 16], strides = [1, 1, 1]} : vector<1x32x128xf32> to vector<1x32x16xf32>
    %435 = arith.truncf %434 : vector<1x32x16xf32> to vector<1x32x16xbf16>
    %436 = vector.extract_strided_slice %299 {offsets = [0, 0, 96], sizes = [1, 32, 16], strides = [1, 1, 1]} : vector<1x32x128xf32> to vector<1x32x16xf32>
    %437 = arith.truncf %436 : vector<1x32x16xf32> to vector<1x32x16xbf16>
    "tpu.trace_start"() <{level = 10 : i32, message = "bqd,bkd->bqk"}> : () -> ()
    %cst_168 = arith.constant dense<0.000000e+00> : vector<1x32x32xf32>
    %438 = tpu.matmul %433, %435, %cst_168 {dimension_numbers = #tpu.dot_dimension_numbers<[2], [2], [1], [1], [0, 0, 0, 1, 1, 1], [0], [0]>} : vector<1x32x16xbf16>, vector<1x32x16xbf16>, vector<1x32x32xf32> -> vector<1x32x32xf32>
    "tpu.trace_stop"() : () -> ()
    %439 = vector.broadcast %1 : vector<1x1x32xf32> to vector<1x32x32xf32>
    %440 = arith.addf %438, %439 : vector<1x32x32xf32>
    %cst_169 = arith.constant dense<0xFF800000> : vector<1x32xf32>
    %441 = vector.multi_reduction <maximumf>, %440, %cst_169 [2] : vector<1x32x32xf32> to vector<1x32xf32>
    %442 = vector.shape_cast %441 : vector<1x32xf32> to vector<1x32x1xf32>
    %443 = vector.broadcast %442 : vector<1x32x1xf32> to vector<1x32x32xf32>
    %444 = arith.subf %440, %443 : vector<1x32x32xf32>
    %445 = math.exp %444 : vector<1x32x32xf32>
    %cst_170 = arith.constant dense<0.000000e+00> : vector<1x32xf32>
    %446 = vector.multi_reduction <add>, %445, %cst_170 [2] : vector<1x32x32xf32> to vector<1x32xf32>
    %447 = vector.shape_cast %446 : vector<1x32xf32> to vector<1x32x1xf32>
    %448 = tpu.reciprocal %447 {approx = true} : vector<1x32x1xf32> -> vector<1x32x1xf32>
    %449 = vector.broadcast %448 : vector<1x32x1xf32> to vector<1x32x32xf32>
    %450 = arith.mulf %445, %449 : vector<1x32x32xf32>
    %451 = arith.truncf %450 : vector<1x32x32xf32> to vector<1x32x32xbf16>
    "tpu.trace_start"() <{level = 10 : i32, message = "bqk,bkd->bqd"}> : () -> ()
    %cst_171 = arith.constant dense<0.000000e+00> : vector<1x32x16xf32>
    %452 = tpu.matmul %451, %437, %cst_171 {dimension_numbers = #tpu.dot_dimension_numbers<[2], [1], [1], [2], [0, 0, 0, 1, 1, 2], [0], [0]>} : vector<1x32x32xbf16>, vector<1x32x16xbf16>, vector<1x32x16xf32> -> vector<1x32x16xf32>
    "tpu.trace_stop"() : () -> ()
    %c0_172 = arith.constant 0 : index
    %c0_173 = arith.constant 0 : index
    %c96_174 = arith.constant 96 : index
    %453 = vector.load %arg13[%c0_172, %c0_173, %c96_174] : memref<1x32x128xf32, #tpu.memory_space<vmem>>, vector<1x32x16xf32>
    tpu.vector_store %arg13[%c0_172, %c0_173, %c96_174], %452 {strides = array<i32>} : memref<1x32x128xf32, #tpu.memory_space<vmem>>, vector<1x32x16xf32>,
    %454 = vector.extract_strided_slice %295 {offsets = [0, 0, 112], sizes = [1, 32, 16], strides = [1, 1, 1]} : vector<1x32x128xf32> to vector<1x32x16xf32>
    %455 = arith.truncf %454 : vector<1x32x16xf32> to vector<1x32x16xbf16>
    %456 = vector.extract_strided_slice %297 {offsets = [0, 0, 112], sizes = [1, 32, 16], strides = [1, 1, 1]} : vector<1x32x128xf32> to vector<1x32x16xf32>
    %457 = arith.truncf %456 : vector<1x32x16xf32> to vector<1x32x16xbf16>
    %458 = vector.extract_strided_slice %299 {offsets = [0, 0, 112], sizes = [1, 32, 16], strides = [1, 1, 1]} : vector<1x32x128xf32> to vector<1x32x16xf32>
    %459 = arith.truncf %458 : vector<1x32x16xf32> to vector<1x32x16xbf16>
    "tpu.trace_start"() <{level = 10 : i32, message = "bqd,bkd->bqk"}> : () -> ()
    %cst_175 = arith.constant dense<0.000000e+00> : vector<1x32x32xf32>
    %460 = tpu.matmul %455, %457, %cst_175 {dimension_numbers = #tpu.dot_dimension_numbers<[2], [2], [1], [1], [0, 0, 0, 1, 1, 1], [0], [0]>} : vector<1x32x16xbf16>, vector<1x32x16xbf16>, vector<1x32x32xf32> -> vector<1x32x32xf32>
    "tpu.trace_stop"() : () -> ()
    %461 = vector.broadcast %1 : vector<1x1x32xf32> to vector<1x32x32xf32>
    %462 = arith.addf %460, %461 : vector<1x32x32xf32>
    %cst_176 = arith.constant dense<0xFF800000> : vector<1x32xf32>
    %463 = vector.multi_reduction <maximumf>, %462, %cst_176 [2] : vector<1x32x32xf32> to vector<1x32xf32>
    %464 = vector.shape_cast %463 : vector<1x32xf32> to vector<1x32x1xf32>
    %465 = vector.broadcast %464 : vector<1x32x1xf32> to vector<1x32x32xf32>
    %466 = arith.subf %462, %465 : vector<1x32x32xf32>
    %467 = math.exp %466 : vector<1x32x32xf32>
    %cst_177 = arith.constant dense<0.000000e+00> : vector<1x32xf32>
    %468 = vector.multi_reduction <add>, %467, %cst_177 [2] : vector<1x32x32xf32> to vector<1x32xf32>
    %469 = vector.shape_cast %468 : vector<1x32xf32> to vector<1x32x1xf32>
    %470 = tpu.reciprocal %469 {approx = true} : vector<1x32x1xf32> -> vector<1x32x1xf32>
    %471 = vector.broadcast %470 : vector<1x32x1xf32> to vector<1x32x32xf32>
    %472 = arith.mulf %467, %471 : vector<1x32x32xf32>
    %473 = arith.truncf %472 : vector<1x32x32xf32> to vector<1x32x32xbf16>
    "tpu.trace_start"() <{level = 10 : i32, message = "bqk,bkd->bqd"}> : () -> ()
    %cst_178 = arith.constant dense<0.000000e+00> : vector<1x32x16xf32>
    %474 = tpu.matmul %473, %459, %cst_178 {dimension_numbers = #tpu.dot_dimension_numbers<[2], [1], [1], [2], [0, 0, 0, 1, 1, 2], [0], [0]>} : vector<1x32x32xbf16>, vector<1x32x16xbf16>, vector<1x32x16xf32> -> vector<1x32x16xf32>
    "tpu.trace_stop"() : () -> ()
    %c0_179 = arith.constant 0 : index
    %c0_180 = arith.constant 0 : index
    %c112_181 = arith.constant 112 : index
    %475 = vector.load %arg13[%c0_179, %c0_180, %c112_181] : memref<1x32x128xf32, #tpu.memory_space<vmem>>, vector<1x32x16xf32>
    tpu.vector_store %arg13[%c0_179, %c0_180, %c112_181], %474 {strides = array<i32>} : memref<1x32x128xf32, #tpu.memory_space<vmem>>, vector<1x32x16xf32>,
    %c0_182 = arith.constant 0 : index
    %c0_183 = arith.constant 0 : index
    %c0_184 = arith.constant 0 : index
    %476 = vector.load %arg13[%c0_182, %c0_183, %c0_184] : memref<1x32x128xf32, #tpu.memory_space<vmem>>, vector<1x32x128xf32>
    %477 = vector.shape_cast %476 : vector<1x32x128xf32> to vector<32x128xf32>
    %478 = arith.truncf %477 : vector<32x128xf32> to vector<32x128xbf16>
    %c1_185 = arith.constant 1 : index
    %c0_186 = arith.constant 0 : index
    %c0_187 = arith.constant 0 : index
    %479 = vector.load %arg7[%c1_185, %c0_186, %c0_187] : memref<3x128x128xbf16, #tpu.memory_space<vmem>>, vector<1x128x128xbf16>
    %480 = vector.shape_cast %479 : vector<1x128x128xbf16> to vector<128x128xbf16>
    %cst_188 = arith.constant dense<0.000000e+00> : vector<32x128xf32>
    %481 = tpu.matmul %478, %480, %cst_188 {dimension_numbers = #tpu.dot_dimension_numbers<[1], [0], [0], [1], [0, 0, 1, 1], [], []>} : vector<32x128xbf16>, vector<128x128xbf16>, vector<32x128xf32> -> vector<32x128xf32>
    %482 = vector.broadcast %275 : vector<1x128xf32> to vector<32x128xf32>
    %483 = arith.addf %481, %482 : vector<32x128xf32>
    %484 = arith.addf %273, %483 : vector<32x128xf32>
    %cst_189 = arith.constant dense<0.000000e+00> : vector<32xf32>
    %485 = vector.multi_reduction <add>, %484, %cst_189 [1] : vector<32x128xf32> to vector<32xf32>
    %486 = vector.shape_cast %485 : vector<32xf32> to vector<32x1xf32>
    %cst_190 = arith.constant 1.280000e+02 : f32
    %487 = vector.broadcast %cst_190 : f32 to vector<32x1xf32>
    %488 = arith.divf %486, %487 : vector<32x1xf32>
    %489 = arith.mulf %484, %484 : vector<32x128xf32>
    %cst_191 = arith.constant dense<0.000000e+00> : vector<32xf32>
    %490 = vector.multi_reduction <add>, %489, %cst_191 [1] : vector<32x128xf32> to vector<32xf32>
    %491 = vector.shape_cast %490 : vector<32xf32> to vector<32x1xf32>
    %cst_192 = arith.constant 1.280000e+02 : f32
    %492 = vector.broadcast %cst_192 : f32 to vector<32x1xf32>
    %493 = arith.divf %491, %492 : vector<32x1xf32>
    %494 = arith.mulf %488, %488 : vector<32x1xf32>
    %495 = arith.subf %493, %494 : vector<32x1xf32>
    %496 = vector.broadcast %488 : vector<32x1xf32> to vector<32x128xf32>
    %497 = arith.subf %484, %496 : vector<32x128xf32>
    %cst_193 = arith.constant 9.99999974E-6 : f32
    %498 = vector.broadcast %cst_193 : f32 to vector<32x1xf32>
    %499 = arith.addf %495, %498 : vector<32x1xf32>
    %500 = math.rsqrt %499 : vector<32x1xf32>
    %501 = vector.broadcast %500 : vector<32x1xf32> to vector<32x128xf32>
    %502 = arith.mulf %497, %501 : vector<32x128xf32>
    %503 = vector.broadcast %279 : vector<1x128xf32> to vector<32x128xf32>
    %504 = arith.mulf %502, %503 : vector<32x128xf32>
    %505 = vector.broadcast %281 : vector<1x128xf32> to vector<32x128xf32>
    %506 = arith.addf %504, %505 : vector<32x128xf32>
    %507 = arith.truncf %506 : vector<32x128xf32> to vector<32x128xbf16>
    %c1_194 = arith.constant 1 : index
    %c0_195 = arith.constant 0 : index
    %c0_196 = arith.constant 0 : index
    %508 = vector.load %arg8[%c1_194, %c0_195, %c0_196] : memref<3x128x256xbf16, #tpu.memory_space<vmem>>, vector<1x128x256xbf16>
    %509 = vector.shape_cast %508 : vector<1x128x256xbf16> to vector<128x256xbf16>
    %cst_197 = arith.constant dense<0.000000e+00> : vector<32x256xf32>
    %510 = tpu.matmul %507, %509, %cst_197 {dimension_numbers = #tpu.dot_dimension_numbers<[1], [0], [0], [1], [0, 0, 1, 1], [], []>} : vector<32x128xbf16>, vector<128x256xbf16>, vector<32x256xf32> -> vector<32x256xf32>
    %c1_198 = arith.constant 1 : index
    %c0_199 = arith.constant 0 : index
    %c0_200 = arith.constant 0 : index
    %511 = vector.load %arg9[%c1_198, %c0_199, %c0_200] : memref<3x1x256xf32, #tpu.memory_space<vmem>>, vector<1x1x256xf32>
    %512 = vector.shape_cast %511 : vector<1x1x256xf32> to vector<1x256xf32>
    %513 = vector.broadcast %512 : vector<1x256xf32> to vector<32x256xf32>
    %514 = arith.addf %510, %513 : vector<32x256xf32>
    %cst_201 = arith.constant 0.000000e+00 : f32
    %515 = vector.broadcast %cst_201 : f32 to vector<32x256xf32>
    %516 = arith.maximumf %514, %515 : vector<32x256xf32>
    %517 = arith.truncf %516 : vector<32x256xf32> to vector<32x256xbf16>
    %c1_202 = arith.constant 1 : index
    %c0_203 = arith.constant 0 : index
    %c0_204 = arith.constant 0 : index
    %518 = vector.load %arg10[%c1_202, %c0_203, %c0_204] : memref<3x256x128xbf16, #tpu.memory_space<vmem>>, vector<1x256x128xbf16>
    %519 = vector.shape_cast %518 : vector<1x256x128xbf16> to vector<256x128xbf16>
    %cst_205 = arith.constant dense<0.000000e+00> : vector<32x128xf32>
    %520 = tpu.matmul %517, %519, %cst_205 {dimension_numbers = #tpu.dot_dimension_numbers<[1], [0], [0], [1], [0, 0, 1, 1], [], []>} : vector<32x256xbf16>, vector<256x128xbf16>, vector<32x128xf32> -> vector<32x128xf32>
    %521 = vector.broadcast %277 : vector<1x128xf32> to vector<32x128xf32>
    %522 = arith.addf %520, %521 : vector<32x128xf32>
    %523 = arith.addf %506, %522 : vector<32x128xf32>
    %cst_206 = arith.constant dense<0.000000e+00> : vector<32xf32>
    %524 = vector.multi_reduction <add>, %523, %cst_206 [1] : vector<32x128xf32> to vector<32xf32>
    %525 = vector.shape_cast %524 : vector<32xf32> to vector<32x1xf32>
    %cst_207 = arith.constant 1.280000e+02 : f32
    %526 = vector.broadcast %cst_207 : f32 to vector<32x1xf32>
    %527 = arith.divf %525, %526 : vector<32x1xf32>
    %528 = arith.mulf %523, %523 : vector<32x128xf32>
    %cst_208 = arith.constant dense<0.000000e+00> : vector<32xf32>
    %529 = vector.multi_reduction <add>, %528, %cst_208 [1] : vector<32x128xf32> to vector<32xf32>
    %530 = vector.shape_cast %529 : vector<32xf32> to vector<32x1xf32>
    %cst_209 = arith.constant 1.280000e+02 : f32
    %531 = vector.broadcast %cst_209 : f32 to vector<32x1xf32>
    %532 = arith.divf %530, %531 : vector<32x1xf32>
    %533 = arith.mulf %527, %527 : vector<32x1xf32>
    %534 = arith.subf %532, %533 : vector<32x1xf32>
    %535 = vector.broadcast %527 : vector<32x1xf32> to vector<32x128xf32>
    %536 = arith.subf %523, %535 : vector<32x128xf32>
    %cst_210 = arith.constant 9.99999974E-6 : f32
    %537 = vector.broadcast %cst_210 : f32 to vector<32x1xf32>
    %538 = arith.addf %534, %537 : vector<32x1xf32>
    %539 = math.rsqrt %538 : vector<32x1xf32>
    %540 = vector.broadcast %539 : vector<32x1xf32> to vector<32x128xf32>
    %541 = arith.mulf %536, %540 : vector<32x128xf32>
    %542 = vector.broadcast %283 : vector<1x128xf32> to vector<32x128xf32>
    %543 = arith.mulf %541, %542 : vector<32x128xf32>
    %544 = vector.broadcast %285 : vector<1x128xf32> to vector<32x128xf32>
    %545 = arith.addf %543, %544 : vector<32x128xf32>
    %c2_211 = arith.constant 2 : index
    %c0_212 = arith.constant 0 : index
    %c0_213 = arith.constant 0 : index
    %546 = vector.load %arg11[%c2_211, %c0_212, %c0_213] : memref<3x6x128xf32, #tpu.memory_space<vmem>>, vector<1x1x128xf32>
    %547 = vector.shape_cast %546 : vector<1x1x128xf32> to vector<1x128xf32>
    %c2_214 = arith.constant 2 : index
    %c1_215 = arith.constant 1 : index
    %c0_216 = arith.constant 0 : index
    %548 = vector.load %arg11[%c2_214, %c1_215, %c0_216] : memref<3x6x128xf32, #tpu.memory_space<vmem>>, vector<1x1x128xf32>
    %549 = vector.shape_cast %548 : vector<1x1x128xf32> to vector<1x128xf32>
    %c2_217 = arith.constant 2 : index
    %c2_218 = arith.constant 2 : index
    %c0_219 = arith.constant 0 : index
    %550 = vector.load %arg11[%c2_217, %c2_218, %c0_219] : memref<3x6x128xf32, #tpu.memory_space<vmem>>, vector<1x1x128xf32>
    %551 = vector.shape_cast %550 : vector<1x1x128xf32> to vector<1x128xf32>
    %c2_220 = arith.constant 2 : index
    %c3_221 = arith.constant 3 : index
    %c0_222 = arith.constant 0 : index
    %552 = vector.load %arg11[%c2_220, %c3_221, %c0_222] : memref<3x6x128xf32, #tpu.memory_space<vmem>>, vector<1x1x128xf32>
    %553 = vector.shape_cast %552 : vector<1x1x128xf32> to vector<1x128xf32>
    %c2_223 = arith.constant 2 : index
    %c4_224 = arith.constant 4 : index
    %c0_225 = arith.constant 0 : index
    %554 = vector.load %arg11[%c2_223, %c4_224, %c0_225] : memref<3x6x128xf32, #tpu.memory_space<vmem>>, vector<1x1x128xf32>
    %555 = vector.shape_cast %554 : vector<1x1x128xf32> to vector<1x128xf32>
    %c2_226 = arith.constant 2 : index
    %c5_227 = arith.constant 5 : index
    %c0_228 = arith.constant 0 : index
    %556 = vector.load %arg11[%c2_226, %c5_227, %c0_228] : memref<3x6x128xf32, #tpu.memory_space<vmem>>, vector<1x1x128xf32>
    %557 = vector.shape_cast %556 : vector<1x1x128xf32> to vector<1x128xf32>
    %558 = arith.truncf %545 : vector<32x128xf32> to vector<32x128xbf16>
    %c2_229 = arith.constant 2 : index
    %c0_230 = arith.constant 0 : index
    %c0_231 = arith.constant 0 : index
    %559 = vector.load %arg5[%c2_229, %c0_230, %c0_231] : memref<3x128x384xbf16, #tpu.memory_space<vmem>>, vector<1x128x384xbf16>
    %560 = vector.shape_cast %559 : vector<1x128x384xbf16> to vector<128x384xbf16>
    %cst_232 = arith.constant dense<0.000000e+00> : vector<32x384xf32>
    %561 = tpu.matmul %558, %560, %cst_232 {dimension_numbers = #tpu.dot_dimension_numbers<[1], [0], [0], [1], [0, 0, 1, 1], [], []>} : vector<32x128xbf16>, vector<128x384xbf16>, vector<32x384xf32> -> vector<32x384xf32>
    %c2_233 = arith.constant 2 : index
    %c0_234 = arith.constant 0 : index
    %c0_235 = arith.constant 0 : index
    %562 = vector.load %arg6[%c2_233, %c0_234, %c0_235] : memref<3x1x384xf32, #tpu.memory_space<vmem>>, vector<1x1x384xf32>
    %563 = vector.shape_cast %562 : vector<1x1x384xf32> to vector<1x384xf32>
    %564 = vector.broadcast %563 : vector<1x384xf32> to vector<32x384xf32>
    %565 = arith.addf %561, %564 : vector<32x384xf32>
    %566 = vector.extract_strided_slice %565 {offsets = [0, 0], sizes = [32, 128], strides = [1, 1]} : vector<32x384xf32> to vector<32x128xf32>
    %567 = vector.shape_cast %566 : vector<32x128xf32> to vector<1x32x128xf32>
    %568 = vector.extract_strided_slice %565 {offsets = [0, 128], sizes = [32, 128], strides = [1, 1]} : vector<32x384xf32> to vector<32x128xf32>
    %569 = vector.shape_cast %568 : vector<32x128xf32> to vector<1x32x128xf32>
    %570 = vector.extract_strided_slice %565 {offsets = [0, 256], sizes = [32, 128], strides = [1, 1]} : vector<32x384xf32> to vector<32x128xf32>
    %571 = vector.shape_cast %570 : vector<32x128xf32> to vector<1x32x128xf32>
    %572 = vector.extract_strided_slice %567 {offsets = [0, 0, 0], sizes = [1, 32, 16], strides = [1, 1, 1]} : vector<1x32x128xf32> to vector<1x32x16xf32>
    %573 = arith.truncf %572 : vector<1x32x16xf32> to vector<1x32x16xbf16>
    %574 = vector.extract_strided_slice %569 {offsets = [0, 0, 0], sizes = [1, 32, 16], strides = [1, 1, 1]} : vector<1x32x128xf32> to vector<1x32x16xf32>
    %575 = arith.truncf %574 : vector<1x32x16xf32> to vector<1x32x16xbf16>
    %576 = vector.extract_strided_slice %571 {offsets = [0, 0, 0], sizes = [1, 32, 16], strides = [1, 1, 1]} : vector<1x32x128xf32> to vector<1x32x16xf32>
    %577 = arith.truncf %576 : vector<1x32x16xf32> to vector<1x32x16xbf16>
    "tpu.trace_start"() <{level = 10 : i32, message = "bqd,bkd->bqk"}> : () -> ()
    %cst_236 = arith.constant dense<0.000000e+00> : vector<1x32x32xf32>
    %578 = tpu.matmul %573, %575, %cst_236 {dimension_numbers = #tpu.dot_dimension_numbers<[2], [2], [1], [1], [0, 0, 0, 1, 1, 1], [0], [0]>} : vector<1x32x16xbf16>, vector<1x32x16xbf16>, vector<1x32x32xf32> -> vector<1x32x32xf32>
    "tpu.trace_stop"() : () -> ()
    %579 = vector.broadcast %1 : vector<1x1x32xf32> to vector<1x32x32xf32>
    %580 = arith.addf %578, %579 : vector<1x32x32xf32>
    %cst_237 = arith.constant dense<0xFF800000> : vector<1x32xf32>
    %581 = vector.multi_reduction <maximumf>, %580, %cst_237 [2] : vector<1x32x32xf32> to vector<1x32xf32>
    %582 = vector.shape_cast %581 : vector<1x32xf32> to vector<1x32x1xf32>
    %583 = vector.broadcast %582 : vector<1x32x1xf32> to vector<1x32x32xf32>
    %584 = arith.subf %580, %583 : vector<1x32x32xf32>
    %585 = math.exp %584 : vector<1x32x32xf32>
    %cst_238 = arith.constant dense<0.000000e+00> : vector<1x32xf32>
    %586 = vector.multi_reduction <add>, %585, %cst_238 [2] : vector<1x32x32xf32> to vector<1x32xf32>
    %587 = vector.shape_cast %586 : vector<1x32xf32> to vector<1x32x1xf32>
    %588 = tpu.reciprocal %587 {approx = true} : vector<1x32x1xf32> -> vector<1x32x1xf32>
    %589 = vector.broadcast %588 : vector<1x32x1xf32> to vector<1x32x32xf32>
    %590 = arith.mulf %585, %589 : vector<1x32x32xf32>
    %591 = arith.truncf %590 : vector<1x32x32xf32> to vector<1x32x32xbf16>
    "tpu.trace_start"() <{level = 10 : i32, message = "bqk,bkd->bqd"}> : () -> ()
    %cst_239 = arith.constant dense<0.000000e+00> : vector<1x32x16xf32>
    %592 = tpu.matmul %591, %577, %cst_239 {dimension_numbers = #tpu.dot_dimension_numbers<[2], [1], [1], [2], [0, 0, 0, 1, 1, 2], [0], [0]>} : vector<1x32x32xbf16>, vector<1x32x16xbf16>, vector<1x32x16xf32> -> vector<1x32x16xf32>
    "tpu.trace_stop"() : () -> ()
    %c0_240 = arith.constant 0 : index
    %c0_241 = arith.constant 0 : index
    %c0_242 = arith.constant 0 : index
    %593 = vector.load %arg13[%c0_240, %c0_241, %c0_242] : memref<1x32x128xf32, #tpu.memory_space<vmem>>, vector<1x32x16xf32>
    tpu.vector_store %arg13[%c0_240, %c0_241, %c0_242], %592 {strides = array<i32>} : memref<1x32x128xf32, #tpu.memory_space<vmem>>, vector<1x32x16xf32>,
    %594 = vector.extract_strided_slice %567 {offsets = [0, 0, 16], sizes = [1, 32, 16], strides = [1, 1, 1]} : vector<1x32x128xf32> to vector<1x32x16xf32>
    %595 = arith.truncf %594 : vector<1x32x16xf32> to vector<1x32x16xbf16>
    %596 = vector.extract_strided_slice %569 {offsets = [0, 0, 16], sizes = [1, 32, 16], strides = [1, 1, 1]} : vector<1x32x128xf32> to vector<1x32x16xf32>
    %597 = arith.truncf %596 : vector<1x32x16xf32> to vector<1x32x16xbf16>
    %598 = vector.extract_strided_slice %571 {offsets = [0, 0, 16], sizes = [1, 32, 16], strides = [1, 1, 1]} : vector<1x32x128xf32> to vector<1x32x16xf32>
    %599 = arith.truncf %598 : vector<1x32x16xf32> to vector<1x32x16xbf16>
    "tpu.trace_start"() <{level = 10 : i32, message = "bqd,bkd->bqk"}> : () -> ()
    %cst_243 = arith.constant dense<0.000000e+00> : vector<1x32x32xf32>
    %600 = tpu.matmul %595, %597, %cst_243 {dimension_numbers = #tpu.dot_dimension_numbers<[2], [2], [1], [1], [0, 0, 0, 1, 1, 1], [0], [0]>} : vector<1x32x16xbf16>, vector<1x32x16xbf16>, vector<1x32x32xf32> -> vector<1x32x32xf32>
    "tpu.trace_stop"() : () -> ()
    %601 = vector.broadcast %1 : vector<1x1x32xf32> to vector<1x32x32xf32>
    %602 = arith.addf %600, %601 : vector<1x32x32xf32>
    %cst_244 = arith.constant dense<0xFF800000> : vector<1x32xf32>
    %603 = vector.multi_reduction <maximumf>, %602, %cst_244 [2] : vector<1x32x32xf32> to vector<1x32xf32>
    %604 = vector.shape_cast %603 : vector<1x32xf32> to vector<1x32x1xf32>
    %605 = vector.broadcast %604 : vector<1x32x1xf32> to vector<1x32x32xf32>
    %606 = arith.subf %602, %605 : vector<1x32x32xf32>
    %607 = math.exp %606 : vector<1x32x32xf32>
    %cst_245 = arith.constant dense<0.000000e+00> : vector<1x32xf32>
    %608 = vector.multi_reduction <add>, %607, %cst_245 [2] : vector<1x32x32xf32> to vector<1x32xf32>
    %609 = vector.shape_cast %608 : vector<1x32xf32> to vector<1x32x1xf32>
    %610 = tpu.reciprocal %609 {approx = true} : vector<1x32x1xf32> -> vector<1x32x1xf32>
    %611 = vector.broadcast %610 : vector<1x32x1xf32> to vector<1x32x32xf32>
    %612 = arith.mulf %607, %611 : vector<1x32x32xf32>
    %613 = arith.truncf %612 : vector<1x32x32xf32> to vector<1x32x32xbf16>
    "tpu.trace_start"() <{level = 10 : i32, message = "bqk,bkd->bqd"}> : () -> ()
    %cst_246 = arith.constant dense<0.000000e+00> : vector<1x32x16xf32>
    %614 = tpu.matmul %613, %599, %cst_246 {dimension_numbers = #tpu.dot_dimension_numbers<[2], [1], [1], [2], [0, 0, 0, 1, 1, 2], [0], [0]>} : vector<1x32x32xbf16>, vector<1x32x16xbf16>, vector<1x32x16xf32> -> vector<1x32x16xf32>
    "tpu.trace_stop"() : () -> ()
    %c0_247 = arith.constant 0 : index
    %c0_248 = arith.constant 0 : index
    %c16_249 = arith.constant 16 : index
    %615 = vector.load %arg13[%c0_247, %c0_248, %c16_249] : memref<1x32x128xf32, #tpu.memory_space<vmem>>, vector<1x32x16xf32>
    tpu.vector_store %arg13[%c0_247, %c0_248, %c16_249], %614 {strides = array<i32>} : memref<1x32x128xf32, #tpu.memory_space<vmem>>, vector<1x32x16xf32>,
    %616 = vector.extract_strided_slice %567 {offsets = [0, 0, 32], sizes = [1, 32, 16], strides = [1, 1, 1]} : vector<1x32x128xf32> to vector<1x32x16xf32>
    %617 = arith.truncf %616 : vector<1x32x16xf32> to vector<1x32x16xbf16>
    %618 = vector.extract_strided_slice %569 {offsets = [0, 0, 32], sizes = [1, 32, 16], strides = [1, 1, 1]} : vector<1x32x128xf32> to vector<1x32x16xf32>
    %619 = arith.truncf %618 : vector<1x32x16xf32> to vector<1x32x16xbf16>
    %620 = vector.extract_strided_slice %571 {offsets = [0, 0, 32], sizes = [1, 32, 16], strides = [1, 1, 1]} : vector<1x32x128xf32> to vector<1x32x16xf32>
    %621 = arith.truncf %620 : vector<1x32x16xf32> to vector<1x32x16xbf16>
    "tpu.trace_start"() <{level = 10 : i32, message = "bqd,bkd->bqk"}> : () -> ()
    %cst_250 = arith.constant dense<0.000000e+00> : vector<1x32x32xf32>
    %622 = tpu.matmul %617, %619, %cst_250 {dimension_numbers = #tpu.dot_dimension_numbers<[2], [2], [1], [1], [0, 0, 0, 1, 1, 1], [0], [0]>} : vector<1x32x16xbf16>, vector<1x32x16xbf16>, vector<1x32x32xf32> -> vector<1x32x32xf32>
    "tpu.trace_stop"() : () -> ()
    %623 = vector.broadcast %1 : vector<1x1x32xf32> to vector<1x32x32xf32>
    %624 = arith.addf %622, %623 : vector<1x32x32xf32>
    %cst_251 = arith.constant dense<0xFF800000> : vector<1x32xf32>
    %625 = vector.multi_reduction <maximumf>, %624, %cst_251 [2] : vector<1x32x32xf32> to vector<1x32xf32>
    %626 = vector.shape_cast %625 : vector<1x32xf32> to vector<1x32x1xf32>
    %627 = vector.broadcast %626 : vector<1x32x1xf32> to vector<1x32x32xf32>
    %628 = arith.subf %624, %627 : vector<1x32x32xf32>
    %629 = math.exp %628 : vector<1x32x32xf32>
    %cst_252 = arith.constant dense<0.000000e+00> : vector<1x32xf32>
    %630 = vector.multi_reduction <add>, %629, %cst_252 [2] : vector<1x32x32xf32> to vector<1x32xf32>
    %631 = vector.shape_cast %630 : vector<1x32xf32> to vector<1x32x1xf32>
    %632 = tpu.reciprocal %631 {approx = true} : vector<1x32x1xf32> -> vector<1x32x1xf32>
    %633 = vector.broadcast %632 : vector<1x32x1xf32> to vector<1x32x32xf32>
    %634 = arith.mulf %629, %633 : vector<1x32x32xf32>
    %635 = arith.truncf %634 : vector<1x32x32xf32> to vector<1x32x32xbf16>
    "tpu.trace_start"() <{level = 10 : i32, message = "bqk,bkd->bqd"}> : () -> ()
    %cst_253 = arith.constant dense<0.000000e+00> : vector<1x32x16xf32>
    %636 = tpu.matmul %635, %621, %cst_253 {dimension_numbers = #tpu.dot_dimension_numbers<[2], [1], [1], [2], [0, 0, 0, 1, 1, 2], [0], [0]>} : vector<1x32x32xbf16>, vector<1x32x16xbf16>, vector<1x32x16xf32> -> vector<1x32x16xf32>
    "tpu.trace_stop"() : () -> ()
    %c0_254 = arith.constant 0 : index
    %c0_255 = arith.constant 0 : index
    %c32_256 = arith.constant 32 : index
    %637 = vector.load %arg13[%c0_254, %c0_255, %c32_256] : memref<1x32x128xf32, #tpu.memory_space<vmem>>, vector<1x32x16xf32>
    tpu.vector_store %arg13[%c0_254, %c0_255, %c32_256], %636 {strides = array<i32>} : memref<1x32x128xf32, #tpu.memory_space<vmem>>, vector<1x32x16xf32>,
    %638 = vector.extract_strided_slice %567 {offsets = [0, 0, 48], sizes = [1, 32, 16], strides = [1, 1, 1]} : vector<1x32x128xf32> to vector<1x32x16xf32>
    %639 = arith.truncf %638 : vector<1x32x16xf32> to vector<1x32x16xbf16>
    %640 = vector.extract_strided_slice %569 {offsets = [0, 0, 48], sizes = [1, 32, 16], strides = [1, 1, 1]} : vector<1x32x128xf32> to vector<1x32x16xf32>
    %641 = arith.truncf %640 : vector<1x32x16xf32> to vector<1x32x16xbf16>
    %642 = vector.extract_strided_slice %571 {offsets = [0, 0, 48], sizes = [1, 32, 16], strides = [1, 1, 1]} : vector<1x32x128xf32> to vector<1x32x16xf32>
    %643 = arith.truncf %642 : vector<1x32x16xf32> to vector<1x32x16xbf16>
    "tpu.trace_start"() <{level = 10 : i32, message = "bqd,bkd->bqk"}> : () -> ()
    %cst_257 = arith.constant dense<0.000000e+00> : vector<1x32x32xf32>
    %644 = tpu.matmul %639, %641, %cst_257 {dimension_numbers = #tpu.dot_dimension_numbers<[2], [2], [1], [1], [0, 0, 0, 1, 1, 1], [0], [0]>} : vector<1x32x16xbf16>, vector<1x32x16xbf16>, vector<1x32x32xf32> -> vector<1x32x32xf32>
    "tpu.trace_stop"() : () -> ()
    %645 = vector.broadcast %1 : vector<1x1x32xf32> to vector<1x32x32xf32>
    %646 = arith.addf %644, %645 : vector<1x32x32xf32>
    %cst_258 = arith.constant dense<0xFF800000> : vector<1x32xf32>
    %647 = vector.multi_reduction <maximumf>, %646, %cst_258 [2] : vector<1x32x32xf32> to vector<1x32xf32>
    %648 = vector.shape_cast %647 : vector<1x32xf32> to vector<1x32x1xf32>
    %649 = vector.broadcast %648 : vector<1x32x1xf32> to vector<1x32x32xf32>
    %650 = arith.subf %646, %649 : vector<1x32x32xf32>
    %651 = math.exp %650 : vector<1x32x32xf32>
    %cst_259 = arith.constant dense<0.000000e+00> : vector<1x32xf32>
    %652 = vector.multi_reduction <add>, %651, %cst_259 [2] : vector<1x32x32xf32> to vector<1x32xf32>
    %653 = vector.shape_cast %652 : vector<1x32xf32> to vector<1x32x1xf32>
    %654 = tpu.reciprocal %653 {approx = true} : vector<1x32x1xf32> -> vector<1x32x1xf32>
    %655 = vector.broadcast %654 : vector<1x32x1xf32> to vector<1x32x32xf32>
    %656 = arith.mulf %651, %655 : vector<1x32x32xf32>
    %657 = arith.truncf %656 : vector<1x32x32xf32> to vector<1x32x32xbf16>
    "tpu.trace_start"() <{level = 10 : i32, message = "bqk,bkd->bqd"}> : () -> ()
    %cst_260 = arith.constant dense<0.000000e+00> : vector<1x32x16xf32>
    %658 = tpu.matmul %657, %643, %cst_260 {dimension_numbers = #tpu.dot_dimension_numbers<[2], [1], [1], [2], [0, 0, 0, 1, 1, 2], [0], [0]>} : vector<1x32x32xbf16>, vector<1x32x16xbf16>, vector<1x32x16xf32> -> vector<1x32x16xf32>
    "tpu.trace_stop"() : () -> ()
    %c0_261 = arith.constant 0 : index
    %c0_262 = arith.constant 0 : index
    %c48_263 = arith.constant 48 : index
    %659 = vector.load %arg13[%c0_261, %c0_262, %c48_263] : memref<1x32x128xf32, #tpu.memory_space<vmem>>, vector<1x32x16xf32>
    tpu.vector_store %arg13[%c0_261, %c0_262, %c48_263], %658 {strides = array<i32>} : memref<1x32x128xf32, #tpu.memory_space<vmem>>, vector<1x32x16xf32>,
    %660 = vector.extract_strided_slice %567 {offsets = [0, 0, 64], sizes = [1, 32, 16], strides = [1, 1, 1]} : vector<1x32x128xf32> to vector<1x32x16xf32>
    %661 = arith.truncf %660 : vector<1x32x16xf32> to vector<1x32x16xbf16>
    %662 = vector.extract_strided_slice %569 {offsets = [0, 0, 64], sizes = [1, 32, 16], strides = [1, 1, 1]} : vector<1x32x128xf32> to vector<1x32x16xf32>
    %663 = arith.truncf %662 : vector<1x32x16xf32> to vector<1x32x16xbf16>
    %664 = vector.extract_strided_slice %571 {offsets = [0, 0, 64], sizes = [1, 32, 16], strides = [1, 1, 1]} : vector<1x32x128xf32> to vector<1x32x16xf32>
    %665 = arith.truncf %664 : vector<1x32x16xf32> to vector<1x32x16xbf16>
    "tpu.trace_start"() <{level = 10 : i32, message = "bqd,bkd->bqk"}> : () -> ()
    %cst_264 = arith.constant dense<0.000000e+00> : vector<1x32x32xf32>
    %666 = tpu.matmul %661, %663, %cst_264 {dimension_numbers = #tpu.dot_dimension_numbers<[2], [2], [1], [1], [0, 0, 0, 1, 1, 1], [0], [0]>} : vector<1x32x16xbf16>, vector<1x32x16xbf16>, vector<1x32x32xf32> -> vector<1x32x32xf32>
    "tpu.trace_stop"() : () -> ()
    %667 = vector.broadcast %1 : vector<1x1x32xf32> to vector<1x32x32xf32>
    %668 = arith.addf %666, %667 : vector<1x32x32xf32>
    %cst_265 = arith.constant dense<0xFF800000> : vector<1x32xf32>
    %669 = vector.multi_reduction <maximumf>, %668, %cst_265 [2] : vector<1x32x32xf32> to vector<1x32xf32>
    %670 = vector.shape_cast %669 : vector<1x32xf32> to vector<1x32x1xf32>
    %671 = vector.broadcast %670 : vector<1x32x1xf32> to vector<1x32x32xf32>
    %672 = arith.subf %668, %671 : vector<1x32x32xf32>
    %673 = math.exp %672 : vector<1x32x32xf32>
    %cst_266 = arith.constant dense<0.000000e+00> : vector<1x32xf32>
    %674 = vector.multi_reduction <add>, %673, %cst_266 [2] : vector<1x32x32xf32> to vector<1x32xf32>
    %675 = vector.shape_cast %674 : vector<1x32xf32> to vector<1x32x1xf32>
    %676 = tpu.reciprocal %675 {approx = true} : vector<1x32x1xf32> -> vector<1x32x1xf32>
    %677 = vector.broadcast %676 : vector<1x32x1xf32> to vector<1x32x32xf32>
    %678 = arith.mulf %673, %677 : vector<1x32x32xf32>
    %679 = arith.truncf %678 : vector<1x32x32xf32> to vector<1x32x32xbf16>
    "tpu.trace_start"() <{level = 10 : i32, message = "bqk,bkd->bqd"}> : () -> ()
    %cst_267 = arith.constant dense<0.000000e+00> : vector<1x32x16xf32>
    %680 = tpu.matmul %679, %665, %cst_267 {dimension_numbers = #tpu.dot_dimension_numbers<[2], [1], [1], [2], [0, 0, 0, 1, 1, 2], [0], [0]>} : vector<1x32x32xbf16>, vector<1x32x16xbf16>, vector<1x32x16xf32> -> vector<1x32x16xf32>
    "tpu.trace_stop"() : () -> ()
    %c0_268 = arith.constant 0 : index
    %c0_269 = arith.constant 0 : index
    %c64_270 = arith.constant 64 : index
    %681 = vector.load %arg13[%c0_268, %c0_269, %c64_270] : memref<1x32x128xf32, #tpu.memory_space<vmem>>, vector<1x32x16xf32>
    tpu.vector_store %arg13[%c0_268, %c0_269, %c64_270], %680 {strides = array<i32>} : memref<1x32x128xf32, #tpu.memory_space<vmem>>, vector<1x32x16xf32>,
    %682 = vector.extract_strided_slice %567 {offsets = [0, 0, 80], sizes = [1, 32, 16], strides = [1, 1, 1]} : vector<1x32x128xf32> to vector<1x32x16xf32>
    %683 = arith.truncf %682 : vector<1x32x16xf32> to vector<1x32x16xbf16>
    %684 = vector.extract_strided_slice %569 {offsets = [0, 0, 80], sizes = [1, 32, 16], strides = [1, 1, 1]} : vector<1x32x128xf32> to vector<1x32x16xf32>
    %685 = arith.truncf %684 : vector<1x32x16xf32> to vector<1x32x16xbf16>
    %686 = vector.extract_strided_slice %571 {offsets = [0, 0, 80], sizes = [1, 32, 16], strides = [1, 1, 1]} : vector<1x32x128xf32> to vector<1x32x16xf32>
    %687 = arith.truncf %686 : vector<1x32x16xf32> to vector<1x32x16xbf16>
    "tpu.trace_start"() <{level = 10 : i32, message = "bqd,bkd->bqk"}> : () -> ()
    %cst_271 = arith.constant dense<0.000000e+00> : vector<1x32x32xf32>
    %688 = tpu.matmul %683, %685, %cst_271 {dimension_numbers = #tpu.dot_dimension_numbers<[2], [2], [1], [1], [0, 0, 0, 1, 1, 1], [0], [0]>} : vector<1x32x16xbf16>, vector<1x32x16xbf16>, vector<1x32x32xf32> -> vector<1x32x32xf32>
    "tpu.trace_stop"() : () -> ()
    %689 = vector.broadcast %1 : vector<1x1x32xf32> to vector<1x32x32xf32>
    %690 = arith.addf %688, %689 : vector<1x32x32xf32>
    %cst_272 = arith.constant dense<0xFF800000> : vector<1x32xf32>
    %691 = vector.multi_reduction <maximumf>, %690, %cst_272 [2] : vector<1x32x32xf32> to vector<1x32xf32>
    %692 = vector.shape_cast %691 : vector<1x32xf32> to vector<1x32x1xf32>
    %693 = vector.broadcast %692 : vector<1x32x1xf32> to vector<1x32x32xf32>
    %694 = arith.subf %690, %693 : vector<1x32x32xf32>
    %695 = math.exp %694 : vector<1x32x32xf32>
    %cst_273 = arith.constant dense<0.000000e+00> : vector<1x32xf32>
    %696 = vector.multi_reduction <add>, %695, %cst_273 [2] : vector<1x32x32xf32> to vector<1x32xf32>
    %697 = vector.shape_cast %696 : vector<1x32xf32> to vector<1x32x1xf32>
    %698 = tpu.reciprocal %697 {approx = true} : vector<1x32x1xf32> -> vector<1x32x1xf32>
    %699 = vector.broadcast %698 : vector<1x32x1xf32> to vector<1x32x32xf32>
    %700 = arith.mulf %695, %699 : vector<1x32x32xf32>
    %701 = arith.truncf %700 : vector<1x32x32xf32> to vector<1x32x32xbf16>
    "tpu.trace_start"() <{level = 10 : i32, message = "bqk,bkd->bqd"}> : () -> ()
    %cst_274 = arith.constant dense<0.000000e+00> : vector<1x32x16xf32>
    %702 = tpu.matmul %701, %687, %cst_274 {dimension_numbers = #tpu.dot_dimension_numbers<[2], [1], [1], [2], [0, 0, 0, 1, 1, 2], [0], [0]>} : vector<1x32x32xbf16>, vector<1x32x16xbf16>, vector<1x32x16xf32> -> vector<1x32x16xf32>
    "tpu.trace_stop"() : () -> ()
    %c0_275 = arith.constant 0 : index
    %c0_276 = arith.constant 0 : index
    %c80_277 = arith.constant 80 : index
    %703 = vector.load %arg13[%c0_275, %c0_276, %c80_277] : memref<1x32x128xf32, #tpu.memory_space<vmem>>, vector<1x32x16xf32>
    tpu.vector_store %arg13[%c0_275, %c0_276, %c80_277], %702 {strides = array<i32>} : memref<1x32x128xf32, #tpu.memory_space<vmem>>, vector<1x32x16xf32>,
    %704 = vector.extract_strided_slice %567 {offsets = [0, 0, 96], sizes = [1, 32, 16], strides = [1, 1, 1]} : vector<1x32x128xf32> to vector<1x32x16xf32>
    %705 = arith.truncf %704 : vector<1x32x16xf32> to vector<1x32x16xbf16>
    %706 = vector.extract_strided_slice %569 {offsets = [0, 0, 96], sizes = [1, 32, 16], strides = [1, 1, 1]} : vector<1x32x128xf32> to vector<1x32x16xf32>
    %707 = arith.truncf %706 : vector<1x32x16xf32> to vector<1x32x16xbf16>
    %708 = vector.extract_strided_slice %571 {offsets = [0, 0, 96], sizes = [1, 32, 16], strides = [1, 1, 1]} : vector<1x32x128xf32> to vector<1x32x16xf32>
    %709 = arith.truncf %708 : vector<1x32x16xf32> to vector<1x32x16xbf16>
    "tpu.trace_start"() <{level = 10 : i32, message = "bqd,bkd->bqk"}> : () -> ()
    %cst_278 = arith.constant dense<0.000000e+00> : vector<1x32x32xf32>
    %710 = tpu.matmul %705, %707, %cst_278 {dimension_numbers = #tpu.dot_dimension_numbers<[2], [2], [1], [1], [0, 0, 0, 1, 1, 1], [0], [0]>} : vector<1x32x16xbf16>, vector<1x32x16xbf16>, vector<1x32x32xf32> -> vector<1x32x32xf32>
    "tpu.trace_stop"() : () -> ()
    %711 = vector.broadcast %1 : vector<1x1x32xf32> to vector<1x32x32xf32>
    %712 = arith.addf %710, %711 : vector<1x32x32xf32>
    %cst_279 = arith.constant dense<0xFF800000> : vector<1x32xf32>
    %713 = vector.multi_reduction <maximumf>, %712, %cst_279 [2] : vector<1x32x32xf32> to vector<1x32xf32>
    %714 = vector.shape_cast %713 : vector<1x32xf32> to vector<1x32x1xf32>
    %715 = vector.broadcast %714 : vector<1x32x1xf32> to vector<1x32x32xf32>
    %716 = arith.subf %712, %715 : vector<1x32x32xf32>
    %717 = math.exp %716 : vector<1x32x32xf32>
    %cst_280 = arith.constant dense<0.000000e+00> : vector<1x32xf32>
    %718 = vector.multi_reduction <add>, %717, %cst_280 [2] : vector<1x32x32xf32> to vector<1x32xf32>
    %719 = vector.shape_cast %718 : vector<1x32xf32> to vector<1x32x1xf32>
    %720 = tpu.reciprocal %719 {approx = true} : vector<1x32x1xf32> -> vector<1x32x1xf32>
    %721 = vector.broadcast %720 : vector<1x32x1xf32> to vector<1x32x32xf32>
    %722 = arith.mulf %717, %721 : vector<1x32x32xf32>
    %723 = arith.truncf %722 : vector<1x32x32xf32> to vector<1x32x32xbf16>
    "tpu.trace_start"() <{level = 10 : i32, message = "bqk,bkd->bqd"}> : () -> ()
    %cst_281 = arith.constant dense<0.000000e+00> : vector<1x32x16xf32>
    %724 = tpu.matmul %723, %709, %cst_281 {dimension_numbers = #tpu.dot_dimension_numbers<[2], [1], [1], [2], [0, 0, 0, 1, 1, 2], [0], [0]>} : vector<1x32x32xbf16>, vector<1x32x16xbf16>, vector<1x32x16xf32> -> vector<1x32x16xf32>
    "tpu.trace_stop"() : () -> ()
    %c0_282 = arith.constant 0 : index
    %c0_283 = arith.constant 0 : index
    %c96_284 = arith.constant 96 : index
    %725 = vector.load %arg13[%c0_282, %c0_283, %c96_284] : memref<1x32x128xf32, #tpu.memory_space<vmem>>, vector<1x32x16xf32>
    tpu.vector_store %arg13[%c0_282, %c0_283, %c96_284], %724 {strides = array<i32>} : memref<1x32x128xf32, #tpu.memory_space<vmem>>, vector<1x32x16xf32>,
    %726 = vector.extract_strided_slice %567 {offsets = [0, 0, 112], sizes = [1, 32, 16], strides = [1, 1, 1]} : vector<1x32x128xf32> to vector<1x32x16xf32>
    %727 = arith.truncf %726 : vector<1x32x16xf32> to vector<1x32x16xbf16>
    %728 = vector.extract_strided_slice %569 {offsets = [0, 0, 112], sizes = [1, 32, 16], strides = [1, 1, 1]} : vector<1x32x128xf32> to vector<1x32x16xf32>
    %729 = arith.truncf %728 : vector<1x32x16xf32> to vector<1x32x16xbf16>
    %730 = vector.extract_strided_slice %571 {offsets = [0, 0, 112], sizes = [1, 32, 16], strides = [1, 1, 1]} : vector<1x32x128xf32> to vector<1x32x16xf32>
    %731 = arith.truncf %730 : vector<1x32x16xf32> to vector<1x32x16xbf16>
    "tpu.trace_start"() <{level = 10 : i32, message = "bqd,bkd->bqk"}> : () -> ()
    %cst_285 = arith.constant dense<0.000000e+00> : vector<1x32x32xf32>
    %732 = tpu.matmul %727, %729, %cst_285 {dimension_numbers = #tpu.dot_dimension_numbers<[2], [2], [1], [1], [0, 0, 0, 1, 1, 1], [0], [0]>} : vector<1x32x16xbf16>, vector<1x32x16xbf16>, vector<1x32x32xf32> -> vector<1x32x32xf32>
    "tpu.trace_stop"() : () -> ()
    %733 = vector.broadcast %1 : vector<1x1x32xf32> to vector<1x32x32xf32>
    %734 = arith.addf %732, %733 : vector<1x32x32xf32>
    %cst_286 = arith.constant dense<0xFF800000> : vector<1x32xf32>
    %735 = vector.multi_reduction <maximumf>, %734, %cst_286 [2] : vector<1x32x32xf32> to vector<1x32xf32>
    %736 = vector.shape_cast %735 : vector<1x32xf32> to vector<1x32x1xf32>
    %737 = vector.broadcast %736 : vector<1x32x1xf32> to vector<1x32x32xf32>
    %738 = arith.subf %734, %737 : vector<1x32x32xf32>
    %739 = math.exp %738 : vector<1x32x32xf32>
    %cst_287 = arith.constant dense<0.000000e+00> : vector<1x32xf32>
    %740 = vector.multi_reduction <add>, %739, %cst_287 [2] : vector<1x32x32xf32> to vector<1x32xf32>
    %741 = vector.shape_cast %740 : vector<1x32xf32> to vector<1x32x1xf32>
    %742 = tpu.reciprocal %741 {approx = true} : vector<1x32x1xf32> -> vector<1x32x1xf32>
    %743 = vector.broadcast %742 : vector<1x32x1xf32> to vector<1x32x32xf32>
    %744 = arith.mulf %739, %743 : vector<1x32x32xf32>
    %745 = arith.truncf %744 : vector<1x32x32xf32> to vector<1x32x32xbf16>
    "tpu.trace_start"() <{level = 10 : i32, message = "bqk,bkd->bqd"}> : () -> ()
    %cst_288 = arith.constant dense<0.000000e+00> : vector<1x32x16xf32>
    %746 = tpu.matmul %745, %731, %cst_288 {dimension_numbers = #tpu.dot_dimension_numbers<[2], [1], [1], [2], [0, 0, 0, 1, 1, 2], [0], [0]>} : vector<1x32x32xbf16>, vector<1x32x16xbf16>, vector<1x32x16xf32> -> vector<1x32x16xf32>
    "tpu.trace_stop"() : () -> ()
    %c0_289 = arith.constant 0 : index
    %c0_290 = arith.constant 0 : index
    %c112_291 = arith.constant 112 : index
    %747 = vector.load %arg13[%c0_289, %c0_290, %c112_291] : memref<1x32x128xf32, #tpu.memory_space<vmem>>, vector<1x32x16xf32>
    tpu.vector_store %arg13[%c0_289, %c0_290, %c112_291], %746 {strides = array<i32>} : memref<1x32x128xf32, #tpu.memory_space<vmem>>, vector<1x32x16xf32>,
    %c0_292 = arith.constant 0 : index
    %c0_293 = arith.constant 0 : index
    %c0_294 = arith.constant 0 : index
    %748 = vector.load %arg13[%c0_292, %c0_293, %c0_294] : memref<1x32x128xf32, #tpu.memory_space<vmem>>, vector<1x32x128xf32>
    %749 = vector.shape_cast %748 : vector<1x32x128xf32> to vector<32x128xf32>
    %750 = arith.truncf %749 : vector<32x128xf32> to vector<32x128xbf16>
    %c2_295 = arith.constant 2 : index
    %c0_296 = arith.constant 0 : index
    %c0_297 = arith.constant 0 : index
    %751 = vector.load %arg7[%c2_295, %c0_296, %c0_297] : memref<3x128x128xbf16, #tpu.memory_space<vmem>>, vector<1x128x128xbf16>
    %752 = vector.shape_cast %751 : vector<1x128x128xbf16> to vector<128x128xbf16>
    %cst_298 = arith.constant dense<0.000000e+00> : vector<32x128xf32>
    %753 = tpu.matmul %750, %752, %cst_298 {dimension_numbers = #tpu.dot_dimension_numbers<[1], [0], [0], [1], [0, 0, 1, 1], [], []>} : vector<32x128xbf16>, vector<128x128xbf16>, vector<32x128xf32> -> vector<32x128xf32>
    %754 = vector.broadcast %547 : vector<1x128xf32> to vector<32x128xf32>
    %755 = arith.addf %753, %754 : vector<32x128xf32>
    %756 = arith.addf %545, %755 : vector<32x128xf32>
    %cst_299 = arith.constant dense<0.000000e+00> : vector<32xf32>
    %757 = vector.multi_reduction <add>, %756, %cst_299 [1] : vector<32x128xf32> to vector<32xf32>
    %758 = vector.shape_cast %757 : vector<32xf32> to vector<32x1xf32>
    %cst_300 = arith.constant 1.280000e+02 : f32
    %759 = vector.broadcast %cst_300 : f32 to vector<32x1xf32>
    %760 = arith.divf %758, %759 : vector<32x1xf32>
    %761 = arith.mulf %756, %756 : vector<32x128xf32>
    %cst_301 = arith.constant dense<0.000000e+00> : vector<32xf32>
    %762 = vector.multi_reduction <add>, %761, %cst_301 [1] : vector<32x128xf32> to vector<32xf32>
    %763 = vector.shape_cast %762 : vector<32xf32> to vector<32x1xf32>
    %cst_302 = arith.constant 1.280000e+02 : f32
    %764 = vector.broadcast %cst_302 : f32 to vector<32x1xf32>
    %765 = arith.divf %763, %764 : vector<32x1xf32>
    %766 = arith.mulf %760, %760 : vector<32x1xf32>
    %767 = arith.subf %765, %766 : vector<32x1xf32>
    %768 = vector.broadcast %760 : vector<32x1xf32> to vector<32x128xf32>
    %769 = arith.subf %756, %768 : vector<32x128xf32>
    %cst_303 = arith.constant 9.99999974E-6 : f32
    %770 = vector.broadcast %cst_303 : f32 to vector<32x1xf32>
    %771 = arith.addf %767, %770 : vector<32x1xf32>
    %772 = math.rsqrt %771 : vector<32x1xf32>
    %773 = vector.broadcast %772 : vector<32x1xf32> to vector<32x128xf32>
    %774 = arith.mulf %769, %773 : vector<32x128xf32>
    %775 = vector.broadcast %551 : vector<1x128xf32> to vector<32x128xf32>
    %776 = arith.mulf %774, %775 : vector<32x128xf32>
    %777 = vector.broadcast %553 : vector<1x128xf32> to vector<32x128xf32>
    %778 = arith.addf %776, %777 : vector<32x128xf32>
    %779 = arith.truncf %778 : vector<32x128xf32> to vector<32x128xbf16>
    %c2_304 = arith.constant 2 : index
    %c0_305 = arith.constant 0 : index
    %c0_306 = arith.constant 0 : index
    %780 = vector.load %arg8[%c2_304, %c0_305, %c0_306] : memref<3x128x256xbf16, #tpu.memory_space<vmem>>, vector<1x128x256xbf16>
    %781 = vector.shape_cast %780 : vector<1x128x256xbf16> to vector<128x256xbf16>
    %cst_307 = arith.constant dense<0.000000e+00> : vector<32x256xf32>
    %782 = tpu.matmul %779, %781, %cst_307 {dimension_numbers = #tpu.dot_dimension_numbers<[1], [0], [0], [1], [0, 0, 1, 1], [], []>} : vector<32x128xbf16>, vector<128x256xbf16>, vector<32x256xf32> -> vector<32x256xf32>
    %c2_308 = arith.constant 2 : index
    %c0_309 = arith.constant 0 : index
    %c0_310 = arith.constant 0 : index
    %783 = vector.load %arg9[%c2_308, %c0_309, %c0_310] : memref<3x1x256xf32, #tpu.memory_space<vmem>>, vector<1x1x256xf32>
    %784 = vector.shape_cast %783 : vector<1x1x256xf32> to vector<1x256xf32>
    %785 = vector.broadcast %784 : vector<1x256xf32> to vector<32x256xf32>
    %786 = arith.addf %782, %785 : vector<32x256xf32>
    %cst_311 = arith.constant 0.000000e+00 : f32
    %787 = vector.broadcast %cst_311 : f32 to vector<32x256xf32>
    %788 = arith.maximumf %786, %787 : vector<32x256xf32>
    %789 = arith.truncf %788 : vector<32x256xf32> to vector<32x256xbf16>
    %c2_312 = arith.constant 2 : index
    %c0_313 = arith.constant 0 : index
    %c0_314 = arith.constant 0 : index
    %790 = vector.load %arg10[%c2_312, %c0_313, %c0_314] : memref<3x256x128xbf16, #tpu.memory_space<vmem>>, vector<1x256x128xbf16>
    %791 = vector.shape_cast %790 : vector<1x256x128xbf16> to vector<256x128xbf16>
    %cst_315 = arith.constant dense<0.000000e+00> : vector<32x128xf32>
    %792 = tpu.matmul %789, %791, %cst_315 {dimension_numbers = #tpu.dot_dimension_numbers<[1], [0], [0], [1], [0, 0, 1, 1], [], []>} : vector<32x256xbf16>, vector<256x128xbf16>, vector<32x128xf32> -> vector<32x128xf32>
    %793 = vector.broadcast %549 : vector<1x128xf32> to vector<32x128xf32>
    %794 = arith.addf %792, %793 : vector<32x128xf32>
    %795 = arith.addf %778, %794 : vector<32x128xf32>
    %cst_316 = arith.constant dense<0.000000e+00> : vector<32xf32>
    %796 = vector.multi_reduction <add>, %795, %cst_316 [1] : vector<32x128xf32> to vector<32xf32>
    %797 = vector.shape_cast %796 : vector<32xf32> to vector<32x1xf32>
    %cst_317 = arith.constant 1.280000e+02 : f32
    %798 = vector.broadcast %cst_317 : f32 to vector<32x1xf32>
    %799 = arith.divf %797, %798 : vector<32x1xf32>
    %800 = arith.mulf %795, %795 : vector<32x128xf32>
    %cst_318 = arith.constant dense<0.000000e+00> : vector<32xf32>
    %801 = vector.multi_reduction <add>, %800, %cst_318 [1] : vector<32x128xf32> to vector<32xf32>
    %802 = vector.shape_cast %801 : vector<32xf32> to vector<32x1xf32>
    %cst_319 = arith.constant 1.280000e+02 : f32
    %803 = vector.broadcast %cst_319 : f32 to vector<32x1xf32>
    %804 = arith.divf %802, %803 : vector<32x1xf32>
    %805 = arith.mulf %799, %799 : vector<32x1xf32>
    %806 = arith.subf %804, %805 : vector<32x1xf32>
    %807 = vector.broadcast %799 : vector<32x1xf32> to vector<32x128xf32>
    %808 = arith.subf %795, %807 : vector<32x128xf32>
    %cst_320 = arith.constant 9.99999974E-6 : f32
    %809 = vector.broadcast %cst_320 : f32 to vector<32x1xf32>
    %810 = arith.addf %806, %809 : vector<32x1xf32>
    %811 = math.rsqrt %810 : vector<32x1xf32>
    %812 = vector.broadcast %811 : vector<32x1xf32> to vector<32x128xf32>
    %813 = arith.mulf %808, %812 : vector<32x128xf32>
    %814 = vector.broadcast %555 : vector<1x128xf32> to vector<32x128xf32>
    %815 = arith.mulf %813, %814 : vector<32x128xf32>
    %816 = vector.broadcast %557 : vector<1x128xf32> to vector<32x128xf32>
    %817 = arith.addf %815, %816 : vector<32x128xf32>
    %c0_321 = arith.constant 0 : index
    %c0_322 = arith.constant 0 : index
    %818 = vector.load %arg3[%c0_321, %c0_322] : memref<32x1xf32, #tpu.memory_space<vmem>>, vector<32x1xf32>
    %819 = vector.broadcast %818 : vector<32x1xf32> to vector<32x128xf32>
    %820 = arith.mulf %817, %819 : vector<32x128xf32>
    %821 = vector.shape_cast %820 : vector<32x128xf32> to vector<1x32x128xf32>
    %cst_323 = arith.constant dense<0.000000e+00> : vector<1x128xf32>
    %822 = vector.multi_reduction <add>, %821, %cst_323 [1] : vector<1x32x128xf32> to vector<1x128xf32>
    %823 = vector.shape_cast %822 : vector<1x128xf32> to vector<1x1x128xf32>
    %c0_324 = arith.constant 0 : index
    %c0_325 = arith.constant 0 : index
    %c0_326 = arith.constant 0 : index
    %824 = vector.load %arg4[%c0_324, %c0_325, %c0_326] : memref<1x1x1xf32, #tpu.memory_space<vmem>>, vector<1x1x1xf32>
    %825 = vector.broadcast %824 : vector<1x1x1xf32> to vector<1x1x128xf32>
    %826 = arith.mulf %823, %825 : vector<1x1x128xf32>
    %c0_327 = arith.constant 0 : index
    %c0_328 = arith.constant 0 : index
    %c0_329 = arith.constant 0 : index
    %827 = vector.load %arg12[%c0_327, %c0_328, %c0_329] : memref<1x1x128xf32, #tpu.memory_space<vmem>>, vector<1x1x128xf32>
    tpu.vector_store %arg12[%c0_327, %c0_328, %c0_329], %826 {strides = array<i32>} : memref<1x1x128xf32, #tpu.memory_space<vmem>>, vector<1x1x128xf32>,
    return
  }
  func.func @transform_0(%arg0: i32) -> (i32, i32) {
    %c0_i32 = arith.constant 0 : i32
    %c0_i32_0 = arith.constant 0 : i32
    return %arg0, %c0_i32 : i32, i32
  }
  func.func @transform_1(%arg0: i32) -> (i32, i32, i32) {
    %c0_i32 = arith.constant 0 : i32
    %c0_i32_0 = arith.constant 0 : i32
    %c0_i32_1 = arith.constant 0 : i32
    return %arg0, %c0_i32, %c0_i32_0 : i32, i32, i32
  }
  func.func @transform_2(%arg0: i32) -> (i32, i32) {
    %c0_i32 = arith.constant 0 : i32
    %c0_i32_0 = arith.constant 0 : i32
    return %arg0, %c0_i32 : i32, i32
  }
  func.func @transform_3(%arg0: i32) -> (i32, i32, i32) {
    %c0_i32 = arith.constant 0 : i32
    %c0_i32_0 = arith.constant 0 : i32
    %c0_i32_1 = arith.constant 0 : i32
    return %arg0, %c0_i32, %c0_i32_0 : i32, i32, i32
  }
  func.func @transform_4(%arg0: i32) -> (i32, i32, i32) {
    %c0_i32 = arith.constant 0 : i32
    %c0_i32_0 = arith.constant 0 : i32
    %c0_i32_1 = arith.constant 0 : i32
    %c0_i32_2 = arith.constant 0 : i32
    return %c0_i32, %c0_i32_0, %c0_i32_1 : i32, i32, i32
  }
  func.func @transform_5(%arg0: i32) -> (i32, i32, i32) {
    %c0_i32 = arith.constant 0 : i32
    %c0_i32_0 = arith.constant 0 : i32
    %c0_i32_1 = arith.constant 0 : i32
    %c0_i32_2 = arith.constant 0 : i32
    return %c0_i32, %c0_i32_0, %c0_i32_1 : i32, i32, i32
  }
  func.func @transform_6(%arg0: i32) -> (i32, i32, i32) {
    %c0_i32 = arith.constant 0 : i32
    %c0_i32_0 = arith.constant 0 : i32
    %c0_i32_1 = arith.constant 0 : i32
    %c0_i32_2 = arith.constant 0 : i32
    return %c0_i32, %c0_i32_0, %c0_i32_1 : i32, i32, i32
  }
  func.func @transform_7(%arg0: i32) -> (i32, i32, i32) {
    %c0_i32 = arith.constant 0 : i32
    %c0_i32_0 = arith.constant 0 : i32
    %c0_i32_1 = arith.constant 0 : i32
    %c0_i32_2 = arith.constant 0 : i32
    return %c0_i32, %c0_i32_0, %c0_i32_1 : i32, i32, i32
  }
  func.func @transform_8(%arg0: i32) -> (i32, i32, i32) {
    %c0_i32 = arith.constant 0 : i32
    %c0_i32_0 = arith.constant 0 : i32
    %c0_i32_1 = arith.constant 0 : i32
    %c0_i32_2 = arith.constant 0 : i32
    return %c0_i32, %c0_i32_0, %c0_i32_1 : i32, i32, i32
  }
  func.func @transform_9(%arg0: i32) -> (i32, i32, i32) {
    %c0_i32 = arith.constant 0 : i32
    %c0_i32_0 = arith.constant 0 : i32
    %c0_i32_1 = arith.constant 0 : i32
    %c0_i32_2 = arith.constant 0 : i32
    return %c0_i32, %c0_i32_0, %c0_i32_1 : i32, i32, i32
  }
  func.func @transform_10(%arg0: i32) -> (i32, i32, i32) {
    %c0_i32 = arith.constant 0 : i32
    %c0_i32_0 = arith.constant 0 : i32
    %c0_i32_1 = arith.constant 0 : i32
    %c0_i32_2 = arith.constant 0 : i32
    return %c0_i32, %c0_i32_0, %c0_i32_1 : i32, i32, i32
  }
  func.func @transform_11(%arg0: i32) -> (i32, i32, i32) {
    %c0_i32 = arith.constant 0 : i32
    %c0_i32_0 = arith.constant 0 : i32
    %c0_i32_1 = arith.constant 0 : i32
    return %arg0, %c0_i32, %c0_i32_0 : i32, i32, i32
  }
}

</mosaic_0001>

<llo_original>
// kernel: tpu_custom_call.1
$region0: #{tpu_custom_call.1}
  #allocation0 [shape = 'u32[]', space=smem, size = 0x4, offset = 0x4, fixed_abs, tag = 'smem constant byte address 0x4 - core index']
  #allocation1 [shape = 'u32[144,128]{1,0:T(1,128)}', space=vmem, size = 0x12000, scoped, tag = 'internal scratch']
  #allocation2 [shape = 'f32[1,32,128]{2,1,0:T(8,128)}', space=vmem, size = 0x4000, scoped, tag = 'scratch operand']
  %s0 = inlined_call_operand.vmem [shape: f32[64,128], index: 0, kind: input, shape index: {}]
  %s1 = inlined_call_operand.hbm [shape: f32[2,1,32], index: 1, kind: input, shape index: {}]
  %s2 = inlined_call_operand.vmem [shape: f32[64,1], index: 2, kind: input, shape index: {}]
  %s3 = inlined_call_operand.vmem [shape: f32[2,1,1], index: 3, kind: input, shape index: {}]
  %s4 = inlined_call_operand.hbm [shape: bf16[3,128,384], index: 4, kind: input, shape index: {}]
  %s5 = inlined_call_operand.hbm [shape: f32[3,1,384], index: 5, kind: input, shape index: {}]
  %s6 = inlined_call_operand.hbm [shape: bf16[3,128,128], index: 6, kind: input, shape index: {}]
  %s7 = inlined_call_operand.hbm [shape: bf16[3,128,256], index: 7, kind: input, shape index: {}]
  %s8 = inlined_call_operand.vmem [shape: f32[3,1,256], index: 8, kind: input, shape index: {}]
  %s9 = inlined_call_operand.hbm [shape: bf16[3,256,128], index: 9, kind: input, shape index: {}]
  %s10 = inlined_call_operand.vmem [shape: f32[3,6,128], index: 10, kind: input, shape index: {}]
  %s11 = inlined_call_operand.hbm [shape: f32[2,1,128], index: 11, kind: output, shape index: {}]
  %s12 = sld [smem:[#allocation0]]
  $region101: #{tpu_custom_call.1} parent=0
    _
  %s14 = ssub.s32 1, %s12
  %s15 = scalar_select 0, %s14, %s12
  $region1: #{tpu_custom_call.1} parent=0
    #allocation3 [shape = 'u8[1024]{0}', space=vmem, size = 0x400, scoped, tag = 'input window, operand 1']
    #allocation4 [shape = 's32[2]{0}', space=sflag, size = 0x8, scoped, tag = 'scoped memory for tpu_custom_call.1']
    #allocation5 [shape = 's32[2]{0}', space=sflag, size = 0x8, scoped, tag = 'scoped memory for tpu_custom_call.1']
    #allocation6 [shape = 'u8[294912]{0}', space=vmem, size = 0x48000, scoped, tag = 'input window, operand 4, single buffered']
    #allocation7 [shape = 's32[1]{0}', space=sflag, size = 0x4, scoped, tag = 'scoped memory for tpu_custom_call.1']
    #allocation8 [shape = 'u8[4608]{0}', space=vmem, size = 0x1400, scoped, tag = 'input window, operand 5, single buffered']
    #allocation9 [shape = 'u8[98304]{0}', space=vmem, size = 0x18000, scoped, tag = 'input window, operand 6, single buffered']
    #allocation10 [shape = 's32[1]{0}', space=sflag, size = 0x4, scoped, tag = 'scoped memory for tpu_custom_call.1']
    #allocation11 [shape = 'u8[196608]{0}', space=vmem, size = 0x30000, scoped, tag = 'input window, operand 7, single buffered']
    #allocation12 [shape = 'u8[196608]{0}', space=vmem, size = 0x30000, scoped, tag = 'input window, operand 9, single buffered']
    #allocation13 [shape = 's32[1]{0}', space=sflag, size = 0x4, scoped, tag = 'scoped memory for tpu_custom_call.1']
    #allocation14 [shape = 'u8[1024]{0}', space=vmem, size = 0x400, scoped, tag = 'output window, operand 0']
    %16 = vsyncpa [#allocation4], 0
    %s17 = scalar_lea.sflag [#allocation4], 1
    %18 = vsyncpa %s17, 0
    %19 = vsyncpa [#allocation7], 0
    %20 = vsyncpa [#allocation10], 0
    %21 = vsyncpa [#allocation13], 0
    %22 = vsyncpa [#allocation5], 0
    %s23 = scalar_lea.sflag [#allocation5], 1
    %24 = vsyncpa %s23, 0
    loop: start=0, step=1, limit=4
    $region2: #{tpu_custom_call.1} parent=1 // loop_pre_header
      _
    $region3: #{tpu_custom_call.1} parent=1 // loop_header
      %s26 = sphi 0, %s30
      %p27 = scmp.ge.s32.totalorder %s26, 4
      %s36 = sphi 0, %s38
      %s39 = sphi 0, %s36
      %s40 = sphi 0, %s39
      %s56 = sphi 0, %s40
      %s62 = sphi 0, %s64
      %s65 = sphi 0, %s62
      %s66 = sphi 0, %s65
      %s82 = sphi 0, %s66
      %s88 = sphi 0, %s90
      %s91 = sphi 0, %s88
      %s92 = sphi 0, %s91
      %s108 = sphi 0, %s92
      %s114 = sphi 0, %s116
      %s117 = sphi 0, %s114
      %s118 = sphi 0, %s117
      %s134 = sphi 0, %s118
      %s138 = sphi 0, %s138
      %s140 = sphi 0, %s138
      %s141 = sphi 0, %s140
      %s155 = sphi 0, %s141
      %s159 = sphi 0, %s159
      %s161 = sphi 0, %s159
      %s162 = sphi 0, %s161
      %s176 = sphi 0, %s162
      %s180 = sphi 0, %s180
      %s182 = sphi 0, %s180
      %s183 = sphi 0, %s182
      %s197 = sphi 0, %s183
      %s201 = sphi 0, %s201
      %s203 = sphi 0, %s201
      %s204 = sphi 0, %s203
      %s218 = sphi 0, %s204
      %s222 = sphi 0, %s222
      %s224 = sphi 0, %s222
      %s225 = sphi 0, %s224
      %s239 = sphi 0, %s225
      %s243 = sphi 0, %s243
      %s245 = sphi 0, %s243
      %s246 = sphi 0, %s245
      %s260 = sphi 0, %s246
      %s264 = sphi 0, %s264
      %s266 = sphi 0, %s264
      %s267 = sphi 0, %s266
      %s281 = sphi 0, %s267
      %s287 = sphi 0, %s289
      %s290 = sphi 0, %s287
      %s291 = sphi 0, %s290
      %s307 = sphi 0, %s291
    $region4: #{tpu_custom_call.1} parent=1 // loop_header_branch
      %29 = sbr.rel (%p27) target = $region8
    $region5: #{tpu_custom_call.1} parent=1 // loop_body
      %s31 = ssub.s32 %s26, 1
      %s32 = ssub.s32 %s26, 2
      %s33 = sadd.s32 %s26, 1
      %s34 = ssub.s32 %s26, %s33
      %p35 = scmp.eq.s32.totalorder %s34, 0
      %s37 = sadd.s32 %s36, 1
      %s38 = scalar_select %p35, %s36, %s37
      %p41 = pneg %p35
      %p42 = scmp.eq.s32.totalorder %s26, 1
      %p43 = por %p41, %p42
      %p44 = scmp.ne.s32.totalorder %s36, %s39
      %p45 = scmp.eq.s32.totalorder %s26, 0
      %p46 = por %p44, %p45
      %p47 = scmp.ne.s32.totalorder %s36, %s39
      %p48 = scmp.eq.s32.totalorder %s31, 1
      %p49 = por %p47, %p48
      %p50 = scmp.ne.s32.totalorder %s39, %s40
      %p51 = scmp.eq.s32.totalorder %s31, 0
      %p52 = por %p50, %p51
      %p53 = scmp.ne.s32.totalorder %s39, %s40
      %p54 = scmp.eq.s32.totalorder %s32, 1
      %p55 = por %p53, %p54
      %p57 = scmp.ne.s32.totalorder %s40, %s56
      %p58 = scmp.eq.s32.totalorder %s32, 0
      %p59 = por %p57, %p58
      %s60 = ssub.s32 %s26, %s33
      %p61 = scmp.eq.s32.totalorder %s60, 0
      %s63 = sadd.s32 %s62, 1
      %s64 = scalar_select %p61, %s62, %s63
      %p67 = pneg %p61
      %p68 = scmp.eq.s32.totalorder %s26, 1
      %p69 = por %p67, %p68
      %p70 = scmp.ne.s32.totalorder %s62, %s65
      %p71 = scmp.eq.s32.totalorder %s26, 0
      %p72 = por %p70, %p71
      %p73 = scmp.ne.s32.totalorder %s62, %s65
      %p74 = scmp.eq.s32.totalorder %s31, 1
      %p75 = por %p73, %p74
      %p76 = scmp.ne.s32.totalorder %s65, %s66
      %p77 = scmp.eq.s32.totalorder %s31, 0
      %p78 = por %p76, %p77
      %p79 = scmp.ne.s32.totalorder %s65, %s66
      %p80 = scmp.eq.s32.totalorder %s32, 1
      %p81 = por %p79, %p80
      %p83 = scmp.ne.s32.totalorder %s66, %s82
      %p84 = scmp.eq.s32.totalorder %s32, 0
      %p85 = por %p83, %p84
      %s86 = ssub.s32 %s26, %s33
      %p87 = scmp.eq.s32.totalorder %s86, 0
      %s89 = sadd.s32 %s88, 1
      %s90 = scalar_select %p87, %s88, %s89
      %p93 = pneg %p87
      %p94 = scmp.eq.s32.totalorder %s26, 1
      %p95 = por %p93, %p94
      %p96 = scmp.ne.s32.totalorder %s88, %s91
      %p97 = scmp.eq.s32.totalorder %s26, 0
      %p98 = por %p96, %p97
      %p99 = scmp.ne.s32.totalorder %s88, %s91
      %p100 = scmp.eq.s32.totalorder %s31, 1
      %p101 = por %p99, %p100
      %p102 = scmp.ne.s32.totalorder %s91, %s92
      %p103 = scmp.eq.s32.totalorder %s31, 0
      %p104 = por %p102, %p103
      %p105 = scmp.ne.s32.totalorder %s91, %s92
      %p106 = scmp.eq.s32.totalorder %s32, 1
      %p107 = por %p105, %p106
      %p109 = scmp.ne.s32.totalorder %s92, %s108
      %p110 = scmp.eq.s32.totalorder %s32, 0
      %p111 = por %p109, %p110
      %s112 = ssub.s32 %s26, %s33
      %p113 = scmp.eq.s32.totalorder %s112, 0
      %s115 = sadd.s32 %s114, 1
      %s116 = scalar_select %p113, %s114, %s115
      %p119 = pneg %p113
      %p120 = scmp.eq.s32.totalorder %s26, 1
      %p121 = por %p119, %p120
      %p122 = scmp.ne.s32.totalorder %s114, %s117
      %p123 = scmp.eq.s32.totalorder %s26, 0
      %p124 = por %p122, %p123
      %p125 = scmp.ne.s32.totalorder %s114, %s117
      %p126 = scmp.eq.s32.totalorder %s31, 1
      %p127 = por %p125, %p126
      %p128 = scmp.ne.s32.totalorder %s117, %s118
      %p129 = scmp.eq.s32.totalorder %s31, 0
      %p130 = por %p128, %p129
      %p131 = scmp.ne.s32.totalorder %s117, %s118
      %p132 = scmp.eq.s32.totalorder %s32, 1
      %p133 = por %p131, %p132
      %p135 = scmp.ne.s32.totalorder %s118, %s134
      %p136 = scmp.eq.s32.totalorder %s32, 0
      %p137 = por %p135, %p136
      %s139 = sadd.s32 %s138, 1
      %p142 = scmp.eq.s32.totalorder %s26, 1
      %p143 = scmp.ne.s32.totalorder %s138, %s140
      %p144 = scmp.eq.s32.totalorder %s26, 0
      %p145 = por %p143, %p144
      %p146 = scmp.ne.s32.totalorder %s138, %s140
      %p147 = scmp.eq.s32.totalorder %s31, 1
      %p148 = por %p146, %p147
      %p149 = scmp.ne.s32.totalorder %s140, %s141
      %p150 = scmp.eq.s32.totalorder %s31, 0
      %p151 = por %p149, %p150
      %p152 = scmp.ne.s32.totalorder %s140, %s141
      %p153 = scmp.eq.s32.totalorder %s32, 1
      %p154 = por %p152, %p153
      %p156 = scmp.ne.s32.totalorder %s141, %s155
      %p157 = scmp.eq.s32.totalorder %s32, 0
      %p158 = por %p156, %p157
      %s160 = sadd.s32 %s159, 1
      %p163 = scmp.eq.s32.totalorder %s26, 1
      %p164 = scmp.ne.s32.totalorder %s159, %s161
      %p165 = scmp.eq.s32.totalorder %s26, 0
      %p166 = por %p164, %p165
      %p167 = scmp.ne.s32.totalorder %s159, %s161
      %p168 = scmp.eq.s32.totalorder %s31, 1
      %p169 = por %p167, %p168
      %p170 = scmp.ne.s32.totalorder %s161, %s162
      %p171 = scmp.eq.s32.totalorder %s31, 0
      %p172 = por %p170, %p171
      %p173 = scmp.ne.s32.totalorder %s161, %s162
      %p174 = scmp.eq.s32.totalorder %s32, 1
      %p175 = por %p173, %p174
      %p177 = scmp.ne.s32.totalorder %s162, %s176
      %p178 = scmp.eq.s32.totalorder %s32, 0
      %p179 = por %p177, %p178
      %s181 = sadd.s32 %s180, 1
      %p184 = scmp.eq.s32.totalorder %s26, 1
      %p185 = scmp.ne.s32.totalorder %s180, %s182
      %p186 = scmp.eq.s32.totalorder %s26, 0
      %p187 = por %p185, %p186
      %p188 = scmp.ne.s32.totalorder %s180, %s182
      %p189 = scmp.eq.s32.totalorder %s31, 1
      %p190 = por %p188, %p189
      %p191 = scmp.ne.s32.totalorder %s182, %s183
      %p192 = scmp.eq.s32.totalorder %s31, 0
      %p193 = por %p191, %p192
      %p194 = scmp.ne.s32.totalorder %s182, %s183
      %p195 = scmp.eq.s32.totalorder %s32, 1
      %p196 = por %p194, %p195
      %p198 = scmp.ne.s32.totalorder %s183, %s197
      %p199 = scmp.eq.s32.totalorder %s32, 0
      %p200 = por %p198, %p199
      %s202 = sadd.s32 %s201, 1
      %p205 = scmp.eq.s32.totalorder %s26, 1
      %p206 = scmp.ne.s32.totalorder %s201, %s203
      %p207 = scmp.eq.s32.totalorder %s26, 0
      %p208 = por %p206, %p207
      %p209 = scmp.ne.s32.totalorder %s201, %s203
      %p210 = scmp.eq.s32.totalorder %s31, 1
      %p211 = por %p209, %p210
      %p212 = scmp.ne.s32.totalorder %s203, %s204
      %p213 = scmp.eq.s32.totalorder %s31, 0
      %p214 = por %p212, %p213
      %p215 = scmp.ne.s32.totalorder %s203, %s204
      %p216 = scmp.eq.s32.totalorder %s32, 1
      %p217 = por %p215, %p216
      %p219 = scmp.ne.s32.totalorder %s204, %s218
      %p220 = scmp.eq.s32.totalorder %s32, 0
      %p221 = por %p219, %p220
      %s223 = sadd.s32 %s222, 1
      %p226 = scmp.eq.s32.totalorder %s26, 1
      %p227 = scmp.ne.s32.totalorder %s222, %s224
      %p228 = scmp.eq.s32.totalorder %s26, 0
      %p229 = por %p227, %p228
      %p230 = scmp.ne.s32.totalorder %s222, %s224
      %p231 = scmp.eq.s32.totalorder %s31, 1
      %p232 = por %p230, %p231
      %p233 = scmp.ne.s32.totalorder %s224, %s225
      %p234 = scmp.eq.s32.totalorder %s31, 0
      %p235 = por %p233, %p234
      %p236 = scmp.ne.s32.totalorder %s224, %s225
      %p237 = scmp.eq.s32.totalorder %s32, 1
      %p238 = por %p236, %p237
      %p240 = scmp.ne.s32.totalorder %s225, %s239
      %p241 = scmp.eq.s32.totalorder %s32, 0
      %p242 = por %p240, %p241
      %s244 = sadd.s32 %s243, 1
      %p247 = scmp.eq.s32.totalorder %s26, 1
      %p248 = scmp.ne.s32.totalorder %s243, %s245
      %p249 = scmp.eq.s32.totalorder %s26, 0
      %p250 = por %p248, %p249
      %p251 = scmp.ne.s32.totalorder %s243, %s245
      %p252 = scmp.eq.s32.totalorder %s31, 1
      %p253 = por %p251, %p252
      %p254 = scmp.ne.s32.totalorder %s245, %s246
      %p255 = scmp.eq.s32.totalorder %s31, 0
      %p256 = por %p254, %p255
      %p257 = scmp.ne.s32.totalorder %s245, %s246
      %p258 = scmp.eq.s32.totalorder %s32, 1
      %p259 = por %p257, %p258
      %p261 = scmp.ne.s32.totalorder %s246, %s260
      %p262 = scmp.eq.s32.totalorder %s32, 0
      %p263 = por %p261, %p262
      %s265 = sadd.s32 %s264, 1
      %p268 = scmp.eq.s32.totalorder %s26, 1
      %p269 = scmp.ne.s32.totalorder %s264, %s266
      %p270 = scmp.eq.s32.totalorder %s26, 0
      %p271 = por %p269, %p270
      %p272 = scmp.ne.s32.totalorder %s264, %s266
      %p273 = scmp.eq.s32.totalorder %s31, 1
      %p274 = por %p272, %p273
      %p275 = scmp.ne.s32.totalorder %s266, %s267
      %p276 = scmp.eq.s32.totalorder %s31, 0
      %p277 = por %p275, %p276
      %p278 = scmp.ne.s32.totalorder %s266, %s267
      %p279 = scmp.eq.s32.totalorder %s32, 1
      %p280 = por %p278, %p279
      %p282 = scmp.ne.s32.totalorder %s267, %s281
      %p283 = scmp.eq.s32.totalorder %s32, 0
      %p284 = por %p282, %p283
      %s285 = ssub.s32 %s26, %s33
      %p286 = scmp.eq.s32.totalorder %s285, 0
      %s288 = sadd.s32 %s287, 1
      %s289 = scalar_select %p286, %s287, %s288
      %p292 = pneg %p286
      %p293 = scmp.eq.s32.totalorder %s26, 1
      %p294 = por %p292, %p293
      %p295 = scmp.ne.s32.totalorder %s287, %s290
      %p296 = scmp.eq.s32.totalorder %s26, 0
      %p297 = por %p295, %p296
      %p298 = scmp.ne.s32.totalorder %s287, %s290
      %p299 = scmp.eq.s32.totalorder %s31, 1
      %p300 = por %p298, %p299
      %p301 = scmp.ne.s32.totalorder %s290, %s291
      %p302 = scmp.eq.s32.totalorder %s31, 0
      %p303 = por %p301, %p302
      %p304 = scmp.ne.s32.totalorder %s290, %s291
      %p305 = scmp.eq.s32.totalorder %s32, 1
      %p306 = por %p304, %p305
      %p308 = scmp.ne.s32.totalorder %s291, %s307
      %p309 = scmp.eq.s32.totalorder %s32, 0
      %p310 = por %p308, %p309
      %p311 = scmp.le.s32.totalorder 1, %s26
      %p312 = scmp.lt.s32.totalorder %s26, 3
      %p313 = pnand %p311, %p312
      %p314 = pneg %p313
      // Predicated region
      $region9: #{tpu_custom_call.1} parent=5 // pred_check
        _
      $region10: #{tpu_custom_call.1} parent=5 // pred_check_branch
        %316 = sbr.rel (%p313) target = $region12
      $region11: #{tpu_custom_call.1} parent=5 // pred_region
        %s317 = ssub.s32 %s26, 1
        // Predicated region
        $region13: #{tpu_custom_call.1} parent=11 // pred_check
          %p318 = pneg %p151
        $region14: #{tpu_custom_call.1} parent=11 // pred_check_branch
          %320 = sbr.rel (%p318) target = $region16
        $region15: #{tpu_custom_call.1} parent=11 // pred_region
          %s322 = ssub.s32 9216, 9216
          %323 = vsyncadd [#allocation7], %s322
          %s324 = sshll.u32 [#allocation6], 4
          %s325 = int_to_ptr.vmem [resolvable:$true] %s324
          %330 = dma.hbm_to_vmem [thread:$0]  %s4, 9216, %s325, [#allocation7], 192, 192, 12
        $region16: #{tpu_custom_call.1} parent=11 // pred_fallthru
          _
        // Predicated region
        $region17: #{tpu_custom_call.1} parent=11 // pred_check
          %p331 = pneg %p172
        $region18: #{tpu_custom_call.1} parent=11 // pred_check_branch
          %333 = sbr.rel (%p331) target = $region20
        $region19: #{tpu_custom_call.1} parent=11 // pred_region
          %s335 = ssub.s32 144, 144
          %336 = vsyncadd [#allocation7], %s335
          %s337 = sshll.u32 [#allocation8], 4
          %s338 = int_to_ptr.vmem [resolvable:$true] %s337
          %343 = dma.hbm_to_vmem [thread:$0]  %s5, 144, %s338, [#allocation7], 48, 48, 3
        $region20: #{tpu_custom_call.1} parent=11 // pred_fallthru
          _
        // Predicated region
        $region21: #{tpu_custom_call.1} parent=11 // pred_check
          %p344 = pneg %p193
        $region22: #{tpu_custom_call.1} parent=11 // pred_check_branch
          %346 = sbr.rel (%p344) target = $region24
        $region23: #{tpu_custom_call.1} parent=11 // pred_region
          %s348 = ssub.s32 3072, 3072
          %349 = vsyncadd [#allocation10], %s348
          %s350 = sshll.u32 [#allocation9], 4
          %s351 = int_to_ptr.vmem [resolvable:$true] %s350
          %356 = dma.hbm_to_vmem [thread:$0]  %s6, 3072, %s351, [#allocation10], 64, 64, 4
        $region24: #{tpu_custom_call.1} parent=11 // pred_fallthru
          _
        // Predicated region
        $region25: #{tpu_custom_call.1} parent=11 // pred_check
          %p357 = pneg %p214
        $region26: #{tpu_custom_call.1} parent=11 // pred_check_branch
          %359 = sbr.rel (%p357) target = $region28
        $region27: #{tpu_custom_call.1} parent=11 // pred_region
          %s361 = ssub.s32 6144, 6144
          %362 = vsyncadd [#allocation10], %s361
          %s363 = sshll.u32 [#allocation11], 4
          %s364 = int_to_ptr.vmem [resolvable:$true] %s363
          %369 = dma.hbm_to_vmem [thread:$0]  %s7, 6144, %s364, [#allocation10], 128, 128, 8
        $region28: #{tpu_custom_call.1} parent=11 // pred_fallthru
          _
        // Predicated region
        $region29: #{tpu_custom_call.1} parent=11 // pred_check
          %p370 = pneg %p235
        $region30: #{tpu_custom_call.1} parent=11 // pred_check_branch
          %372 = sbr.rel (%p370) target = $region32
        $region31: #{tpu_custom_call.1} parent=11 // pred_region
          _
        $region32: #{tpu_custom_call.1} parent=11 // pred_fallthru
          _
        // Predicated region
        $region33: #{tpu_custom_call.1} parent=11 // pred_check
          %p373 = pneg %p256
        $region34: #{tpu_custom_call.1} parent=11 // pred_check_branch
          %375 = sbr.rel (%p373) target = $region36
        $region35: #{tpu_custom_call.1} parent=11 // pred_region
          %s377 = ssub.s32 6144, 6144
          %378 = vsyncadd [#allocation13], %s377
          %s379 = sshll.u32 [#allocation12], 4
          %s380 = int_to_ptr.vmem [resolvable:$true] %s379
          %385 = dma.hbm_to_vmem [thread:$0]  %s9, 6144, %s380, [#allocation13], 64, 64, 4
        $region36: #{tpu_custom_call.1} parent=11 // pred_fallthru
          _
        // Predicated region
        $region37: #{tpu_custom_call.1} parent=11 // pred_check
          %p386 = pneg %p277
        $region38: #{tpu_custom_call.1} parent=11 // pred_check_branch
          %388 = sbr.rel (%p386) target = $region40
        $region39: #{tpu_custom_call.1} parent=11 // pred_region
          _
        $region40: #{tpu_custom_call.1} parent=11 // pred_fallthru
          _
      $region12: #{tpu_custom_call.1} parent=5 // pred_fallthru
        _
      %p389 = scmp.lt.s32.totalorder %s26, 2
      // Predicated region
      $region41: #{tpu_custom_call.1} parent=5 // pred_check
        %p390 = pneg %p389
      $region42: #{tpu_custom_call.1} parent=5 // pred_check_branch
        %392 = sbr.rel (%p390) target = $region44
      $region43: #{tpu_custom_call.1} parent=5 // pred_region
        // Predicated region
        $region45: #{tpu_custom_call.1} parent=43 // pred_check
          %p393 = pneg %p46
        $region46: #{tpu_custom_call.1} parent=43 // pred_check_branch
          %395 = sbr.rel (%p393) target = $region48
        $region47: #{tpu_custom_call.1} parent=43 // pred_region
          %s396 = smul.u32 4, %s26
          %p397 = scmp.lt.s32.totalorder %s396, 7
          %s398 = scalar_select %p397, %s396, 7
          %s399 = smul.addr %s398, 8
          %s400 = scalar_lea.vmem %s0, %s399
          %s401 = smul.u32 4, %s26
        $region48: #{tpu_custom_call.1} parent=43 // pred_fallthru
          _
        // Predicated region
        $region49: #{tpu_custom_call.1} parent=43 // pred_check
          %p402 = pneg %p72
        $region50: #{tpu_custom_call.1} parent=43 // pred_check_branch
          %404 = sbr.rel (%p402) target = $region52
        $region51: #{tpu_custom_call.1} parent=43 // pred_region
          %s405 = sand.u32 %s62, 1
          %s406 = scalar_lea.sflag [#allocation4], %s405
          %s407 = sand.u32 %s62, 1
          %s408 = scalar_lea.vmem [#allocation3], %s407
          %s410 = ssub.s32 16, 16
          %411 = vsyncadd %s406, %s410
          %s412 = smul.addr %s26, 16
          %s413 = scalar_lea.hbm %s1, %s412
          %s415 = sshll.u32 %s408, 4
          %s416 = int_to_ptr.vmem [resolvable:$true] %s415
          %418 = dma.hbm_to_vmem [thread:$0]  %s413, 16, %s416, %s406
        $region52: #{tpu_custom_call.1} parent=43 // pred_fallthru
          _
        // Predicated region
        $region53: #{tpu_custom_call.1} parent=43 // pred_check
          %p419 = pneg %p98
        $region54: #{tpu_custom_call.1} parent=43 // pred_check_branch
          %421 = sbr.rel (%p419) target = $region56
        $region55: #{tpu_custom_call.1} parent=43 // pred_region
          %s422 = smul.u32 4, %s26
          %p423 = scmp.lt.s32.totalorder %s422, 7
          %s424 = scalar_select %p423, %s422, 7
          %s425 = smul.addr %s424, 8
          %s426 = scalar_lea.vmem %s2, %s425
          %s427 = smul.u32 4, %s26
        $region56: #{tpu_custom_call.1} parent=43 // pred_fallthru
          _
        // Predicated region
        $region57: #{tpu_custom_call.1} parent=43 // pred_check
          %p428 = pneg %p124
        $region58: #{tpu_custom_call.1} parent=43 // pred_check_branch
          %430 = sbr.rel (%p428) target = $region60
        $region59: #{tpu_custom_call.1} parent=43 // pred_region
          %p431 = scmp.lt.s32.totalorder %s26, 1
          %s432 = scalar_select %p431, %s26, 1
          %s433 = scalar_lea.vmem %s3, %s432
        $region60: #{tpu_custom_call.1} parent=43 // pred_fallthru
          _
      $region44: #{tpu_custom_call.1} parent=5 // pred_fallthru
        _
      %p434 = scmp.le.s32.totalorder 1, %s26
      %p435 = scmp.lt.s32.totalorder %s26, 3
      %p436 = pnand %p434, %p435
      %p437 = pneg %p436
      // Predicated region
      $region61: #{tpu_custom_call.1} parent=5 // pred_check
        _
      $region62: #{tpu_custom_call.1} parent=5 // pred_check_branch
        %439 = sbr.rel (%p436) target = $region64
      $region63: #{tpu_custom_call.1} parent=5 // pred_region
        %s440 = ssub.s32 %s26, 1
        %s441 = sand.u32 %s65, 1
        %s442 = scalar_lea.sflag [#allocation4], %s441
        %s443 = sand.u32 %s65, 1
        %s444 = scalar_lea.vmem [#allocation3], %s443
        // Predicated region
        $region65: #{tpu_custom_call.1} parent=63 // pred_check
          %p445 = pneg %p78
        $region66: #{tpu_custom_call.1} parent=63 // pred_check_branch
          %447 = sbr.rel (%p445) target = $region68
        $region67: #{tpu_custom_call.1} parent=63 // pred_region
          %448 = dma.done %s442, 16
        $region68: #{tpu_custom_call.1} parent=63 // pred_fallthru
          _
        // Predicated region
        $region69: #{tpu_custom_call.1} parent=63 // pred_check
          %p449 = pneg %p151
        $region70: #{tpu_custom_call.1} parent=63 // pred_check_branch
          %451 = sbr.rel (%p449) target = $region72
        $region71: #{tpu_custom_call.1} parent=63 // pred_region
          %452 = dma.done [#allocation7], 9216
        $region72: #{tpu_custom_call.1} parent=63 // pred_fallthru
          _
        // Predicated region
        $region73: #{tpu_custom_call.1} parent=63 // pred_check
          %p453 = pneg %p172
        $region74: #{tpu_custom_call.1} parent=63 // pred_check_branch
          %455 = sbr.rel (%p453) target = $region76
        $region75: #{tpu_custom_call.1} parent=63 // pred_region
          %456 = dma.done [#allocation7], 144
        $region76: #{tpu_custom_call.1} parent=63 // pred_fallthru
          _
        // Predicated region
        $region77: #{tpu_custom_call.1} parent=63 // pred_check
          %p457 = pneg %p193
        $region78: #{tpu_custom_call.1} parent=63 // pred_check_branch
          %459 = sbr.rel (%p457) target = $region80
        $region79: #{tpu_custom_call.1} parent=63 // pred_region
          %460 = dma.done [#allocation10], 3072
        $region80: #{tpu_custom_call.1} parent=63 // pred_fallthru
          _
        // Predicated region
        $region81: #{tpu_custom_call.1} parent=63 // pred_check
          %p461 = pneg %p214
        $region82: #{tpu_custom_call.1} parent=63 // pred_check_branch
          %463 = sbr.rel (%p461) target = $region84
        $region83: #{tpu_custom_call.1} parent=63 // pred_region
          %464 = dma.done [#allocation10], 6144
        $region84: #{tpu_custom_call.1} parent=63 // pred_fallthru
          _
        // Predicated region
        $region85: #{tpu_custom_call.1} parent=63 // pred_check
          %p465 = pneg %p256
        $region86: #{tpu_custom_call.1} parent=63 // pred_check_branch
          %467 = sbr.rel (%p465) target = $region88
        $region87: #{tpu_custom_call.1} parent=63 // pred_region
          %468 = dma.done [#allocation13], 6144
        $region88: #{tpu_custom_call.1} parent=63 // pred_fallthru
          _
        %s469 = smul.u32 4, %s31
        %p470 = scmp.lt.s32.totalorder %s469, 7
        %s471 = scalar_select %p470, %s469, 7
        %s472 = smul.addr %s471, 8
        %s473 = scalar_lea.vmem %s0, %s472
        %p474 = pneg %p52
        %p475 = pneg %p49
        %s476 = sand.u32 %s65, 1
        %s477 = scalar_lea.sflag [#allocation4], %s476
        %s478 = sand.u32 %s65, 1
        %s479 = scalar_lea.vmem [#allocation3], %s478
        %p480 = pneg %p78
        %p481 = pneg %p75
        %s482 = smul.u32 4, %s31
        %p483 = scmp.lt.s32.totalorder %s482, 7
        %s484 = scalar_select %p483, %s482, 7
        %s485 = smul.addr %s484, 8
        %s486 = scalar_lea.vmem %s2, %s485
        %p487 = pneg %p104
        %p488 = pneg %p101
        %p489 = scmp.lt.s32.totalorder %s31, 1
        %s490 = scalar_select %p489, %s31, 1
        %s491 = scalar_lea.vmem %s3, %s490
        %p492 = pneg %p130
        %p493 = pneg %p127
        %p494 = pneg %p151
        %p495 = pneg %p148
        %p496 = pneg %p172
        %p497 = pneg %p169
        %p498 = pneg %p193
        %p499 = pneg %p190
        %p500 = pneg %p214
        %p501 = pneg %p211
        %p502 = pneg %p235
        %p503 = pneg %p232
        %p504 = pneg %p256
        %p505 = pneg %p253
        %p506 = pneg %p277
        %p507 = pneg %p274
        %p508 = pneg %p303
        %p509 = pneg %p300
        %s510 = sand.u32 %s290, 1
        %s511 = scalar_lea.sflag [#allocation5], %s510
        %s512 = sand.u32 %s290, 1
        %s513 = scalar_lea.vmem [#allocation14], %s512
        %s514 = smul.u32 4, %s31
        %p515 = scmp.lt.s32.totalorder %s514, 7
        %s516 = scalar_select %p515, %s514, 7
        %s517 = smul.addr %s516, 8
        %s518 = scalar_lea.vmem %s0, %s517
        %s519 = smul.u32 4, %s31
        %s520 = smul.u32 4, %s31
        %p521 = scmp.lt.s32.totalorder %s520, 7
        %s522 = scalar_select %p521, %s520, 7
        %s523 = smul.addr %s522, 8
        %s524 = scalar_lea.vmem %s2, %s523
        %s525 = smul.u32 4, %s31
        %p526 = scmp.lt.s32.totalorder %s31, 1
        %s527 = scalar_select %p526, %s31, 1
        %s528 = scalar_lea.vmem %s3, %s527
        %v530 = vld [vmem:[%s518] sm:$0xff]
        %v531 = vld [vmem:[%s518 + $0x8] sm:$0xff]
        %v532 = vld [vmem:[%s518 + $0x10] sm:$0xff]
        %v533 = vld [vmem:[%s518 + $0x18] sm:$0xff]
        %v534 = vld [vmem:[%s444] sm:$0x1]
        %v535 = vld [vmem:[%s10] sm:$0x1]
        %v536 = vld [vmem:[%s10 + $0x1] sm:$0x1]
        %v537 = vld [vmem:[%s10 + $0x2] sm:$0x1]
        %v538 = vld [vmem:[%s10 + $0x3] sm:$0x1]
        %v539 = vld [vmem:[%s10 + $0x4] sm:$0x1]
        %v540 = vld [vmem:[%s10 + $0x5] sm:$0x1]
        %v541 = vpack.c.bf16 %v531, %v530
        %v542 = vpack.c.bf16 %v533, %v532
        %v543 = vld [vmem:[#allocation6] sm:$0xff]
        %v544 = vld [vmem:[#allocation6 + $0x8] sm:$0xf]
        %v545 = vld [vmem:[#allocation6 + $0xc] sm:$0xff]
        %v546 = vld [vmem:[#allocation6 + $0x14] sm:$0xf]
        %v547 = vld [vmem:[#allocation6 + $0x18] sm:$0xff]
        %v548 = vld [vmem:[#allocation6 + $0x20] sm:$0xf]
        %v549 = vld [vmem:[#allocation6 + $0x24] sm:$0xff]
        %v550 = vld [vmem:[#allocation6 + $0x2c] sm:$0xf]
        %v551 = vld [vmem:[#allocation6 + $0x30] sm:$0xff]
        %v552 = vld [vmem:[#allocation6 + $0x38] sm:$0xf]
        %v553 = vld [vmem:[#allocation6 + $0x3c] sm:$0xff]
        %v554 = vld [vmem:[#allocation6 + $0x44] sm:$0xf]
        %v555 = vld [vmem:[#allocation6 + $0x48] sm:$0xff]
        %v556 = vld [vmem:[#allocation6 + $0x50] sm:$0xf]
        %v557 = vld [vmem:[#allocation6 + $0x54] sm:$0xff]
        %v558 = vld [vmem:[#allocation6 + $0x5c] sm:$0xf]
        %v559 = vld [vmem:[#allocation6 + $0x60] sm:$0xff]
        %v560 = vld [vmem:[#allocation6 + $0x68] sm:$0xf]
        %v561 = vld [vmem:[#allocation6 + $0x6c] sm:$0xff]
        %v562 = vld [vmem:[#allocation6 + $0x74] sm:$0xf]
        %v563 = vld [vmem:[#allocation6 + $0x78] sm:$0xff]
        %v564 = vld [vmem:[#allocation6 + $0x80] sm:$0xf]
        %v565 = vld [vmem:[#allocation6 + $0x84] sm:$0xff]
        %v566 = vld [vmem:[#allocation6 + $0x8c] sm:$0xf]
        %v567 = vld [vmem:[#allocation6 + $0x90] sm:$0xff]
        %v568 = vld [vmem:[#allocation6 + $0x98] sm:$0xf]
        %v569 = vld [vmem:[#allocation6 + $0x9c] sm:$0xff]
        %v570 = vld [vmem:[#allocation6 + $0xa4] sm:$0xf]
        %v571 = vld [vmem:[#allocation6 + $0xa8] sm:$0xff]
        %v572 = vld [vmem:[#allocation6 + $0xb0] sm:$0xf]
        %v573 = vld [vmem:[#allocation6 + $0xb4] sm:$0xff]
        %v574 = vld [vmem:[#allocation6 + $0xbc] sm:$0xf]
        %v575 = vld [vmem:[#allocation8] sm:$0x7]
        %v577 = vlaneseq
        %v578 = vshrl.u32 %v577, 7
        %v579 = vsub.s32 0, %v578
        %v580 = vrot.slane %v575, %v579
        %v581 = vlaneseq
        %v582 = vshrl.u32 %v581, 7
        %v583 = vsub.s32 1, %v582
        %v584 = vrot.slane %v575, %v583
        %v585 = vlaneseq
        %v586 = vshrl.u32 %v585, 7
        %v587 = vsub.s32 2, %v586
        %v588 = vrot.slane %v575, %v587
        %v624 = vunpack.c.l.b16 %v543
        %v625 = vunpack.c.h.b16 %v543
        %v626 = vunpack.c.l.b16 %v544
        %v627 = vunpack.c.l.b16 %v545
        %v628 = vunpack.c.h.b16 %v545
        %v629 = vunpack.c.l.b16 %v546
        %v630 = vunpack.c.l.b16 %v547
        %v631 = vunpack.c.h.b16 %v547
        %v632 = vunpack.c.l.b16 %v548
        %v633 = vunpack.c.l.b16 %v549
        %v634 = vunpack.c.h.b16 %v549
        %v635 = vunpack.c.l.b16 %v550
        %v636 = vunpack.c.l.b16 %v551
        %v637 = vunpack.c.h.b16 %v551
        %v638 = vunpack.c.l.b16 %v552
        %v639 = vunpack.c.l.b16 %v553
        %v640 = vunpack.c.h.b16 %v553
        %v641 = vunpack.c.l.b16 %v554
        %v642 = vunpack.c.l.b16 %v555
        %v643 = vunpack.c.h.b16 %v555
        %v644 = vunpack.c.l.b16 %v556
        %v645 = vunpack.c.l.b16 %v557
        %v646 = vunpack.c.h.b16 %v557
        %v647 = vunpack.c.l.b16 %v558
        %v648 = vunpack.c.l.b16 %v559
        %v649 = vunpack.c.h.b16 %v559
        %v650 = vunpack.c.l.b16 %v560
        %v651 = vunpack.c.l.b16 %v561
        %v652 = vunpack.c.h.b16 %v561
        %v653 = vunpack.c.l.b16 %v562
        %v654 = vunpack.c.l.b16 %v563
        %v655 = vunpack.c.h.b16 %v563
        %v656 = vunpack.c.l.b16 %v564
        %v657 = vunpack.c.l.b16 %v565
        %v658 = vunpack.c.h.b16 %v565
        %v659 = vunpack.c.l.b16 %v566
        %v660 = vunpack.c.l.b16 %v567
        %v661 = vunpack.c.h.b16 %v567
        %v662 = vunpack.c.l.b16 %v568
        %v663 = vunpack.c.l.b16 %v569
        %v664 = vunpack.c.h.b16 %v569
        %v665 = vunpack.c.l.b16 %v570
        %v666 = vunpack.c.l.b16 %v571
        %v667 = vunpack.c.h.b16 %v571
        %v668 = vunpack.c.l.b16 %v572
        %v669 = vunpack.c.l.b16 %v573
        %v670 = vunpack.c.h.b16 %v573
        %v671 = vunpack.c.l.b16 %v574
        %v672 = vpack.c.b16 %v627, %v624
        %v673 = vpack.c.b16 %v628, %v625
        %v674 = vpack.c.b16 %v629, %v626
        %v675 = vpack.c.b16 %v633, %v630
        %v676 = vpack.c.b16 %v634, %v631
        %v677 = vpack.c.b16 %v635, %v632
        %v678 = vpack.c.b16 %v639, %v636
        %v679 = vpack.c.b16 %v640, %v637
        %v680 = vpack.c.b16 %v641, %v638
        %v681 = vpack.c.b16 %v645, %v642
        %v682 = vpack.c.b16 %v646, %v643
        %v683 = vpack.c.b16 %v647, %v644
        %v684 = vpack.c.b16 %v651, %v648
        %v685 = vpack.c.b16 %v652, %v649
        %v686 = vpack.c.b16 %v653, %v650
        %v687 = vpack.c.b16 %v657, %v654
        %v688 = vpack.c.b16 %v658, %v655
        %v689 = vpack.c.b16 %v659, %v656
        %v690 = vpack.c.b16 %v663, %v660
        %v691 = vpack.c.b16 %v664, %v661
        %v692 = vpack.c.b16 %v665, %v662
        %v693 = vpack.c.b16 %v669, %v666
        %v694 = vpack.c.b16 %v670, %v667
        %v695 = vpack.c.b16 %v671, %v668
        %720 = vmatprep.subr.bf16.mxu0 %v673
        %721 = vmatpush1.bf16.msra.mxu0 %v672
        %722 = vmatprep.subr.bf16.mxu0 %v676
        %723 = vmatpush1.bf16.msra.mxu0 %v675
        %724 = vmatprep.subr.bf16.mxu0 %v679
        %725 = vmatpush1.bf16.msra.mxu0 %v678
        %726 = vmatprep.subr.bf16.mxu0 %v682
        %727 = vmatpush1.bf16.msra.mxu0 %v681
        %728 = vmatprep.subr.bf16.mxu0 %v685
        %729 = vmatpush1.bf16.msra.mxu0 %v684
        %730 = vmatprep.subr.bf16.mxu0 %v688
        %731 = vmatpush1.bf16.msra.mxu0 %v687
        %732 = vmatprep.subr.bf16.mxu0 %v691
        %733 = vmatpush1.bf16.msra.mxu0 %v690
        %734 = vmatprep.subr.bf16.mxu0 %v694
        %735 = vmatpush1.bf16.msra.mxu0 %v693
        %736 = vmatprep.subr.bf16.mxu0 0
        %737 = vmatpush1.bf16.msra.mxu0 0
        %738 = vmatprep.subr.bf16.mxu0 0
        %739 = vmatpush1.bf16.msra.mxu0 0
        %740 = vmatprep.subr.bf16.mxu0 0
        %741 = vmatpush1.bf16.msra.mxu0 0
        %742 = vmatprep.subr.bf16.mxu0 0
        %743 = vmatpush1.bf16.msra.mxu0 0
        %744 = vmatprep.subr.bf16.mxu0 0
        %745 = vmatpush1.bf16.msra.mxu0 0
        %746 = vmatprep.subr.bf16.mxu0 0
        %747 = vmatpush1.bf16.msra.mxu0 0
        %748 = vmatprep.subr.bf16.mxu0 0
        %749 = vmatpush1.bf16.msra.mxu0 0
        %750 = vmatprep.subr.bf16.mxu0 0
        %751 = vmatpush1.bf16.msra.mxu0 0
        %752 = vmatprep.mubr.bf16.mxu0 0
        %753 = vmatmul.mubr.bf16.gmra.mrb[0].mxu0 %v541
        %v754 = vpop.f32.mrb[0].mxu0
        %v755 = vadd.f32 %v580, %v754
        %v756 = vpop.f32.mrb[0].mxu0
        %v757 = vadd.f32 %v584, %v756
        %v758 = vpop.f32.mrb[0].mxu0
        %v759 = vadd.f32 %v580, %v758
        %v760 = vpop.f32.mrb[0].mxu0
        %v761 = vadd.f32 %v584, %v760
        %762 = vmatprep.mubr.bf16.mxu0 0
        %763 = vmatmul.mubr.bf16.gmra.mrb[0].mxu0 %v542
        %v764 = vpop.f32.mrb[0].mxu0
        %v765 = vadd.f32 %v580, %v764
        %v766 = vpop.f32.mrb[0].mxu0
        %v767 = vadd.f32 %v584, %v766
        %v768 = vpop.f32.mrb[0].mxu0
        %v769 = vadd.f32 %v580, %v768
        %v770 = vpop.f32.mrb[0].mxu0
        %v771 = vadd.f32 %v584, %v770
        %772 = vdwg.mxu0
        %773 = vmatprep.subr.bf16.mxu0 0
        %774 = vmatpush1.bf16.msra.mxu0 %v674
        %775 = vmatprep.subr.bf16.mxu0 0
        %776 = vmatpush1.bf16.msra.mxu0 %v677
        %777 = vmatprep.subr.bf16.mxu0 0
        %778 = vmatpush1.bf16.msra.mxu0 %v680
        %779 = vmatprep.subr.bf16.mxu0 0
        %780 = vmatpush1.bf16.msra.mxu0 %v683
        %781 = vmatprep.subr.bf16.mxu0 0
        %782 = vmatpush1.bf16.msra.mxu0 %v686
        %783 = vmatprep.subr.bf16.mxu0 0
        %784 = vmatpush1.bf16.msra.mxu0 %v689
        %785 = vmatprep.subr.bf16.mxu0 0
        %786 = vmatpush1.bf16.msra.mxu0 %v692
        %787 = vmatprep.subr.bf16.mxu0 0
        %788 = vmatpush1.bf16.msra.mxu0 %v695
        %789 = vmatprep.subr.bf16.mxu0 0
        %790 = vmatpush1.bf16.msra.mxu0 0
        %791 = vmatprep.subr.bf16.mxu0 0
        %792 = vmatpush1.bf16.msra.mxu0 0
        %793 = vmatprep.subr.bf16.mxu0 0
        %794 = vmatpush1.bf16.msra.mxu0 0
        %795 = vmatprep.subr.bf16.mxu0 0
        %796 = vmatpush1.bf16.msra.mxu0 0
        %797 = vmatprep.subr.bf16.mxu0 0
        %798 = vmatpush1.bf16.msra.mxu0 0
        %799 = vmatprep.subr.bf16.mxu0 0
        %800 = vmatpush1.bf16.msra.mxu0 0
        %801 = vmatprep.subr.bf16.mxu0 0
        %802 = vmatpush1.bf16.msra.mxu0 0
        %803 = vmatprep.subr.bf16.mxu0 0
        %804 = vmatpush1.bf16.msra.mxu0 0
        %805 = vmatprep.mubr.bf16.mxu0 0
        %806 = vmatmul.mubr.bf16.gmra.mrb[0].mxu0 %v541
        %v807 = vpop.f32.mrb[0].mxu0
        %v808 = vadd.f32 %v588, %v807
        %v809 = vpop.f32.mrb[0].mxu0
        %v810 = vpop.f32.mrb[0].mxu0
        %v811 = vadd.f32 %v588, %v810
        %v812 = vpop.f32.mrb[0].mxu0
        %813 = vmatprep.mubr.bf16.mxu0 0
        %814 = vmatmul.mubr.bf16.gmra.mrb[0].mxu0 %v542
        %v815 = vpop.f32.mrb[0].mxu0
        %v816 = vadd.f32 %v588, %v815
        %v817 = vpop.f32.mrb[0].mxu0
        %v818 = vpop.f32.mrb[0].mxu0
        %v819 = vadd.f32 %v588, %v818
        %v820 = vpop.f32.mrb[0].mxu0
        %821 = vdwg.mxu0
        %v822 = vpack.c.bf16 %v759, %v755
        %v823 = vpack.c.bf16 %v769, %v765
        %v824 = vpack.c.bf16 %v761, %v757
        %v825 = vpack.c.bf16 %v771, %v767
        %v826 = vpack.c.bf16 %v811, %v808
        %v827 = vpack.c.bf16 %v819, %v816
        %v829 = vlaneseq
        %v830 = vshrl.u32 %v829, 7
        %v831 = vsub.s32 0, %v830
        %v832 = vrot.slane %v534, %v831
        %vm834 = vcmask 130048
        %v836 = vsel %vm834, %v822, 0
        %v839 = vsel %vm834, %v823, 0
        %v842 = vsel %vm834, %v824, 0
        %v845 = vsel %vm834, %v825, 0
        %847 = vmatprep.subr.bf16.mxu0 0
        %848 = vmatpush1.bf16.xpose.msra.mxu0 %v842
        %849 = vmatprep.subr.bf16.mxu0 0
        %850 = vmatpush1.bf16.xpose.msra.mxu0 %v845
        %851 = vmatprep.subr.bf16.mxu0 0
        %852 = vmatpush1.bf16.xpose.msra.mxu0 0
        %853 = vmatprep.subr.bf16.mxu0 0
        %854 = vmatpush1.bf16.xpose.msra.mxu0 0
        %855 = vmatprep.subr.bf16.mxu0 0
        %856 = vmatpush1.bf16.xpose.msra.mxu0 0
        %857 = vmatprep.subr.bf16.mxu0 0
        %858 = vmatpush1.bf16.xpose.msra.mxu0 0
        %859 = vmatprep.subr.bf16.mxu0 0
        %860 = vmatpush1.bf16.xpose.msra.mxu0 0
        %861 = vmatprep.subr.bf16.mxu0 0
        %862 = vmatpush1.bf16.xpose.msra.mxu0 0
        %863 = vmatprep.subr.bf16.mxu0 0
        %864 = vmatpush1.bf16.xpose.msra.mxu0 0
        %865 = vmatprep.subr.bf16.mxu0 0
        %866 = vmatpush1.bf16.xpose.msra.mxu0 0
        %867 = vmatprep.subr.bf16.mxu0 0
        %868 = vmatpush1.bf16.xpose.msra.mxu0 0
        %869 = vmatprep.subr.bf16.mxu0 0
        %870 = vmatpush1.bf16.xpose.msra.mxu0 0
        %871 = vmatprep.subr.bf16.mxu0 0
        %872 = vmatpush1.bf16.xpose.msra.mxu0 0
        %873 = vmatprep.subr.bf16.mxu0 0
        %874 = vmatpush1.bf16.xpose.msra.mxu0 0
        %875 = vmatprep.subr.bf16.mxu0 0
        %876 = vmatpush1.bf16.xpose.msra.mxu0 0
        %877 = vmatprep.subr.bf16.mxu0 0
        %878 = vmatpush1.bf16.xpose.msra.mxu0 0
        %879 = vmatprep.mubr.bf16.mxu0 0
        %880 = vmatmul.mubr.bf16.gmra.mrb[0].mxu0 %v836
        %v881 = vpop.f32.mrb[0].mxu0
        %v882 = vadd.f32 %v832, %v881
        %v883 = vpop.f32.mrb[0].mxu0
        %v884 = vpop.f32.mrb[0].mxu0
        %v885 = vadd.f32 %v832, %v884
        %v886 = vpop.f32.mrb[0].mxu0
        %887 = vmatprep.mubr.bf16.mxu0 0
        %888 = vmatmul.mubr.bf16.gmra.mrb[0].mxu0 %v839
        %v889 = vpop.f32.mrb[0].mxu0
        %v890 = vadd.f32 %v832, %v889
        %v891 = vpop.f32.mrb[0].mxu0
        %v892 = vpop.f32.mrb[0].mxu0
        %v893 = vadd.f32 %v832, %v892
        %v894 = vpop.f32.mrb[0].mxu0
        %895 = vdwg.mxu0
        %vm896 = vcmask 261120
        %v897 = vsel %vm896, %v882, -inf
        %898 = vmax.xlane.f32.xlu0 %v897
        %v899 = vpop.xlane.xlu0 %898
        %v900 = vsel %vm896, %v885, -inf
        %901 = vmax.xlane.f32.xlu0 %v900
        %v902 = vpop.xlane.xlu0 %901
        %v903 = vsel %vm896, %v890, -inf
        %904 = vmax.xlane.f32.xlu0 %v903
        %v905 = vpop.xlane.xlu0 %904
        %v906 = vsel %vm896, %v893, -inf
        %907 = vmax.xlane.f32.xlu0 %v906
        %v908 = vpop.xlane.xlu0 %907
        %v909 = vsub.f32 %v882, %v899
        %v910 = vsub.f32 %v885, %v902
        %v911 = vsub.f32 %v890, %v905
        %v912 = vsub.f32 %v893, %v908
        %v913 = vmul.f32 %v909, 1.442695
        %v914 = vpow.pop %v913
        %v915 = vmul.f32 %v910, 1.442695
        %v916 = vpow.pop %v915
        %v917 = vmul.f32 %v911, 1.442695
        %v918 = vpow.pop %v917
        %v919 = vmul.f32 %v912, 1.442695
        %v920 = vpow.pop %v919
        %v921 = vsel %vm896, %v914, 0.0
        %922 = vadd.xlane.f32.xlu0 %v921
        %v923 = vpop.xlane.xlu0 %922
        %v924 = vsel %vm896, %v916, 0.0
        %925 = vadd.xlane.f32.xlu0 %v924
        %v926 = vpop.xlane.xlu0 %925
        %v927 = vsel %vm896, %v918, 0.0
        %928 = vadd.xlane.f32.xlu0 %v927
        %v929 = vpop.xlane.xlu0 %928
        %v930 = vsel %vm896, %v920, 0.0
        %931 = vadd.xlane.f32.xlu0 %v930
        %v932 = vpop.xlane.xlu0 %931
        %v933 = vrcp.pop %v923
        %v934 = vrcp.pop %v926
        %v935 = vrcp.pop %v929
        %v936 = vrcp.pop %v932
        %v937 = vmul.f32 %v914, %v933
        %v938 = vmul.f32 %v916, %v934
        %v939 = vmul.f32 %v918, %v935
        %v940 = vmul.f32 %v920, %v936
        %v941 = vpack.c.bf16 %v938, %v937
        %v942 = vpack.c.bf16 %v940, %v939
        %v944 = vsel %vm896, %v941, 0
        %v947 = vsel %vm896, %v942, 0
        %949 = vmatprep.subr.bf16.mxu0 0
        %950 = vmatpush1.bf16.msra.mxu0 %v826
        %951 = vmatprep.subr.bf16.mxu0 0
        %952 = vmatpush1.bf16.msra.mxu0 %v827
        %953 = vmatprep.subr.bf16.mxu0 0
        %954 = vmatpush1.bf16.msra.mxu0 0
        %955 = vmatprep.subr.bf16.mxu0 0
        %956 = vmatpush1.bf16.msra.mxu0 0
        %957 = vmatprep.subr.bf16.mxu0 0
        %958 = vmatpush1.bf16.msra.mxu0 0
        %959 = vmatprep.subr.bf16.mxu0 0
        %960 = vmatpush1.bf16.msra.mxu0 0
        %961 = vmatprep.subr.bf16.mxu0 0
        %962 = vmatpush1.bf16.msra.mxu0 0
        %963 = vmatprep.subr.bf16.mxu0 0
        %964 = vmatpush1.bf16.msra.mxu0 0
        %965 = vmatprep.subr.bf16.mxu0 0
        %966 = vmatpush1.bf16.msra.mxu0 0
        %967 = vmatprep.subr.bf16.mxu0 0
        %968 = vmatpush1.bf16.msra.mxu0 0
        %969 = vmatprep.subr.bf16.mxu0 0
        %970 = vmatpush1.bf16.msra.mxu0 0
        %971 = vmatprep.subr.bf16.mxu0 0
        %972 = vmatpush1.bf16.msra.mxu0 0
        %973 = vmatprep.subr.bf16.mxu0 0
        %974 = vmatpush1.bf16.msra.mxu0 0
        %975 = vmatprep.subr.bf16.mxu0 0
        %976 = vmatpush1.bf16.msra.mxu0 0
        %977 = vmatprep.subr.bf16.mxu0 0
        %978 = vmatpush1.bf16.msra.mxu0 0
        %979 = vmatprep.subr.bf16.mxu0 0
        %980 = vmatpush1.bf16.msra.mxu0 0
        %981 = vmatprep.mubr.bf16.mxu0 0
        %982 = vmatmul.mubr.bf16.gmra.mrb[0].mxu0 %v944
        %v983 = vpop.f32.mrb[0].mxu0
        %v984 = vadd.f32 0.0, %v983
        %v985 = vpop.f32.mrb[0].mxu0
        %v986 = vpop.f32.mrb[0].mxu0
        %v987 = vadd.f32 0.0, %v986
        %v988 = vpop.f32.mrb[0].mxu0
        %989 = vmatprep.mubr.bf16.mxu0 0
        %990 = vmatmul.mubr.bf16.gmra.mrb[0].mxu0 %v947
        %v991 = vpop.f32.mrb[0].mxu0
        %v992 = vadd.f32 0.0, %v991
        %v993 = vpop.f32.mrb[0].mxu0
        %v994 = vpop.f32.mrb[0].mxu0
        %v995 = vadd.f32 0.0, %v994
        %v996 = vpop.f32.mrb[0].mxu0
        %997 = vdwg.mxu0
        %998 = vst.msk [vmem:[#allocation2] sm:$0xff] %vm834, %v984
        %999 = vst.msk [vmem:[#allocation2 + $0x8] sm:$0xff] %vm834, %v987
        %1000 = vst.msk [vmem:[#allocation2 + $0x10] sm:$0xff] %vm834, %v992
        %1001 = vst.msk [vmem:[#allocation2 + $0x18] sm:$0xff] %vm834, %v995
        %1004 = vrot.lane.b32.xlu0 %v822, 112
        %v1005 = vpop.permute.xlu0 %1004
        %1006 = vrot.lane.b32.xlu0 %v823, 112
        %v1007 = vpop.permute.xlu0 %1006
        %1010 = vrot.lane.b32.xlu0 %v824, 112
        %v1011 = vpop.permute.xlu0 %1010
        %1012 = vrot.lane.b32.xlu0 %v825, 112
        %v1013 = vpop.permute.xlu0 %1012
        %v1015 = vsel %vm834, %v1005, 0
        %v1018 = vsel %vm834, %v1007, 0
        %v1021 = vsel %vm834, %v1011, 0
        %v1024 = vsel %vm834, %v1013, 0
        %1026 = vmatprep.subr.bf16.mxu0 0
        %1027 = vmatpush1.bf16.xpose.msra.mxu0 %v1021
        %1028 = vmatprep.subr.bf16.mxu0 0
        %1029 = vmatpush1.bf16.xpose.msra.mxu0 %v1024
        %1030 = vmatprep.subr.bf16.mxu0 0
        %1031 = vmatpush1.bf16.xpose.msra.mxu0 0
        %1032 = vmatprep.subr.bf16.mxu0 0
        %1033 = vmatpush1.bf16.xpose.msra.mxu0 0
        %1034 = vmatprep.subr.bf16.mxu0 0
        %1035 = vmatpush1.bf16.xpose.msra.mxu0 0
        %1036 = vmatprep.subr.bf16.mxu0 0
        %1037 = vmatpush1.bf16.xpose.msra.mxu0 0
        %1038 = vmatprep.subr.bf16.mxu0 0
        %1039 = vmatpush1.bf16.xpose.msra.mxu0 0
        %1040 = vmatprep.subr.bf16.mxu0 0
        %1041 = vmatpush1.bf16.xpose.msra.mxu0 0
        %1042 = vmatprep.subr.bf16.mxu0 0
        %1043 = vmatpush1.bf16.xpose.msra.mxu0 0
        %1044 = vmatprep.subr.bf16.mxu0 0
        %1045 = vmatpush1.bf16.xpose.msra.mxu0 0
        %1046 = vmatprep.subr.bf16.mxu0 0
        %1047 = vmatpush1.bf16.xpose.msra.mxu0 0
        %1048 = vmatprep.subr.bf16.mxu0 0
        %1049 = vmatpush1.bf16.xpose.msra.mxu0 0
        %1050 = vmatprep.subr.bf16.mxu0 0
        %1051 = vmatpush1.bf16.xpose.msra.mxu0 0
        %1052 = vmatprep.subr.bf16.mxu0 0
        %1053 = vmatpush1.bf16.xpose.msra.mxu0 0
        %1054 = vmatprep.subr.bf16.mxu0 0
        %1055 = vmatpush1.bf16.xpose.msra.mxu0 0
        %1056 = vmatprep.subr.bf16.mxu0 0
        %1057 = vmatpush1.bf16.xpose.msra.mxu0 0
        %1058 = vmatprep.mubr.bf16.mxu0 0
        %1059 = vmatmul.mubr.bf16.gmra.mrb[0].mxu0 %v1015
        %v1060 = vpop.f32.mrb[0].mxu0
        %v1061 = vadd.f32 %v832, %v1060
        %v1062 = vpop.f32.mrb[0].mxu0
        %v1063 = vpop.f32.mrb[0].mxu0
        %v1064 = vadd.f32 %v832, %v1063
        %v1065 = vpop.f32.mrb[0].mxu0
        %1066 = vmatprep.mubr.bf16.mxu0 0
        %1067 = vmatmul.mubr.bf16.gmra.mrb[0].mxu0 %v1018
        %v1068 = vpop.f32.mrb[0].mxu0
        %v1069 = vadd.f32 %v832, %v1068
        %v1070 = vpop.f32.mrb[0].mxu0
        %v1071 = vpop.f32.mrb[0].mxu0
        %v1072 = vadd.f32 %v832, %v1071
        %v1073 = vpop.f32.mrb[0].mxu0
        %1074 = vdwg.mxu0
        %v1075 = vsel %vm896, %v1061, -inf
        %1076 = vmax.xlane.f32.xlu0 %v1075
        %v1077 = vpop.xlane.xlu0 %1076
        %v1078 = vsel %vm896, %v1064, -inf
        %1079 = vmax.xlane.f32.xlu0 %v1078
        %v1080 = vpop.xlane.xlu0 %1079
        %v1081 = vsel %vm896, %v1069, -inf
        %1082 = vmax.xlane.f32.xlu0 %v1081
        %v1083 = vpop.xlane.xlu0 %1082
        %v1084 = vsel %vm896, %v1072, -inf
        %1085 = vmax.xlane.f32.xlu0 %v1084
        %v1086 = vpop.xlane.xlu0 %1085
        %v1087 = vsub.f32 %v1061, %v1077
        %v1088 = vsub.f32 %v1064, %v1080
        %v1089 = vsub.f32 %v1069, %v1083
        %v1090 = vsub.f32 %v1072, %v1086
        %v1091 = vmul.f32 %v1087, 1.442695
        %v1092 = vpow.pop %v1091
        %v1093 = vmul.f32 %v1088, 1.442695
        %v1094 = vpow.pop %v1093
        %v1095 = vmul.f32 %v1089, 1.442695
        %v1096 = vpow.pop %v1095
        %v1097 = vmul.f32 %v1090, 1.442695
        %v1098 = vpow.pop %v1097
        %v1099 = vsel %vm896, %v1092, 0.0
        %1100 = vadd.xlane.f32.xlu0 %v1099
        %v1101 = vpop.xlane.xlu0 %1100
        %v1102 = vsel %vm896, %v1094, 0.0
        %1103 = vadd.xlane.f32.xlu0 %v1102
        %v1104 = vpop.xlane.xlu0 %1103
        %v1105 = vsel %vm896, %v1096, 0.0
        %1106 = vadd.xlane.f32.xlu0 %v1105
        %v1107 = vpop.xlane.xlu0 %1106
        %v1108 = vsel %vm896, %v1098, 0.0
        %1109 = vadd.xlane.f32.xlu0 %v1108
        %v1110 = vpop.xlane.xlu0 %1109
        %v1111 = vrcp.pop %v1101
        %v1112 = vrcp.pop %v1104
        %v1113 = vrcp.pop %v1107
        %v1114 = vrcp.pop %v1110
        %v1115 = vmul.f32 %v1092, %v1111
        %v1116 = vmul.f32 %v1094, %v1112
        %v1117 = vmul.f32 %v1096, %v1113
        %v1118 = vmul.f32 %v1098, %v1114
        %v1119 = vpack.c.bf16 %v1116, %v1115
        %v1120 = vpack.c.bf16 %v1118, %v1117
        %1123 = vrot.lane.b32.xlu0 %v826, 112
        %v1124 = vpop.permute.xlu0 %1123
        %1125 = vrot.lane.b32.xlu0 %v827, 112
        %v1126 = vpop.permute.xlu0 %1125
        %v1130 = vsel %vm896, %v1119, 0
        %v1133 = vsel %vm896, %v1120, 0
        %1135 = vmatprep.subr.bf16.mxu0 0
        %1136 = vmatpush1.bf16.msra.mxu0 %v1124
        %1137 = vmatprep.subr.bf16.mxu0 0
        %1138 = vmatpush1.bf16.msra.mxu0 %v1126
        %1139 = vmatprep.subr.bf16.mxu0 0
        %1140 = vmatpush1.bf16.msra.mxu0 0
        %1141 = vmatprep.subr.bf16.mxu0 0
        %1142 = vmatpush1.bf16.msra.mxu0 0
        %1143 = vmatprep.subr.bf16.mxu0 0
        %1144 = vmatpush1.bf16.msra.mxu0 0
        %1145 = vmatprep.subr.bf16.mxu0 0
        %1146 = vmatpush1.bf16.msra.mxu0 0
        %1147 = vmatprep.subr.bf16.mxu0 0
        %1148 = vmatpush1.bf16.msra.mxu0 0
        %1149 = vmatprep.subr.bf16.mxu0 0
        %1150 = vmatpush1.bf16.msra.mxu0 0
        %1151 = vmatprep.subr.bf16.mxu0 0
        %1152 = vmatpush1.bf16.msra.mxu0 0
        %1153 = vmatprep.subr.bf16.mxu0 0
        %1154 = vmatpush1.bf16.msra.mxu0 0
        %1155 = vmatprep.subr.bf16.mxu0 0
        %1156 = vmatpush1.bf16.msra.mxu0 0
        %1157 = vmatprep.subr.bf16.mxu0 0
        %1158 = vmatpush1.bf16.msra.mxu0 0
        %1159 = vmatprep.subr.bf16.mxu0 0
        %1160 = vmatpush1.bf16.msra.mxu0 0
        %1161 = vmatprep.subr.bf16.mxu0 0
        %1162 = vmatpush1.bf16.msra.mxu0 0
        %1163 = vmatprep.subr.bf16.mxu0 0
        %1164 = vmatpush1.bf16.msra.mxu0 0
        %1165 = vmatprep.subr.bf16.mxu0 0
        %1166 = vmatpush1.bf16.msra.mxu0 0
        %1167 = vmatprep.mubr.bf16.mxu0 0
        %1168 = vmatmul.mubr.bf16.gmra.mrb[0].mxu0 %v1130
        %v1169 = vpop.f32.mrb[0].mxu0
        %v1170 = vadd.f32 0.0, %v1169
        %v1171 = vpop.f32.mrb[0].mxu0
        %v1172 = vpop.f32.mrb[0].mxu0
        %v1173 = vadd.f32 0.0, %v1172
        %v1174 = vpop.f32.mrb[0].mxu0
        %1175 = vmatprep.mubr.bf16.mxu0 0
        %1176 = vmatmul.mubr.bf16.gmra.mrb[0].mxu0 %v1133
        %v1177 = vpop.f32.mrb[0].mxu0
        %v1178 = vadd.f32 0.0, %v1177
        %v1179 = vpop.f32.mrb[0].mxu0
        %v1180 = vpop.f32.mrb[0].mxu0
        %v1181 = vadd.f32 0.0, %v1180
        %v1182 = vpop.f32.mrb[0].mxu0
        %1183 = vdwg.mxu0
        %1188 = vrot.lane.b32.xlu0 %v1170, 16
        %v1189 = vpop.permute.xlu0 %1188
        %1190 = vrot.lane.b32.xlu0 %v1173, 16
        %v1191 = vpop.permute.xlu0 %1190
        %1192 = vrot.lane.b32.xlu0 %v1178, 16
        %v1193 = vpop.permute.xlu0 %1192
        %1194 = vrot.lane.b32.xlu0 %v1181, 16
        %v1195 = vpop.permute.xlu0 %1194
        %vm1200 = vcmask 261248
        %1201 = vst.msk [vmem:[#allocation2] sm:$0xff] %vm1200, %v1189
        %1202 = vst.msk [vmem:[#allocation2 + $0x8] sm:$0xff] %vm1200, %v1191
        %1203 = vst.msk [vmem:[#allocation2 + $0x10] sm:$0xff] %vm1200, %v1193
        %1204 = vst.msk [vmem:[#allocation2 + $0x18] sm:$0xff] %vm1200, %v1195
        %1205 = vrot.lane.b32.xlu0 %v822, 96
        %v1206 = vpop.permute.xlu0 %1205
        %1207 = vrot.lane.b32.xlu0 %v823, 96
        %v1208 = vpop.permute.xlu0 %1207
        %1209 = vrot.lane.b32.xlu0 %v824, 96
        %v1210 = vpop.permute.xlu0 %1209
        %1211 = vrot.lane.b32.xlu0 %v825, 96
        %v1212 = vpop.permute.xlu0 %1211
        %v1214 = vsel %vm834, %v1206, 0
        %v1217 = vsel %vm834, %v1208, 0
        %v1220 = vsel %vm834, %v1210, 0
        %v1223 = vsel %vm834, %v1212, 0
        %1225 = vmatprep.subr.bf16.mxu0 0
        %1226 = vmatpush1.bf16.xpose.msra.mxu0 %v1220
        %1227 = vmatprep.subr.bf16.mxu0 0
        %1228 = vmatpush1.bf16.xpose.msra.mxu0 %v1223
        %1229 = vmatprep.subr.bf16.mxu0 0
        %1230 = vmatpush1.bf16.xpose.msra.mxu0 0
        %1231 = vmatprep.subr.bf16.mxu0 0
        %1232 = vmatpush1.bf16.xpose.msra.mxu0 0
        %1233 = vmatprep.subr.bf16.mxu0 0
        %1234 = vmatpush1.bf16.xpose.msra.mxu0 0
        %1235 = vmatprep.subr.bf16.mxu0 0
        %1236 = vmatpush1.bf16.xpose.msra.mxu0 0
        %1237 = vmatprep.subr.bf16.mxu0 0
        %1238 = vmatpush1.bf16.xpose.msra.mxu0 0
        %1239 = vmatprep.subr.bf16.mxu0 0
        %1240 = vmatpush1.bf16.xpose.msra.mxu0 0
        %1241 = vmatprep.subr.bf16.mxu0 0
        %1242 = vmatpush1.bf16.xpose.msra.mxu0 0
        %1243 = vmatprep.subr.bf16.mxu0 0
        %1244 = vmatpush1.bf16.xpose.msra.mxu0 0
        %1245 = vmatprep.subr.bf16.mxu0 0
        %1246 = vmatpush1.bf16.xpose.msra.mxu0 0
        %1247 = vmatprep.subr.bf16.mxu0 0
        %1248 = vmatpush1.bf16.xpose.msra.mxu0 0
        %1249 = vmatprep.subr.bf16.mxu0 0
        %1250 = vmatpush1.bf16.xpose.msra.mxu0 0
        %1251 = vmatprep.subr.bf16.mxu0 0
        %1252 = vmatpush1.bf16.xpose.msra.mxu0 0
        %1253 = vmatprep.subr.bf16.mxu0 0
        %1254 = vmatpush1.bf16.xpose.msra.mxu0 0
        %1255 = vmatprep.subr.bf16.mxu0 0
        %1256 = vmatpush1.bf16.xpose.msra.mxu0 0
        %1257 = vmatprep.mubr.bf16.mxu0 0
        %1258 = vmatmul.mubr.bf16.gmra.mrb[0].mxu0 %v1214
        %v1259 = vpop.f32.mrb[0].mxu0
        %v1260 = vadd.f32 %v832, %v1259
        %v1261 = vpop.f32.mrb[0].mxu0
        %v1262 = vpop.f32.mrb[0].mxu0
        %v1263 = vadd.f32 %v832, %v1262
        %v1264 = vpop.f32.mrb[0].mxu0
        %1265 = vmatprep.mubr.bf16.mxu0 0
        %1266 = vmatmul.mubr.bf16.gmra.mrb[0].mxu0 %v1217
        %v1267 = vpop.f32.mrb[0].mxu0
        %v1268 = vadd.f32 %v832, %v1267
        %v1269 = vpop.f32.mrb[0].mxu0
        %v1270 = vpop.f32.mrb[0].mxu0
        %v1271 = vadd.f32 %v832, %v1270
        %v1272 = vpop.f32.mrb[0].mxu0
        %1273 = vdwg.mxu0
        %v1274 = vsel %vm896, %v1260, -inf
        %1275 = vmax.xlane.f32.xlu0 %v1274
        %v1276 = vpop.xlane.xlu0 %1275
        %v1277 = vsel %vm896, %v1263, -inf
        %1278 = vmax.xlane.f32.xlu0 %v1277
        %v1279 = vpop.xlane.xlu0 %1278
        %v1280 = vsel %vm896, %v1268, -inf
        %1281 = vmax.xlane.f32.xlu0 %v1280
        %v1282 = vpop.xlane.xlu0 %1281
        %v1283 = vsel %vm896, %v1271, -inf
        %1284 = vmax.xlane.f32.xlu0 %v1283
        %v1285 = vpop.xlane.xlu0 %1284
        %v1286 = vsub.f32 %v1260, %v1276
        %v1287 = vsub.f32 %v1263, %v1279
        %v1288 = vsub.f32 %v1268, %v1282
        %v1289 = vsub.f32 %v1271, %v1285
        %v1290 = vmul.f32 %v1286, 1.442695
        %v1291 = vpow.pop %v1290
        %v1292 = vmul.f32 %v1287, 1.442695
        %v1293 = vpow.pop %v1292
        %v1294 = vmul.f32 %v1288, 1.442695
        %v1295 = vpow.pop %v1294
        %v1296 = vmul.f32 %v1289, 1.442695
        %v1297 = vpow.pop %v1296
        %v1298 = vsel %vm896, %v1291, 0.0
        %1299 = vadd.xlane.f32.xlu0 %v1298
        %v1300 = vpop.xlane.xlu0 %1299
        %v1301 = vsel %vm896, %v1293, 0.0
        %1302 = vadd.xlane.f32.xlu0 %v1301
        %v1303 = vpop.xlane.xlu0 %1302
        %v1304 = vsel %vm896, %v1295, 0.0
        %1305 = vadd.xlane.f32.xlu0 %v1304
        %v1306 = vpop.xlane.xlu0 %1305
        %v1307 = vsel %vm896, %v1297, 0.0
        %1308 = vadd.xlane.f32.xlu0 %v1307
        %v1309 = vpop.xlane.xlu0 %1308
        %v1310 = vrcp.pop %v1300
        %v1311 = vrcp.pop %v1303
        %v1312 = vrcp.pop %v1306
        %v1313 = vrcp.pop %v1309
        %v1314 = vmul.f32 %v1291, %v1310
        %v1315 = vmul.f32 %v1293, %v1311
        %v1316 = vmul.f32 %v1295, %v1312
        %v1317 = vmul.f32 %v1297, %v1313
        %v1318 = vpack.c.bf16 %v1315, %v1314
        %v1319 = vpack.c.bf16 %v1317, %v1316
        %1320 = vrot.lane.b32.xlu0 %v826, 96
        %v1321 = vpop.permute.xlu0 %1320
        %1322 = vrot.lane.b32.xlu0 %v827, 96
        %v1323 = vpop.permute.xlu0 %1322
        %v1327 = vsel %vm896, %v1318, 0
        %v1330 = vsel %vm896, %v1319, 0
        %1332 = vmatprep.subr.bf16.mxu0 0
        %1333 = vmatpush1.bf16.msra.mxu0 %v1321
        %1334 = vmatprep.subr.bf16.mxu0 0
        %1335 = vmatpush1.bf16.msra.mxu0 %v1323
        %1336 = vmatprep.subr.bf16.mxu0 0
        %1337 = vmatpush1.bf16.msra.mxu0 0
        %1338 = vmatprep.subr.bf16.mxu0 0
        %1339 = vmatpush1.bf16.msra.mxu0 0
        %1340 = vmatprep.subr.bf16.mxu0 0
        %1341 = vmatpush1.bf16.msra.mxu0 0
        %1342 = vmatprep.subr.bf16.mxu0 0
        %1343 = vmatpush1.bf16.msra.mxu0 0
        %1344 = vmatprep.subr.bf16.mxu0 0
        %1345 = vmatpush1.bf16.msra.mxu0 0
        %1346 = vmatprep.subr.bf16.mxu0 0
        %1347 = vmatpush1.bf16.msra.mxu0 0
        %1348 = vmatprep.subr.bf16.mxu0 0
        %1349 = vmatpush1.bf16.msra.mxu0 0
        %1350 = vmatprep.subr.bf16.mxu0 0
        %1351 = vmatpush1.bf16.msra.mxu0 0
        %1352 = vmatprep.subr.bf16.mxu0 0
        %1353 = vmatpush1.bf16.msra.mxu0 0
        %1354 = vmatprep.subr.bf16.mxu0 0
        %1355 = vmatpush1.bf16.msra.mxu0 0
        %1356 = vmatprep.subr.bf16.mxu0 0
        %1357 = vmatpush1.bf16.msra.mxu0 0
        %1358 = vmatprep.subr.bf16.mxu0 0
        %1359 = vmatpush1.bf16.msra.mxu0 0
        %1360 = vmatprep.subr.bf16.mxu0 0
        %1361 = vmatpush1.bf16.msra.mxu0 0
        %1362 = vmatprep.subr.bf16.mxu0 0
        %1363 = vmatpush1.bf16.msra.mxu0 0
        %1364 = vmatprep.mubr.bf16.mxu0 0
        %1365 = vmatmul.mubr.bf16.gmra.mrb[0].mxu0 %v1327
        %v1366 = vpop.f32.mrb[0].mxu0
        %v1367 = vadd.f32 0.0, %v1366
        %v1368 = vpop.f32.mrb[0].mxu0
        %v1369 = vpop.f32.mrb[0].mxu0
        %v1370 = vadd.f32 0.0, %v1369
        %v1371 = vpop.f32.mrb[0].mxu0
        %1372 = vmatprep.mubr.bf16.mxu0 0
        %1373 = vmatmul.mubr.bf16.gmra.mrb[0].mxu0 %v1330
        %v1374 = vpop.f32.mrb[0].mxu0
        %v1375 = vadd.f32 0.0, %v1374
        %v1376 = vpop.f32.mrb[0].mxu0
        %v1377 = vpop.f32.mrb[0].mxu0
        %v1378 = vadd.f32 0.0, %v1377
        %v1379 = vpop.f32.mrb[0].mxu0
        %1380 = vdwg.mxu0
        %1385 = vrot.lane.b32.xlu0 %v1367, 32
        %v1386 = vpop.permute.xlu0 %1385
        %1387 = vrot.lane.b32.xlu0 %v1370, 32
        %v1388 = vpop.permute.xlu0 %1387
        %1389 = vrot.lane.b32.xlu0 %v1375, 32
        %v1390 = vpop.permute.xlu0 %1389
        %1391 = vrot.lane.b32.xlu0 %v1378, 32
        %v1392 = vpop.permute.xlu0 %1391
        %vm1397 = vcmask 392448
        %1398 = vst.msk [vmem:[#allocation2] sm:$0xff] %vm1397, %v1386
        %1399 = vst.msk [vmem:[#allocation2 + $0x8] sm:$0xff] %vm1397, %v1388
        %1400 = vst.msk [vmem:[#allocation2 + $0x10] sm:$0xff] %vm1397, %v1390
        %1401 = vst.msk [vmem:[#allocation2 + $0x18] sm:$0xff] %vm1397, %v1392
        %1402 = vrot.lane.b32.xlu0 %v822, 80
        %v1403 = vpop.permute.xlu0 %1402
        %1404 = vrot.lane.b32.xlu0 %v823, 80
        %v1405 = vpop.permute.xlu0 %1404
        %1406 = vrot.lane.b32.xlu0 %v824, 80
        %v1407 = vpop.permute.xlu0 %1406
        %1408 = vrot.lane.b32.xlu0 %v825, 80
        %v1409 = vpop.permute.xlu0 %1408
        %v1411 = vsel %vm834, %v1403, 0
        %v1414 = vsel %vm834, %v1405, 0
        %v1417 = vsel %vm834, %v1407, 0
        %v1420 = vsel %vm834, %v1409, 0
        %1422 = vmatprep.subr.bf16.mxu0 0
        %1423 = vmatpush1.bf16.xpose.msra.mxu0 %v1417
        %1424 = vmatprep.subr.bf16.mxu0 0
        %1425 = vmatpush1.bf16.xpose.msra.mxu0 %v1420
        %1426 = vmatprep.subr.bf16.mxu0 0
        %1427 = vmatpush1.bf16.xpose.msra.mxu0 0
        %1428 = vmatprep.subr.bf16.mxu0 0
        %1429 = vmatpush1.bf16.xpose.msra.mxu0 0
        %1430 = vmatprep.subr.bf16.mxu0 0
        %1431 = vmatpush1.bf16.xpose.msra.mxu0 0
        %1432 = vmatprep.subr.bf16.mxu0 0
        %1433 = vmatpush1.bf16.xpose.msra.mxu0 0
        %1434 = vmatprep.subr.bf16.mxu0 0
        %1435 = vmatpush1.bf16.xpose.msra.mxu0 0
        %1436 = vmatprep.subr.bf16.mxu0 0
        %1437 = vmatpush1.bf16.xpose.msra.mxu0 0
        %1438 = vmatprep.subr.bf16.mxu0 0
        %1439 = vmatpush1.bf16.xpose.msra.mxu0 0
        %1440 = vmatprep.subr.bf16.mxu0 0
        %1441 = vmatpush1.bf16.xpose.msra.mxu0 0
        %1442 = vmatprep.subr.bf16.mxu0 0
        %1443 = vmatpush1.bf16.xpose.msra.mxu0 0
        %1444 = vmatprep.subr.bf16.mxu0 0
        %1445 = vmatpush1.bf16.xpose.msra.mxu0 0
        %1446 = vmatprep.subr.bf16.mxu0 0
        %1447 = vmatpush1.bf16.xpose.msra.mxu0 0
        %1448 = vmatprep.subr.bf16.mxu0 0
        %1449 = vmatpush1.bf16.xpose.msra.mxu0 0
        %1450 = vmatprep.subr.bf16.mxu0 0
        %1451 = vmatpush1.bf16.xpose.msra.mxu0 0
        %1452 = vmatprep.subr.bf16.mxu0 0
        %1453 = vmatpush1.bf16.xpose.msra.mxu0 0
        %1454 = vmatprep.mubr.bf16.mxu0 0
        %1455 = vmatmul.mubr.bf16.gmra.mrb[0].mxu0 %v1411
        %v1456 = vpop.f32.mrb[0].mxu0
        %v1457 = vadd.f32 %v832, %v1456
        %v1458 = vpop.f32.mrb[0].mxu0
        %v1459 = vpop.f32.mrb[0].mxu0
        %v1460 = vadd.f32 %v832, %v1459
        %v1461 = vpop.f32.mrb[0].mxu0
        %1462 = vmatprep.mubr.bf16.mxu0 0
        %1463 = vmatmul.mubr.bf16.gmra.mrb[0].mxu0 %v1414
        %v1464 = vpop.f32.mrb[0].mxu0
        %v1465 = vadd.f32 %v832, %v1464
        %v1466 = vpop.f32.mrb[0].mxu0
        %v1467 = vpop.f32.mrb[0].mxu0
        %v1468 = vadd.f32 %v832, %v1467
        %v1469 = vpop.f32.mrb[0].mxu0
        %1470 = vdwg.mxu0
        %v1471 = vsel %vm896, %v1457, -inf
        %1472 = vmax.xlane.f32.xlu0 %v1471
        %v1473 = vpop.xlane.xlu0 %1472
        %v1474 = vsel %vm896, %v1460, -inf
        %1475 = vmax.xlane.f32.xlu0 %v1474
        %v1476 = vpop.xlane.xlu0 %1475
        %v1477 = vsel %vm896, %v1465, -inf
        %1478 = vmax.xlane.f32.xlu0 %v1477
        %v1479 = vpop.xlane.xlu0 %1478
        %v1480 = vsel %vm896, %v1468, -inf
        %1481 = vmax.xlane.f32.xlu0 %v1480
        %v1482 = vpop.xlane.xlu0 %1481
        %v1483 = vsub.f32 %v1457, %v1473
        %v1484 = vsub.f32 %v1460, %v1476
        %v1485 = vsub.f32 %v1465, %v1479
        %v1486 = vsub.f32 %v1468, %v1482
        %v1487 = vmul.f32 %v1483, 1.442695
        %v1488 = vpow.pop %v1487
        %v1489 = vmul.f32 %v1484, 1.442695
        %v1490 = vpow.pop %v1489
        %v1491 = vmul.f32 %v1485, 1.442695
        %v1492 = vpow.pop %v1491
        %v1493 = vmul.f32 %v1486, 1.442695
        %v1494 = vpow.pop %v1493
        %v1495 = vsel %vm896, %v1488, 0.0
        %1496 = vadd.xlane.f32.xlu0 %v1495
        %v1497 = vpop.xlane.xlu0 %1496
        %v1498 = vsel %vm896, %v1490, 0.0
        %1499 = vadd.xlane.f32.xlu0 %v1498
        %v1500 = vpop.xlane.xlu0 %1499
        %v1501 = vsel %vm896, %v1492, 0.0
        %1502 = vadd.xlane.f32.xlu0 %v1501
        %v1503 = vpop.xlane.xlu0 %1502
        %v1504 = vsel %vm896, %v1494, 0.0
        %1505 = vadd.xlane.f32.xlu0 %v1504
        %v1506 = vpop.xlane.xlu0 %1505
        %v1507 = vrcp.pop %v1497
        %v1508 = vrcp.pop %v1500
        %v1509 = vrcp.pop %v1503
        %v1510 = vrcp.pop %v1506
        %v1511 = vmul.f32 %v1488, %v1507
        %v1512 = vmul.f32 %v1490, %v1508
        %v1513 = vmul.f32 %v1492, %v1509
        %v1514 = vmul.f32 %v1494, %v1510
        %v1515 = vpack.c.bf16 %v1512, %v1511
        %v1516 = vpack.c.bf16 %v1514, %v1513
        %1517 = vrot.lane.b32.xlu0 %v826, 80
        %v1518 = vpop.permute.xlu0 %1517
        %1519 = vrot.lane.b32.xlu0 %v827, 80
        %v1520 = vpop.permute.xlu0 %1519
        %v1524 = vsel %vm896, %v1515, 0
        %v1527 = vsel %vm896, %v1516, 0
        %1529 = vmatprep.subr.bf16.mxu0 0
        %1530 = vmatpush1.bf16.msra.mxu0 %v1518
        %1531 = vmatprep.subr.bf16.mxu0 0
        %1532 = vmatpush1.bf16.msra.mxu0 %v1520
        %1533 = vmatprep.subr.bf16.mxu0 0
        %1534 = vmatpush1.bf16.msra.mxu0 0
        %1535 = vmatprep.subr.bf16.mxu0 0
        %1536 = vmatpush1.bf16.msra.mxu0 0
        %1537 = vmatprep.subr.bf16.mxu0 0
        %1538 = vmatpush1.bf16.msra.mxu0 0
        %1539 = vmatprep.subr.bf16.mxu0 0
        %1540 = vmatpush1.bf16.msra.mxu0 0
        %1541 = vmatprep.subr.bf16.mxu0 0
        %1542 = vmatpush1.bf16.msra.mxu0 0
        %1543 = vmatprep.subr.bf16.mxu0 0
        %1544 = vmatpush1.bf16.msra.mxu0 0
        %1545 = vmatprep.subr.bf16.mxu0 0
        %1546 = vmatpush1.bf16.msra.mxu0 0
        %1547 = vmatprep.subr.bf16.mxu0 0
        %1548 = vmatpush1.bf16.msra.mxu0 0
        %1549 = vmatprep.subr.bf16.mxu0 0
        %1550 = vmatpush1.bf16.msra.mxu0 0
        %1551 = vmatprep.subr.bf16.mxu0 0
        %1552 = vmatpush1.bf16.msra.mxu0 0
        %1553 = vmatprep.subr.bf16.mxu0 0
        %1554 = vmatpush1.bf16.msra.mxu0 0
        %1555 = vmatprep.subr.bf16.mxu0 0
        %1556 = vmatpush1.bf16.msra.mxu0 0
        %1557 = vmatprep.subr.bf16.mxu0 0
        %1558 = vmatpush1.bf16.msra.mxu0 0
        %1559 = vmatprep.subr.bf16.mxu0 0
        %1560 = vmatpush1.bf16.msra.mxu0 0
        %1561 = vmatprep.mubr.bf16.mxu0 0
        %1562 = vmatmul.mubr.bf16.gmra.mrb[0].mxu0 %v1524
        %v1563 = vpop.f32.mrb[0].mxu0
        %v1564 = vadd.f32 0.0, %v1563
        %v1565 = vpop.f32.mrb[0].mxu0
        %v1566 = vpop.f32.mrb[0].mxu0
        %v1567 = vadd.f32 0.0, %v1566
        %v1568 = vpop.f32.mrb[0].mxu0
        %1569 = vmatprep.mubr.bf16.mxu0 0
        %1570 = vmatmul.mubr.bf16.gmra.mrb[0].mxu0 %v1527
        %v1571 = vpop.f32.mrb[0].mxu0
        %v1572 = vadd.f32 0.0, %v1571
        %v1573 = vpop.f32.mrb[0].mxu0
        %v1574 = vpop.f32.mrb[0].mxu0
        %v1575 = vadd.f32 0.0, %v1574
        %v1576 = vpop.f32.mrb[0].mxu0
        %1577 = vdwg.mxu0
        %1582 = vrot.lane.b32.xlu0 %v1564, 48
        %v1583 = vpop.permute.xlu0 %1582
        %1584 = vrot.lane.b32.xlu0 %v1567, 48
        %v1585 = vpop.permute.xlu0 %1584
        %1586 = vrot.lane.b32.xlu0 %v1572, 48
        %v1587 = vpop.permute.xlu0 %1586
        %1588 = vrot.lane.b32.xlu0 %v1575, 48
        %v1589 = vpop.permute.xlu0 %1588
        %vm1594 = vcmask 523648
        %1595 = vst.msk [vmem:[#allocation2] sm:$0xff] %vm1594, %v1583
        %1596 = vst.msk [vmem:[#allocation2 + $0x8] sm:$0xff] %vm1594, %v1585
        %1597 = vst.msk [vmem:[#allocation2 + $0x10] sm:$0xff] %vm1594, %v1587
        %1598 = vst.msk [vmem:[#allocation2 + $0x18] sm:$0xff] %vm1594, %v1589
        %1599 = vrot.lane.b32.xlu0 %v822, 64
        %v1600 = vpop.permute.xlu0 %1599
        %1601 = vrot.lane.b32.xlu0 %v823, 64
        %v1602 = vpop.permute.xlu0 %1601
        %1603 = vrot.lane.b32.xlu0 %v824, 64
        %v1604 = vpop.permute.xlu0 %1603
        %1605 = vrot.lane.b32.xlu0 %v825, 64
        %v1606 = vpop.permute.xlu0 %1605
        %v1608 = vsel %vm834, %v1600, 0
        %v1611 = vsel %vm834, %v1602, 0
        %v1614 = vsel %vm834, %v1604, 0
        %v1617 = vsel %vm834, %v1606, 0
        %1619 = vmatprep.subr.bf16.mxu0 0
        %1620 = vmatpush1.bf16.xpose.msra.mxu0 %v1614
        %1621 = vmatprep.subr.bf16.mxu0 0
        %1622 = vmatpush1.bf16.xpose.msra.mxu0 %v1617
        %1623 = vmatprep.subr.bf16.mxu0 0
        %1624 = vmatpush1.bf16.xpose.msra.mxu0 0
        %1625 = vmatprep.subr.bf16.mxu0 0
        %1626 = vmatpush1.bf16.xpose.msra.mxu0 0
        %1627 = vmatprep.subr.bf16.mxu0 0
        %1628 = vmatpush1.bf16.xpose.msra.mxu0 0
        %1629 = vmatprep.subr.bf16.mxu0 0
        %1630 = vmatpush1.bf16.xpose.msra.mxu0 0
        %1631 = vmatprep.subr.bf16.mxu0 0
        %1632 = vmatpush1.bf16.xpose.msra.mxu0 0
        %1633 = vmatprep.subr.bf16.mxu0 0
        %1634 = vmatpush1.bf16.xpose.msra.mxu0 0
        %1635 = vmatprep.subr.bf16.mxu0 0
        %1636 = vmatpush1.bf16.xpose.msra.mxu0 0
        %1637 = vmatprep.subr.bf16.mxu0 0
        %1638 = vmatpush1.bf16.xpose.msra.mxu0 0
        %1639 = vmatprep.subr.bf16.mxu0 0
        %1640 = vmatpush1.bf16.xpose.msra.mxu0 0
        %1641 = vmatprep.subr.bf16.mxu0 0
        %1642 = vmatpush1.bf16.xpose.msra.mxu0 0
        %1643 = vmatprep.subr.bf16.mxu0 0
        %1644 = vmatpush1.bf16.xpose.msra.mxu0 0
        %1645 = vmatprep.subr.bf16.mxu0 0
        %1646 = vmatpush1.bf16.xpose.msra.mxu0 0
        %1647 = vmatprep.subr.bf16.mxu0 0
        %1648 = vmatpush1.bf16.xpose.msra.mxu0 0
        %1649 = vmatprep.subr.bf16.mxu0 0
        %1650 = vmatpush1.bf16.xpose.msra.mxu0 0
        %1651 = vmatprep.mubr.bf16.mxu0 0
        %1652 = vmatmul.mubr.bf16.gmra.mrb[0].mxu0 %v1608
        %v1653 = vpop.f32.mrb[0].mxu0
        %v1654 = vadd.f32 %v832, %v1653
        %v1655 = vpop.f32.mrb[0].mxu0
        %v1656 = vpop.f32.mrb[0].mxu0
        %v1657 = vadd.f32 %v832, %v1656
        %v1658 = vpop.f32.mrb[0].mxu0
        %1659 = vmatprep.mubr.bf16.mxu0 0
        %1660 = vmatmul.mubr.bf16.gmra.mrb[0].mxu0 %v1611
        %v1661 = vpop.f32.mrb[0].mxu0
        %v1662 = vadd.f32 %v832, %v1661
        %v1663 = vpop.f32.mrb[0].mxu0
        %v1664 = vpop.f32.mrb[0].mxu0
        %v1665 = vadd.f32 %v832, %v1664
        %v1666 = vpop.f32.mrb[0].mxu0
        %1667 = vdwg.mxu0
        %v1668 = vsel %vm896, %v1654, -inf
        %1669 = vmax.xlane.f32.xlu0 %v1668
        %v1670 = vpop.xlane.xlu0 %1669
        %v1671 = vsel %vm896, %v1657, -inf
        %1672 = vmax.xlane.f32.xlu0 %v1671
        %v1673 = vpop.xlane.xlu0 %1672
        %v1674 = vsel %vm896, %v1662, -inf
        %1675 = vmax.xlane.f32.xlu0 %v1674
        %v1676 = vpop.xlane.xlu0 %1675
        %v1677 = vsel %vm896, %v1665, -inf
        %1678 = vmax.xlane.f32.xlu0 %v1677
        %v1679 = vpop.xlane.xlu0 %1678
        %v1680 = vsub.f32 %v1654, %v1670
        %v1681 = vsub.f32 %v1657, %v1673
        %v1682 = vsub.f32 %v1662, %v1676
        %v1683 = vsub.f32 %v1665, %v1679
        %v1684 = vmul.f32 %v1680, 1.442695
        %v1685 = vpow.pop %v1684
        %v1686 = vmul.f32 %v1681, 1.442695
        %v1687 = vpow.pop %v1686
        %v1688 = vmul.f32 %v1682, 1.442695
        %v1689 = vpow.pop %v1688
        %v1690 = vmul.f32 %v1683, 1.442695
        %v1691 = vpow.pop %v1690
        %v1692 = vsel %vm896, %v1685, 0.0
        %1693 = vadd.xlane.f32.xlu0 %v1692
        %v1694 = vpop.xlane.xlu0 %1693
        %v1695 = vsel %vm896, %v1687, 0.0
        %1696 = vadd.xlane.f32.xlu0 %v1695
        %v1697 = vpop.xlane.xlu0 %1696
        %v1698 = vsel %vm896, %v1689, 0.0
        %1699 = vadd.xlane.f32.xlu0 %v1698
        %v1700 = vpop.xlane.xlu0 %1699
        %v1701 = vsel %vm896, %v1691, 0.0
        %1702 = vadd.xlane.f32.xlu0 %v1701
        %v1703 = vpop.xlane.xlu0 %1702
        %v1704 = vrcp.pop %v1694
        %v1705 = vrcp.pop %v1697
        %v1706 = vrcp.pop %v1700
        %v1707 = vrcp.pop %v1703
        %v1708 = vmul.f32 %v1685, %v1704
        %v1709 = vmul.f32 %v1687, %v1705
        %v1710 = vmul.f32 %v1689, %v1706
        %v1711 = vmul.f32 %v1691, %v1707
        %v1712 = vpack.c.bf16 %v1709, %v1708
        %v1713 = vpack.c.bf16 %v1711, %v1710
        %1714 = vrot.lane.b32.xlu0 %v826, 64
        %v1715 = vpop.permute.xlu0 %1714
        %1716 = vrot.lane.b32.xlu0 %v827, 64
        %v1717 = vpop.permute.xlu0 %1716
        %v1721 = vsel %vm896, %v1712, 0
        %v1724 = vsel %vm896, %v1713, 0
        %1726 = vmatprep.subr.bf16.mxu0 0
        %1727 = vmatpush1.bf16.msra.mxu0 %v1715
        %1728 = vmatprep.subr.bf16.mxu0 0
        %1729 = vmatpush1.bf16.msra.mxu0 %v1717
        %1730 = vmatprep.subr.bf16.mxu0 0
        %1731 = vmatpush1.bf16.msra.mxu0 0
        %1732 = vmatprep.subr.bf16.mxu0 0
        %1733 = vmatpush1.bf16.msra.mxu0 0
        %1734 = vmatprep.subr.bf16.mxu0 0
        %1735 = vmatpush1.bf16.msra.mxu0 0
        %1736 = vmatprep.subr.bf16.mxu0 0
        %1737 = vmatpush1.bf16.msra.mxu0 0
        %1738 = vmatprep.subr.bf16.mxu0 0
        %1739 = vmatpush1.bf16.msra.mxu0 0
        %1740 = vmatprep.subr.bf16.mxu0 0
        %1741 = vmatpush1.bf16.msra.mxu0 0
        %1742 = vmatprep.subr.bf16.mxu0 0
        %1743 = vmatpush1.bf16.msra.mxu0 0
        %1744 = vmatprep.subr.bf16.mxu0 0
        %1745 = vmatpush1.bf16.msra.mxu0 0
        %1746 = vmatprep.subr.bf16.mxu0 0
        %1747 = vmatpush1.bf16.msra.mxu0 0
        %1748 = vmatprep.subr.bf16.mxu0 0
        %1749 = vmatpush1.bf16.msra.mxu0 0
        %1750 = vmatprep.subr.bf16.mxu0 0
        %1751 = vmatpush1.bf16.msra.mxu0 0
        %1752 = vmatprep.subr.bf16.mxu0 0
        %1753 = vmatpush1.bf16.msra.mxu0 0
        %1754 = vmatprep.subr.bf16.mxu0 0
        %1755 = vmatpush1.bf16.msra.mxu0 0
        %1756 = vmatprep.subr.bf16.mxu0 0
        %1757 = vmatpush1.bf16.msra.mxu0 0
        %1758 = vmatprep.mubr.bf16.mxu0 0
        %1759 = vmatmul.mubr.bf16.gmra.mrb[0].mxu0 %v1721
        %v1760 = vpop.f32.mrb[0].mxu0
        %v1761 = vadd.f32 0.0, %v1760
        %v1762 = vpop.f32.mrb[0].mxu0
        %v1763 = vpop.f32.mrb[0].mxu0
        %v1764 = vadd.f32 0.0, %v1763
        %v1765 = vpop.f32.mrb[0].mxu0
        %1766 = vmatprep.mubr.bf16.mxu0 0
        %1767 = vmatmul.mubr.bf16.gmra.mrb[0].mxu0 %v1724
        %v1768 = vpop.f32.mrb[0].mxu0
        %v1769 = vadd.f32 0.0, %v1768
        %v1770 = vpop.f32.mrb[0].mxu0
        %v1771 = vpop.f32.mrb[0].mxu0
        %v1772 = vadd.f32 0.0, %v1771
        %v1773 = vpop.f32.mrb[0].mxu0
        %1774 = vdwg.mxu0
        %1779 = vrot.lane.b32.xlu0 %v1761, 64
        %v1780 = vpop.permute.xlu0 %1779
        %1781 = vrot.lane.b32.xlu0 %v1764, 64
        %v1782 = vpop.permute.xlu0 %1781
        %1783 = vrot.lane.b32.xlu0 %v1769, 64
        %v1784 = vpop.permute.xlu0 %1783
        %1785 = vrot.lane.b32.xlu0 %v1772, 64
        %v1786 = vpop.permute.xlu0 %1785
        %vm1791 = vcmask 654848
        %1792 = vst.msk [vmem:[#allocation2] sm:$0xff] %vm1791, %v1780
        %1793 = vst.msk [vmem:[#allocation2 + $0x8] sm:$0xff] %vm1791, %v1782
        %1794 = vst.msk [vmem:[#allocation2 + $0x10] sm:$0xff] %vm1791, %v1784
        %1795 = vst.msk [vmem:[#allocation2 + $0x18] sm:$0xff] %vm1791, %v1786
        %1796 = vrot.lane.b32.xlu0 %v822, 48
        %v1797 = vpop.permute.xlu0 %1796
        %1798 = vrot.lane.b32.xlu0 %v823, 48
        %v1799 = vpop.permute.xlu0 %1798
        %1800 = vrot.lane.b32.xlu0 %v824, 48
        %v1801 = vpop.permute.xlu0 %1800
        %1802 = vrot.lane.b32.xlu0 %v825, 48
        %v1803 = vpop.permute.xlu0 %1802
        %v1805 = vsel %vm834, %v1797, 0
        %v1808 = vsel %vm834, %v1799, 0
        %v1811 = vsel %vm834, %v1801, 0
        %v1814 = vsel %vm834, %v1803, 0
        %1816 = vmatprep.subr.bf16.mxu0 0
        %1817 = vmatpush1.bf16.xpose.msra.mxu0 %v1811
        %1818 = vmatprep.subr.bf16.mxu0 0
        %1819 = vmatpush1.bf16.xpose.msra.mxu0 %v1814
        %1820 = vmatprep.subr.bf16.mxu0 0
        %1821 = vmatpush1.bf16.xpose.msra.mxu0 0
        %1822 = vmatprep.subr.bf16.mxu0 0
        %1823 = vmatpush1.bf16.xpose.msra.mxu0 0
        %1824 = vmatprep.subr.bf16.mxu0 0
        %1825 = vmatpush1.bf16.xpose.msra.mxu0 0
        %1826 = vmatprep.subr.bf16.mxu0 0
        %1827 = vmatpush1.bf16.xpose.msra.mxu0 0
        %1828 = vmatprep.subr.bf16.mxu0 0
        %1829 = vmatpush1.bf16.xpose.msra.mxu0 0
        %1830 = vmatprep.subr.bf16.mxu0 0
        %1831 = vmatpush1.bf16.xpose.msra.mxu0 0
        %1832 = vmatprep.subr.bf16.mxu0 0
        %1833 = vmatpush1.bf16.xpose.msra.mxu0 0
        %1834 = vmatprep.subr.bf16.mxu0 0
        %1835 = vmatpush1.bf16.xpose.msra.mxu0 0
        %1836 = vmatprep.subr.bf16.mxu0 0
        %1837 = vmatpush1.bf16.xpose.msra.mxu0 0
        %1838 = vmatprep.subr.bf16.mxu0 0
        %1839 = vmatpush1.bf16.xpose.msra.mxu0 0
        %1840 = vmatprep.subr.bf16.mxu0 0
        %1841 = vmatpush1.bf16.xpose.msra.mxu0 0
        %1842 = vmatprep.subr.bf16.mxu0 0
        %1843 = vmatpush1.bf16.xpose.msra.mxu0 0
        %1844 = vmatprep.subr.bf16.mxu0 0
        %1845 = vmatpush1.bf16.xpose.msra.mxu0 0
        %1846 = vmatprep.subr.bf16.mxu0 0
        %1847 = vmatpush1.bf16.xpose.msra.mxu0 0
        %1848 = vmatprep.mubr.bf16.mxu0 0
        %1849 = vmatmul.mubr.bf16.gmra.mrb[0].mxu0 %v1805
        %v1850 = vpop.f32.mrb[0].mxu0
        %v1851 = vadd.f32 %v832, %v1850
        %v1852 = vpop.f32.mrb[0].mxu0
        %v1853 = vpop.f32.mrb[0].mxu0
        %v1854 = vadd.f32 %v832, %v1853
        %v1855 = vpop.f32.mrb[0].mxu0
        %1856 = vmatprep.mubr.bf16.mxu0 0
        %1857 = vmatmul.mubr.bf16.gmra.mrb[0].mxu0 %v1808
        %v1858 = vpop.f32.mrb[0].mxu0
        %v1859 = vadd.f32 %v832, %v1858
        %v1860 = vpop.f32.mrb[0].mxu0
        %v1861 = vpop.f32.mrb[0].mxu0
        %v1862 = vadd.f32 %v832, %v1861
        %v1863 = vpop.f32.mrb[0].mxu0
        %1864 = vdwg.mxu0
        %v1865 = vsel %vm896, %v1851, -inf
        %1866 = vmax.xlane.f32.xlu0 %v1865
        %v1867 = vpop.xlane.xlu0 %1866
        %v1868 = vsel %vm896, %v1854, -inf
        %1869 = vmax.xlane.f32.xlu0 %v1868
        %v1870 = vpop.xlane.xlu0 %1869
        %v1871 = vsel %vm896, %v1859, -inf
        %1872 = vmax.xlane.f32.xlu0 %v1871
        %v1873 = vpop.xlane.xlu0 %1872
        %v1874 = vsel %vm896, %v1862, -inf
        %1875 = vmax.xlane.f32.xlu0 %v1874
        %v1876 = vpop.xlane.xlu0 %1875
        %v1877 = vsub.f32 %v1851, %v1867
        %v1878 = vsub.f32 %v1854, %v1870
        %v1879 = vsub.f32 %v1859, %v1873
        %v1880 = vsub.f32 %v1862, %v1876
        %v1881 = vmul.f32 %v1877, 1.442695
        %v1882 = vpow.pop %v1881
        %v1883 = vmul.f32 %v1878, 1.442695
        %v1884 = vpow.pop %v1883
        %v1885 = vmul.f32 %v1879, 1.442695
        %v1886 = vpow.pop %v1885
        %v1887 = vmul.f32 %v1880, 1.442695
        %v1888 = vpow.pop %v1887
        %v1889 = vsel %vm896, %v1882, 0.0
        %1890 = vadd.xlane.f32.xlu0 %v1889
        %v1891 = vpop.xlane.xlu0 %1890
        %v1892 = vsel %vm896, %v1884, 0.0
        %1893 = vadd.xlane.f32.xlu0 %v1892
        %v1894 = vpop.xlane.xlu0 %1893
        %v1895 = vsel %vm896, %v1886, 0.0
        %1896 = vadd.xlane.f32.xlu0 %v1895
        %v1897 = vpop.xlane.xlu0 %1896
        %v1898 = vsel %vm896, %v1888, 0.0
        %1899 = vadd.xlane.f32.xlu0 %v1898
        %v1900 = vpop.xlane.xlu0 %1899
        %v1901 = vrcp.pop %v1891
        %v1902 = vrcp.pop %v1894
        %v1903 = vrcp.pop %v1897
        %v1904 = vrcp.pop %v1900
        %v1905 = vmul.f32 %v1882, %v1901
        %v1906 = vmul.f32 %v1884, %v1902
        %v1907 = vmul.f32 %v1886, %v1903
        %v1908 = vmul.f32 %v1888, %v1904
        %v1909 = vpack.c.bf16 %v1906, %v1905
        %v1910 = vpack.c.bf16 %v1908, %v1907
        %1911 = vrot.lane.b32.xlu0 %v826, 48
        %v1912 = vpop.permute.xlu0 %1911
        %1913 = vrot.lane.b32.xlu0 %v827, 48
        %v1914 = vpop.permute.xlu0 %1913
        %v1918 = vsel %vm896, %v1909, 0
        %v1921 = vsel %vm896, %v1910, 0
        %1923 = vmatprep.subr.bf16.mxu0 0
        %1924 = vmatpush1.bf16.msra.mxu0 %v1912
        %1925 = vmatprep.subr.bf16.mxu0 0
        %1926 = vmatpush1.bf16.msra.mxu0 %v1914
        %1927 = vmatprep.subr.bf16.mxu0 0
        %1928 = vmatpush1.bf16.msra.mxu0 0
        %1929 = vmatprep.subr.bf16.mxu0 0
        %1930 = vmatpush1.bf16.msra.mxu0 0
        %1931 = vmatprep.subr.bf16.mxu0 0
        %1932 = vmatpush1.bf16.msra.mxu0 0
        %1933 = vmatprep.subr.bf16.mxu0 0
        %1934 = vmatpush1.bf16.msra.mxu0 0
        %1935 = vmatprep.subr.bf16.mxu0 0
        %1936 = vmatpush1.bf16.msra.mxu0 0
        %1937 = vmatprep.subr.bf16.mxu0 0
        %1938 = vmatpush1.bf16.msra.mxu0 0
        %1939 = vmatprep.subr.bf16.mxu0 0
        %1940 = vmatpush1.bf16.msra.mxu0 0
        %1941 = vmatprep.subr.bf16.mxu0 0
        %1942 = vmatpush1.bf16.msra.mxu0 0
        %1943 = vmatprep.subr.bf16.mxu0 0
        %1944 = vmatpush1.bf16.msra.mxu0 0
        %1945 = vmatprep.subr.bf16.mxu0 0
        %1946 = vmatpush1.bf16.msra.mxu0 0
        %1947 = vmatprep.subr.bf16.mxu0 0
        %1948 = vmatpush1.bf16.msra.mxu0 0
        %1949 = vmatprep.subr.bf16.mxu0 0
        %1950 = vmatpush1.bf16.msra.mxu0 0
        %1951 = vmatprep.subr.bf16.mxu0 0
        %1952 = vmatpush1.bf16.msra.mxu0 0
        %1953 = vmatprep.subr.bf16.mxu0 0
        %1954 = vmatpush1.bf16.msra.mxu0 0
        %1955 = vmatprep.mubr.bf16.mxu0 0
        %1956 = vmatmul.mubr.bf16.gmra.mrb[0].mxu0 %v1918
        %v1957 = vpop.f32.mrb[0].mxu0
        %v1958 = vadd.f32 0.0, %v1957
        %v1959 = vpop.f32.mrb[0].mxu0
        %v1960 = vpop.f32.mrb[0].mxu0
        %v1961 = vadd.f32 0.0, %v1960
        %v1962 = vpop.f32.mrb[0].mxu0
        %1963 = vmatprep.mubr.bf16.mxu0 0
        %1964 = vmatmul.mubr.bf16.gmra.mrb[0].mxu0 %v1921
        %v1965 = vpop.f32.mrb[0].mxu0
        %v1966 = vadd.f32 0.0, %v1965
        %v1967 = vpop.f32.mrb[0].mxu0
        %v1968 = vpop.f32.mrb[0].mxu0
        %v1969 = vadd.f32 0.0, %v1968
        %v1970 = vpop.f32.mrb[0].mxu0
        %1971 = vdwg.mxu0
        %1976 = vrot.lane.b32.xlu0 %v1958, 80
        %v1977 = vpop.permute.xlu0 %1976
        %1978 = vrot.lane.b32.xlu0 %v1961, 80
        %v1979 = vpop.permute.xlu0 %1978
        %1980 = vrot.lane.b32.xlu0 %v1966, 80
        %v1981 = vpop.permute.xlu0 %1980
        %1982 = vrot.lane.b32.xlu0 %v1969, 80
        %v1983 = vpop.permute.xlu0 %1982
        %vm1988 = vcmask 786048
        %1989 = vst.msk [vmem:[#allocation2] sm:$0xff] %vm1988, %v1977
        %1990 = vst.msk [vmem:[#allocation2 + $0x8] sm:$0xff] %vm1988, %v1979
        %1991 = vst.msk [vmem:[#allocation2 + $0x10] sm:$0xff] %vm1988, %v1981
        %1992 = vst.msk [vmem:[#allocation2 + $0x18] sm:$0xff] %vm1988, %v1983
        %1993 = vrot.lane.b32.xlu0 %v822, 32
        %v1994 = vpop.permute.xlu0 %1993
        %1995 = vrot.lane.b32.xlu0 %v823, 32
        %v1996 = vpop.permute.xlu0 %1995
        %1997 = vrot.lane.b32.xlu0 %v824, 32
        %v1998 = vpop.permute.xlu0 %1997
        %1999 = vrot.lane.b32.xlu0 %v825, 32
        %v2000 = vpop.permute.xlu0 %1999
        %v2002 = vsel %vm834, %v1994, 0
        %v2005 = vsel %vm834, %v1996, 0
        %v2008 = vsel %vm834, %v1998, 0
        %v2011 = vsel %vm834, %v2000, 0
        %2013 = vmatprep.subr.bf16.mxu0 0
        %2014 = vmatpush1.bf16.xpose.msra.mxu0 %v2008
        %2015 = vmatprep.subr.bf16.mxu0 0
        %2016 = vmatpush1.bf16.xpose.msra.mxu0 %v2011
        %2017 = vmatprep.subr.bf16.mxu0 0
        %2018 = vmatpush1.bf16.xpose.msra.mxu0 0
        %2019 = vmatprep.subr.bf16.mxu0 0
        %2020 = vmatpush1.bf16.xpose.msra.mxu0 0
        %2021 = vmatprep.subr.bf16.mxu0 0
        %2022 = vmatpush1.bf16.xpose.msra.mxu0 0
        %2023 = vmatprep.subr.bf16.mxu0 0
        %2024 = vmatpush1.bf16.xpose.msra.mxu0 0
        %2025 = vmatprep.subr.bf16.mxu0 0
        %2026 = vmatpush1.bf16.xpose.msra.mxu0 0
        %2027 = vmatprep.subr.bf16.mxu0 0
        %2028 = vmatpush1.bf16.xpose.msra.mxu0 0
        %2029 = vmatprep.subr.bf16.mxu0 0
        %2030 = vmatpush1.bf16.xpose.msra.mxu0 0
        %2031 = vmatprep.subr.bf16.mxu0 0
        %2032 = vmatpush1.bf16.xpose.msra.mxu0 0
        %2033 = vmatprep.subr.bf16.mxu0 0
        %2034 = vmatpush1.bf16.xpose.msra.mxu0 0
        %2035 = vmatprep.subr.bf16.mxu0 0
        %2036 = vmatpush1.bf16.xpose.msra.mxu0 0
        %2037 = vmatprep.subr.bf16.mxu0 0
        %2038 = vmatpush1.bf16.xpose.msra.mxu0 0
        %2039 = vmatprep.subr.bf16.mxu0 0
        %2040 = vmatpush1.bf16.xpose.msra.mxu0 0
        %2041 = vmatprep.subr.bf16.mxu0 0
        %2042 = vmatpush1.bf16.xpose.msra.mxu0 0
        %2043 = vmatprep.subr.bf16.mxu0 0
        %2044 = vmatpush1.bf16.xpose.msra.mxu0 0
        %2045 = vmatprep.mubr.bf16.mxu0 0
        %2046 = vmatmul.mubr.bf16.gmra.mrb[0].mxu0 %v2002
        %v2047 = vpop.f32.mrb[0].mxu0
        %v2048 = vadd.f32 %v832, %v2047
        %v2049 = vpop.f32.mrb[0].mxu0
        %v2050 = vpop.f32.mrb[0].mxu0
        %v2051 = vadd.f32 %v832, %v2050
        %v2052 = vpop.f32.mrb[0].mxu0
        %2053 = vmatprep.mubr.bf16.mxu0 0
        %2054 = vmatmul.mubr.bf16.gmra.mrb[0].mxu0 %v2005
        %v2055 = vpop.f32.mrb[0].mxu0
        %v2056 = vadd.f32 %v832, %v2055
        %v2057 = vpop.f32.mrb[0].mxu0
        %v2058 = vpop.f32.mrb[0].mxu0
        %v2059 = vadd.f32 %v832, %v2058
        %v2060 = vpop.f32.mrb[0].mxu0
        %2061 = vdwg.mxu0
        %v2062 = vsel %vm896, %v2048, -inf
        %2063 = vmax.xlane.f32.xlu0 %v2062
        %v2064 = vpop.xlane.xlu0 %2063
        %v2065 = vsel %vm896, %v2051, -inf
        %2066 = vmax.xlane.f32.xlu0 %v2065
        %v2067 = vpop.xlane.xlu0 %2066
        %v2068 = vsel %vm896, %v2056, -inf
        %2069 = vmax.xlane.f32.xlu0 %v2068
        %v2070 = vpop.xlane.xlu0 %2069
        %v2071 = vsel %vm896, %v2059, -inf
        %2072 = vmax.xlane.f32.xlu0 %v2071
        %v2073 = vpop.xlane.xlu0 %2072
        %v2074 = vsub.f32 %v2048, %v2064
        %v2075 = vsub.f32 %v2051, %v2067
        %v2076 = vsub.f32 %v2056, %v2070
        %v2077 = vsub.f32 %v2059, %v2073
        %v2078 = vmul.f32 %v2074, 1.442695
        %v2079 = vpow.pop %v2078
        %v2080 = vmul.f32 %v2075, 1.442695
        %v2081 = vpow.pop %v2080
        %v2082 = vmul.f32 %v2076, 1.442695
        %v2083 = vpow.pop %v2082
        %v2084 = vmul.f32 %v2077, 1.442695
        %v2085 = vpow.pop %v2084
        %v2086 = vsel %vm896, %v2079, 0.0
        %2087 = vadd.xlane.f32.xlu0 %v2086
        %v2088 = vpop.xlane.xlu0 %2087
        %v2089 = vsel %vm896, %v2081, 0.0
        %2090 = vadd.xlane.f32.xlu0 %v2089
        %v2091 = vpop.xlane.xlu0 %2090
        %v2092 = vsel %vm896, %v2083, 0.0
        %2093 = vadd.xlane.f32.xlu0 %v2092
        %v2094 = vpop.xlane.xlu0 %2093
        %v2095 = vsel %vm896, %v2085, 0.0
        %2096 = vadd.xlane.f32.xlu0 %v2095
        %v2097 = vpop.xlane.xlu0 %2096
        %v2098 = vrcp.pop %v2088
        %v2099 = vrcp.pop %v2091
        %v2100 = vrcp.pop %v2094
        %v2101 = vrcp.pop %v2097
        %v2102 = vmul.f32 %v2079, %v2098
        %v2103 = vmul.f32 %v2081, %v2099
        %v2104 = vmul.f32 %v2083, %v2100
        %v2105 = vmul.f32 %v2085, %v2101
        %v2106 = vpack.c.bf16 %v2103, %v2102
        %v2107 = vpack.c.bf16 %v2105, %v2104
        %2108 = vrot.lane.b32.xlu0 %v826, 32
        %v2109 = vpop.permute.xlu0 %2108
        %2110 = vrot.lane.b32.xlu0 %v827, 32
        %v2111 = vpop.permute.xlu0 %2110
        %v2115 = vsel %vm896, %v2106, 0
        %v2118 = vsel %vm896, %v2107, 0
        %2120 = vmatprep.subr.bf16.mxu0 0
        %2121 = vmatpush1.bf16.msra.mxu0 %v2109
        %2122 = vmatprep.subr.bf16.mxu0 0
        %2123 = vmatpush1.bf16.msra.mxu0 %v2111
        %2124 = vmatprep.subr.bf16.mxu0 0
        %2125 = vmatpush1.bf16.msra.mxu0 0
        %2126 = vmatprep.subr.bf16.mxu0 0
        %2127 = vmatpush1.bf16.msra.mxu0 0
        %2128 = vmatprep.subr.bf16.mxu0 0
        %2129 = vmatpush1.bf16.msra.mxu0 0
        %2130 = vmatprep.subr.bf16.mxu0 0
        %2131 = vmatpush1.bf16.msra.mxu0 0
        %2132 = vmatprep.subr.bf16.mxu0 0
        %2133 = vmatpush1.bf16.msra.mxu0 0
        %2134 = vmatprep.subr.bf16.mxu0 0
        %2135 = vmatpush1.bf16.msra.mxu0 0
        %2136 = vmatprep.subr.bf16.mxu0 0
        %2137 = vmatpush1.bf16.msra.mxu0 0
        %2138 = vmatprep.subr.bf16.mxu0 0
        %2139 = vmatpush1.bf16.msra.mxu0 0
        %2140 = vmatprep.subr.bf16.mxu0 0
        %2141 = vmatpush1.bf16.msra.mxu0 0
        %2142 = vmatprep.subr.bf16.mxu0 0
        %2143 = vmatpush1.bf16.msra.mxu0 0
        %2144 = vmatprep.subr.bf16.mxu0 0
        %2145 = vmatpush1.bf16.msra.mxu0 0
        %2146 = vmatprep.subr.bf16.mxu0 0
        %2147 = vmatpush1.bf16.msra.mxu0 0
        %2148 = vmatprep.subr.bf16.mxu0 0
        %2149 = vmatpush1.bf16.msra.mxu0 0
        %2150 = vmatprep.subr.bf16.mxu0 0
        %2151 = vmatpush1.bf16.msra.mxu0 0
        %2152 = vmatprep.mubr.bf16.mxu0 0
        %2153 = vmatmul.mubr.bf16.gmra.mrb[0].mxu0 %v2115
        %v2154 = vpop.f32.mrb[0].mxu0
        %v2155 = vadd.f32 0.0, %v2154
        %v2156 = vpop.f32.mrb[0].mxu0
        %v2157 = vpop.f32.mrb[0].mxu0
        %v2158 = vadd.f32 0.0, %v2157
        %v2159 = vpop.f32.mrb[0].mxu0
        %2160 = vmatprep.mubr.bf16.mxu0 0
        %2161 = vmatmul.mubr.bf16.gmra.mrb[0].mxu0 %v2118
        %v2162 = vpop.f32.mrb[0].mxu0
        %v2163 = vadd.f32 0.0, %v2162
        %v2164 = vpop.f32.mrb[0].mxu0
        %v2165 = vpop.f32.mrb[0].mxu0
        %v2166 = vadd.f32 0.0, %v2165
        %v2167 = vpop.f32.mrb[0].mxu0
        %2168 = vdwg.mxu0
        %2173 = vrot.lane.b32.xlu0 %v2155, 96
        %v2174 = vpop.permute.xlu0 %2173
        %2175 = vrot.lane.b32.xlu0 %v2158, 96
        %v2176 = vpop.permute.xlu0 %2175
        %2177 = vrot.lane.b32.xlu0 %v2163, 96
        %v2178 = vpop.permute.xlu0 %2177
        %2179 = vrot.lane.b32.xlu0 %v2166, 96
        %v2180 = vpop.permute.xlu0 %2179
        %vm2185 = vcmask 917248
        %2186 = vst.msk [vmem:[#allocation2] sm:$0xff] %vm2185, %v2174
        %2187 = vst.msk [vmem:[#allocation2 + $0x8] sm:$0xff] %vm2185, %v2176
        %2188 = vst.msk [vmem:[#allocation2 + $0x10] sm:$0xff] %vm2185, %v2178
        %2189 = vst.msk [vmem:[#allocation2 + $0x18] sm:$0xff] %vm2185, %v2180
        %2190 = vrot.lane.b32.xlu0 %v822, 16
        %v2191 = vpop.permute.xlu0 %2190
        %2192 = vrot.lane.b32.xlu0 %v823, 16
        %v2193 = vpop.permute.xlu0 %2192
        %2194 = vrot.lane.b32.xlu0 %v824, 16
        %v2195 = vpop.permute.xlu0 %2194
        %2196 = vrot.lane.b32.xlu0 %v825, 16
        %v2197 = vpop.permute.xlu0 %2196
        %v2199 = vsel %vm834, %v2191, 0
        %v2202 = vsel %vm834, %v2193, 0
        %v2205 = vsel %vm834, %v2195, 0
        %v2208 = vsel %vm834, %v2197, 0
        %2210 = vmatprep.subr.bf16.mxu0 0
        %2211 = vmatpush1.bf16.xpose.msra.mxu0 %v2205
        %2212 = vmatprep.subr.bf16.mxu0 0
        %2213 = vmatpush1.bf16.xpose.msra.mxu0 %v2208
        %2214 = vmatprep.subr.bf16.mxu0 0
        %2215 = vmatpush1.bf16.xpose.msra.mxu0 0
        %2216 = vmatprep.subr.bf16.mxu0 0
        %2217 = vmatpush1.bf16.xpose.msra.mxu0 0
        %2218 = vmatprep.subr.bf16.mxu0 0
        %2219 = vmatpush1.bf16.xpose.msra.mxu0 0
        %2220 = vmatprep.subr.bf16.mxu0 0
        %2221 = vmatpush1.bf16.xpose.msra.mxu0 0
        %2222 = vmatprep.subr.bf16.mxu0 0
        %2223 = vmatpush1.bf16.xpose.msra.mxu0 0
        %2224 = vmatprep.subr.bf16.mxu0 0
        %2225 = vmatpush1.bf16.xpose.msra.mxu0 0
        %2226 = vmatprep.subr.bf16.mxu0 0
        %2227 = vmatpush1.bf16.xpose.msra.mxu0 0
        %2228 = vmatprep.subr.bf16.mxu0 0
        %2229 = vmatpush1.bf16.xpose.msra.mxu0 0
        %2230 = vmatprep.subr.bf16.mxu0 0
        %2231 = vmatpush1.bf16.xpose.msra.mxu0 0
        %2232 = vmatprep.subr.bf16.mxu0 0
        %2233 = vmatpush1.bf16.xpose.msra.mxu0 0
        %2234 = vmatprep.subr.bf16.mxu0 0
        %2235 = vmatpush1.bf16.xpose.msra.mxu0 0
        %2236 = vmatprep.subr.bf16.mxu0 0
        %2237 = vmatpush1.bf16.xpose.msra.mxu0 0
        %2238 = vmatprep.subr.bf16.mxu0 0
        %2239 = vmatpush1.bf16.xpose.msra.mxu0 0
        %2240 = vmatprep.subr.bf16.mxu0 0
        %2241 = vmatpush1.bf16.xpose.msra.mxu0 0
        %2242 = vmatprep.mubr.bf16.mxu0 0
        %2243 = vmatmul.mubr.bf16.gmra.mrb[0].mxu0 %v2199
        %v2244 = vpop.f32.mrb[0].mxu0
        %v2245 = vadd.f32 %v832, %v2244
        %v2246 = vpop.f32.mrb[0].mxu0
        %v2247 = vpop.f32.mrb[0].mxu0
        %v2248 = vadd.f32 %v832, %v2247
        %v2249 = vpop.f32.mrb[0].mxu0
        %2250 = vmatprep.mubr.bf16.mxu0 0
        %2251 = vmatmul.mubr.bf16.gmra.mrb[0].mxu0 %v2202
        %v2252 = vpop.f32.mrb[0].mxu0
        %v2253 = vadd.f32 %v832, %v2252
        %v2254 = vpop.f32.mrb[0].mxu0
        %v2255 = vpop.f32.mrb[0].mxu0
        %v2256 = vadd.f32 %v832, %v2255
        %v2257 = vpop.f32.mrb[0].mxu0
        %2258 = vdwg.mxu0
        %v2259 = vsel %vm896, %v2245, -inf
        %2260 = vmax.xlane.f32.xlu0 %v2259
        %v2261 = vpop.xlane.xlu0 %2260
        %v2262 = vsel %vm896, %v2248, -inf
        %2263 = vmax.xlane.f32.xlu0 %v2262
        %v2264 = vpop.xlane.xlu0 %2263
        %v2265 = vsel %vm896, %v2253, -inf
        %2266 = vmax.xlane.f32.xlu0 %v2265
        %v2267 = vpop.xlane.xlu0 %2266
        %v2268 = vsel %vm896, %v2256, -inf
        %2269 = vmax.xlane.f32.xlu0 %v2268
        %v2270 = vpop.xlane.xlu0 %2269
        %v2271 = vsub.f32 %v2245, %v2261
        %v2272 = vsub.f32 %v2248, %v2264
        %v2273 = vsub.f32 %v2253, %v2267
        %v2274 = vsub.f32 %v2256, %v2270
        %v2275 = vmul.f32 %v2271, 1.442695
        %v2276 = vpow.pop %v2275
        %v2277 = vmul.f32 %v2272, 1.442695
        %v2278 = vpow.pop %v2277
        %v2279 = vmul.f32 %v2273, 1.442695
        %v2280 = vpow.pop %v2279
        %v2281 = vmul.f32 %v2274, 1.442695
        %v2282 = vpow.pop %v2281
        %v2283 = vsel %vm896, %v2276, 0.0
        %2284 = vadd.xlane.f32.xlu0 %v2283
        %v2285 = vpop.xlane.xlu0 %2284
        %v2286 = vsel %vm896, %v2278, 0.0
        %2287 = vadd.xlane.f32.xlu0 %v2286
        %v2288 = vpop.xlane.xlu0 %2287
        %v2289 = vsel %vm896, %v2280, 0.0
        %2290 = vadd.xlane.f32.xlu0 %v2289
        %v2291 = vpop.xlane.xlu0 %2290
        %v2292 = vsel %vm896, %v2282, 0.0
        %2293 = vadd.xlane.f32.xlu0 %v2292
        %v2294 = vpop.xlane.xlu0 %2293
        %v2295 = vrcp.pop %v2285
        %v2296 = vrcp.pop %v2288
        %v2297 = vrcp.pop %v2291
        %v2298 = vrcp.pop %v2294
        %v2299 = vmul.f32 %v2276, %v2295
        %v2300 = vmul.f32 %v2278, %v2296
        %v2301 = vmul.f32 %v2280, %v2297
        %v2302 = vmul.f32 %v2282, %v2298
        %v2303 = vpack.c.bf16 %v2300, %v2299
        %v2304 = vpack.c.bf16 %v2302, %v2301
        %2305 = vrot.lane.b32.xlu0 %v826, 16
        %v2306 = vpop.permute.xlu0 %2305
        %2307 = vrot.lane.b32.xlu0 %v827, 16
        %v2308 = vpop.permute.xlu0 %2307
        %v2312 = vsel %vm896, %v2303, 0
        %v2315 = vsel %vm896, %v2304, 0
        %2317 = vmatprep.subr.bf16.mxu0 0
        %2318 = vmatpush1.bf16.msra.mxu0 %v2306
        %2319 = vmatprep.subr.bf16.mxu0 0
        %2320 = vmatpush1.bf16.msra.mxu0 %v2308
        %2321 = vmatprep.subr.bf16.mxu0 0
        %2322 = vmatpush1.bf16.msra.mxu0 0
        %2323 = vmatprep.subr.bf16.mxu0 0
        %2324 = vmatpush1.bf16.msra.mxu0 0
        %2325 = vmatprep.subr.bf16.mxu0 0
        %2326 = vmatpush1.bf16.msra.mxu0 0
        %2327 = vmatprep.subr.bf16.mxu0 0
        %2328 = vmatpush1.bf16.msra.mxu0 0
        %2329 = vmatprep.subr.bf16.mxu0 0
        %2330 = vmatpush1.bf16.msra.mxu0 0
        %2331 = vmatprep.subr.bf16.mxu0 0
        %2332 = vmatpush1.bf16.msra.mxu0 0
        %2333 = vmatprep.subr.bf16.mxu0 0
        %2334 = vmatpush1.bf16.msra.mxu0 0
        %2335 = vmatprep.subr.bf16.mxu0 0
        %2336 = vmatpush1.bf16.msra.mxu0 0
        %2337 = vmatprep.subr.bf16.mxu0 0
        %2338 = vmatpush1.bf16.msra.mxu0 0
        %2339 = vmatprep.subr.bf16.mxu0 0
        %2340 = vmatpush1.bf16.msra.mxu0 0
        %2341 = vmatprep.subr.bf16.mxu0 0
        %2342 = vmatpush1.bf16.msra.mxu0 0
        %2343 = vmatprep.subr.bf16.mxu0 0
        %2344 = vmatpush1.bf16.msra.mxu0 0
        %2345 = vmatprep.subr.bf16.mxu0 0
        %2346 = vmatpush1.bf16.msra.mxu0 0
        %2347 = vmatprep.subr.bf16.mxu0 0
        %2348 = vmatpush1.bf16.msra.mxu0 0
        %2349 = vmatprep.mubr.bf16.mxu0 0
        %2350 = vmatmul.mubr.bf16.gmra.mrb[0].mxu0 %v2312
        %v2351 = vpop.f32.mrb[0].mxu0
        %v2352 = vadd.f32 0.0, %v2351
        %v2353 = vpop.f32.mrb[0].mxu0
        %v2354 = vpop.f32.mrb[0].mxu0
        %v2355 = vadd.f32 0.0, %v2354
        %v2356 = vpop.f32.mrb[0].mxu0
        %2357 = vmatprep.mubr.bf16.mxu0 0
        %2358 = vmatmul.mubr.bf16.gmra.mrb[0].mxu0 %v2315
        %v2359 = vpop.f32.mrb[0].mxu0
        %v2360 = vadd.f32 0.0, %v2359
        %v2361 = vpop.f32.mrb[0].mxu0
        %v2362 = vpop.f32.mrb[0].mxu0
        %v2363 = vadd.f32 0.0, %v2362
        %v2364 = vpop.f32.mrb[0].mxu0
        %2365 = vdwg.mxu0
        %2370 = vrot.lane.b32.xlu0 %v2352, 112
        %v2371 = vpop.permute.xlu0 %2370
        %2372 = vrot.lane.b32.xlu0 %v2355, 112
        %v2373 = vpop.permute.xlu0 %2372
        %2374 = vrot.lane.b32.xlu0 %v2360, 112
        %v2375 = vpop.permute.xlu0 %2374
        %2376 = vrot.lane.b32.xlu0 %v2363, 112
        %v2377 = vpop.permute.xlu0 %2376
        %vm2382 = vcmask 1048448
        %2383 = vst.msk [vmem:[#allocation2] sm:$0xff] %vm2382, %v2371
        %2384 = vst.msk [vmem:[#allocation2 + $0x8] sm:$0xff] %vm2382, %v2373
        %2385 = vst.msk [vmem:[#allocation2 + $0x10] sm:$0xff] %vm2382, %v2375
        %2386 = vst.msk [vmem:[#allocation2 + $0x18] sm:$0xff] %vm2382, %v2377
        %v2387 = vld [vmem:[#allocation2] sm:$0xff]
        %v2388 = vld [vmem:[#allocation2 + $0x8] sm:$0xff]
        %v2389 = vld [vmem:[#allocation2 + $0x10] sm:$0xff]
        %v2390 = vld [vmem:[#allocation2 + $0x18] sm:$0xff]
        %v2391 = vpack.c.bf16 %v2388, %v2387
        %v2392 = vpack.c.bf16 %v2390, %v2389
        %v2393 = vld [vmem:[#allocation9] sm:$0xf]
        %v2394 = vld [vmem:[#allocation9 + $0x4] sm:$0xf]
        %v2395 = vld [vmem:[#allocation9 + $0x8] sm:$0xf]
        %v2396 = vld [vmem:[#allocation9 + $0xc] sm:$0xf]
        %v2397 = vld [vmem:[#allocation9 + $0x10] sm:$0xf]
        %v2398 = vld [vmem:[#allocation9 + $0x14] sm:$0xf]
        %v2399 = vld [vmem:[#allocation9 + $0x18] sm:$0xf]
        %v2400 = vld [vmem:[#allocation9 + $0x1c] sm:$0xf]
        %v2401 = vld [vmem:[#allocation9 + $0x20] sm:$0xf]
        %v2402 = vld [vmem:[#allocation9 + $0x24] sm:$0xf]
        %v2403 = vld [vmem:[#allocation9 + $0x28] sm:$0xf]
        %v2404 = vld [vmem:[#allocation9 + $0x2c] sm:$0xf]
        %v2405 = vld [vmem:[#allocation9 + $0x30] sm:$0xf]
        %v2406 = vld [vmem:[#allocation9 + $0x34] sm:$0xf]
        %v2407 = vld [vmem:[#allocation9 + $0x38] sm:$0xf]
        %v2408 = vld [vmem:[#allocation9 + $0x3c] sm:$0xf]
        %v2409 = vlaneseq
        %v2410 = vshrl.u32 %v2409, 7
        %v2411 = vsub.s32 0, %v2410
        %v2412 = vrot.slane %v535, %v2411
        %v2429 = vunpack.c.l.b16 %v2393
        %v2430 = vunpack.c.l.b16 %v2394
        %v2431 = vunpack.c.l.b16 %v2395
        %v2432 = vunpack.c.l.b16 %v2396
        %v2433 = vunpack.c.l.b16 %v2397
        %v2434 = vunpack.c.l.b16 %v2398
        %v2435 = vunpack.c.l.b16 %v2399
        %v2436 = vunpack.c.l.b16 %v2400
        %v2437 = vunpack.c.l.b16 %v2401
        %v2438 = vunpack.c.l.b16 %v2402
        %v2439 = vunpack.c.l.b16 %v2403
        %v2440 = vunpack.c.l.b16 %v2404
        %v2441 = vunpack.c.l.b16 %v2405
        %v2442 = vunpack.c.l.b16 %v2406
        %v2443 = vunpack.c.l.b16 %v2407
        %v2444 = vunpack.c.l.b16 %v2408
        %v2445 = vpack.c.b16 %v2430, %v2429
        %v2446 = vpack.c.b16 %v2432, %v2431
        %v2447 = vpack.c.b16 %v2434, %v2433
        %v2448 = vpack.c.b16 %v2436, %v2435
        %v2449 = vpack.c.b16 %v2438, %v2437
        %v2450 = vpack.c.b16 %v2440, %v2439
        %v2451 = vpack.c.b16 %v2442, %v2441
        %v2452 = vpack.c.b16 %v2444, %v2443
        %2461 = vmatprep.subr.bf16.mxu0 0
        %2462 = vmatpush1.bf16.msra.mxu0 %v2445
        %2463 = vmatprep.subr.bf16.mxu0 0
        %2464 = vmatpush1.bf16.msra.mxu0 %v2446
        %2465 = vmatprep.subr.bf16.mxu0 0
        %2466 = vmatpush1.bf16.msra.mxu0 %v2447
        %2467 = vmatprep.subr.bf16.mxu0 0
        %2468 = vmatpush1.bf16.msra.mxu0 %v2448
        %2469 = vmatprep.subr.bf16.mxu0 0
        %2470 = vmatpush1.bf16.msra.mxu0 %v2449
        %2471 = vmatprep.subr.bf16.mxu0 0
        %2472 = vmatpush1.bf16.msra.mxu0 %v2450
        %2473 = vmatprep.subr.bf16.mxu0 0
        %2474 = vmatpush1.bf16.msra.mxu0 %v2451
        %2475 = vmatprep.subr.bf16.mxu0 0
        %2476 = vmatpush1.bf16.msra.mxu0 %v2452
        %2477 = vmatprep.subr.bf16.mxu0 0
        %2478 = vmatpush1.bf16.msra.mxu0 0
        %2479 = vmatprep.subr.bf16.mxu0 0
        %2480 = vmatpush1.bf16.msra.mxu0 0
        %2481 = vmatprep.subr.bf16.mxu0 0
        %2482 = vmatpush1.bf16.msra.mxu0 0
        %2483 = vmatprep.subr.bf16.mxu0 0
        %2484 = vmatpush1.bf16.msra.mxu0 0
        %2485 = vmatprep.subr.bf16.mxu0 0
        %2486 = vmatpush1.bf16.msra.mxu0 0
        %2487 = vmatprep.subr.bf16.mxu0 0
        %2488 = vmatpush1.bf16.msra.mxu0 0
        %2489 = vmatprep.subr.bf16.mxu0 0
        %2490 = vmatpush1.bf16.msra.mxu0 0
        %2491 = vmatprep.subr.bf16.mxu0 0
        %2492 = vmatpush1.bf16.msra.mxu0 0
        %2493 = vmatprep.mubr.bf16.mxu0 0
        %2494 = vmatmul.mubr.bf16.gmra.mrb[0].mxu0 %v2391
        %v2495 = vpop.f32.mrb[0].mxu0
        %v2496 = vadd.f32 %v2412, %v2495
        %v2497 = vpop.f32.mrb[0].mxu0
        %v2498 = vpop.f32.mrb[0].mxu0
        %v2499 = vadd.f32 %v2412, %v2498
        %v2500 = vpop.f32.mrb[0].mxu0
        %2501 = vmatprep.mubr.bf16.mxu0 0
        %2502 = vmatmul.mubr.bf16.gmra.mrb[0].mxu0 %v2392
        %v2503 = vpop.f32.mrb[0].mxu0
        %v2504 = vadd.f32 %v2412, %v2503
        %v2505 = vpop.f32.mrb[0].mxu0
        %v2506 = vpop.f32.mrb[0].mxu0
        %v2507 = vadd.f32 %v2412, %v2506
        %v2508 = vpop.f32.mrb[0].mxu0
        %2509 = vdwg.mxu0
        %v2510 = vadd.f32 %v530, %v2496
        %v2511 = vadd.f32 %v531, %v2499
        %v2512 = vadd.f32 %v532, %v2504
        %v2513 = vadd.f32 %v533, %v2507
        %2514 = vadd.xlane.f32.xlu0 %v2510
        %v2515 = vpop.xlane.xlu0 %2514
        %2516 = vadd.xlane.f32.xlu0 %v2511
        %v2517 = vpop.xlane.xlu0 %2516
        %2518 = vadd.xlane.f32.xlu0 %v2512
        %v2519 = vpop.xlane.xlu0 %2518
        %2520 = vadd.xlane.f32.xlu0 %v2513
        %v2521 = vpop.xlane.xlu0 %2520
        %v2522 = vrcp.pop 128.0
        %v2523 = vmul.f32 %v2515, %v2522
        %v2524 = vmul.f32 %v2517, %v2522
        %v2525 = vmul.f32 %v2519, %v2522
        %v2526 = vmul.f32 %v2521, %v2522
        %v2527 = vmul.f32 %v2510, %v2510
        %v2528 = vmul.f32 %v2511, %v2511
        %v2529 = vmul.f32 %v2512, %v2512
        %v2530 = vmul.f32 %v2513, %v2513
        %2531 = vadd.xlane.f32.xlu0 %v2527
        %v2532 = vpop.xlane.xlu0 %2531
        %2533 = vadd.xlane.f32.xlu0 %v2528
        %v2534 = vpop.xlane.xlu0 %2533
        %2535 = vadd.xlane.f32.xlu0 %v2529
        %v2536 = vpop.xlane.xlu0 %2535
        %2537 = vadd.xlane.f32.xlu0 %v2530
        %v2538 = vpop.xlane.xlu0 %2537
        %v2539 = vmul.f32 %v2532, %v2522
        %v2540 = vmul.f32 %v2534, %v2522
        %v2541 = vmul.f32 %v2536, %v2522
        %v2542 = vmul.f32 %v2538, %v2522
        %v2543 = vmul.f32 %v2523, %v2523
        %v2544 = vmul.f32 %v2524, %v2524
        %v2545 = vmul.f32 %v2525, %v2525
        %v2546 = vmul.f32 %v2526, %v2526
        %v2547 = vsub.f32 %v2539, %v2543
        %v2548 = vsub.f32 %v2540, %v2544
        %v2549 = vsub.f32 %v2541, %v2545
        %v2550 = vsub.f32 %v2542, %v2546
        %v2551 = vsub.f32 %v2510, %v2523
        %v2552 = vsub.f32 %v2511, %v2524
        %v2553 = vsub.f32 %v2512, %v2525
        %v2554 = vsub.f32 %v2513, %v2526
        %v2555 = vadd.f32 %v2547, 1e-05
        %v2556 = vadd.f32 %v2548, 1e-05
        %v2557 = vadd.f32 %v2549, 1e-05
        %v2558 = vadd.f32 %v2550, 1e-05
        %v2559 = vrsqrt.pop %v2555
        %v2560 = vrsqrt.pop %v2556
        %v2561 = vrsqrt.pop %v2557
        %v2562 = vrsqrt.pop %v2558
        %v2563 = vmul.f32 %v2551, %v2559
        %v2564 = vmul.f32 %v2552, %v2560
        %v2565 = vmul.f32 %v2553, %v2561
        %v2566 = vmul.f32 %v2554, %v2562
        %v2567 = vlaneseq
        %v2568 = vshrl.u32 %v2567, 7
        %v2569 = vsub.s32 0, %v2568
        %v2570 = vrot.slane %v537, %v2569
        %v2571 = vmul.f32 %v2563, %v2570
        %v2572 = vmul.f32 %v2564, %v2570
        %v2573 = vmul.f32 %v2565, %v2570
        %v2574 = vmul.f32 %v2566, %v2570
        %v2575 = vlaneseq
        %v2576 = vshrl.u32 %v2575, 7
        %v2577 = vsub.s32 0, %v2576
        %v2578 = vrot.slane %v538, %v2577
        %v2579 = vadd.f32 %v2571, %v2578
        %v2580 = vadd.f32 %v2572, %v2578
        %v2581 = vadd.f32 %v2573, %v2578
        %v2582 = vadd.f32 %v2574, %v2578
        %v2583 = vpack.c.bf16 %v2580, %v2579
        %v2584 = vpack.c.bf16 %v2582, %v2581
        %v2585 = vld [vmem:[#allocation11] sm:$0xff]
        %v2586 = vld [vmem:[#allocation11 + $0x8] sm:$0xff]
        %v2587 = vld [vmem:[#allocation11 + $0x10] sm:$0xff]
        %v2588 = vld [vmem:[#allocation11 + $0x18] sm:$0xff]
        %v2589 = vld [vmem:[#allocation11 + $0x20] sm:$0xff]
        %v2590 = vld [vmem:[#allocation11 + $0x28] sm:$0xff]
        %v2591 = vld [vmem:[#allocation11 + $0x30] sm:$0xff]
        %v2592 = vld [vmem:[#allocation11 + $0x38] sm:$0xff]
        %v2593 = vld [vmem:[#allocation11 + $0x40] sm:$0xff]
        %v2594 = vld [vmem:[#allocation11 + $0x48] sm:$0xff]
        %v2595 = vld [vmem:[#allocation11 + $0x50] sm:$0xff]
        %v2596 = vld [vmem:[#allocation11 + $0x58] sm:$0xff]
        %v2597 = vld [vmem:[#allocation11 + $0x60] sm:$0xff]
        %v2598 = vld [vmem:[#allocation11 + $0x68] sm:$0xff]
        %v2599 = vld [vmem:[#allocation11 + $0x70] sm:$0xff]
        %v2600 = vld [vmem:[#allocation11 + $0x78] sm:$0xff]
        %v2601 = vld [vmem:[%s8] sm:$0x3]
        %v2603 = vlaneseq
        %v2604 = vshrl.u32 %v2603, 7
        %v2605 = vsub.s32 0, %v2604
        %v2606 = vrot.slane %v2601, %v2605
        %v2607 = vlaneseq
        %v2608 = vshrl.u32 %v2607, 7
        %v2609 = vsub.s32 1, %v2608
        %v2610 = vrot.slane %v2601, %v2609
        %v2629 = vunpack.c.l.b16 %v2585
        %v2630 = vunpack.c.h.b16 %v2585
        %v2631 = vunpack.c.l.b16 %v2586
        %v2632 = vunpack.c.h.b16 %v2586
        %v2633 = vunpack.c.l.b16 %v2587
        %v2634 = vunpack.c.h.b16 %v2587
        %v2635 = vunpack.c.l.b16 %v2588
        %v2636 = vunpack.c.h.b16 %v2588
        %v2637 = vunpack.c.l.b16 %v2589
        %v2638 = vunpack.c.h.b16 %v2589
        %v2639 = vunpack.c.l.b16 %v2590
        %v2640 = vunpack.c.h.b16 %v2590
        %v2641 = vunpack.c.l.b16 %v2591
        %v2642 = vunpack.c.h.b16 %v2591
        %v2643 = vunpack.c.l.b16 %v2592
        %v2644 = vunpack.c.h.b16 %v2592
        %v2645 = vunpack.c.l.b16 %v2593
        %v2646 = vunpack.c.h.b16 %v2593
        %v2647 = vunpack.c.l.b16 %v2594
        %v2648 = vunpack.c.h.b16 %v2594
        %v2649 = vunpack.c.l.b16 %v2595
        %v2650 = vunpack.c.h.b16 %v2595
        %v2651 = vunpack.c.l.b16 %v2596
        %v2652 = vunpack.c.h.b16 %v2596
        %v2653 = vunpack.c.l.b16 %v2597
        %v2654 = vunpack.c.h.b16 %v2597
        %v2655 = vunpack.c.l.b16 %v2598
        %v2656 = vunpack.c.h.b16 %v2598
        %v2657 = vunpack.c.l.b16 %v2599
        %v2658 = vunpack.c.h.b16 %v2599
        %v2659 = vunpack.c.l.b16 %v2600
        %v2660 = vunpack.c.h.b16 %v2600
        %v2661 = vpack.c.b16 %v2631, %v2629
        %v2662 = vpack.c.b16 %v2632, %v2630
        %v2663 = vpack.c.b16 %v2635, %v2633
        %v2664 = vpack.c.b16 %v2636, %v2634
        %v2665 = vpack.c.b16 %v2639, %v2637
        %v2666 = vpack.c.b16 %v2640, %v2638
        %v2667 = vpack.c.b16 %v2643, %v2641
        %v2668 = vpack.c.b16 %v2644, %v2642
        %v2669 = vpack.c.b16 %v2647, %v2645
        %v2670 = vpack.c.b16 %v2648, %v2646
        %v2671 = vpack.c.b16 %v2651, %v2649
        %v2672 = vpack.c.b16 %v2652, %v2650
        %v2673 = vpack.c.b16 %v2655, %v2653
        %v2674 = vpack.c.b16 %v2656, %v2654
        %v2675 = vpack.c.b16 %v2659, %v2657
        %v2676 = vpack.c.b16 %v2660, %v2658
        %2693 = vmatprep.subr.bf16.mxu0 %v2662
        %2694 = vmatpush1.bf16.msra.mxu0 %v2661
        %2695 = vmatprep.subr.bf16.mxu0 %v2664
        %2696 = vmatpush1.bf16.msra.mxu0 %v2663
        %2697 = vmatprep.subr.bf16.mxu0 %v2666
        %2698 = vmatpush1.bf16.msra.mxu0 %v2665
        %2699 = vmatprep.subr.bf16.mxu0 %v2668
        %2700 = vmatpush1.bf16.msra.mxu0 %v2667
        %2701 = vmatprep.subr.bf16.mxu0 %v2670
        %2702 = vmatpush1.bf16.msra.mxu0 %v2669
        %2703 = vmatprep.subr.bf16.mxu0 %v2672
        %2704 = vmatpush1.bf16.msra.mxu0 %v2671
        %2705 = vmatprep.subr.bf16.mxu0 %v2674
        %2706 = vmatpush1.bf16.msra.mxu0 %v2673
        %2707 = vmatprep.subr.bf16.mxu0 %v2676
        %2708 = vmatpush1.bf16.msra.mxu0 %v2675
        %2709 = vmatprep.subr.bf16.mxu0 0
        %2710 = vmatpush1.bf16.msra.mxu0 0
        %2711 = vmatprep.subr.bf16.mxu0 0
        %2712 = vmatpush1.bf16.msra.mxu0 0
        %2713 = vmatprep.subr.bf16.mxu0 0
        %2714 = vmatpush1.bf16.msra.mxu0 0
        %2715 = vmatprep.subr.bf16.mxu0 0
        %2716 = vmatpush1.bf16.msra.mxu0 0
        %2717 = vmatprep.subr.bf16.mxu0 0
        %2718 = vmatpush1.bf16.msra.mxu0 0
        %2719 = vmatprep.subr.bf16.mxu0 0
        %2720 = vmatpush1.bf16.msra.mxu0 0
        %2721 = vmatprep.subr.bf16.mxu0 0
        %2722 = vmatpush1.bf16.msra.mxu0 0
        %2723 = vmatprep.subr.bf16.mxu0 0
        %2724 = vmatpush1.bf16.msra.mxu0 0
        %2725 = vmatprep.mubr.bf16.mxu0 0
        %2726 = vmatmul.mubr.bf16.gmra.mrb[0].mxu0 %v2583
        %v2727 = vpop.f32.mrb[0].mxu0
        %v2728 = vadd.f32 %v2606, %v2727
        %v2729 = vpop.f32.mrb[0].mxu0
        %v2730 = vadd.f32 %v2610, %v2729
        %v2731 = vpop.f32.mrb[0].mxu0
        %v2732 = vadd.f32 %v2606, %v2731
        %v2733 = vpop.f32.mrb[0].mxu0
        %v2734 = vadd.f32 %v2610, %v2733
        %2735 = vmatprep.mubr.bf16.mxu0 0
        %2736 = vmatmul.mubr.bf16.gmra.mrb[0].mxu0 %v2584
        %v2737 = vpop.f32.mrb[0].mxu0
        %v2738 = vadd.f32 %v2606, %v2737
        %v2739 = vpop.f32.mrb[0].mxu0
        %v2740 = vadd.f32 %v2610, %v2739
        %v2741 = vpop.f32.mrb[0].mxu0
        %v2742 = vadd.f32 %v2606, %v2741
        %v2743 = vpop.f32.mrb[0].mxu0
        %v2744 = vadd.f32 %v2610, %v2743
        %2745 = vdwg.mxu0
        %v2746 = vmax.f32 %v2728, 0.0
        %v2747 = vmax.f32 %v2730, 0.0
        %v2748 = vmax.f32 %v2732, 0.0
        %v2749 = vmax.f32 %v2734, 0.0
        %v2750 = vmax.f32 %v2738, 0.0
        %v2751 = vmax.f32 %v2740, 0.0
        %v2752 = vmax.f32 %v2742, 0.0
        %v2753 = vmax.f32 %v2744, 0.0
        %v2754 = vpack.c.bf16 %v2748, %v2746
        %v2755 = vpack.c.bf16 %v2749, %v2747
        %v2756 = vpack.c.bf16 %v2752, %v2750
        %v2757 = vpack.c.bf16 %v2753, %v2751
        %v2758 = vld [vmem:[#allocation12] sm:$0xf]
        %v2759 = vld [vmem:[#allocation12 + $0x4] sm:$0xf]
        %v2760 = vld [vmem:[#allocation12 + $0x8] sm:$0xf]
        %v2761 = vld [vmem:[#allocation12 + $0xc] sm:$0xf]
        %v2762 = vld [vmem:[#allocation12 + $0x10] sm:$0xf]
        %v2763 = vld [vmem:[#allocation12 + $0x14] sm:$0xf]
        %v2764 = vld [vmem:[#allocation12 + $0x18] sm:$0xf]
        %v2765 = vld [vmem:[#allocation12 + $0x1c] sm:$0xf]
        %v2766 = vld [vmem:[#allocation12 + $0x20] sm:$0xf]
        %v2767 = vld [vmem:[#allocation12 + $0x24] sm:$0xf]
        %v2768 = vld [vmem:[#allocation12 + $0x28] sm:$0xf]
        %v2769 = vld [vmem:[#allocation12 + $0x2c] sm:$0xf]
        %v2770 = vld [vmem:[#allocation12 + $0x30] sm:$0xf]
        %v2771 = vld [vmem:[#allocation12 + $0x34] sm:$0xf]
        %v2772 = vld [vmem:[#allocation12 + $0x38] sm:$0xf]
        %v2773 = vld [vmem:[#allocation12 + $0x3c] sm:$0xf]
        %v2774 = vld [vmem:[#allocation12 + $0x40] sm:$0xf]
        %v2775 = vld [vmem:[#allocation12 + $0x44] sm:$0xf]
        %v2776 = vld [vmem:[#allocation12 + $0x48] sm:$0xf]
        %v2777 = vld [vmem:[#allocation12 + $0x4c] sm:$0xf]
        %v2778 = vld [vmem:[#allocation12 + $0x50] sm:$0xf]
        %v2779 = vld [vmem:[#allocation12 + $0x54] sm:$0xf]
        %v2780 = vld [vmem:[#allocation12 + $0x58] sm:$0xf]
        %v2781 = vld [vmem:[#allocation12 + $0x5c] sm:$0xf]
        %v2782 = vld [vmem:[#allocation12 + $0x60] sm:$0xf]
        %v2783 = vld [vmem:[#allocation12 + $0x64] sm:$0xf]
        %v2784 = vld [vmem:[#allocation12 + $0x68] sm:$0xf]
        %v2785 = vld [vmem:[#allocation12 + $0x6c] sm:$0xf]
        %v2786 = vld [vmem:[#allocation12 + $0x70] sm:$0xf]
        %v2787 = vld [vmem:[#allocation12 + $0x74] sm:$0xf]
        %v2788 = vld [vmem:[#allocation12 + $0x78] sm:$0xf]
        %v2789 = vld [vmem:[#allocation12 + $0x7c] sm:$0xf]
        %v2790 = vlaneseq
        %v2791 = vshrl.u32 %v2790, 7
        %v2792 = vsub.s32 0, %v2791
        %v2793 = vrot.slane %v536, %v2792
        %v2826 = vunpack.c.l.b16 %v2758
        %v2827 = vunpack.c.l.b16 %v2759
        %v2828 = vunpack.c.l.b16 %v2760
        %v2829 = vunpack.c.l.b16 %v2761
        %v2830 = vunpack.c.l.b16 %v2762
        %v2831 = vunpack.c.l.b16 %v2763
        %v2832 = vunpack.c.l.b16 %v2764
        %v2833 = vunpack.c.l.b16 %v2765
        %v2834 = vunpack.c.l.b16 %v2766
        %v2835 = vunpack.c.l.b16 %v2767
        %v2836 = vunpack.c.l.b16 %v2768
        %v2837 = vunpack.c.l.b16 %v2769
        %v2838 = vunpack.c.l.b16 %v2770
        %v2839 = vunpack.c.l.b16 %v2771
        %v2840 = vunpack.c.l.b16 %v2772
        %v2841 = vunpack.c.l.b16 %v2773
        %v2842 = vunpack.c.l.b16 %v2774
        %v2843 = vunpack.c.l.b16 %v2775
        %v2844 = vunpack.c.l.b16 %v2776
        %v2845 = vunpack.c.l.b16 %v2777
        %v2846 = vunpack.c.l.b16 %v2778
        %v2847 = vunpack.c.l.b16 %v2779
        %v2848 = vunpack.c.l.b16 %v2780
        %v2849 = vunpack.c.l.b16 %v2781
        %v2850 = vunpack.c.l.b16 %v2782
        %v2851 = vunpack.c.l.b16 %v2783
        %v2852 = vunpack.c.l.b16 %v2784
        %v2853 = vunpack.c.l.b16 %v2785
        %v2854 = vunpack.c.l.b16 %v2786
        %v2855 = vunpack.c.l.b16 %v2787
        %v2856 = vunpack.c.l.b16 %v2788
        %v2857 = vunpack.c.l.b16 %v2789
        %v2858 = vpack.c.b16 %v2827, %v2826
        %v2859 = vpack.c.b16 %v2829, %v2828
        %v2860 = vpack.c.b16 %v2831, %v2830
        %v2861 = vpack.c.b16 %v2833, %v2832
        %v2862 = vpack.c.b16 %v2835, %v2834
        %v2863 = vpack.c.b16 %v2837, %v2836
        %v2864 = vpack.c.b16 %v2839, %v2838
        %v2865 = vpack.c.b16 %v2841, %v2840
        %v2866 = vpack.c.b16 %v2843, %v2842
        %v2867 = vpack.c.b16 %v2845, %v2844
        %v2868 = vpack.c.b16 %v2847, %v2846
        %v2869 = vpack.c.b16 %v2849, %v2848
        %v2870 = vpack.c.b16 %v2851, %v2850
        %v2871 = vpack.c.b16 %v2853, %v2852
        %v2872 = vpack.c.b16 %v2855, %v2854
        %v2873 = vpack.c.b16 %v2857, %v2856
        %2890 = vmatprep.subr.bf16.mxu0 0
        %2891 = vmatpush1.bf16.msra.mxu0 %v2858
        %2892 = vmatprep.subr.bf16.mxu0 0
        %2893 = vmatpush1.bf16.msra.mxu0 %v2859
        %2894 = vmatprep.subr.bf16.mxu0 0
        %2895 = vmatpush1.bf16.msra.mxu0 %v2860
        %2896 = vmatprep.subr.bf16.mxu0 0
        %2897 = vmatpush1.bf16.msra.mxu0 %v2861
        %2898 = vmatprep.subr.bf16.mxu0 0
        %2899 = vmatpush1.bf16.msra.mxu0 %v2862
        %2900 = vmatprep.subr.bf16.mxu0 0
        %2901 = vmatpush1.bf16.msra.mxu0 %v2863
        %2902 = vmatprep.subr.bf16.mxu0 0
        %2903 = vmatpush1.bf16.msra.mxu0 %v2864
        %2904 = vmatprep.subr.bf16.mxu0 0
        %2905 = vmatpush1.bf16.msra.mxu0 %v2865
        %2906 = vmatprep.subr.bf16.mxu0 0
        %2907 = vmatpush1.bf16.msra.mxu0 %v2866
        %2908 = vmatprep.subr.bf16.mxu0 0
        %2909 = vmatpush1.bf16.msra.mxu0 %v2867
        %2910 = vmatprep.subr.bf16.mxu0 0
        %2911 = vmatpush1.bf16.msra.mxu0 %v2868
        %2912 = vmatprep.subr.bf16.mxu0 0
        %2913 = vmatpush1.bf16.msra.mxu0 %v2869
        %2914 = vmatprep.subr.bf16.mxu0 0
        %2915 = vmatpush1.bf16.msra.mxu0 %v2870
        %2916 = vmatprep.subr.bf16.mxu0 0
        %2917 = vmatpush1.bf16.msra.mxu0 %v2871
        %2918 = vmatprep.subr.bf16.mxu0 0
        %2919 = vmatpush1.bf16.msra.mxu0 %v2872
        %2920 = vmatprep.subr.bf16.mxu0 0
        %2921 = vmatpush1.bf16.msra.mxu0 %v2873
        %2922 = vmatprep.mubr.bf16.mxu0 %v2755
        %2923 = vmatmul.mubr.bf16.gmra.mrb[0].mxu0 %v2754
        %v2924 = vpop.f32.mrb[0].mxu0
        %v2925 = vadd.f32 %v2793, %v2924
        %v2926 = vpop.f32.mrb[0].mxu0
        %v2927 = vpop.f32.mrb[0].mxu0
        %v2928 = vadd.f32 %v2793, %v2927
        %v2929 = vpop.f32.mrb[0].mxu0
        %2930 = vmatprep.mubr.bf16.mxu0 %v2757
        %2931 = vmatmul.mubr.bf16.gmra.mrb[0].mxu0 %v2756
        %v2932 = vpop.f32.mrb[0].mxu0
        %v2933 = vadd.f32 %v2793, %v2932
        %v2934 = vpop.f32.mrb[0].mxu0
        %v2935 = vpop.f32.mrb[0].mxu0
        %v2936 = vadd.f32 %v2793, %v2935
        %v2937 = vpop.f32.mrb[0].mxu0
        %2938 = vdwg.mxu0
        %v2939 = vadd.f32 %v2579, %v2925
        %v2940 = vadd.f32 %v2580, %v2928
        %v2941 = vadd.f32 %v2581, %v2933
        %v2942 = vadd.f32 %v2582, %v2936
        %2943 = vadd.xlane.f32.xlu0 %v2939
        %v2944 = vpop.xlane.xlu0 %2943
        %2945 = vadd.xlane.f32.xlu0 %v2940
        %v2946 = vpop.xlane.xlu0 %2945
        %2947 = vadd.xlane.f32.xlu0 %v2941
        %v2948 = vpop.xlane.xlu0 %2947
        %2949 = vadd.xlane.f32.xlu0 %v2942
        %v2950 = vpop.xlane.xlu0 %2949
        %v2951 = vmul.f32 %v2944, %v2522
        %v2952 = vmul.f32 %v2946, %v2522
        %v2953 = vmul.f32 %v2948, %v2522
        %v2954 = vmul.f32 %v2950, %v2522
        %v2955 = vmul.f32 %v2939, %v2939
        %v2956 = vmul.f32 %v2940, %v2940
        %v2957 = vmul.f32 %v2941, %v2941
        %v2958 = vmul.f32 %v2942, %v2942
        %2959 = vadd.xlane.f32.xlu0 %v2955
        %v2960 = vpop.xlane.xlu0 %2959
        %2961 = vadd.xlane.f32.xlu0 %v2956
        %v2962 = vpop.xlane.xlu0 %2961
        %2963 = vadd.xlane.f32.xlu0 %v2957
        %v2964 = vpop.xlane.xlu0 %2963
        %2965 = vadd.xlane.f32.xlu0 %v2958
        %v2966 = vpop.xlane.xlu0 %2965
        %v2967 = vmul.f32 %v2960, %v2522
        %v2968 = vmul.f32 %v2962, %v2522
        %v2969 = vmul.f32 %v2964, %v2522
        %v2970 = vmul.f32 %v2966, %v2522
        %v2971 = vmul.f32 %v2951, %v2951
        %v2972 = vmul.f32 %v2952, %v2952
        %v2973 = vmul.f32 %v2953, %v2953
        %v2974 = vmul.f32 %v2954, %v2954
        %v2975 = vsub.f32 %v2967, %v2971
        %v2976 = vsub.f32 %v2968, %v2972
        %v2977 = vsub.f32 %v2969, %v2973
        %v2978 = vsub.f32 %v2970, %v2974
        %v2979 = vsub.f32 %v2939, %v2951
        %v2980 = vsub.f32 %v2940, %v2952
        %v2981 = vsub.f32 %v2941, %v2953
        %v2982 = vsub.f32 %v2942, %v2954
        %v2983 = vadd.f32 %v2975, 1e-05
        %v2984 = vadd.f32 %v2976, 1e-05
        %v2985 = vadd.f32 %v2977, 1e-05
        %v2986 = vadd.f32 %v2978, 1e-05
        %v2987 = vrsqrt.pop %v2983
        %v2988 = vrsqrt.pop %v2984
        %v2989 = vrsqrt.pop %v2985
        %v2990 = vrsqrt.pop %v2986
        %v2991 = vmul.f32 %v2979, %v2987
        %v2992 = vmul.f32 %v2980, %v2988
        %v2993 = vmul.f32 %v2981, %v2989
        %v2994 = vmul.f32 %v2982, %v2990
        %v2995 = vlaneseq
        %v2996 = vshrl.u32 %v2995, 7
        %v2997 = vsub.s32 0, %v2996
        %v2998 = vrot.slane %v539, %v2997
        %v2999 = vmul.f32 %v2991, %v2998
        %v3000 = vmul.f32 %v2992, %v2998
        %v3001 = vmul.f32 %v2993, %v2998
        %v3002 = vmul.f32 %v2994, %v2998
        %v3003 = vlaneseq
        %v3004 = vshrl.u32 %v3003, 7
        %v3005 = vsub.s32 0, %v3004
        %v3006 = vrot.slane %v540, %v3005
        %v3007 = vadd.f32 %v2999, %v3006
        %v3008 = vadd.f32 %v3000, %v3006
        %v3009 = vadd.f32 %v3001, %v3006
        %v3010 = vadd.f32 %v3002, %v3006
        %s3011 = scalar_lea.vmem %s10, 8
        %v3012 = vld [vmem:[%s3011] sm:$0x1]
        %v3013 = vld [vmem:[%s3011 + $0x1] sm:$0x1]
        %v3014 = vld [vmem:[%s3011 + $0x2] sm:$0x1]
        %v3015 = vld [vmem:[%s3011 + $0x3] sm:$0x1]
        %v3016 = vld [vmem:[%s3011 + $0x4] sm:$0x1]
        %v3017 = vld [vmem:[%s3011 + $0x5] sm:$0x1]
        %v3018 = vpack.c.bf16 %v3008, %v3007
        %v3019 = vpack.c.bf16 %v3010, %v3009
        %s3020 = scalar_lea.vmem [#allocation6], 192
        %v3021 = vld [vmem:[%s3020] sm:$0xff]
        %v3022 = vld [vmem:[%s3020 + $0x8] sm:$0xf]
        %v3023 = vld [vmem:[%s3020 + $0xc] sm:$0xff]
        %v3024 = vld [vmem:[%s3020 + $0x14] sm:$0xf]
        %v3025 = vld [vmem:[%s3020 + $0x18] sm:$0xff]
        %v3026 = vld [vmem:[%s3020 + $0x20] sm:$0xf]
        %v3027 = vld [vmem:[%s3020 + $0x24] sm:$0xff]
        %v3028 = vld [vmem:[%s3020 + $0x2c] sm:$0xf]
        %v3029 = vld [vmem:[%s3020 + $0x30] sm:$0xff]
        %v3030 = vld [vmem:[%s3020 + $0x38] sm:$0xf]
        %v3031 = vld [vmem:[%s3020 + $0x3c] sm:$0xff]
        %v3032 = vld [vmem:[%s3020 + $0x44] sm:$0xf]
        %v3033 = vld [vmem:[%s3020 + $0x48] sm:$0xff]
        %v3034 = vld [vmem:[%s3020 + $0x50] sm:$0xf]
        %v3035 = vld [vmem:[%s3020 + $0x54] sm:$0xff]
        %v3036 = vld [vmem:[%s3020 + $0x5c] sm:$0xf]
        %v3037 = vld [vmem:[%s3020 + $0x60] sm:$0xff]
        %v3038 = vld [vmem:[%s3020 + $0x68] sm:$0xf]
        %v3039 = vld [vmem:[%s3020 + $0x6c] sm:$0xff]
        %v3040 = vld [vmem:[%s3020 + $0x74] sm:$0xf]
        %v3041 = vld [vmem:[%s3020 + $0x78] sm:$0xff]
        %v3042 = vld [vmem:[%s3020 + $0x80] sm:$0xf]
        %v3043 = vld [vmem:[%s3020 + $0x84] sm:$0xff]
        %v3044 = vld [vmem:[%s3020 + $0x8c] sm:$0xf]
        %v3045 = vld [vmem:[%s3020 + $0x90] sm:$0xff]
        %v3046 = vld [vmem:[%s3020 + $0x98] sm:$0xf]
        %v3047 = vld [vmem:[%s3020 + $0x9c] sm:$0xff]
        %v3048 = vld [vmem:[%s3020 + $0xa4] sm:$0xf]
        %v3049 = vld [vmem:[%s3020 + $0xa8] sm:$0xff]
        %v3050 = vld [vmem:[%s3020 + $0xb0] sm:$0xf]
        %v3051 = vld [vmem:[%s3020 + $0xb4] sm:$0xff]
        %v3052 = vld [vmem:[%s3020 + $0xbc] sm:$0xf]
        %s3053 = scalar_lea.vmem [#allocation8], 3
        %v3054 = vld [vmem:[%s3053] sm:$0x7]
        %v3056 = vlaneseq
        %v3057 = vshrl.u32 %v3056, 7
        %v3058 = vsub.s32 0, %v3057
        %v3059 = vrot.slane %v3054, %v3058
        %v3060 = vlaneseq
        %v3061 = vshrl.u32 %v3060, 7
        %v3062 = vsub.s32 1, %v3061
        %v3063 = vrot.slane %v3054, %v3062
        %v3064 = vlaneseq
        %v3065 = vshrl.u32 %v3064, 7
        %v3066 = vsub.s32 2, %v3065
        %v3067 = vrot.slane %v3054, %v3066
        %v3103 = vunpack.c.l.b16 %v3021
        %v3104 = vunpack.c.h.b16 %v3021
        %v3105 = vunpack.c.l.b16 %v3022
        %v3106 = vunpack.c.l.b16 %v3023
        %v3107 = vunpack.c.h.b16 %v3023
        %v3108 = vunpack.c.l.b16 %v3024
        %v3109 = vunpack.c.l.b16 %v3025
        %v3110 = vunpack.c.h.b16 %v3025
        %v3111 = vunpack.c.l.b16 %v3026
        %v3112 = vunpack.c.l.b16 %v3027
        %v3113 = vunpack.c.h.b16 %v3027
        %v3114 = vunpack.c.l.b16 %v3028
        %v3115 = vunpack.c.l.b16 %v3029
        %v3116 = vunpack.c.h.b16 %v3029
        %v3117 = vunpack.c.l.b16 %v3030
        %v3118 = vunpack.c.l.b16 %v3031
        %v3119 = vunpack.c.h.b16 %v3031
        %v3120 = vunpack.c.l.b16 %v3032
        %v3121 = vunpack.c.l.b16 %v3033
        %v3122 = vunpack.c.h.b16 %v3033
        %v3123 = vunpack.c.l.b16 %v3034
        %v3124 = vunpack.c.l.b16 %v3035
        %v3125 = vunpack.c.h.b16 %v3035
        %v3126 = vunpack.c.l.b16 %v3036
        %v3127 = vunpack.c.l.b16 %v3037
        %v3128 = vunpack.c.h.b16 %v3037
        %v3129 = vunpack.c.l.b16 %v3038
        %v3130 = vunpack.c.l.b16 %v3039
        %v3131 = vunpack.c.h.b16 %v3039
        %v3132 = vunpack.c.l.b16 %v3040
        %v3133 = vunpack.c.l.b16 %v3041
        %v3134 = vunpack.c.h.b16 %v3041
        %v3135 = vunpack.c.l.b16 %v3042
        %v3136 = vunpack.c.l.b16 %v3043
        %v3137 = vunpack.c.h.b16 %v3043
        %v3138 = vunpack.c.l.b16 %v3044
        %v3139 = vunpack.c.l.b16 %v3045
        %v3140 = vunpack.c.h.b16 %v3045
        %v3141 = vunpack.c.l.b16 %v3046
        %v3142 = vunpack.c.l.b16 %v3047
        %v3143 = vunpack.c.h.b16 %v3047
        %v3144 = vunpack.c.l.b16 %v3048
        %v3145 = vunpack.c.l.b16 %v3049
        %v3146 = vunpack.c.h.b16 %v3049
        %v3147 = vunpack.c.l.b16 %v3050
        %v3148 = vunpack.c.l.b16 %v3051
        %v3149 = vunpack.c.h.b16 %v3051
        %v3150 = vunpack.c.l.b16 %v3052
        %v3151 = vpack.c.b16 %v3106, %v3103
        %v3152 = vpack.c.b16 %v3107, %v3104
        %v3153 = vpack.c.b16 %v3108, %v3105
        %v3154 = vpack.c.b16 %v3112, %v3109
        %v3155 = vpack.c.b16 %v3113, %v3110
        %v3156 = vpack.c.b16 %v3114, %v3111
        %v3157 = vpack.c.b16 %v3118, %v3115
        %v3158 = vpack.c.b16 %v3119, %v3116
        %v3159 = vpack.c.b16 %v3120, %v3117
        %v3160 = vpack.c.b16 %v3124, %v3121
        %v3161 = vpack.c.b16 %v3125, %v3122
        %v3162 = vpack.c.b16 %v3126, %v3123
        %v3163 = vpack.c.b16 %v3130, %v3127
        %v3164 = vpack.c.b16 %v3131, %v3128
        %v3165 = vpack.c.b16 %v3132, %v3129
        %v3166 = vpack.c.b16 %v3136, %v3133
        %v3167 = vpack.c.b16 %v3137, %v3134
        %v3168 = vpack.c.b16 %v3138, %v3135
        %v3169 = vpack.c.b16 %v3142, %v3139
        %v3170 = vpack.c.b16 %v3143, %v3140
        %v3171 = vpack.c.b16 %v3144, %v3141
        %v3172 = vpack.c.b16 %v3148, %v3145
        %v3173 = vpack.c.b16 %v3149, %v3146
        %v3174 = vpack.c.b16 %v3150, %v3147
        %3199 = vmatprep.subr.bf16.mxu0 %v3152
        %3200 = vmatpush1.bf16.msra.mxu0 %v3151
        %3201 = vmatprep.subr.bf16.mxu0 %v3155
        %3202 = vmatpush1.bf16.msra.mxu0 %v3154
        %3203 = vmatprep.subr.bf16.mxu0 %v3158
        %3204 = vmatpush1.bf16.msra.mxu0 %v3157
        %3205 = vmatprep.subr.bf16.mxu0 %v3161
        %3206 = vmatpush1.bf16.msra.mxu0 %v3160
        %3207 = vmatprep.subr.bf16.mxu0 %v3164
        %3208 = vmatpush1.bf16.msra.mxu0 %v3163
        %3209 = vmatprep.subr.bf16.mxu0 %v3167
        %3210 = vmatpush1.bf16.msra.mxu0 %v3166
        %3211 = vmatprep.subr.bf16.mxu0 %v3170
        %3212 = vmatpush1.bf16.msra.mxu0 %v3169
        %3213 = vmatprep.subr.bf16.mxu0 %v3173
        %3214 = vmatpush1.bf16.msra.mxu0 %v3172
        %3215 = vmatprep.subr.bf16.mxu0 0
        %3216 = vmatpush1.bf16.msra.mxu0 0
        %3217 = vmatprep.subr.bf16.mxu0 0
        %3218 = vmatpush1.bf16.msra.mxu0 0
        %3219 = vmatprep.subr.bf16.mxu0 0
        %3220 = vmatpush1.bf16.msra.mxu0 0
        %3221 = vmatprep.subr.bf16.mxu0 0
        %3222 = vmatpush1.bf16.msra.mxu0 0
        %3223 = vmatprep.subr.bf16.mxu0 0
        %3224 = vmatpush1.bf16.msra.mxu0 0
        %3225 = vmatprep.subr.bf16.mxu0 0
        %3226 = vmatpush1.bf16.msra.mxu0 0
        %3227 = vmatprep.subr.bf16.mxu0 0
        %3228 = vmatpush1.bf16.msra.mxu0 0
        %3229 = vmatprep.subr.bf16.mxu0 0
        %3230 = vmatpush1.bf16.msra.mxu0 0
        %3231 = vmatprep.mubr.bf16.mxu0 0
        %3232 = vmatmul.mubr.bf16.gmra.mrb[0].mxu0 %v3018
        %v3233 = vpop.f32.mrb[0].mxu0
        %v3234 = vadd.f32 %v3059, %v3233
        %v3235 = vpop.f32.mrb[0].mxu0
        %v3236 = vadd.f32 %v3063, %v3235
        %v3237 = vpop.f32.mrb[0].mxu0
        %v3238 = vadd.f32 %v3059, %v3237
        %v3239 = vpop.f32.mrb[0].mxu0
        %v3240 = vadd.f32 %v3063, %v3239
        %3241 = vmatprep.mubr.bf16.mxu0 0
        %3242 = vmatmul.mubr.bf16.gmra.mrb[0].mxu0 %v3019
        %v3243 = vpop.f32.mrb[0].mxu0
        %v3244 = vadd.f32 %v3059, %v3243
        %v3245 = vpop.f32.mrb[0].mxu0
        %v3246 = vadd.f32 %v3063, %v3245
        %v3247 = vpop.f32.mrb[0].mxu0
        %v3248 = vadd.f32 %v3059, %v3247
        %v3249 = vpop.f32.mrb[0].mxu0
        %v3250 = vadd.f32 %v3063, %v3249
        %3251 = vdwg.mxu0
        %3252 = vmatprep.subr.bf16.mxu0 0
        %3253 = vmatpush1.bf16.msra.mxu0 %v3153
        %3254 = vmatprep.subr.bf16.mxu0 0
        %3255 = vmatpush1.bf16.msra.mxu0 %v3156
        %3256 = vmatprep.subr.bf16.mxu0 0
        %3257 = vmatpush1.bf16.msra.mxu0 %v3159
        %3258 = vmatprep.subr.bf16.mxu0 0
        %3259 = vmatpush1.bf16.msra.mxu0 %v3162
        %3260 = vmatprep.subr.bf16.mxu0 0
        %3261 = vmatpush1.bf16.msra.mxu0 %v3165
        %3262 = vmatprep.subr.bf16.mxu0 0
        %3263 = vmatpush1.bf16.msra.mxu0 %v3168
        %3264 = vmatprep.subr.bf16.mxu0 0
        %3265 = vmatpush1.bf16.msra.mxu0 %v3171
        %3266 = vmatprep.subr.bf16.mxu0 0
        %3267 = vmatpush1.bf16.msra.mxu0 %v3174
        %3268 = vmatprep.subr.bf16.mxu0 0
        %3269 = vmatpush1.bf16.msra.mxu0 0
        %3270 = vmatprep.subr.bf16.mxu0 0
        %3271 = vmatpush1.bf16.msra.mxu0 0
        %3272 = vmatprep.subr.bf16.mxu0 0
        %3273 = vmatpush1.bf16.msra.mxu0 0
        %3274 = vmatprep.subr.bf16.mxu0 0
        %3275 = vmatpush1.bf16.msra.mxu0 0
        %3276 = vmatprep.subr.bf16.mxu0 0
        %3277 = vmatpush1.bf16.msra.mxu0 0
        %3278 = vmatprep.subr.bf16.mxu0 0
        %3279 = vmatpush1.bf16.msra.mxu0 0
        %3280 = vmatprep.subr.bf16.mxu0 0
        %3281 = vmatpush1.bf16.msra.mxu0 0
        %3282 = vmatprep.subr.bf16.mxu0 0
        %3283 = vmatpush1.bf16.msra.mxu0 0
        %3284 = vmatprep.mubr.bf16.mxu0 0
        %3285 = vmatmul.mubr.bf16.gmra.mrb[0].mxu0 %v3018
        %v3286 = vpop.f32.mrb[0].mxu0
        %v3287 = vadd.f32 %v3067, %v3286
        %v3288 = vpop.f32.mrb[0].mxu0
        %v3289 = vpop.f32.mrb[0].mxu0
        %v3290 = vadd.f32 %v3067, %v3289
        %v3291 = vpop.f32.mrb[0].mxu0
        %3292 = vmatprep.mubr.bf16.mxu0 0
        %3293 = vmatmul.mubr.bf16.gmra.mrb[0].mxu0 %v3019
        %v3294 = vpop.f32.mrb[0].mxu0
        %v3295 = vadd.f32 %v3067, %v3294
        %v3296 = vpop.f32.mrb[0].mxu0
        %v3297 = vpop.f32.mrb[0].mxu0
        %v3298 = vadd.f32 %v3067, %v3297
        %v3299 = vpop.f32.mrb[0].mxu0
        %3300 = vdwg.mxu0
        %v3301 = vpack.c.bf16 %v3238, %v3234
        %v3302 = vpack.c.bf16 %v3248, %v3244
        %v3303 = vpack.c.bf16 %v3240, %v3236
        %v3304 = vpack.c.bf16 %v3250, %v3246
        %v3305 = vpack.c.bf16 %v3290, %v3287
        %v3306 = vpack.c.bf16 %v3298, %v3295
        %v3308 = vsel %vm834, %v3301, 0
        %v3311 = vsel %vm834, %v3302, 0
        %v3314 = vsel %vm834, %v3303, 0
        %v3317 = vsel %vm834, %v3304, 0
        %3319 = vmatprep.subr.bf16.mxu0 0
        %3320 = vmatpush1.bf16.xpose.msra.mxu0 %v3314
        %3321 = vmatprep.subr.bf16.mxu0 0
        %3322 = vmatpush1.bf16.xpose.msra.mxu0 %v3317
        %3323 = vmatprep.subr.bf16.mxu0 0
        %3324 = vmatpush1.bf16.xpose.msra.mxu0 0
        %3325 = vmatprep.subr.bf16.mxu0 0
        %3326 = vmatpush1.bf16.xpose.msra.mxu0 0
        %3327 = vmatprep.subr.bf16.mxu0 0
        %3328 = vmatpush1.bf16.xpose.msra.mxu0 0
        %3329 = vmatprep.subr.bf16.mxu0 0
        %3330 = vmatpush1.bf16.xpose.msra.mxu0 0
        %3331 = vmatprep.subr.bf16.mxu0 0
        %3332 = vmatpush1.bf16.xpose.msra.mxu0 0
        %3333 = vmatprep.subr.bf16.mxu0 0
        %3334 = vmatpush1.bf16.xpose.msra.mxu0 0
        %3335 = vmatprep.subr.bf16.mxu0 0
        %3336 = vmatpush1.bf16.xpose.msra.mxu0 0
        %3337 = vmatprep.subr.bf16.mxu0 0
        %3338 = vmatpush1.bf16.xpose.msra.mxu0 0
        %3339 = vmatprep.subr.bf16.mxu0 0
        %3340 = vmatpush1.bf16.xpose.msra.mxu0 0
        %3341 = vmatprep.subr.bf16.mxu0 0
        %3342 = vmatpush1.bf16.xpose.msra.mxu0 0
        %3343 = vmatprep.subr.bf16.mxu0 0
        %3344 = vmatpush1.bf16.xpose.msra.mxu0 0
        %3345 = vmatprep.subr.bf16.mxu0 0
        %3346 = vmatpush1.bf16.xpose.msra.mxu0 0
        %3347 = vmatprep.subr.bf16.mxu0 0
        %3348 = vmatpush1.bf16.xpose.msra.mxu0 0
        %3349 = vmatprep.subr.bf16.mxu0 0
        %3350 = vmatpush1.bf16.xpose.msra.mxu0 0
        %3351 = vmatprep.mubr.bf16.mxu0 0
        %3352 = vmatmul.mubr.bf16.gmra.mrb[0].mxu0 %v3308
        %v3353 = vpop.f32.mrb[0].mxu0
        %v3354 = vadd.f32 %v832, %v3353
        %v3355 = vpop.f32.mrb[0].mxu0
        %v3356 = vpop.f32.mrb[0].mxu0
        %v3357 = vadd.f32 %v832, %v3356
        %v3358 = vpop.f32.mrb[0].mxu0
        %3359 = vmatprep.mubr.bf16.mxu0 0
        %3360 = vmatmul.mubr.bf16.gmra.mrb[0].mxu0 %v3311
        %v3361 = vpop.f32.mrb[0].mxu0
        %v3362 = vadd.f32 %v832, %v3361
        %v3363 = vpop.f32.mrb[0].mxu0
        %v3364 = vpop.f32.mrb[0].mxu0
        %v3365 = vadd.f32 %v832, %v3364
        %v3366 = vpop.f32.mrb[0].mxu0
        %3367 = vdwg.mxu0
        %v3368 = vsel %vm896, %v3354, -inf
        %3369 = vmax.xlane.f32.xlu0 %v3368
        %v3370 = vpop.xlane.xlu0 %3369
        %v3371 = vsel %vm896, %v3357, -inf
        %3372 = vmax.xlane.f32.xlu0 %v3371
        %v3373 = vpop.xlane.xlu0 %3372
        %v3374 = vsel %vm896, %v3362, -inf
        %3375 = vmax.xlane.f32.xlu0 %v3374
        %v3376 = vpop.xlane.xlu0 %3375
        %v3377 = vsel %vm896, %v3365, -inf
        %3378 = vmax.xlane.f32.xlu0 %v3377
        %v3379 = vpop.xlane.xlu0 %3378
        %v3380 = vsub.f32 %v3354, %v3370
        %v3381 = vsub.f32 %v3357, %v3373
        %v3382 = vsub.f32 %v3362, %v3376
        %v3383 = vsub.f32 %v3365, %v3379
        %v3384 = vmul.f32 %v3380, 1.442695
        %v3385 = vpow.pop %v3384
        %v3386 = vmul.f32 %v3381, 1.442695
        %v3387 = vpow.pop %v3386
        %v3388 = vmul.f32 %v3382, 1.442695
        %v3389 = vpow.pop %v3388
        %v3390 = vmul.f32 %v3383, 1.442695
        %v3391 = vpow.pop %v3390
        %v3392 = vsel %vm896, %v3385, 0.0
        %3393 = vadd.xlane.f32.xlu0 %v3392
        %v3394 = vpop.xlane.xlu0 %3393
        %v3395 = vsel %vm896, %v3387, 0.0
        %3396 = vadd.xlane.f32.xlu0 %v3395
        %v3397 = vpop.xlane.xlu0 %3396
        %v3398 = vsel %vm896, %v3389, 0.0
        %3399 = vadd.xlane.f32.xlu0 %v3398
        %v3400 = vpop.xlane.xlu0 %3399
        %v3401 = vsel %vm896, %v3391, 0.0
        %3402 = vadd.xlane.f32.xlu0 %v3401
        %v3403 = vpop.xlane.xlu0 %3402
        %v3404 = vrcp.pop %v3394
        %v3405 = vrcp.pop %v3397
        %v3406 = vrcp.pop %v3400
        %v3407 = vrcp.pop %v3403
        %v3408 = vmul.f32 %v3385, %v3404
        %v3409 = vmul.f32 %v3387, %v3405
        %v3410 = vmul.f32 %v3389, %v3406
        %v3411 = vmul.f32 %v3391, %v3407
        %v3412 = vpack.c.bf16 %v3409, %v3408
        %v3413 = vpack.c.bf16 %v3411, %v3410
        %v3415 = vsel %vm896, %v3412, 0
        %v3418 = vsel %vm896, %v3413, 0
        %3420 = vmatprep.subr.bf16.mxu0 0
        %3421 = vmatpush1.bf16.msra.mxu0 %v3305
        %3422 = vmatprep.subr.bf16.mxu0 0
        %3423 = vmatpush1.bf16.msra.mxu0 %v3306
        %3424 = vmatprep.subr.bf16.mxu0 0
        %3425 = vmatpush1.bf16.msra.mxu0 0
        %3426 = vmatprep.subr.bf16.mxu0 0
        %3427 = vmatpush1.bf16.msra.mxu0 0
        %3428 = vmatprep.subr.bf16.mxu0 0
        %3429 = vmatpush1.bf16.msra.mxu0 0
        %3430 = vmatprep.subr.bf16.mxu0 0
        %3431 = vmatpush1.bf16.msra.mxu0 0
        %3432 = vmatprep.subr.bf16.mxu0 0
        %3433 = vmatpush1.bf16.msra.mxu0 0
        %3434 = vmatprep.subr.bf16.mxu0 0
        %3435 = vmatpush1.bf16.msra.mxu0 0
        %3436 = vmatprep.subr.bf16.mxu0 0
        %3437 = vmatpush1.bf16.msra.mxu0 0
        %3438 = vmatprep.subr.bf16.mxu0 0
        %3439 = vmatpush1.bf16.msra.mxu0 0
        %3440 = vmatprep.subr.bf16.mxu0 0
        %3441 = vmatpush1.bf16.msra.mxu0 0
        %3442 = vmatprep.subr.bf16.mxu0 0
        %3443 = vmatpush1.bf16.msra.mxu0 0
        %3444 = vmatprep.subr.bf16.mxu0 0
        %3445 = vmatpush1.bf16.msra.mxu0 0
        %3446 = vmatprep.subr.bf16.mxu0 0
        %3447 = vmatpush1.bf16.msra.mxu0 0
        %3448 = vmatprep.subr.bf16.mxu0 0
        %3449 = vmatpush1.bf16.msra.mxu0 0
        %3450 = vmatprep.subr.bf16.mxu0 0
        %3451 = vmatpush1.bf16.msra.mxu0 0
        %3452 = vmatprep.mubr.bf16.mxu0 0
        %3453 = vmatmul.mubr.bf16.gmra.mrb[0].mxu0 %v3415
        %v3454 = vpop.f32.mrb[0].mxu0
        %v3455 = vadd.f32 0.0, %v3454
        %v3456 = vpop.f32.mrb[0].mxu0
        %v3457 = vpop.f32.mrb[0].mxu0
        %v3458 = vadd.f32 0.0, %v3457
        %v3459 = vpop.f32.mrb[0].mxu0
        %3460 = vmatprep.mubr.bf16.mxu0 0
        %3461 = vmatmul.mubr.bf16.gmra.mrb[0].mxu0 %v3418
        %v3462 = vpop.f32.mrb[0].mxu0
        %v3463 = vadd.f32 0.0, %v3462
        %v3464 = vpop.f32.mrb[0].mxu0
        %v3465 = vpop.f32.mrb[0].mxu0
        %v3466 = vadd.f32 0.0, %v3465
        %v3467 = vpop.f32.mrb[0].mxu0
        %3468 = vdwg.mxu0
        %3469 = vst.msk [vmem:[#allocation2] sm:$0xff] %vm834, %v3455
        %3470 = vst.msk [vmem:[#allocation2 + $0x8] sm:$0xff] %vm834, %v3458
        %3471 = vst.msk [vmem:[#allocation2 + $0x10] sm:$0xff] %vm834, %v3463
        %3472 = vst.msk [vmem:[#allocation2 + $0x18] sm:$0xff] %vm834, %v3466
        %3475 = vrot.lane.b32.xlu0 %v3301, 112
        %v3476 = vpop.permute.xlu0 %3475
        %3477 = vrot.lane.b32.xlu0 %v3302, 112
        %v3478 = vpop.permute.xlu0 %3477
        %3481 = vrot.lane.b32.xlu0 %v3303, 112
        %v3482 = vpop.permute.xlu0 %3481
        %3483 = vrot.lane.b32.xlu0 %v3304, 112
        %v3484 = vpop.permute.xlu0 %3483
        %v3486 = vsel %vm834, %v3476, 0
        %v3489 = vsel %vm834, %v3478, 0
        %v3492 = vsel %vm834, %v3482, 0
        %v3495 = vsel %vm834, %v3484, 0
        %3497 = vmatprep.subr.bf16.mxu0 0
        %3498 = vmatpush1.bf16.xpose.msra.mxu0 %v3492
        %3499 = vmatprep.subr.bf16.mxu0 0
        %3500 = vmatpush1.bf16.xpose.msra.mxu0 %v3495
        %3501 = vmatprep.subr.bf16.mxu0 0
        %3502 = vmatpush1.bf16.xpose.msra.mxu0 0
        %3503 = vmatprep.subr.bf16.mxu0 0
        %3504 = vmatpush1.bf16.xpose.msra.mxu0 0
        %3505 = vmatprep.subr.bf16.mxu0 0
        %3506 = vmatpush1.bf16.xpose.msra.mxu0 0
        %3507 = vmatprep.subr.bf16.mxu0 0
        %3508 = vmatpush1.bf16.xpose.msra.mxu0 0
        %3509 = vmatprep.subr.bf16.mxu0 0
        %3510 = vmatpush1.bf16.xpose.msra.mxu0 0
        %3511 = vmatprep.subr.bf16.mxu0 0
        %3512 = vmatpush1.bf16.xpose.msra.mxu0 0
        %3513 = vmatprep.subr.bf16.mxu0 0
        %3514 = vmatpush1.bf16.xpose.msra.mxu0 0
        %3515 = vmatprep.subr.bf16.mxu0 0
        %3516 = vmatpush1.bf16.xpose.msra.mxu0 0
        %3517 = vmatprep.subr.bf16.mxu0 0
        %3518 = vmatpush1.bf16.xpose.msra.mxu0 0
        %3519 = vmatprep.subr.bf16.mxu0 0
        %3520 = vmatpush1.bf16.xpose.msra.mxu0 0
        %3521 = vmatprep.subr.bf16.mxu0 0
        %3522 = vmatpush1.bf16.xpose.msra.mxu0 0
        %3523 = vmatprep.subr.bf16.mxu0 0
        %3524 = vmatpush1.bf16.xpose.msra.mxu0 0
        %3525 = vmatprep.subr.bf16.mxu0 0
        %3526 = vmatpush1.bf16.xpose.msra.mxu0 0
        %3527 = vmatprep.subr.bf16.mxu0 0
        %3528 = vmatpush1.bf16.xpose.msra.mxu0 0
        %3529 = vmatprep.mubr.bf16.mxu0 0
        %3530 = vmatmul.mubr.bf16.gmra.mrb[0].mxu0 %v3486
        %v3531 = vpop.f32.mrb[0].mxu0
        %v3532 = vadd.f32 %v832, %v3531
        %v3533 = vpop.f32.mrb[0].mxu0
        %v3534 = vpop.f32.mrb[0].mxu0
        %v3535 = vadd.f32 %v832, %v3534
        %v3536 = vpop.f32.mrb[0].mxu0
        %3537 = vmatprep.mubr.bf16.mxu0 0
        %3538 = vmatmul.mubr.bf16.gmra.mrb[0].mxu0 %v3489
        %v3539 = vpop.f32.mrb[0].mxu0
        %v3540 = vadd.f32 %v832, %v3539
        %v3541 = vpop.f32.mrb[0].mxu0
        %v3542 = vpop.f32.mrb[0].mxu0
        %v3543 = vadd.f32 %v832, %v3542
        %v3544 = vpop.f32.mrb[0].mxu0
        %3545 = vdwg.mxu0
        %v3546 = vsel %vm896, %v3532, -inf
        %3547 = vmax.xlane.f32.xlu0 %v3546
        %v3548 = vpop.xlane.xlu0 %3547
        %v3549 = vsel %vm896, %v3535, -inf
        %3550 = vmax.xlane.f32.xlu0 %v3549
        %v3551 = vpop.xlane.xlu0 %3550
        %v3552 = vsel %vm896, %v3540, -inf
        %3553 = vmax.xlane.f32.xlu0 %v3552
        %v3554 = vpop.xlane.xlu0 %3553
        %v3555 = vsel %vm896, %v3543, -inf
        %3556 = vmax.xlane.f32.xlu0 %v3555
        %v3557 = vpop.xlane.xlu0 %3556
        %v3558 = vsub.f32 %v3532, %v3548
        %v3559 = vsub.f32 %v3535, %v3551
        %v3560 = vsub.f32 %v3540, %v3554
        %v3561 = vsub.f32 %v3543, %v3557
        %v3562 = vmul.f32 %v3558, 1.442695
        %v3563 = vpow.pop %v3562
        %v3564 = vmul.f32 %v3559, 1.442695
        %v3565 = vpow.pop %v3564
        %v3566 = vmul.f32 %v3560, 1.442695
        %v3567 = vpow.pop %v3566
        %v3568 = vmul.f32 %v3561, 1.442695
        %v3569 = vpow.pop %v3568
        %v3570 = vsel %vm896, %v3563, 0.0
        %3571 = vadd.xlane.f32.xlu0 %v3570
        %v3572 = vpop.xlane.xlu0 %3571
        %v3573 = vsel %vm896, %v3565, 0.0
        %3574 = vadd.xlane.f32.xlu0 %v3573
        %v3575 = vpop.xlane.xlu0 %3574
        %v3576 = vsel %vm896, %v3567, 0.0
        %3577 = vadd.xlane.f32.xlu0 %v3576
        %v3578 = vpop.xlane.xlu0 %3577
        %v3579 = vsel %vm896, %v3569, 0.0
        %3580 = vadd.xlane.f32.xlu0 %v3579
        %v3581 = vpop.xlane.xlu0 %3580
        %v3582 = vrcp.pop %v3572
        %v3583 = vrcp.pop %v3575
        %v3584 = vrcp.pop %v3578
        %v3585 = vrcp.pop %v3581
        %v3586 = vmul.f32 %v3563, %v3582
        %v3587 = vmul.f32 %v3565, %v3583
        %v3588 = vmul.f32 %v3567, %v3584
        %v3589 = vmul.f32 %v3569, %v3585
        %v3590 = vpack.c.bf16 %v3587, %v3586
        %v3591 = vpack.c.bf16 %v3589, %v3588
        %3594 = vrot.lane.b32.xlu0 %v3305, 112
        %v3595 = vpop.permute.xlu0 %3594
        %3596 = vrot.lane.b32.xlu0 %v3306, 112
        %v3597 = vpop.permute.xlu0 %3596
        %v3601 = vsel %vm896, %v3590, 0
        %v3604 = vsel %vm896, %v3591, 0
        %3606 = vmatprep.subr.bf16.mxu0 0
        %3607 = vmatpush1.bf16.msra.mxu0 %v3595
        %3608 = vmatprep.subr.bf16.mxu0 0
        %3609 = vmatpush1.bf16.msra.mxu0 %v3597
        %3610 = vmatprep.subr.bf16.mxu0 0
        %3611 = vmatpush1.bf16.msra.mxu0 0
        %3612 = vmatprep.subr.bf16.mxu0 0
        %3613 = vmatpush1.bf16.msra.mxu0 0
        %3614 = vmatprep.subr.bf16.mxu0 0
        %3615 = vmatpush1.bf16.msra.mxu0 0
        %3616 = vmatprep.subr.bf16.mxu0 0
        %3617 = vmatpush1.bf16.msra.mxu0 0
        %3618 = vmatprep.subr.bf16.mxu0 0
        %3619 = vmatpush1.bf16.msra.mxu0 0
        %3620 = vmatprep.subr.bf16.mxu0 0
        %3621 = vmatpush1.bf16.msra.mxu0 0
        %3622 = vmatprep.subr.bf16.mxu0 0
        %3623 = vmatpush1.bf16.msra.mxu0 0
        %3624 = vmatprep.subr.bf16.mxu0 0
        %3625 = vmatpush1.bf16.msra.mxu0 0
        %3626 = vmatprep.subr.bf16.mxu0 0
        %3627 = vmatpush1.bf16.msra.mxu0 0
        %3628 = vmatprep.subr.bf16.mxu0 0
        %3629 = vmatpush1.bf16.msra.mxu0 0
        %3630 = vmatprep.subr.bf16.mxu0 0
        %3631 = vmatpush1.bf16.msra.mxu0 0
        %3632 = vmatprep.subr.bf16.mxu0 0
        %3633 = vmatpush1.bf16.msra.mxu0 0
        %3634 = vmatprep.subr.bf16.mxu0 0
        %3635 = vmatpush1.bf16.msra.mxu0 0
        %3636 = vmatprep.subr.bf16.mxu0 0
        %3637 = vmatpush1.bf16.msra.mxu0 0
        %3638 = vmatprep.mubr.bf16.mxu0 0
        %3639 = vmatmul.mubr.bf16.gmra.mrb[0].mxu0 %v3601
        %v3640 = vpop.f32.mrb[0].mxu0
        %v3641 = vadd.f32 0.0, %v3640
        %v3642 = vpop.f32.mrb[0].mxu0
        %v3643 = vpop.f32.mrb[0].mxu0
        %v3644 = vadd.f32 0.0, %v3643
        %v3645 = vpop.f32.mrb[0].mxu0
        %3646 = vmatprep.mubr.bf16.mxu0 0
        %3647 = vmatmul.mubr.bf16.gmra.mrb[0].mxu0 %v3604
        %v3648 = vpop.f32.mrb[0].mxu0
        %v3649 = vadd.f32 0.0, %v3648
        %v3650 = vpop.f32.mrb[0].mxu0
        %v3651 = vpop.f32.mrb[0].mxu0
        %v3652 = vadd.f32 0.0, %v3651
        %v3653 = vpop.f32.mrb[0].mxu0
        %3654 = vdwg.mxu0
        %3659 = vrot.lane.b32.xlu0 %v3641, 16
        %v3660 = vpop.permute.xlu0 %3659
        %3661 = vrot.lane.b32.xlu0 %v3644, 16
        %v3662 = vpop.permute.xlu0 %3661
        %3663 = vrot.lane.b32.xlu0 %v3649, 16
        %v3664 = vpop.permute.xlu0 %3663
        %3665 = vrot.lane.b32.xlu0 %v3652, 16
        %v3666 = vpop.permute.xlu0 %3665
        %3671 = vst.msk [vmem:[#allocation2] sm:$0xff] %vm1200, %v3660
        %3672 = vst.msk [vmem:[#allocation2 + $0x8] sm:$0xff] %vm1200, %v3662
        %3673 = vst.msk [vmem:[#allocation2 + $0x10] sm:$0xff] %vm1200, %v3664
        %3674 = vst.msk [vmem:[#allocation2 + $0x18] sm:$0xff] %vm1200, %v3666
        %3675 = vrot.lane.b32.xlu0 %v3301, 96
        %v3676 = vpop.permute.xlu0 %3675
        %3677 = vrot.lane.b32.xlu0 %v3302, 96
        %v3678 = vpop.permute.xlu0 %3677
        %3679 = vrot.lane.b32.xlu0 %v3303, 96
        %v3680 = vpop.permute.xlu0 %3679
        %3681 = vrot.lane.b32.xlu0 %v3304, 96
        %v3682 = vpop.permute.xlu0 %3681
        %v3684 = vsel %vm834, %v3676, 0
        %v3687 = vsel %vm834, %v3678, 0
        %v3690 = vsel %vm834, %v3680, 0
        %v3693 = vsel %vm834, %v3682, 0
        %3695 = vmatprep.subr.bf16.mxu0 0
        %3696 = vmatpush1.bf16.xpose.msra.mxu0 %v3690
        %3697 = vmatprep.subr.bf16.mxu0 0
        %3698 = vmatpush1.bf16.xpose.msra.mxu0 %v3693
        %3699 = vmatprep.subr.bf16.mxu0 0
        %3700 = vmatpush1.bf16.xpose.msra.mxu0 0
        %3701 = vmatprep.subr.bf16.mxu0 0
        %3702 = vmatpush1.bf16.xpose.msra.mxu0 0
        %3703 = vmatprep.subr.bf16.mxu0 0
        %3704 = vmatpush1.bf16.xpose.msra.mxu0 0
        %3705 = vmatprep.subr.bf16.mxu0 0
        %3706 = vmatpush1.bf16.xpose.msra.mxu0 0
        %3707 = vmatprep.subr.bf16.mxu0 0
        %3708 = vmatpush1.bf16.xpose.msra.mxu0 0
        %3709 = vmatprep.subr.bf16.mxu0 0
        %3710 = vmatpush1.bf16.xpose.msra.mxu0 0
        %3711 = vmatprep.subr.bf16.mxu0 0
        %3712 = vmatpush1.bf16.xpose.msra.mxu0 0
        %3713 = vmatprep.subr.bf16.mxu0 0
        %3714 = vmatpush1.bf16.xpose.msra.mxu0 0
        %3715 = vmatprep.subr.bf16.mxu0 0
        %3716 = vmatpush1.bf16.xpose.msra.mxu0 0
        %3717 = vmatprep.subr.bf16.mxu0 0
        %3718 = vmatpush1.bf16.xpose.msra.mxu0 0
        %3719 = vmatprep.subr.bf16.mxu0 0
        %3720 = vmatpush1.bf16.xpose.msra.mxu0 0
        %3721 = vmatprep.subr.bf16.mxu0 0
        %3722 = vmatpush1.bf16.xpose.msra.mxu0 0
        %3723 = vmatprep.subr.bf16.mxu0 0
        %3724 = vmatpush1.bf16.xpose.msra.mxu0 0
        %3725 = vmatprep.subr.bf16.mxu0 0
        %3726 = vmatpush1.bf16.xpose.msra.mxu0 0
        %3727 = vmatprep.mubr.bf16.mxu0 0
        %3728 = vmatmul.mubr.bf16.gmra.mrb[0].mxu0 %v3684
        %v3729 = vpop.f32.mrb[0].mxu0
        %v3730 = vadd.f32 %v832, %v3729
        %v3731 = vpop.f32.mrb[0].mxu0
        %v3732 = vpop.f32.mrb[0].mxu0
        %v3733 = vadd.f32 %v832, %v3732
        %v3734 = vpop.f32.mrb[0].mxu0
        %3735 = vmatprep.mubr.bf16.mxu0 0
        %3736 = vmatmul.mubr.bf16.gmra.mrb[0].mxu0 %v3687
        %v3737 = vpop.f32.mrb[0].mxu0
        %v3738 = vadd.f32 %v832, %v3737
        %v3739 = vpop.f32.mrb[0].mxu0
        %v3740 = vpop.f32.mrb[0].mxu0
        %v3741 = vadd.f32 %v832, %v3740
        %v3742 = vpop.f32.mrb[0].mxu0
        %3743 = vdwg.mxu0
        %v3744 = vsel %vm896, %v3730, -inf
        %3745 = vmax.xlane.f32.xlu0 %v3744
        %v3746 = vpop.xlane.xlu0 %3745
        %v3747 = vsel %vm896, %v3733, -inf
        %3748 = vmax.xlane.f32.xlu0 %v3747
        %v3749 = vpop.xlane.xlu0 %3748
        %v3750 = vsel %vm896, %v3738, -inf
        %3751 = vmax.xlane.f32.xlu0 %v3750
        %v3752 = vpop.xlane.xlu0 %3751
        %v3753 = vsel %vm896, %v3741, -inf
        %3754 = vmax.xlane.f32.xlu0 %v3753
        %v3755 = vpop.xlane.xlu0 %3754
        %v3756 = vsub.f32 %v3730, %v3746
        %v3757 = vsub.f32 %v3733, %v3749
        %v3758 = vsub.f32 %v3738, %v3752
        %v3759 = vsub.f32 %v3741, %v3755
        %v3760 = vmul.f32 %v3756, 1.442695
        %v3761 = vpow.pop %v3760
        %v3762 = vmul.f32 %v3757, 1.442695
        %v3763 = vpow.pop %v3762
        %v3764 = vmul.f32 %v3758, 1.442695
        %v3765 = vpow.pop %v3764
        %v3766 = vmul.f32 %v3759, 1.442695
        %v3767 = vpow.pop %v3766
        %v3768 = vsel %vm896, %v3761, 0.0
        %3769 = vadd.xlane.f32.xlu0 %v3768
        %v3770 = vpop.xlane.xlu0 %3769
        %v3771 = vsel %vm896, %v3763, 0.0
        %3772 = vadd.xlane.f32.xlu0 %v3771
        %v3773 = vpop.xlane.xlu0 %3772
        %v3774 = vsel %vm896, %v3765, 0.0
        %3775 = vadd.xlane.f32.xlu0 %v3774
        %v3776 = vpop.xlane.xlu0 %3775
        %v3777 = vsel %vm896, %v3767, 0.0
        %3778 = vadd.xlane.f32.xlu0 %v3777
        %v3779 = vpop.xlane.xlu0 %3778
        %v3780 = vrcp.pop %v3770
        %v3781 = vrcp.pop %v3773
        %v3782 = vrcp.pop %v3776
        %v3783 = vrcp.pop %v3779
        %v3784 = vmul.f32 %v3761, %v3780
        %v3785 = vmul.f32 %v3763, %v3781
        %v3786 = vmul.f32 %v3765, %v3782
        %v3787 = vmul.f32 %v3767, %v3783
        %v3788 = vpack.c.bf16 %v3785, %v3784
        %v3789 = vpack.c.bf16 %v3787, %v3786
        %3790 = vrot.lane.b32.xlu0 %v3305, 96
        %v3791 = vpop.permute.xlu0 %3790
        %3792 = vrot.lane.b32.xlu0 %v3306, 96
        %v3793 = vpop.permute.xlu0 %3792
        %v3797 = vsel %vm896, %v3788, 0
        %v3800 = vsel %vm896, %v3789, 0
        %3802 = vmatprep.subr.bf16.mxu0 0
        %3803 = vmatpush1.bf16.msra.mxu0 %v3791
        %3804 = vmatprep.subr.bf16.mxu0 0
        %3805 = vmatpush1.bf16.msra.mxu0 %v3793
        %3806 = vmatprep.subr.bf16.mxu0 0
        %3807 = vmatpush1.bf16.msra.mxu0 0
        %3808 = vmatprep.subr.bf16.mxu0 0
        %3809 = vmatpush1.bf16.msra.mxu0 0
        %3810 = vmatprep.subr.bf16.mxu0 0
        %3811 = vmatpush1.bf16.msra.mxu0 0
        %3812 = vmatprep.subr.bf16.mxu0 0
        %3813 = vmatpush1.bf16.msra.mxu0 0
        %3814 = vmatprep.subr.bf16.mxu0 0
        %3815 = vmatpush1.bf16.msra.mxu0 0
        %3816 = vmatprep.subr.bf16.mxu0 0
        %3817 = vmatpush1.bf16.msra.mxu0 0
        %3818 = vmatprep.subr.bf16.mxu0 0
        %3819 = vmatpush1.bf16.msra.mxu0 0
        %3820 = vmatprep.subr.bf16.mxu0 0
        %3821 = vmatpush1.bf16.msra.mxu0 0
        %3822 = vmatprep.subr.bf16.mxu0 0
        %3823 = vmatpush1.bf16.msra.mxu0 0
        %3824 = vmatprep.subr.bf16.mxu0 0
        %3825 = vmatpush1.bf16.msra.mxu0 0
        %3826 = vmatprep.subr.bf16.mxu0 0
        %3827 = vmatpush1.bf16.msra.mxu0 0
        %3828 = vmatprep.subr.bf16.mxu0 0
        %3829 = vmatpush1.bf16.msra.mxu0 0
        %3830 = vmatprep.subr.bf16.mxu0 0
        %3831 = vmatpush1.bf16.msra.mxu0 0
        %3832 = vmatprep.subr.bf16.mxu0 0
        %3833 = vmatpush1.bf16.msra.mxu0 0
        %3834 = vmatprep.mubr.bf16.mxu0 0
        %3835 = vmatmul.mubr.bf16.gmra.mrb[0].mxu0 %v3797
        %v3836 = vpop.f32.mrb[0].mxu0
        %v3837 = vadd.f32 0.0, %v3836
        %v3838 = vpop.f32.mrb[0].mxu0
        %v3839 = vpop.f32.mrb[0].mxu0
        %v3840 = vadd.f32 0.0, %v3839
        %v3841 = vpop.f32.mrb[0].mxu0
        %3842 = vmatprep.mubr.bf16.mxu0 0
        %3843 = vmatmul.mubr.bf16.gmra.mrb[0].mxu0 %v3800
        %v3844 = vpop.f32.mrb[0].mxu0
        %v3845 = vadd.f32 0.0, %v3844
        %v3846 = vpop.f32.mrb[0].mxu0
        %v3847 = vpop.f32.mrb[0].mxu0
        %v3848 = vadd.f32 0.0, %v3847
        %v3849 = vpop.f32.mrb[0].mxu0
        %3850 = vdwg.mxu0
        %3855 = vrot.lane.b32.xlu0 %v3837, 32
        %v3856 = vpop.permute.xlu0 %3855
        %3857 = vrot.lane.b32.xlu0 %v3840, 32
        %v3858 = vpop.permute.xlu0 %3857
        %3859 = vrot.lane.b32.xlu0 %v3845, 32
        %v3860 = vpop.permute.xlu0 %3859
        %3861 = vrot.lane.b32.xlu0 %v3848, 32
        %v3862 = vpop.permute.xlu0 %3861
        %3867 = vst.msk [vmem:[#allocation2] sm:$0xff] %vm1397, %v3856
        %3868 = vst.msk [vmem:[#allocation2 + $0x8] sm:$0xff] %vm1397, %v3858
        %3869 = vst.msk [vmem:[#allocation2 + $0x10] sm:$0xff] %vm1397, %v3860
        %3870 = vst.msk [vmem:[#allocation2 + $0x18] sm:$0xff] %vm1397, %v3862
        %3871 = vrot.lane.b32.xlu0 %v3301, 80
        %v3872 = vpop.permute.xlu0 %3871
        %3873 = vrot.lane.b32.xlu0 %v3302, 80
        %v3874 = vpop.permute.xlu0 %3873
        %3875 = vrot.lane.b32.xlu0 %v3303, 80
        %v3876 = vpop.permute.xlu0 %3875
        %3877 = vrot.lane.b32.xlu0 %v3304, 80
        %v3878 = vpop.permute.xlu0 %3877
        %v3880 = vsel %vm834, %v3872, 0
        %v3883 = vsel %vm834, %v3874, 0
        %v3886 = vsel %vm834, %v3876, 0
        %v3889 = vsel %vm834, %v3878, 0
        %3891 = vmatprep.subr.bf16.mxu0 0
        %3892 = vmatpush1.bf16.xpose.msra.mxu0 %v3886
        %3893 = vmatprep.subr.bf16.mxu0 0
        %3894 = vmatpush1.bf16.xpose.msra.mxu0 %v3889
        %3895 = vmatprep.subr.bf16.mxu0 0
        %3896 = vmatpush1.bf16.xpose.msra.mxu0 0
        %3897 = vmatprep.subr.bf16.mxu0 0
        %3898 = vmatpush1.bf16.xpose.msra.mxu0 0
        %3899 = vmatprep.subr.bf16.mxu0 0
        %3900 = vmatpush1.bf16.xpose.msra.mxu0 0
        %3901 = vmatprep.subr.bf16.mxu0 0
        %3902 = vmatpush1.bf16.xpose.msra.mxu0 0
        %3903 = vmatprep.subr.bf16.mxu0 0
        %3904 = vmatpush1.bf16.xpose.msra.mxu0 0
        %3905 = vmatprep.subr.bf16.mxu0 0
        %3906 = vmatpush1.bf16.xpose.msra.mxu0 0
        %3907 = vmatprep.subr.bf16.mxu0 0
        %3908 = vmatpush1.bf16.xpose.msra.mxu0 0
        %3909 = vmatprep.subr.bf16.mxu0 0
        %3910 = vmatpush1.bf16.xpose.msra.mxu0 0
        %3911 = vmatprep.subr.bf16.mxu0 0
        %3912 = vmatpush1.bf16.xpose.msra.mxu0 0
        %3913 = vmatprep.subr.bf16.mxu0 0
        %3914 = vmatpush1.bf16.xpose.msra.mxu0 0
        %3915 = vmatprep.subr.bf16.mxu0 0
        %3916 = vmatpush1.bf16.xpose.msra.mxu0 0
        %3917 = vmatprep.subr.bf16.mxu0 0
        %3918 = vmatpush1.bf16.xpose.msra.mxu0 0
        %3919 = vmatprep.subr.bf16.mxu0 0
        %3920 = vmatpush1.bf16.xpose.msra.mxu0 0
        %3921 = vmatprep.subr.bf16.mxu0 0
        %3922 = vmatpush1.bf16.xpose.msra.mxu0 0
        %3923 = vmatprep.mubr.bf16.mxu0 0
        %3924 = vmatmul.mubr.bf16.gmra.mrb[0].mxu0 %v3880
        %v3925 = vpop.f32.mrb[0].mxu0
        %v3926 = vadd.f32 %v832, %v3925
        %v3927 = vpop.f32.mrb[0].mxu0
        %v3928 = vpop.f32.mrb[0].mxu0
        %v3929 = vadd.f32 %v832, %v3928
        %v3930 = vpop.f32.mrb[0].mxu0
        %3931 = vmatprep.mubr.bf16.mxu0 0
        %3932 = vmatmul.mubr.bf16.gmra.mrb[0].mxu0 %v3883
        %v3933 = vpop.f32.mrb[0].mxu0
        %v3934 = vadd.f32 %v832, %v3933
        %v3935 = vpop.f32.mrb[0].mxu0
        %v3936 = vpop.f32.mrb[0].mxu0
        %v3937 = vadd.f32 %v832, %v3936
        %v3938 = vpop.f32.mrb[0].mxu0
        %3939 = vdwg.mxu0
        %v3940 = vsel %vm896, %v3926, -inf
        %3941 = vmax.xlane.f32.xlu0 %v3940
        %v3942 = vpop.xlane.xlu0 %3941
        %v3943 = vsel %vm896, %v3929, -inf
        %3944 = vmax.xlane.f32.xlu0 %v3943
        %v3945 = vpop.xlane.xlu0 %3944
        %v3946 = vsel %vm896, %v3934, -inf
        %3947 = vmax.xlane.f32.xlu0 %v3946
        %v3948 = vpop.xlane.xlu0 %3947
        %v3949 = vsel %vm896, %v3937, -inf
        %3950 = vmax.xlane.f32.xlu0 %v3949
        %v3951 = vpop.xlane.xlu0 %3950
        %v3952 = vsub.f32 %v3926, %v3942
        %v3953 = vsub.f32 %v3929, %v3945
        %v3954 = vsub.f32 %v3934, %v3948
        %v3955 = vsub.f32 %v3937, %v3951
        %v3956 = vmul.f32 %v3952, 1.442695
        %v3957 = vpow.pop %v3956
        %v3958 = vmul.f32 %v3953, 1.442695
        %v3959 = vpow.pop %v3958
        %v3960 = vmul.f32 %v3954, 1.442695
        %v3961 = vpow.pop %v3960
        %v3962 = vmul.f32 %v3955, 1.442695
        %v3963 = vpow.pop %v3962
        %v3964 = vsel %vm896, %v3957, 0.0
        %3965 = vadd.xlane.f32.xlu0 %v3964
        %v3966 = vpop.xlane.xlu0 %3965
        %v3967 = vsel %vm896, %v3959, 0.0
        %3968 = vadd.xlane.f32.xlu0 %v3967
        %v3969 = vpop.xlane.xlu0 %3968
        %v3970 = vsel %vm896, %v3961, 0.0
        %3971 = vadd.xlane.f32.xlu0 %v3970
        %v3972 = vpop.xlane.xlu0 %3971
        %v3973 = vsel %vm896, %v3963, 0.0
        %3974 = vadd.xlane.f32.xlu0 %v3973
        %v3975 = vpop.xlane.xlu0 %3974
        %v3976 = vrcp.pop %v3966
        %v3977 = vrcp.pop %v3969
        %v3978 = vrcp.pop %v3972
        %v3979 = vrcp.pop %v3975
        %v3980 = vmul.f32 %v3957, %v3976
        %v3981 = vmul.f32 %v3959, %v3977
        %v3982 = vmul.f32 %v3961, %v3978
        %v3983 = vmul.f32 %v3963, %v3979
        %v3984 = vpack.c.bf16 %v3981, %v3980
        %v3985 = vpack.c.bf16 %v3983, %v3982
        %3986 = vrot.lane.b32.xlu0 %v3305, 80
        %v3987 = vpop.permute.xlu0 %3986
        %3988 = vrot.lane.b32.xlu0 %v3306, 80
        %v3989 = vpop.permute.xlu0 %3988
        %v3993 = vsel %vm896, %v3984, 0
        %v3996 = vsel %vm896, %v3985, 0
        %3998 = vmatprep.subr.bf16.mxu0 0
        %3999 = vmatpush1.bf16.msra.mxu0 %v3987
        %4000 = vmatprep.subr.bf16.mxu0 0
        %4001 = vmatpush1.bf16.msra.mxu0 %v3989
        %4002 = vmatprep.subr.bf16.mxu0 0
        %4003 = vmatpush1.bf16.msra.mxu0 0
        %4004 = vmatprep.subr.bf16.mxu0 0
        %4005 = vmatpush1.bf16.msra.mxu0 0
        %4006 = vmatprep.subr.bf16.mxu0 0
        %4007 = vmatpush1.bf16.msra.mxu0 0
        %4008 = vmatprep.subr.bf16.mxu0 0
        %4009 = vmatpush1.bf16.msra.mxu0 0
        %4010 = vmatprep.subr.bf16.mxu0 0
        %4011 = vmatpush1.bf16.msra.mxu0 0
        %4012 = vmatprep.subr.bf16.mxu0 0
        %4013 = vmatpush1.bf16.msra.mxu0 0
        %4014 = vmatprep.subr.bf16.mxu0 0
        %4015 = vmatpush1.bf16.msra.mxu0 0
        %4016 = vmatprep.subr.bf16.mxu0 0
        %4017 = vmatpush1.bf16.msra.mxu0 0
        %4018 = vmatprep.subr.bf16.mxu0 0
        %4019 = vmatpush1.bf16.msra.mxu0 0
        %4020 = vmatprep.subr.bf16.mxu0 0
        %4021 = vmatpush1.bf16.msra.mxu0 0
        %4022 = vmatprep.subr.bf16.mxu0 0
        %4023 = vmatpush1.bf16.msra.mxu0 0
        %4024 = vmatprep.subr.bf16.mxu0 0
        %4025 = vmatpush1.bf16.msra.mxu0 0
        %4026 = vmatprep.subr.bf16.mxu0 0
        %4027 = vmatpush1.bf16.msra.mxu0 0
        %4028 = vmatprep.subr.bf16.mxu0 0
        %4029 = vmatpush1.bf16.msra.mxu0 0
        %4030 = vmatprep.mubr.bf16.mxu0 0
        %4031 = vmatmul.mubr.bf16.gmra.mrb[0].mxu0 %v3993
        %v4032 = vpop.f32.mrb[0].mxu0
        %v4033 = vadd.f32 0.0, %v4032
        %v4034 = vpop.f32.mrb[0].mxu0
        %v4035 = vpop.f32.mrb[0].mxu0
        %v4036 = vadd.f32 0.0, %v4035
        %v4037 = vpop.f32.mrb[0].mxu0
        %4038 = vmatprep.mubr.bf16.mxu0 0
        %4039 = vmatmul.mubr.bf16.gmra.mrb[0].mxu0 %v3996
        %v4040 = vpop.f32.mrb[0].mxu0
        %v4041 = vadd.f32 0.0, %v4040
        %v4042 = vpop.f32.mrb[0].mxu0
        %v4043 = vpop.f32.mrb[0].mxu0
        %v4044 = vadd.f32 0.0, %v4043
        %v4045 = vpop.f32.mrb[0].mxu0
        %4046 = vdwg.mxu0
        %4051 = vrot.lane.b32.xlu0 %v4033, 48
        %v4052 = vpop.permute.xlu0 %4051
        %4053 = vrot.lane.b32.xlu0 %v4036, 48
        %v4054 = vpop.permute.xlu0 %4053
        %4055 = vrot.lane.b32.xlu0 %v4041, 48
        %v4056 = vpop.permute.xlu0 %4055
        %4057 = vrot.lane.b32.xlu0 %v4044, 48
        %v4058 = vpop.permute.xlu0 %4057
        %4063 = vst.msk [vmem:[#allocation2] sm:$0xff] %vm1594, %v4052
        %4064 = vst.msk [vmem:[#allocation2 + $0x8] sm:$0xff] %vm1594, %v4054
        %4065 = vst.msk [vmem:[#allocation2 + $0x10] sm:$0xff] %vm1594, %v4056
        %4066 = vst.msk [vmem:[#allocation2 + $0x18] sm:$0xff] %vm1594, %v4058
        %4067 = vrot.lane.b32.xlu0 %v3301, 64
        %v4068 = vpop.permute.xlu0 %4067
        %4069 = vrot.lane.b32.xlu0 %v3302, 64
        %v4070 = vpop.permute.xlu0 %4069
        %4071 = vrot.lane.b32.xlu0 %v3303, 64
        %v4072 = vpop.permute.xlu0 %4071
        %4073 = vrot.lane.b32.xlu0 %v3304, 64
        %v4074 = vpop.permute.xlu0 %4073
        %v4076 = vsel %vm834, %v4068, 0
        %v4079 = vsel %vm834, %v4070, 0
        %v4082 = vsel %vm834, %v4072, 0
        %v4085 = vsel %vm834, %v4074, 0
        %4087 = vmatprep.subr.bf16.mxu0 0
        %4088 = vmatpush1.bf16.xpose.msra.mxu0 %v4082
        %4089 = vmatprep.subr.bf16.mxu0 0
        %4090 = vmatpush1.bf16.xpose.msra.mxu0 %v4085
        %4091 = vmatprep.subr.bf16.mxu0 0
        %4092 = vmatpush1.bf16.xpose.msra.mxu0 0
        %4093 = vmatprep.subr.bf16.mxu0 0
        %4094 = vmatpush1.bf16.xpose.msra.mxu0 0
        %4095 = vmatprep.subr.bf16.mxu0 0
        %4096 = vmatpush1.bf16.xpose.msra.mxu0 0
        %4097 = vmatprep.subr.bf16.mxu0 0
        %4098 = vmatpush1.bf16.xpose.msra.mxu0 0
        %4099 = vmatprep.subr.bf16.mxu0 0
        %4100 = vmatpush1.bf16.xpose.msra.mxu0 0
        %4101 = vmatprep.subr.bf16.mxu0 0
        %4102 = vmatpush1.bf16.xpose.msra.mxu0 0
        %4103 = vmatprep.subr.bf16.mxu0 0
        %4104 = vmatpush1.bf16.xpose.msra.mxu0 0
        %4105 = vmatprep.subr.bf16.mxu0 0
        %4106 = vmatpush1.bf16.xpose.msra.mxu0 0
        %4107 = vmatprep.subr.bf16.mxu0 0
        %4108 = vmatpush1.bf16.xpose.msra.mxu0 0
        %4109 = vmatprep.subr.bf16.mxu0 0
        %4110 = vmatpush1.bf16.xpose.msra.mxu0 0
        %4111 = vmatprep.subr.bf16.mxu0 0
        %4112 = vmatpush1.bf16.xpose.msra.mxu0 0
        %4113 = vmatprep.subr.bf16.mxu0 0
        %4114 = vmatpush1.bf16.xpose.msra.mxu0 0
        %4115 = vmatprep.subr.bf16.mxu0 0
        %4116 = vmatpush1.bf16.xpose.msra.mxu0 0
        %4117 = vmatprep.subr.bf16.mxu0 0
        %4118 = vmatpush1.bf16.xpose.msra.mxu0 0
        %4119 = vmatprep.mubr.bf16.mxu0 0
        %4120 = vmatmul.mubr.bf16.gmra.mrb[0].mxu0 %v4076
        %v4121 = vpop.f32.mrb[0].mxu0
        %v4122 = vadd.f32 %v832, %v4121
        %v4123 = vpop.f32.mrb[0].mxu0
        %v4124 = vpop.f32.mrb[0].mxu0
        %v4125 = vadd.f32 %v832, %v4124
        %v4126 = vpop.f32.mrb[0].mxu0
        %4127 = vmatprep.mubr.bf16.mxu0 0
        %4128 = vmatmul.mubr.bf16.gmra.mrb[0].mxu0 %v4079
        %v4129 = vpop.f32.mrb[0].mxu0
        %v4130 = vadd.f32 %v832, %v4129
        %v4131 = vpop.f32.mrb[0].mxu0
        %v4132 = vpop.f32.mrb[0].mxu0
        %v4133 = vadd.f32 %v832, %v4132
        %v4134 = vpop.f32.mrb[0].mxu0
        %4135 = vdwg.mxu0
        %v4136 = vsel %vm896, %v4122, -inf
        %4137 = vmax.xlane.f32.xlu0 %v4136
        %v4138 = vpop.xlane.xlu0 %4137
        %v4139 = vsel %vm896, %v4125, -inf
        %4140 = vmax.xlane.f32.xlu0 %v4139
        %v4141 = vpop.xlane.xlu0 %4140
        %v4142 = vsel %vm896, %v4130, -inf
        %4143 = vmax.xlane.f32.xlu0 %v4142
        %v4144 = vpop.xlane.xlu0 %4143
        %v4145 = vsel %vm896, %v4133, -inf
        %4146 = vmax.xlane.f32.xlu0 %v4145
        %v4147 = vpop.xlane.xlu0 %4146
        %v4148 = vsub.f32 %v4122, %v4138
        %v4149 = vsub.f32 %v4125, %v4141
        %v4150 = vsub.f32 %v4130, %v4144
        %v4151 = vsub.f32 %v4133, %v4147
        %v4152 = vmul.f32 %v4148, 1.442695
        %v4153 = vpow.pop %v4152
        %v4154 = vmul.f32 %v4149, 1.442695
        %v4155 = vpow.pop %v4154
        %v4156 = vmul.f32 %v4150, 1.442695
        %v4157 = vpow.pop %v4156
        %v4158 = vmul.f32 %v4151, 1.442695
        %v4159 = vpow.pop %v4158
        %v4160 = vsel %vm896, %v4153, 0.0
        %4161 = vadd.xlane.f32.xlu0 %v4160
        %v4162 = vpop.xlane.xlu0 %4161
        %v4163 = vsel %vm896, %v4155, 0.0
        %4164 = vadd.xlane.f32.xlu0 %v4163
        %v4165 = vpop.xlane.xlu0 %4164
        %v4166 = vsel %vm896, %v4157, 0.0
        %4167 = vadd.xlane.f32.xlu0 %v4166
        %v4168 = vpop.xlane.xlu0 %4167
        %v4169 = vsel %vm896, %v4159, 0.0
        %4170 = vadd.xlane.f32.xlu0 %v4169
        %v4171 = vpop.xlane.xlu0 %4170
        %v4172 = vrcp.pop %v4162
        %v4173 = vrcp.pop %v4165
        %v4174 = vrcp.pop %v4168
        %v4175 = vrcp.pop %v4171
        %v4176 = vmul.f32 %v4153, %v4172
        %v4177 = vmul.f32 %v4155, %v4173
        %v4178 = vmul.f32 %v4157, %v4174
        %v4179 = vmul.f32 %v4159, %v4175
        %v4180 = vpack.c.bf16 %v4177, %v4176
        %v4181 = vpack.c.bf16 %v4179, %v4178
        %4182 = vrot.lane.b32.xlu0 %v3305, 64
        %v4183 = vpop.permute.xlu0 %4182
        %4184 = vrot.lane.b32.xlu0 %v3306, 64
        %v4185 = vpop.permute.xlu0 %4184
        %v4189 = vsel %vm896, %v4180, 0
        %v4192 = vsel %vm896, %v4181, 0
        %4194 = vmatprep.subr.bf16.mxu0 0
        %4195 = vmatpush1.bf16.msra.mxu0 %v4183
        %4196 = vmatprep.subr.bf16.mxu0 0
        %4197 = vmatpush1.bf16.msra.mxu0 %v4185
        %4198 = vmatprep.subr.bf16.mxu0 0
        %4199 = vmatpush1.bf16.msra.mxu0 0
        %4200 = vmatprep.subr.bf16.mxu0 0
        %4201 = vmatpush1.bf16.msra.mxu0 0
        %4202 = vmatprep.subr.bf16.mxu0 0
        %4203 = vmatpush1.bf16.msra.mxu0 0
        %4204 = vmatprep.subr.bf16.mxu0 0
        %4205 = vmatpush1.bf16.msra.mxu0 0
        %4206 = vmatprep.subr.bf16.mxu0 0
        %4207 = vmatpush1.bf16.msra.mxu0 0
        %4208 = vmatprep.subr.bf16.mxu0 0
        %4209 = vmatpush1.bf16.msra.mxu0 0
        %4210 = vmatprep.subr.bf16.mxu0 0
        %4211 = vmatpush1.bf16.msra.mxu0 0
        %4212 = vmatprep.subr.bf16.mxu0 0
        %4213 = vmatpush1.bf16.msra.mxu0 0
        %4214 = vmatprep.subr.bf16.mxu0 0
        %4215 = vmatpush1.bf16.msra.mxu0 0
        %4216 = vmatprep.subr.bf16.mxu0 0
        %4217 = vmatpush1.bf16.msra.mxu0 0
        %4218 = vmatprep.subr.bf16.mxu0 0
        %4219 = vmatpush1.bf16.msra.mxu0 0
        %4220 = vmatprep.subr.bf16.mxu0 0
        %4221 = vmatpush1.bf16.msra.mxu0 0
        %4222 = vmatprep.subr.bf16.mxu0 0
        %4223 = vmatpush1.bf16.msra.mxu0 0
        %4224 = vmatprep.subr.bf16.mxu0 0
        %4225 = vmatpush1.bf16.msra.mxu0 0
        %4226 = vmatprep.mubr.bf16.mxu0 0
        %4227 = vmatmul.mubr.bf16.gmra.mrb[0].mxu0 %v4189
        %v4228 = vpop.f32.mrb[0].mxu0
        %v4229 = vadd.f32 0.0, %v4228
        %v4230 = vpop.f32.mrb[0].mxu0
        %v4231 = vpop.f32.mrb[0].mxu0
        %v4232 = vadd.f32 0.0, %v4231
        %v4233 = vpop.f32.mrb[0].mxu0
        %4234 = vmatprep.mubr.bf16.mxu0 0
        %4235 = vmatmul.mubr.bf16.gmra.mrb[0].mxu0 %v4192
        %v4236 = vpop.f32.mrb[0].mxu0
        %v4237 = vadd.f32 0.0, %v4236
        %v4238 = vpop.f32.mrb[0].mxu0
        %v4239 = vpop.f32.mrb[0].mxu0
        %v4240 = vadd.f32 0.0, %v4239
        %v4241 = vpop.f32.mrb[0].mxu0
        %4242 = vdwg.mxu0
        %4247 = vrot.lane.b32.xlu0 %v4229, 64
        %v4248 = vpop.permute.xlu0 %4247
        %4249 = vrot.lane.b32.xlu0 %v4232, 64
        %v4250 = vpop.permute.xlu0 %4249
        %4251 = vrot.lane.b32.xlu0 %v4237, 64
        %v4252 = vpop.permute.xlu0 %4251
        %4253 = vrot.lane.b32.xlu0 %v4240, 64
        %v4254 = vpop.permute.xlu0 %4253
        %4259 = vst.msk [vmem:[#allocation2] sm:$0xff] %vm1791, %v4248
        %4260 = vst.msk [vmem:[#allocation2 + $0x8] sm:$0xff] %vm1791, %v4250
        %4261 = vst.msk [vmem:[#allocation2 + $0x10] sm:$0xff] %vm1791, %v4252
        %4262 = vst.msk [vmem:[#allocation2 + $0x18] sm:$0xff] %vm1791, %v4254
        %4263 = vrot.lane.b32.xlu0 %v3301, 48
        %v4264 = vpop.permute.xlu0 %4263
        %4265 = vrot.lane.b32.xlu0 %v3302, 48
        %v4266 = vpop.permute.xlu0 %4265
        %4267 = vrot.lane.b32.xlu0 %v3303, 48
        %v4268 = vpop.permute.xlu0 %4267
        %4269 = vrot.lane.b32.xlu0 %v3304, 48
        %v4270 = vpop.permute.xlu0 %4269
        %v4272 = vsel %vm834, %v4264, 0
        %v4275 = vsel %vm834, %v4266, 0
        %v4278 = vsel %vm834, %v4268, 0
        %v4281 = vsel %vm834, %v4270, 0
        %4283 = vmatprep.subr.bf16.mxu0 0
        %4284 = vmatpush1.bf16.xpose.msra.mxu0 %v4278
        %4285 = vmatprep.subr.bf16.mxu0 0
        %4286 = vmatpush1.bf16.xpose.msra.mxu0 %v4281
        %4287 = vmatprep.subr.bf16.mxu0 0
        %4288 = vmatpush1.bf16.xpose.msra.mxu0 0
        %4289 = vmatprep.subr.bf16.mxu0 0
        %4290 = vmatpush1.bf16.xpose.msra.mxu0 0
        %4291 = vmatprep.subr.bf16.mxu0 0
        %4292 = vmatpush1.bf16.xpose.msra.mxu0 0
        %4293 = vmatprep.subr.bf16.mxu0 0
        %4294 = vmatpush1.bf16.xpose.msra.mxu0 0
        %4295 = vmatprep.subr.bf16.mxu0 0
        %4296 = vmatpush1.bf16.xpose.msra.mxu0 0
        %4297 = vmatprep.subr.bf16.mxu0 0
        %4298 = vmatpush1.bf16.xpose.msra.mxu0 0
        %4299 = vmatprep.subr.bf16.mxu0 0
        %4300 = vmatpush1.bf16.xpose.msra.mxu0 0
        %4301 = vmatprep.subr.bf16.mxu0 0
        %4302 = vmatpush1.bf16.xpose.msra.mxu0 0
        %4303 = vmatprep.subr.bf16.mxu0 0
        %4304 = vmatpush1.bf16.xpose.msra.mxu0 0
        %4305 = vmatprep.subr.bf16.mxu0 0
        %4306 = vmatpush1.bf16.xpose.msra.mxu0 0
        %4307 = vmatprep.subr.bf16.mxu0 0
        %4308 = vmatpush1.bf16.xpose.msra.mxu0 0
        %4309 = vmatprep.subr.bf16.mxu0 0
        %4310 = vmatpush1.bf16.xpose.msra.mxu0 0
        %4311 = vmatprep.subr.bf16.mxu0 0
        %4312 = vmatpush1.bf16.xpose.msra.mxu0 0
        %4313 = vmatprep.subr.bf16.mxu0 0
        %4314 = vmatpush1.bf16.xpose.msra.mxu0 0
        %4315 = vmatprep.mubr.bf16.mxu0 0
        %4316 = vmatmul.mubr.bf16.gmra.mrb[0].mxu0 %v4272
        %v4317 = vpop.f32.mrb[0].mxu0
        %v4318 = vadd.f32 %v832, %v4317
        %v4319 = vpop.f32.mrb[0].mxu0
        %v4320 = vpop.f32.mrb[0].mxu0
        %v4321 = vadd.f32 %v832, %v4320
        %v4322 = vpop.f32.mrb[0].mxu0
        %4323 = vmatprep.mubr.bf16.mxu0 0
        %4324 = vmatmul.mubr.bf16.gmra.mrb[0].mxu0 %v4275
        %v4325 = vpop.f32.mrb[0].mxu0
        %v4326 = vadd.f32 %v832, %v4325
        %v4327 = vpop.f32.mrb[0].mxu0
        %v4328 = vpop.f32.mrb[0].mxu0
        %v4329 = vadd.f32 %v832, %v4328
        %v4330 = vpop.f32.mrb[0].mxu0
        %4331 = vdwg.mxu0
        %v4332 = vsel %vm896, %v4318, -inf
        %4333 = vmax.xlane.f32.xlu0 %v4332
        %v4334 = vpop.xlane.xlu0 %4333
        %v4335 = vsel %vm896, %v4321, -inf
        %4336 = vmax.xlane.f32.xlu0 %v4335
        %v4337 = vpop.xlane.xlu0 %4336
        %v4338 = vsel %vm896, %v4326, -inf
        %4339 = vmax.xlane.f32.xlu0 %v4338
        %v4340 = vpop.xlane.xlu0 %4339
        %v4341 = vsel %vm896, %v4329, -inf
        %4342 = vmax.xlane.f32.xlu0 %v4341
        %v4343 = vpop.xlane.xlu0 %4342
        %v4344 = vsub.f32 %v4318, %v4334
        %v4345 = vsub.f32 %v4321, %v4337
        %v4346 = vsub.f32 %v4326, %v4340
        %v4347 = vsub.f32 %v4329, %v4343
        %v4348 = vmul.f32 %v4344, 1.442695
        %v4349 = vpow.pop %v4348
        %v4350 = vmul.f32 %v4345, 1.442695
        %v4351 = vpow.pop %v4350
        %v4352 = vmul.f32 %v4346, 1.442695
        %v4353 = vpow.pop %v4352
        %v4354 = vmul.f32 %v4347, 1.442695
        %v4355 = vpow.pop %v4354
        %v4356 = vsel %vm896, %v4349, 0.0
        %4357 = vadd.xlane.f32.xlu0 %v4356
        %v4358 = vpop.xlane.xlu0 %4357
        %v4359 = vsel %vm896, %v4351, 0.0
        %4360 = vadd.xlane.f32.xlu0 %v4359
        %v4361 = vpop.xlane.xlu0 %4360
        %v4362 = vsel %vm896, %v4353, 0.0
        %4363 = vadd.xlane.f32.xlu0 %v4362
        %v4364 = vpop.xlane.xlu0 %4363
        %v4365 = vsel %vm896, %v4355, 0.0
        %4366 = vadd.xlane.f32.xlu0 %v4365
        %v4367 = vpop.xlane.xlu0 %4366
        %v4368 = vrcp.pop %v4358
        %v4369 = vrcp.pop %v4361
        %v4370 = vrcp.pop %v4364
        %v4371 = vrcp.pop %v4367
        %v4372 = vmul.f32 %v4349, %v4368
        %v4373 = vmul.f32 %v4351, %v4369
        %v4374 = vmul.f32 %v4353, %v4370
        %v4375 = vmul.f32 %v4355, %v4371
        %v4376 = vpack.c.bf16 %v4373, %v4372
        %v4377 = vpack.c.bf16 %v4375, %v4374
        %4378 = vrot.lane.b32.xlu0 %v3305, 48
        %v4379 = vpop.permute.xlu0 %4378
        %4380 = vrot.lane.b32.xlu0 %v3306, 48
        %v4381 = vpop.permute.xlu0 %4380
        %v4385 = vsel %vm896, %v4376, 0
        %v4388 = vsel %vm896, %v4377, 0
        %4390 = vmatprep.subr.bf16.mxu0 0
        %4391 = vmatpush1.bf16.msra.mxu0 %v4379
        %4392 = vmatprep.subr.bf16.mxu0 0
        %4393 = vmatpush1.bf16.msra.mxu0 %v4381
        %4394 = vmatprep.subr.bf16.mxu0 0
        %4395 = vmatpush1.bf16.msra.mxu0 0
        %4396 = vmatprep.subr.bf16.mxu0 0
        %4397 = vmatpush1.bf16.msra.mxu0 0
        %4398 = vmatprep.subr.bf16.mxu0 0
        %4399 = vmatpush1.bf16.msra.mxu0 0
        %4400 = vmatprep.subr.bf16.mxu0 0
        %4401 = vmatpush1.bf16.msra.mxu0 0
        %4402 = vmatprep.subr.bf16.mxu0 0
        %4403 = vmatpush1.bf16.msra.mxu0 0
        %4404 = vmatprep.subr.bf16.mxu0 0
        %4405 = vmatpush1.bf16.msra.mxu0 0
        %4406 = vmatprep.subr.bf16.mxu0 0
        %4407 = vmatpush1.bf16.msra.mxu0 0
        %4408 = vmatprep.subr.bf16.mxu0 0
        %4409 = vmatpush1.bf16.msra.mxu0 0
        %4410 = vmatprep.subr.bf16.mxu0 0
        %4411 = vmatpush1.bf16.msra.mxu0 0
        %4412 = vmatprep.subr.bf16.mxu0 0
        %4413 = vmatpush1.bf16.msra.mxu0 0
        %4414 = vmatprep.subr.bf16.mxu0 0
        %4415 = vmatpush1.bf16.msra.mxu0 0
        %4416 = vmatprep.subr.bf16.mxu0 0
        %4417 = vmatpush1.bf16.msra.mxu0 0
        %4418 = vmatprep.subr.bf16.mxu0 0
        %4419 = vmatpush1.bf16.msra.mxu0 0
        %4420 = vmatprep.subr.bf16.mxu0 0
        %4421 = vmatpush1.bf16.msra.mxu0 0
        %4422 = vmatprep.mubr.bf16.mxu0 0
        %4423 = vmatmul.mubr.bf16.gmra.mrb[0].mxu0 %v4385
        %v4424 = vpop.f32.mrb[0].mxu0
        %v4425 = vadd.f32 0.0, %v4424
        %v4426 = vpop.f32.mrb[0].mxu0
        %v4427 = vpop.f32.mrb[0].mxu0
        %v4428 = vadd.f32 0.0, %v4427
        %v4429 = vpop.f32.mrb[0].mxu0
        %4430 = vmatprep.mubr.bf16.mxu0 0
        %4431 = vmatmul.mubr.bf16.gmra.mrb[0].mxu0 %v4388
        %v4432 = vpop.f32.mrb[0].mxu0
        %v4433 = vadd.f32 0.0, %v4432
        %v4434 = vpop.f32.mrb[0].mxu0
        %v4435 = vpop.f32.mrb[0].mxu0
        %v4436 = vadd.f32 0.0, %v4435
        %v4437 = vpop.f32.mrb[0].mxu0
        %4438 = vdwg.mxu0
        %4443 = vrot.lane.b32.xlu0 %v4425, 80
        %v4444 = vpop.permute.xlu0 %4443
        %4445 = vrot.lane.b32.xlu0 %v4428, 80
        %v4446 = vpop.permute.xlu0 %4445
        %4447 = vrot.lane.b32.xlu0 %v4433, 80
        %v4448 = vpop.permute.xlu0 %4447
        %4449 = vrot.lane.b32.xlu0 %v4436, 80
        %v4450 = vpop.permute.xlu0 %4449
        %4455 = vst.msk [vmem:[#allocation2] sm:$0xff] %vm1988, %v4444
        %4456 = vst.msk [vmem:[#allocation2 + $0x8] sm:$0xff] %vm1988, %v4446
        %4457 = vst.msk [vmem:[#allocation2 + $0x10] sm:$0xff] %vm1988, %v4448
        %4458 = vst.msk [vmem:[#allocation2 + $0x18] sm:$0xff] %vm1988, %v4450
        %4459 = vrot.lane.b32.xlu0 %v3301, 32
        %v4460 = vpop.permute.xlu0 %4459
        %4461 = vrot.lane.b32.xlu0 %v3302, 32
        %v4462 = vpop.permute.xlu0 %4461
        %4463 = vrot.lane.b32.xlu0 %v3303, 32
        %v4464 = vpop.permute.xlu0 %4463
        %4465 = vrot.lane.b32.xlu0 %v3304, 32
        %v4466 = vpop.permute.xlu0 %4465
        %v4468 = vsel %vm834, %v4460, 0
        %v4471 = vsel %vm834, %v4462, 0
        %v4474 = vsel %vm834, %v4464, 0
        %v4477 = vsel %vm834, %v4466, 0
        %4479 = vmatprep.subr.bf16.mxu0 0
        %4480 = vmatpush1.bf16.xpose.msra.mxu0 %v4474
        %4481 = vmatprep.subr.bf16.mxu0 0
        %4482 = vmatpush1.bf16.xpose.msra.mxu0 %v4477
        %4483 = vmatprep.subr.bf16.mxu0 0
        %4484 = vmatpush1.bf16.xpose.msra.mxu0 0
        %4485 = vmatprep.subr.bf16.mxu0 0
        %4486 = vmatpush1.bf16.xpose.msra.mxu0 0
        %4487 = vmatprep.subr.bf16.mxu0 0
        %4488 = vmatpush1.bf16.xpose.msra.mxu0 0
        %4489 = vmatprep.subr.bf16.mxu0 0
        %4490 = vmatpush1.bf16.xpose.msra.mxu0 0
        %4491 = vmatprep.subr.bf16.mxu0 0
        %4492 = vmatpush1.bf16.xpose.msra.mxu0 0
        %4493 = vmatprep.subr.bf16.mxu0 0
        %4494 = vmatpush1.bf16.xpose.msra.mxu0 0
        %4495 = vmatprep.subr.bf16.mxu0 0
        %4496 = vmatpush1.bf16.xpose.msra.mxu0 0
        %4497 = vmatprep.subr.bf16.mxu0 0
        %4498 = vmatpush1.bf16.xpose.msra.mxu0 0
        %4499 = vmatprep.subr.bf16.mxu0 0
        %4500 = vmatpush1.bf16.xpose.msra.mxu0 0
        %4501 = vmatprep.subr.bf16.mxu0 0
        %4502 = vmatpush1.bf16.xpose.msra.mxu0 0
        %4503 = vmatprep.subr.bf16.mxu0 0
        %4504 = vmatpush1.bf16.xpose.msra.mxu0 0
        %4505 = vmatprep.subr.bf16.mxu0 0
        %4506 = vmatpush1.bf16.xpose.msra.mxu0 0
        %4507 = vmatprep.subr.bf16.mxu0 0
        %4508 = vmatpush1.bf16.xpose.msra.mxu0 0
        %4509 = vmatprep.subr.bf16.mxu0 0
        %4510 = vmatpush1.bf16.xpose.msra.mxu0 0
        %4511 = vmatprep.mubr.bf16.mxu0 0
        %4512 = vmatmul.mubr.bf16.gmra.mrb[0].mxu0 %v4468
        %v4513 = vpop.f32.mrb[0].mxu0
        %v4514 = vadd.f32 %v832, %v4513
        %v4515 = vpop.f32.mrb[0].mxu0
        %v4516 = vpop.f32.mrb[0].mxu0
        %v4517 = vadd.f32 %v832, %v4516
        %v4518 = vpop.f32.mrb[0].mxu0
        %4519 = vmatprep.mubr.bf16.mxu0 0
        %4520 = vmatmul.mubr.bf16.gmra.mrb[0].mxu0 %v4471
        %v4521 = vpop.f32.mrb[0].mxu0
        %v4522 = vadd.f32 %v832, %v4521
        %v4523 = vpop.f32.mrb[0].mxu0
        %v4524 = vpop.f32.mrb[0].mxu0
        %v4525 = vadd.f32 %v832, %v4524
        %v4526 = vpop.f32.mrb[0].mxu0
        %4527 = vdwg.mxu0
        %v4528 = vsel %vm896, %v4514, -inf
        %4529 = vmax.xlane.f32.xlu0 %v4528
        %v4530 = vpop.xlane.xlu0 %4529
        %v4531 = vsel %vm896, %v4517, -inf
        %4532 = vmax.xlane.f32.xlu0 %v4531
        %v4533 = vpop.xlane.xlu0 %4532
        %v4534 = vsel %vm896, %v4522, -inf
        %4535 = vmax.xlane.f32.xlu0 %v4534
        %v4536 = vpop.xlane.xlu0 %4535
        %v4537 = vsel %vm896, %v4525, -inf
        %4538 = vmax.xlane.f32.xlu0 %v4537
        %v4539 = vpop.xlane.xlu0 %4538
        %v4540 = vsub.f32 %v4514, %v4530
        %v4541 = vsub.f32 %v4517, %v4533
        %v4542 = vsub.f32 %v4522, %v4536
        %v4543 = vsub.f32 %v4525, %v4539
        %v4544 = vmul.f32 %v4540, 1.442695
        %v4545 = vpow.pop %v4544
        %v4546 = vmul.f32 %v4541, 1.442695
        %v4547 = vpow.pop %v4546
        %v4548 = vmul.f32 %v4542, 1.442695
        %v4549 = vpow.pop %v4548
        %v4550 = vmul.f32 %v4543, 1.442695
        %v4551 = vpow.pop %v4550
        %v4552 = vsel %vm896, %v4545, 0.0
        %4553 = vadd.xlane.f32.xlu0 %v4552
        %v4554 = vpop.xlane.xlu0 %4553
        %v4555 = vsel %vm896, %v4547, 0.0
        %4556 = vadd.xlane.f32.xlu0 %v4555
        %v4557 = vpop.xlane.xlu0 %4556
        %v4558 = vsel %vm896, %v4549, 0.0
        %4559 = vadd.xlane.f32.xlu0 %v4558
        %v4560 = vpop.xlane.xlu0 %4559
        %v4561 = vsel %vm896, %v4551, 0.0
        %4562 = vadd.xlane.f32.xlu0 %v4561
        %v4563 = vpop.xlane.xlu0 %4562
        %v4564 = vrcp.pop %v4554
        %v4565 = vrcp.pop %v4557
        %v4566 = vrcp.pop %v4560
        %v4567 = vrcp.pop %v4563
        %v4568 = vmul.f32 %v4545, %v4564
        %v4569 = vmul.f32 %v4547, %v4565
        %v4570 = vmul.f32 %v4549, %v4566
        %v4571 = vmul.f32 %v4551, %v4567
        %v4572 = vpack.c.bf16 %v4569, %v4568
        %v4573 = vpack.c.bf16 %v4571, %v4570
        %4574 = vrot.lane.b32.xlu0 %v3305, 32
        %v4575 = vpop.permute.xlu0 %4574
        %4576 = vrot.lane.b32.xlu0 %v3306, 32
        %v4577 = vpop.permute.xlu0 %4576
        %v4581 = vsel %vm896, %v4572, 0
        %v4584 = vsel %vm896, %v4573, 0
        %4586 = vmatprep.subr.bf16.mxu0 0
        %4587 = vmatpush1.bf16.msra.mxu0 %v4575
        %4588 = vmatprep.subr.bf16.mxu0 0
        %4589 = vmatpush1.bf16.msra.mxu0 %v4577
        %4590 = vmatprep.subr.bf16.mxu0 0
        %4591 = vmatpush1.bf16.msra.mxu0 0
        %4592 = vmatprep.subr.bf16.mxu0 0
        %4593 = vmatpush1.bf16.msra.mxu0 0
        %4594 = vmatprep.subr.bf16.mxu0 0
        %4595 = vmatpush1.bf16.msra.mxu0 0
        %4596 = vmatprep.subr.bf16.mxu0 0
        %4597 = vmatpush1.bf16.msra.mxu0 0
        %4598 = vmatprep.subr.bf16.mxu0 0
        %4599 = vmatpush1.bf16.msra.mxu0 0
        %4600 = vmatprep.subr.bf16.mxu0 0
        %4601 = vmatpush1.bf16.msra.mxu0 0
        %4602 = vmatprep.subr.bf16.mxu0 0
        %4603 = vmatpush1.bf16.msra.mxu0 0
        %4604 = vmatprep.subr.bf16.mxu0 0
        %4605 = vmatpush1.bf16.msra.mxu0 0
        %4606 = vmatprep.subr.bf16.mxu0 0
        %4607 = vmatpush1.bf16.msra.mxu0 0
        %4608 = vmatprep.subr.bf16.mxu0 0
        %4609 = vmatpush1.bf16.msra.mxu0 0
        %4610 = vmatprep.subr.bf16.mxu0 0
        %4611 = vmatpush1.bf16.msra.mxu0 0
        %4612 = vmatprep.subr.bf16.mxu0 0
        %4613 = vmatpush1.bf16.msra.mxu0 0
        %4614 = vmatprep.subr.bf16.mxu0 0
        %4615 = vmatpush1.bf16.msra.mxu0 0
        %4616 = vmatprep.subr.bf16.mxu0 0
        %4617 = vmatpush1.bf16.msra.mxu0 0
        %4618 = vmatprep.mubr.bf16.mxu0 0
        %4619 = vmatmul.mubr.bf16.gmra.mrb[0].mxu0 %v4581
        %v4620 = vpop.f32.mrb[0].mxu0
        %v4621 = vadd.f32 0.0, %v4620
        %v4622 = vpop.f32.mrb[0].mxu0
        %v4623 = vpop.f32.mrb[0].mxu0
        %v4624 = vadd.f32 0.0, %v4623
        %v4625 = vpop.f32.mrb[0].mxu0
        %4626 = vmatprep.mubr.bf16.mxu0 0
        %4627 = vmatmul.mubr.bf16.gmra.mrb[0].mxu0 %v4584
        %v4628 = vpop.f32.mrb[0].mxu0
        %v4629 = vadd.f32 0.0, %v4628
        %v4630 = vpop.f32.mrb[0].mxu0
        %v4631 = vpop.f32.mrb[0].mxu0
        %v4632 = vadd.f32 0.0, %v4631
        %v4633 = vpop.f32.mrb[0].mxu0
        %4634 = vdwg.mxu0
        %4639 = vrot.lane.b32.xlu0 %v4621, 96
        %v4640 = vpop.permute.xlu0 %4639
        %4641 = vrot.lane.b32.xlu0 %v4624, 96
        %v4642 = vpop.permute.xlu0 %4641
        %4643 = vrot.lane.b32.xlu0 %v4629, 96
        %v4644 = vpop.permute.xlu0 %4643
        %4645 = vrot.lane.b32.xlu0 %v4632, 96
        %v4646 = vpop.permute.xlu0 %4645
        %4651 = vst.msk [vmem:[#allocation2] sm:$0xff] %vm2185, %v4640
        %4652 = vst.msk [vmem:[#allocation2 + $0x8] sm:$0xff] %vm2185, %v4642
        %4653 = vst.msk [vmem:[#allocation2 + $0x10] sm:$0xff] %vm2185, %v4644
        %4654 = vst.msk [vmem:[#allocation2 + $0x18] sm:$0xff] %vm2185, %v4646
        %4655 = vrot.lane.b32.xlu0 %v3301, 16
        %v4656 = vpop.permute.xlu0 %4655
        %4657 = vrot.lane.b32.xlu0 %v3302, 16
        %v4658 = vpop.permute.xlu0 %4657
        %4659 = vrot.lane.b32.xlu0 %v3303, 16
        %v4660 = vpop.permute.xlu0 %4659
        %4661 = vrot.lane.b32.xlu0 %v3304, 16
        %v4662 = vpop.permute.xlu0 %4661
        %v4664 = vsel %vm834, %v4656, 0
        %v4667 = vsel %vm834, %v4658, 0
        %v4670 = vsel %vm834, %v4660, 0
        %v4673 = vsel %vm834, %v4662, 0
        %4675 = vmatprep.subr.bf16.mxu0 0
        %4676 = vmatpush1.bf16.xpose.msra.mxu0 %v4670
        %4677 = vmatprep.subr.bf16.mxu0 0
        %4678 = vmatpush1.bf16.xpose.msra.mxu0 %v4673
        %4679 = vmatprep.subr.bf16.mxu0 0
        %4680 = vmatpush1.bf16.xpose.msra.mxu0 0
        %4681 = vmatprep.subr.bf16.mxu0 0
        %4682 = vmatpush1.bf16.xpose.msra.mxu0 0
        %4683 = vmatprep.subr.bf16.mxu0 0
        %4684 = vmatpush1.bf16.xpose.msra.mxu0 0
        %4685 = vmatprep.subr.bf16.mxu0 0
        %4686 = vmatpush1.bf16.xpose.msra.mxu0 0
        %4687 = vmatprep.subr.bf16.mxu0 0
        %4688 = vmatpush1.bf16.xpose.msra.mxu0 0
        %4689 = vmatprep.subr.bf16.mxu0 0
        %4690 = vmatpush1.bf16.xpose.msra.mxu0 0
        %4691 = vmatprep.subr.bf16.mxu0 0
        %4692 = vmatpush1.bf16.xpose.msra.mxu0 0
        %4693 = vmatprep.subr.bf16.mxu0 0
        %4694 = vmatpush1.bf16.xpose.msra.mxu0 0
        %4695 = vmatprep.subr.bf16.mxu0 0
        %4696 = vmatpush1.bf16.xpose.msra.mxu0 0
        %4697 = vmatprep.subr.bf16.mxu0 0
        %4698 = vmatpush1.bf16.xpose.msra.mxu0 0
        %4699 = vmatprep.subr.bf16.mxu0 0
        %4700 = vmatpush1.bf16.xpose.msra.mxu0 0
        %4701 = vmatprep.subr.bf16.mxu0 0
        %4702 = vmatpush1.bf16.xpose.msra.mxu0 0
        %4703 = vmatprep.subr.bf16.mxu0 0
        %4704 = vmatpush1.bf16.xpose.msra.mxu0 0
        %4705 = vmatprep.subr.bf16.mxu0 0
        %4706 = vmatpush1.bf16.xpose.msra.mxu0 0
        %4707 = vmatprep.mubr.bf16.mxu0 0
        %4708 = vmatmul.mubr.bf16.gmra.mrb[0].mxu0 %v4664
        %v4709 = vpop.f32.mrb[0].mxu0
        %v4710 = vadd.f32 %v832, %v4709
        %v4711 = vpop.f32.mrb[0].mxu0
        %v4712 = vpop.f32.mrb[0].mxu0
        %v4713 = vadd.f32 %v832, %v4712
        %v4714 = vpop.f32.mrb[0].mxu0
        %4715 = vmatprep.mubr.bf16.mxu0 0
        %4716 = vmatmul.mubr.bf16.gmra.mrb[0].mxu0 %v4667
        %v4717 = vpop.f32.mrb[0].mxu0
        %v4718 = vadd.f32 %v832, %v4717
        %v4719 = vpop.f32.mrb[0].mxu0
        %v4720 = vpop.f32.mrb[0].mxu0
        %v4721 = vadd.f32 %v832, %v4720
        %v4722 = vpop.f32.mrb[0].mxu0
        %4723 = vdwg.mxu0
        %v4724 = vsel %vm896, %v4710, -inf
        %4725 = vmax.xlane.f32.xlu0 %v4724
        %v4726 = vpop.xlane.xlu0 %4725
        %v4727 = vsel %vm896, %v4713, -inf
        %4728 = vmax.xlane.f32.xlu0 %v4727
        %v4729 = vpop.xlane.xlu0 %4728
        %v4730 = vsel %vm896, %v4718, -inf
        %4731 = vmax.xlane.f32.xlu0 %v4730
        %v4732 = vpop.xlane.xlu0 %4731
        %v4733 = vsel %vm896, %v4721, -inf
        %4734 = vmax.xlane.f32.xlu0 %v4733
        %v4735 = vpop.xlane.xlu0 %4734
        %v4736 = vsub.f32 %v4710, %v4726
        %v4737 = vsub.f32 %v4713, %v4729
        %v4738 = vsub.f32 %v4718, %v4732
        %v4739 = vsub.f32 %v4721, %v4735
        %v4740 = vmul.f32 %v4736, 1.442695
        %v4741 = vpow.pop %v4740
        %v4742 = vmul.f32 %v4737, 1.442695
        %v4743 = vpow.pop %v4742
        %v4744 = vmul.f32 %v4738, 1.442695
        %v4745 = vpow.pop %v4744
        %v4746 = vmul.f32 %v4739, 1.442695
        %v4747 = vpow.pop %v4746
        %v4748 = vsel %vm896, %v4741, 0.0
        %4749 = vadd.xlane.f32.xlu0 %v4748
        %v4750 = vpop.xlane.xlu0 %4749
        %v4751 = vsel %vm896, %v4743, 0.0
        %4752 = vadd.xlane.f32.xlu0 %v4751
        %v4753 = vpop.xlane.xlu0 %4752
        %v4754 = vsel %vm896, %v4745, 0.0
        %4755 = vadd.xlane.f32.xlu0 %v4754
        %v4756 = vpop.xlane.xlu0 %4755
        %v4757 = vsel %vm896, %v4747, 0.0
        %4758 = vadd.xlane.f32.xlu0 %v4757
        %v4759 = vpop.xlane.xlu0 %4758
        %v4760 = vrcp.pop %v4750
        %v4761 = vrcp.pop %v4753
        %v4762 = vrcp.pop %v4756
        %v4763 = vrcp.pop %v4759
        %v4764 = vmul.f32 %v4741, %v4760
        %v4765 = vmul.f32 %v4743, %v4761
        %v4766 = vmul.f32 %v4745, %v4762
        %v4767 = vmul.f32 %v4747, %v4763
        %v4768 = vpack.c.bf16 %v4765, %v4764
        %v4769 = vpack.c.bf16 %v4767, %v4766
        %4770 = vrot.lane.b32.xlu0 %v3305, 16
        %v4771 = vpop.permute.xlu0 %4770
        %4772 = vrot.lane.b32.xlu0 %v3306, 16
        %v4773 = vpop.permute.xlu0 %4772
        %v4777 = vsel %vm896, %v4768, 0
        %v4780 = vsel %vm896, %v4769, 0
        %4782 = vmatprep.subr.bf16.mxu0 0
        %4783 = vmatpush1.bf16.msra.mxu0 %v4771
        %4784 = vmatprep.subr.bf16.mxu0 0
        %4785 = vmatpush1.bf16.msra.mxu0 %v4773
        %4786 = vmatprep.subr.bf16.mxu0 0
        %4787 = vmatpush1.bf16.msra.mxu0 0
        %4788 = vmatprep.subr.bf16.mxu0 0
        %4789 = vmatpush1.bf16.msra.mxu0 0
        %4790 = vmatprep.subr.bf16.mxu0 0
        %4791 = vmatpush1.bf16.msra.mxu0 0
        %4792 = vmatprep.subr.bf16.mxu0 0
        %4793 = vmatpush1.bf16.msra.mxu0 0
        %4794 = vmatprep.subr.bf16.mxu0 0
        %4795 = vmatpush1.bf16.msra.mxu0 0
        %4796 = vmatprep.subr.bf16.mxu0 0
        %4797 = vmatpush1.bf16.msra.mxu0 0
        %4798 = vmatprep.subr.bf16.mxu0 0
        %4799 = vmatpush1.bf16.msra.mxu0 0
        %4800 = vmatprep.subr.bf16.mxu0 0
        %4801 = vmatpush1.bf16.msra.mxu0 0
        %4802 = vmatprep.subr.bf16.mxu0 0
        %4803 = vmatpush1.bf16.msra.mxu0 0
        %4804 = vmatprep.subr.bf16.mxu0 0
        %4805 = vmatpush1.bf16.msra.mxu0 0
        %4806 = vmatprep.subr.bf16.mxu0 0
        %4807 = vmatpush1.bf16.msra.mxu0 0
        %4808 = vmatprep.subr.bf16.mxu0 0
        %4809 = vmatpush1.bf16.msra.mxu0 0
        %4810 = vmatprep.subr.bf16.mxu0 0
        %4811 = vmatpush1.bf16.msra.mxu0 0
        %4812 = vmatprep.subr.bf16.mxu0 0
        %4813 = vmatpush1.bf16.msra.mxu0 0
        %4814 = vmatprep.mubr.bf16.mxu0 0
        %4815 = vmatmul.mubr.bf16.gmra.mrb[0].mxu0 %v4777
        %v4816 = vpop.f32.mrb[0].mxu0
        %v4817 = vadd.f32 0.0, %v4816
        %v4818 = vpop.f32.mrb[0].mxu0
        %v4819 = vpop.f32.mrb[0].mxu0
        %v4820 = vadd.f32 0.0, %v4819
        %v4821 = vpop.f32.mrb[0].mxu0
        %4822 = vmatprep.mubr.bf16.mxu0 0
        %4823 = vmatmul.mubr.bf16.gmra.mrb[0].mxu0 %v4780
        %v4824 = vpop.f32.mrb[0].mxu0
        %v4825 = vadd.f32 0.0, %v4824
        %v4826 = vpop.f32.mrb[0].mxu0
        %v4827 = vpop.f32.mrb[0].mxu0
        %v4828 = vadd.f32 0.0, %v4827
        %v4829 = vpop.f32.mrb[0].mxu0
        %4830 = vdwg.mxu0
        %4835 = vrot.lane.b32.xlu0 %v4817, 112
        %v4836 = vpop.permute.xlu0 %4835
        %4837 = vrot.lane.b32.xlu0 %v4820, 112
        %v4838 = vpop.permute.xlu0 %4837
        %4839 = vrot.lane.b32.xlu0 %v4825, 112
        %v4840 = vpop.permute.xlu0 %4839
        %4841 = vrot.lane.b32.xlu0 %v4828, 112
        %v4842 = vpop.permute.xlu0 %4841
        %4847 = vst.msk [vmem:[#allocation2] sm:$0xff] %vm2382, %v4836
        %4848 = vst.msk [vmem:[#allocation2 + $0x8] sm:$0xff] %vm2382, %v4838
        %4849 = vst.msk [vmem:[#allocation2 + $0x10] sm:$0xff] %vm2382, %v4840
        %4850 = vst.msk [vmem:[#allocation2 + $0x18] sm:$0xff] %vm2382, %v4842
        %v4851 = vld [vmem:[#allocation2] sm:$0xff]
        %v4852 = vld [vmem:[#allocation2 + $0x8] sm:$0xff]
        %v4853 = vld [vmem:[#allocation2 + $0x10] sm:$0xff]
        %v4854 = vld [vmem:[#allocation2 + $0x18] sm:$0xff]
        %v4855 = vpack.c.bf16 %v4852, %v4851
        %v4856 = vpack.c.bf16 %v4854, %v4853
        %s4857 = scalar_lea.vmem [#allocation9], 64
        %v4858 = vld [vmem:[%s4857] sm:$0xf]
        %v4859 = vld [vmem:[%s4857 + $0x4] sm:$0xf]
        %v4860 = vld [vmem:[%s4857 + $0x8] sm:$0xf]
        %v4861 = vld [vmem:[%s4857 + $0xc] sm:$0xf]
        %v4862 = vld [vmem:[%s4857 + $0x10] sm:$0xf]
        %v4863 = vld [vmem:[%s4857 + $0x14] sm:$0xf]
        %v4864 = vld [vmem:[%s4857 + $0x18] sm:$0xf]
        %v4865 = vld [vmem:[%s4857 + $0x1c] sm:$0xf]
        %v4866 = vld [vmem:[%s4857 + $0x20] sm:$0xf]
        %v4867 = vld [vmem:[%s4857 + $0x24] sm:$0xf]
        %v4868 = vld [vmem:[%s4857 + $0x28] sm:$0xf]
        %v4869 = vld [vmem:[%s4857 + $0x2c] sm:$0xf]
        %v4870 = vld [vmem:[%s4857 + $0x30] sm:$0xf]
        %v4871 = vld [vmem:[%s4857 + $0x34] sm:$0xf]
        %v4872 = vld [vmem:[%s4857 + $0x38] sm:$0xf]
        %v4873 = vld [vmem:[%s4857 + $0x3c] sm:$0xf]
        %v4874 = vlaneseq
        %v4875 = vshrl.u32 %v4874, 7
        %v4876 = vsub.s32 0, %v4875
        %v4877 = vrot.slane %v3012, %v4876
        %v4894 = vunpack.c.l.b16 %v4858
        %v4895 = vunpack.c.l.b16 %v4859
        %v4896 = vunpack.c.l.b16 %v4860
        %v4897 = vunpack.c.l.b16 %v4861
        %v4898 = vunpack.c.l.b16 %v4862
        %v4899 = vunpack.c.l.b16 %v4863
        %v4900 = vunpack.c.l.b16 %v4864
        %v4901 = vunpack.c.l.b16 %v4865
        %v4902 = vunpack.c.l.b16 %v4866
        %v4903 = vunpack.c.l.b16 %v4867
        %v4904 = vunpack.c.l.b16 %v4868
        %v4905 = vunpack.c.l.b16 %v4869
        %v4906 = vunpack.c.l.b16 %v4870
        %v4907 = vunpack.c.l.b16 %v4871
        %v4908 = vunpack.c.l.b16 %v4872
        %v4909 = vunpack.c.l.b16 %v4873
        %v4910 = vpack.c.b16 %v4895, %v4894
        %v4911 = vpack.c.b16 %v4897, %v4896
        %v4912 = vpack.c.b16 %v4899, %v4898
        %v4913 = vpack.c.b16 %v4901, %v4900
        %v4914 = vpack.c.b16 %v4903, %v4902
        %v4915 = vpack.c.b16 %v4905, %v4904
        %v4916 = vpack.c.b16 %v4907, %v4906
        %v4917 = vpack.c.b16 %v4909, %v4908
        %4926 = vmatprep.subr.bf16.mxu0 0
        %4927 = vmatpush1.bf16.msra.mxu0 %v4910
        %4928 = vmatprep.subr.bf16.mxu0 0
        %4929 = vmatpush1.bf16.msra.mxu0 %v4911
        %4930 = vmatprep.subr.bf16.mxu0 0
        %4931 = vmatpush1.bf16.msra.mxu0 %v4912
        %4932 = vmatprep.subr.bf16.mxu0 0
        %4933 = vmatpush1.bf16.msra.mxu0 %v4913
        %4934 = vmatprep.subr.bf16.mxu0 0
        %4935 = vmatpush1.bf16.msra.mxu0 %v4914
        %4936 = vmatprep.subr.bf16.mxu0 0
        %4937 = vmatpush1.bf16.msra.mxu0 %v4915
        %4938 = vmatprep.subr.bf16.mxu0 0
        %4939 = vmatpush1.bf16.msra.mxu0 %v4916
        %4940 = vmatprep.subr.bf16.mxu0 0
        %4941 = vmatpush1.bf16.msra.mxu0 %v4917
        %4942 = vmatprep.subr.bf16.mxu0 0
        %4943 = vmatpush1.bf16.msra.mxu0 0
        %4944 = vmatprep.subr.bf16.mxu0 0
        %4945 = vmatpush1.bf16.msra.mxu0 0
        %4946 = vmatprep.subr.bf16.mxu0 0
        %4947 = vmatpush1.bf16.msra.mxu0 0
        %4948 = vmatprep.subr.bf16.mxu0 0
        %4949 = vmatpush1.bf16.msra.mxu0 0
        %4950 = vmatprep.subr.bf16.mxu0 0
        %4951 = vmatpush1.bf16.msra.mxu0 0
        %4952 = vmatprep.subr.bf16.mxu0 0
        %4953 = vmatpush1.bf16.msra.mxu0 0
        %4954 = vmatprep.subr.bf16.mxu0 0
        %4955 = vmatpush1.bf16.msra.mxu0 0
        %4956 = vmatprep.subr.bf16.mxu0 0
        %4957 = vmatpush1.bf16.msra.mxu0 0
        %4958 = vmatprep.mubr.bf16.mxu0 0
        %4959 = vmatmul.mubr.bf16.gmra.mrb[0].mxu0 %v4855
        %v4960 = vpop.f32.mrb[0].mxu0
        %v4961 = vadd.f32 %v4877, %v4960
        %v4962 = vpop.f32.mrb[0].mxu0
        %v4963 = vpop.f32.mrb[0].mxu0
        %v4964 = vadd.f32 %v4877, %v4963
        %v4965 = vpop.f32.mrb[0].mxu0
        %4966 = vmatprep.mubr.bf16.mxu0 0
        %4967 = vmatmul.mubr.bf16.gmra.mrb[0].mxu0 %v4856
        %v4968 = vpop.f32.mrb[0].mxu0
        %v4969 = vadd.f32 %v4877, %v4968
        %v4970 = vpop.f32.mrb[0].mxu0
        %v4971 = vpop.f32.mrb[0].mxu0
        %v4972 = vadd.f32 %v4877, %v4971
        %v4973 = vpop.f32.mrb[0].mxu0
        %4974 = vdwg.mxu0
        %v4975 = vadd.f32 %v3007, %v4961
        %v4976 = vadd.f32 %v3008, %v4964
        %v4977 = vadd.f32 %v3009, %v4969
        %v4978 = vadd.f32 %v3010, %v4972
        %4979 = vadd.xlane.f32.xlu0 %v4975
        %v4980 = vpop.xlane.xlu0 %4979
        %4981 = vadd.xlane.f32.xlu0 %v4976
        %v4982 = vpop.xlane.xlu0 %4981
        %4983 = vadd.xlane.f32.xlu0 %v4977
        %v4984 = vpop.xlane.xlu0 %4983
        %4985 = vadd.xlane.f32.xlu0 %v4978
        %v4986 = vpop.xlane.xlu0 %4985
        %v4987 = vmul.f32 %v4980, %v2522
        %v4988 = vmul.f32 %v4982, %v2522
        %v4989 = vmul.f32 %v4984, %v2522
        %v4990 = vmul.f32 %v4986, %v2522
        %v4991 = vmul.f32 %v4975, %v4975
        %v4992 = vmul.f32 %v4976, %v4976
        %v4993 = vmul.f32 %v4977, %v4977
        %v4994 = vmul.f32 %v4978, %v4978
        %4995 = vadd.xlane.f32.xlu0 %v4991
        %v4996 = vpop.xlane.xlu0 %4995
        %4997 = vadd.xlane.f32.xlu0 %v4992
        %v4998 = vpop.xlane.xlu0 %4997
        %4999 = vadd.xlane.f32.xlu0 %v4993
        %v5000 = vpop.xlane.xlu0 %4999
        %5001 = vadd.xlane.f32.xlu0 %v4994
        %v5002 = vpop.xlane.xlu0 %5001
        %v5003 = vmul.f32 %v4996, %v2522
        %v5004 = vmul.f32 %v4998, %v2522
        %v5005 = vmul.f32 %v5000, %v2522
        %v5006 = vmul.f32 %v5002, %v2522
        %v5007 = vmul.f32 %v4987, %v4987
        %v5008 = vmul.f32 %v4988, %v4988
        %v5009 = vmul.f32 %v4989, %v4989
        %v5010 = vmul.f32 %v4990, %v4990
        %v5011 = vsub.f32 %v5003, %v5007
        %v5012 = vsub.f32 %v5004, %v5008
        %v5013 = vsub.f32 %v5005, %v5009
        %v5014 = vsub.f32 %v5006, %v5010
        %v5015 = vsub.f32 %v4975, %v4987
        %v5016 = vsub.f32 %v4976, %v4988
        %v5017 = vsub.f32 %v4977, %v4989
        %v5018 = vsub.f32 %v4978, %v4990
        %v5019 = vadd.f32 %v5011, 1e-05
        %v5020 = vadd.f32 %v5012, 1e-05
        %v5021 = vadd.f32 %v5013, 1e-05
        %v5022 = vadd.f32 %v5014, 1e-05
        %v5023 = vrsqrt.pop %v5019
        %v5024 = vrsqrt.pop %v5020
        %v5025 = vrsqrt.pop %v5021
        %v5026 = vrsqrt.pop %v5022
        %v5027 = vmul.f32 %v5015, %v5023
        %v5028 = vmul.f32 %v5016, %v5024
        %v5029 = vmul.f32 %v5017, %v5025
        %v5030 = vmul.f32 %v5018, %v5026
        %v5031 = vlaneseq
        %v5032 = vshrl.u32 %v5031, 7
        %v5033 = vsub.s32 0, %v5032
        %v5034 = vrot.slane %v3014, %v5033
        %v5035 = vmul.f32 %v5027, %v5034
        %v5036 = vmul.f32 %v5028, %v5034
        %v5037 = vmul.f32 %v5029, %v5034
        %v5038 = vmul.f32 %v5030, %v5034
        %v5039 = vlaneseq
        %v5040 = vshrl.u32 %v5039, 7
        %v5041 = vsub.s32 0, %v5040
        %v5042 = vrot.slane %v3015, %v5041
        %v5043 = vadd.f32 %v5035, %v5042
        %v5044 = vadd.f32 %v5036, %v5042
        %v5045 = vadd.f32 %v5037, %v5042
        %v5046 = vadd.f32 %v5038, %v5042
        %v5047 = vpack.c.bf16 %v5044, %v5043
        %v5048 = vpack.c.bf16 %v5046, %v5045
        %s5049 = scalar_lea.vmem [#allocation11], 128
        %v5050 = vld [vmem:[%s5049] sm:$0xff]
        %v5051 = vld [vmem:[%s5049 + $0x8] sm:$0xff]
        %v5052 = vld [vmem:[%s5049 + $0x10] sm:$0xff]
        %v5053 = vld [vmem:[%s5049 + $0x18] sm:$0xff]
        %v5054 = vld [vmem:[%s5049 + $0x20] sm:$0xff]
        %v5055 = vld [vmem:[%s5049 + $0x28] sm:$0xff]
        %v5056 = vld [vmem:[%s5049 + $0x30] sm:$0xff]
        %v5057 = vld [vmem:[%s5049 + $0x38] sm:$0xff]
        %v5058 = vld [vmem:[%s5049 + $0x40] sm:$0xff]
        %v5059 = vld [vmem:[%s5049 + $0x48] sm:$0xff]
        %v5060 = vld [vmem:[%s5049 + $0x50] sm:$0xff]
        %v5061 = vld [vmem:[%s5049 + $0x58] sm:$0xff]
        %v5062 = vld [vmem:[%s5049 + $0x60] sm:$0xff]
        %v5063 = vld [vmem:[%s5049 + $0x68] sm:$0xff]
        %v5064 = vld [vmem:[%s5049 + $0x70] sm:$0xff]
        %v5065 = vld [vmem:[%s5049 + $0x78] sm:$0xff]
        %s5066 = scalar_lea.vmem %s8, 2
        %v5067 = vld [vmem:[%s5066] sm:$0x3]
        %v5069 = vlaneseq
        %v5070 = vshrl.u32 %v5069, 7
        %v5071 = vsub.s32 0, %v5070
        %v5072 = vrot.slane %v5067, %v5071
        %v5073 = vlaneseq
        %v5074 = vshrl.u32 %v5073, 7
        %v5075 = vsub.s32 1, %v5074
        %v5076 = vrot.slane %v5067, %v5075
        %v5095 = vunpack.c.l.b16 %v5050
        %v5096 = vunpack.c.h.b16 %v5050
        %v5097 = vunpack.c.l.b16 %v5051
        %v5098 = vunpack.c.h.b16 %v5051
        %v5099 = vunpack.c.l.b16 %v5052
        %v5100 = vunpack.c.h.b16 %v5052
        %v5101 = vunpack.c.l.b16 %v5053
        %v5102 = vunpack.c.h.b16 %v5053
        %v5103 = vunpack.c.l.b16 %v5054
        %v5104 = vunpack.c.h.b16 %v5054
        %v5105 = vunpack.c.l.b16 %v5055
        %v5106 = vunpack.c.h.b16 %v5055
        %v5107 = vunpack.c.l.b16 %v5056
        %v5108 = vunpack.c.h.b16 %v5056
        %v5109 = vunpack.c.l.b16 %v5057
        %v5110 = vunpack.c.h.b16 %v5057
        %v5111 = vunpack.c.l.b16 %v5058
        %v5112 = vunpack.c.h.b16 %v5058
        %v5113 = vunpack.c.l.b16 %v5059
        %v5114 = vunpack.c.h.b16 %v5059
        %v5115 = vunpack.c.l.b16 %v5060
        %v5116 = vunpack.c.h.b16 %v5060
        %v5117 = vunpack.c.l.b16 %v5061
        %v5118 = vunpack.c.h.b16 %v5061
        %v5119 = vunpack.c.l.b16 %v5062
        %v5120 = vunpack.c.h.b16 %v5062
        %v5121 = vunpack.c.l.b16 %v5063
        %v5122 = vunpack.c.h.b16 %v5063
        %v5123 = vunpack.c.l.b16 %v5064
        %v5124 = vunpack.c.h.b16 %v5064
        %v5125 = vunpack.c.l.b16 %v5065
        %v5126 = vunpack.c.h.b16 %v5065
        %v5127 = vpack.c.b16 %v5097, %v5095
        %v5128 = vpack.c.b16 %v5098, %v5096
        %v5129 = vpack.c.b16 %v5101, %v5099
        %v5130 = vpack.c.b16 %v5102, %v5100
        %v5131 = vpack.c.b16 %v5105, %v5103
        %v5132 = vpack.c.b16 %v5106, %v5104
        %v5133 = vpack.c.b16 %v5109, %v5107
        %v5134 = vpack.c.b16 %v5110, %v5108
        %v5135 = vpack.c.b16 %v5113, %v5111
        %v5136 = vpack.c.b16 %v5114, %v5112
        %v5137 = vpack.c.b16 %v5117, %v5115
        %v5138 = vpack.c.b16 %v5118, %v5116
        %v5139 = vpack.c.b16 %v5121, %v5119
        %v5140 = vpack.c.b16 %v5122, %v5120
        %v5141 = vpack.c.b16 %v5125, %v5123
        %v5142 = vpack.c.b16 %v5126, %v5124
        %5159 = vmatprep.subr.bf16.mxu0 %v5128
        %5160 = vmatpush1.bf16.msra.mxu0 %v5127
        %5161 = vmatprep.subr.bf16.mxu0 %v5130
        %5162 = vmatpush1.bf16.msra.mxu0 %v5129
        %5163 = vmatprep.subr.bf16.mxu0 %v5132
        %5164 = vmatpush1.bf16.msra.mxu0 %v5131
        %5165 = vmatprep.subr.bf16.mxu0 %v5134
        %5166 = vmatpush1.bf16.msra.mxu0 %v5133
        %5167 = vmatprep.subr.bf16.mxu0 %v5136
        %5168 = vmatpush1.bf16.msra.mxu0 %v5135
        %5169 = vmatprep.subr.bf16.mxu0 %v5138
        %5170 = vmatpush1.bf16.msra.mxu0 %v5137
        %5171 = vmatprep.subr.bf16.mxu0 %v5140
        %5172 = vmatpush1.bf16.msra.mxu0 %v5139
        %5173 = vmatprep.subr.bf16.mxu0 %v5142
        %5174 = vmatpush1.bf16.msra.mxu0 %v5141
        %5175 = vmatprep.subr.bf16.mxu0 0
        %5176 = vmatpush1.bf16.msra.mxu0 0
        %5177 = vmatprep.subr.bf16.mxu0 0
        %5178 = vmatpush1.bf16.msra.mxu0 0
        %5179 = vmatprep.subr.bf16.mxu0 0
        %5180 = vmatpush1.bf16.msra.mxu0 0
        %5181 = vmatprep.subr.bf16.mxu0 0
        %5182 = vmatpush1.bf16.msra.mxu0 0
        %5183 = vmatprep.subr.bf16.mxu0 0
        %5184 = vmatpush1.bf16.msra.mxu0 0
        %5185 = vmatprep.subr.bf16.mxu0 0
        %5186 = vmatpush1.bf16.msra.mxu0 0
        %5187 = vmatprep.subr.bf16.mxu0 0
        %5188 = vmatpush1.bf16.msra.mxu0 0
        %5189 = vmatprep.subr.bf16.mxu0 0
        %5190 = vmatpush1.bf16.msra.mxu0 0
        %5191 = vmatprep.mubr.bf16.mxu0 0
        %5192 = vmatmul.mubr.bf16.gmra.mrb[0].mxu0 %v5047
        %v5193 = vpop.f32.mrb[0].mxu0
        %v5194 = vadd.f32 %v5072, %v5193
        %v5195 = vpop.f32.mrb[0].mxu0
        %v5196 = vadd.f32 %v5076, %v5195
        %v5197 = vpop.f32.mrb[0].mxu0
        %v5198 = vadd.f32 %v5072, %v5197
        %v5199 = vpop.f32.mrb[0].mxu0
        %v5200 = vadd.f32 %v5076, %v5199
        %5201 = vmatprep.mubr.bf16.mxu0 0
        %5202 = vmatmul.mubr.bf16.gmra.mrb[0].mxu0 %v5048
        %v5203 = vpop.f32.mrb[0].mxu0
        %v5204 = vadd.f32 %v5072, %v5203
        %v5205 = vpop.f32.mrb[0].mxu0
        %v5206 = vadd.f32 %v5076, %v5205
        %v5207 = vpop.f32.mrb[0].mxu0
        %v5208 = vadd.f32 %v5072, %v5207
        %v5209 = vpop.f32.mrb[0].mxu0
        %v5210 = vadd.f32 %v5076, %v5209
        %5211 = vdwg.mxu0
        %v5212 = vmax.f32 %v5194, 0.0
        %v5213 = vmax.f32 %v5196, 0.0
        %v5214 = vmax.f32 %v5198, 0.0
        %v5215 = vmax.f32 %v5200, 0.0
        %v5216 = vmax.f32 %v5204, 0.0
        %v5217 = vmax.f32 %v5206, 0.0
        %v5218 = vmax.f32 %v5208, 0.0
        %v5219 = vmax.f32 %v5210, 0.0
        %v5220 = vpack.c.bf16 %v5214, %v5212
        %v5221 = vpack.c.bf16 %v5215, %v5213
        %v5222 = vpack.c.bf16 %v5218, %v5216
        %v5223 = vpack.c.bf16 %v5219, %v5217
        %s5224 = scalar_lea.vmem [#allocation12], 128
        %v5225 = vld [vmem:[%s5224] sm:$0xf]
        %v5226 = vld [vmem:[%s5224 + $0x4] sm:$0xf]
        %v5227 = vld [vmem:[%s5224 + $0x8] sm:$0xf]
        %v5228 = vld [vmem:[%s5224 + $0xc] sm:$0xf]
        %v5229 = vld [vmem:[%s5224 + $0x10] sm:$0xf]
        %v5230 = vld [vmem:[%s5224 + $0x14] sm:$0xf]
        %v5231 = vld [vmem:[%s5224 + $0x18] sm:$0xf]
        %v5232 = vld [vmem:[%s5224 + $0x1c] sm:$0xf]
        %v5233 = vld [vmem:[%s5224 + $0x20] sm:$0xf]
        %v5234 = vld [vmem:[%s5224 + $0x24] sm:$0xf]
        %v5235 = vld [vmem:[%s5224 + $0x28] sm:$0xf]
        %v5236 = vld [vmem:[%s5224 + $0x2c] sm:$0xf]
        %v5237 = vld [vmem:[%s5224 + $0x30] sm:$0xf]
        %v5238 = vld [vmem:[%s5224 + $0x34] sm:$0xf]
        %v5239 = vld [vmem:[%s5224 + $0x38] sm:$0xf]
        %v5240 = vld [vmem:[%s5224 + $0x3c] sm:$0xf]
        %v5241 = vld [vmem:[%s5224 + $0x40] sm:$0xf]
        %v5242 = vld [vmem:[%s5224 + $0x44] sm:$0xf]
        %v5243 = vld [vmem:[%s5224 + $0x48] sm:$0xf]
        %v5244 = vld [vmem:[%s5224 + $0x4c] sm:$0xf]
        %v5245 = vld [vmem:[%s5224 + $0x50] sm:$0xf]
        %v5246 = vld [vmem:[%s5224 + $0x54] sm:$0xf]
        %v5247 = vld [vmem:[%s5224 + $0x58] sm:$0xf]
        %v5248 = vld [vmem:[%s5224 + $0x5c] sm:$0xf]
        %v5249 = vld [vmem:[%s5224 + $0x60] sm:$0xf]
        %v5250 = vld [vmem:[%s5224 + $0x64] sm:$0xf]
        %v5251 = vld [vmem:[%s5224 + $0x68] sm:$0xf]
        %v5252 = vld [vmem:[%s5224 + $0x6c] sm:$0xf]
        %v5253 = vld [vmem:[%s5224 + $0x70] sm:$0xf]
        %v5254 = vld [vmem:[%s5224 + $0x74] sm:$0xf]
        %v5255 = vld [vmem:[%s5224 + $0x78] sm:$0xf]
        %v5256 = vld [vmem:[%s5224 + $0x7c] sm:$0xf]
        %v5257 = vlaneseq
        %v5258 = vshrl.u32 %v5257, 7
        %v5259 = vsub.s32 0, %v5258
        %v5260 = vrot.slane %v3013, %v5259
        %v5293 = vunpack.c.l.b16 %v5225
        %v5294 = vunpack.c.l.b16 %v5226
        %v5295 = vunpack.c.l.b16 %v5227
        %v5296 = vunpack.c.l.b16 %v5228
        %v5297 = vunpack.c.l.b16 %v5229
        %v5298 = vunpack.c.l.b16 %v5230
        %v5299 = vunpack.c.l.b16 %v5231
        %v5300 = vunpack.c.l.b16 %v5232
        %v5301 = vunpack.c.l.b16 %v5233
        %v5302 = vunpack.c.l.b16 %v5234
        %v5303 = vunpack.c.l.b16 %v5235
        %v5304 = vunpack.c.l.b16 %v5236
        %v5305 = vunpack.c.l.b16 %v5237
        %v5306 = vunpack.c.l.b16 %v5238
        %v5307 = vunpack.c.l.b16 %v5239
        %v5308 = vunpack.c.l.b16 %v5240
        %v5309 = vunpack.c.l.b16 %v5241
        %v5310 = vunpack.c.l.b16 %v5242
        %v5311 = vunpack.c.l.b16 %v5243
        %v5312 = vunpack.c.l.b16 %v5244
        %v5313 = vunpack.c.l.b16 %v5245
        %v5314 = vunpack.c.l.b16 %v5246
        %v5315 = vunpack.c.l.b16 %v5247
        %v5316 = vunpack.c.l.b16 %v5248
        %v5317 = vunpack.c.l.b16 %v5249
        %v5318 = vunpack.c.l.b16 %v5250
        %v5319 = vunpack.c.l.b16 %v5251
        %v5320 = vunpack.c.l.b16 %v5252
        %v5321 = vunpack.c.l.b16 %v5253
        %v5322 = vunpack.c.l.b16 %v5254
        %v5323 = vunpack.c.l.b16 %v5255
        %v5324 = vunpack.c.l.b16 %v5256
        %v5325 = vpack.c.b16 %v5294, %v5293
        %v5326 = vpack.c.b16 %v5296, %v5295
        %v5327 = vpack.c.b16 %v5298, %v5297
        %v5328 = vpack.c.b16 %v5300, %v5299
        %v5329 = vpack.c.b16 %v5302, %v5301
        %v5330 = vpack.c.b16 %v5304, %v5303
        %v5331 = vpack.c.b16 %v5306, %v5305
        %v5332 = vpack.c.b16 %v5308, %v5307
        %v5333 = vpack.c.b16 %v5310, %v5309
        %v5334 = vpack.c.b16 %v5312, %v5311
        %v5335 = vpack.c.b16 %v5314, %v5313
        %v5336 = vpack.c.b16 %v5316, %v5315
        %v5337 = vpack.c.b16 %v5318, %v5317
        %v5338 = vpack.c.b16 %v5320, %v5319
        %v5339 = vpack.c.b16 %v5322, %v5321
        %v5340 = vpack.c.b16 %v5324, %v5323
        %5357 = vmatprep.subr.bf16.mxu0 0
        %5358 = vmatpush1.bf16.msra.mxu0 %v5325
        %5359 = vmatprep.subr.bf16.mxu0 0
        %5360 = vmatpush1.bf16.msra.mxu0 %v5326
        %5361 = vmatprep.subr.bf16.mxu0 0
        %5362 = vmatpush1.bf16.msra.mxu0 %v5327
        %5363 = vmatprep.subr.bf16.mxu0 0
        %5364 = vmatpush1.bf16.msra.mxu0 %v5328
        %5365 = vmatprep.subr.bf16.mxu0 0
        %5366 = vmatpush1.bf16.msra.mxu0 %v5329
        %5367 = vmatprep.subr.bf16.mxu0 0
        %5368 = vmatpush1.bf16.msra.mxu0 %v5330
        %5369 = vmatprep.subr.bf16.mxu0 0
        %5370 = vmatpush1.bf16.msra.mxu0 %v5331
        %5371 = vmatprep.subr.bf16.mxu0 0
        %5372 = vmatpush1.bf16.msra.mxu0 %v5332
        %5373 = vmatprep.subr.bf16.mxu0 0
        %5374 = vmatpush1.bf16.msra.mxu0 %v5333
        %5375 = vmatprep.subr.bf16.mxu0 0
        %5376 = vmatpush1.bf16.msra.mxu0 %v5334
        %5377 = vmatprep.subr.bf16.mxu0 0
        %5378 = vmatpush1.bf16.msra.mxu0 %v5335
        %5379 = vmatprep.subr.bf16.mxu0 0
        %5380 = vmatpush1.bf16.msra.mxu0 %v5336
        %5381 = vmatprep.subr.bf16.mxu0 0
        %5382 = vmatpush1.bf16.msra.mxu0 %v5337
        %5383 = vmatprep.subr.bf16.mxu0 0
        %5384 = vmatpush1.bf16.msra.mxu0 %v5338
        %5385 = vmatprep.subr.bf16.mxu0 0
        %5386 = vmatpush1.bf16.msra.mxu0 %v5339
        %5387 = vmatprep.subr.bf16.mxu0 0
        %5388 = vmatpush1.bf16.msra.mxu0 %v5340
        %5389 = vmatprep.mubr.bf16.mxu0 %v5221
        %5390 = vmatmul.mubr.bf16.gmra.mrb[0].mxu0 %v5220
        %v5391 = vpop.f32.mrb[0].mxu0
        %v5392 = vadd.f32 %v5260, %v5391
        %v5393 = vpop.f32.mrb[0].mxu0
        %v5394 = vpop.f32.mrb[0].mxu0
        %v5395 = vadd.f32 %v5260, %v5394
        %v5396 = vpop.f32.mrb[0].mxu0
        %5397 = vmatprep.mubr.bf16.mxu0 %v5223
        %5398 = vmatmul.mubr.bf16.gmra.mrb[0].mxu0 %v5222
        %v5399 = vpop.f32.mrb[0].mxu0
        %v5400 = vadd.f32 %v5260, %v5399
        %v5401 = vpop.f32.mrb[0].mxu0
        %v5402 = vpop.f32.mrb[0].mxu0
        %v5403 = vadd.f32 %v5260, %v5402
        %v5404 = vpop.f32.mrb[0].mxu0
        %5405 = vdwg.mxu0
        %v5406 = vadd.f32 %v5043, %v5392
        %v5407 = vadd.f32 %v5044, %v5395
        %v5408 = vadd.f32 %v5045, %v5400
        %v5409 = vadd.f32 %v5046, %v5403
        %5410 = vadd.xlane.f32.xlu0 %v5406
        %v5411 = vpop.xlane.xlu0 %5410
        %5412 = vadd.xlane.f32.xlu0 %v5407
        %v5413 = vpop.xlane.xlu0 %5412
        %5414 = vadd.xlane.f32.xlu0 %v5408
        %v5415 = vpop.xlane.xlu0 %5414
        %5416 = vadd.xlane.f32.xlu0 %v5409
        %v5417 = vpop.xlane.xlu0 %5416
        %v5418 = vmul.f32 %v5411, %v2522
        %v5419 = vmul.f32 %v5413, %v2522
        %v5420 = vmul.f32 %v5415, %v2522
        %v5421 = vmul.f32 %v5417, %v2522
        %v5422 = vmul.f32 %v5406, %v5406
        %v5423 = vmul.f32 %v5407, %v5407
        %v5424 = vmul.f32 %v5408, %v5408
        %v5425 = vmul.f32 %v5409, %v5409
        %5426 = vadd.xlane.f32.xlu0 %v5422
        %v5427 = vpop.xlane.xlu0 %5426
        %5428 = vadd.xlane.f32.xlu0 %v5423
        %v5429 = vpop.xlane.xlu0 %5428
        %5430 = vadd.xlane.f32.xlu0 %v5424
        %v5431 = vpop.xlane.xlu0 %5430
        %5432 = vadd.xlane.f32.xlu0 %v5425
        %v5433 = vpop.xlane.xlu0 %5432
        %v5434 = vmul.f32 %v5427, %v2522
        %v5435 = vmul.f32 %v5429, %v2522
        %v5436 = vmul.f32 %v5431, %v2522
        %v5437 = vmul.f32 %v5433, %v2522
        %v5438 = vmul.f32 %v5418, %v5418
        %v5439 = vmul.f32 %v5419, %v5419
        %v5440 = vmul.f32 %v5420, %v5420
        %v5441 = vmul.f32 %v5421, %v5421
        %v5442 = vsub.f32 %v5434, %v5438
        %v5443 = vsub.f32 %v5435, %v5439
        %v5444 = vsub.f32 %v5436, %v5440
        %v5445 = vsub.f32 %v5437, %v5441
        %v5446 = vsub.f32 %v5406, %v5418
        %v5447 = vsub.f32 %v5407, %v5419
        %v5448 = vsub.f32 %v5408, %v5420
        %v5449 = vsub.f32 %v5409, %v5421
        %v5450 = vadd.f32 %v5442, 1e-05
        %v5451 = vadd.f32 %v5443, 1e-05
        %v5452 = vadd.f32 %v5444, 1e-05
        %v5453 = vadd.f32 %v5445, 1e-05
        %v5454 = vrsqrt.pop %v5450
        %v5455 = vrsqrt.pop %v5451
        %v5456 = vrsqrt.pop %v5452
        %v5457 = vrsqrt.pop %v5453
        %v5458 = vmul.f32 %v5446, %v5454
        %v5459 = vmul.f32 %v5447, %v5455
        %v5460 = vmul.f32 %v5448, %v5456
        %v5461 = vmul.f32 %v5449, %v5457
        %v5462 = vlaneseq
        %v5463 = vshrl.u32 %v5462, 7
        %v5464 = vsub.s32 0, %v5463
        %v5465 = vrot.slane %v3016, %v5464
        %v5466 = vmul.f32 %v5458, %v5465
        %v5467 = vmul.f32 %v5459, %v5465
        %v5468 = vmul.f32 %v5460, %v5465
        %v5469 = vmul.f32 %v5461, %v5465
        %v5470 = vlaneseq
        %v5471 = vshrl.u32 %v5470, 7
        %v5472 = vsub.s32 0, %v5471
        %v5473 = vrot.slane %v3017, %v5472
        %v5474 = vadd.f32 %v5466, %v5473
        %v5475 = vadd.f32 %v5467, %v5473
        %v5476 = vadd.f32 %v5468, %v5473
        %v5477 = vadd.f32 %v5469, %v5473
        %s5478 = scalar_lea.vmem %s10, 16
        %v5479 = vld [vmem:[%s5478] sm:$0x1]
        %v5480 = vld [vmem:[%s5478 + $0x1] sm:$0x1]
        %v5481 = vld [vmem:[%s5478 + $0x2] sm:$0x1]
        %v5482 = vld [vmem:[%s5478 + $0x3] sm:$0x1]
        %v5483 = vld [vmem:[%s5478 + $0x4] sm:$0x1]
        %v5484 = vld [vmem:[%s5478 + $0x5] sm:$0x1]
        %v5485 = vpack.c.bf16 %v5475, %v5474
        %v5486 = vpack.c.bf16 %v5477, %v5476
        %s5487 = scalar_lea.vmem [#allocation6], 384
        %v5488 = vld [vmem:[%s5487] sm:$0xff]
        %v5489 = vld [vmem:[%s5487 + $0x8] sm:$0xf]
        %v5490 = vld [vmem:[%s5487 + $0xc] sm:$0xff]
        %v5491 = vld [vmem:[%s5487 + $0x14] sm:$0xf]
        %v5492 = vld [vmem:[%s5487 + $0x18] sm:$0xff]
        %v5493 = vld [vmem:[%s5487 + $0x20] sm:$0xf]
        %v5494 = vld [vmem:[%s5487 + $0x24] sm:$0xff]
        %v5495 = vld [vmem:[%s5487 + $0x2c] sm:$0xf]
        %v5496 = vld [vmem:[%s5487 + $0x30] sm:$0xff]
        %v5497 = vld [vmem:[%s5487 + $0x38] sm:$0xf]
        %v5498 = vld [vmem:[%s5487 + $0x3c] sm:$0xff]
        %v5499 = vld [vmem:[%s5487 + $0x44] sm:$0xf]
        %v5500 = vld [vmem:[%s5487 + $0x48] sm:$0xff]
        %v5501 = vld [vmem:[%s5487 + $0x50] sm:$0xf]
        %v5502 = vld [vmem:[%s5487 + $0x54] sm:$0xff]
        %v5503 = vld [vmem:[%s5487 + $0x5c] sm:$0xf]
        %v5504 = vld [vmem:[%s5487 + $0x60] sm:$0xff]
        %v5505 = vld [vmem:[%s5487 + $0x68] sm:$0xf]
        %v5506 = vld [vmem:[%s5487 + $0x6c] sm:$0xff]
        %v5507 = vld [vmem:[%s5487 + $0x74] sm:$0xf]
        %v5508 = vld [vmem:[%s5487 + $0x78] sm:$0xff]
        %v5509 = vld [vmem:[%s5487 + $0x80] sm:$0xf]
        %v5510 = vld [vmem:[%s5487 + $0x84] sm:$0xff]
        %v5511 = vld [vmem:[%s5487 + $0x8c] sm:$0xf]
        %v5512 = vld [vmem:[%s5487 + $0x90] sm:$0xff]
        %v5513 = vld [vmem:[%s5487 + $0x98] sm:$0xf]
        %v5514 = vld [vmem:[%s5487 + $0x9c] sm:$0xff]
        %v5515 = vld [vmem:[%s5487 + $0xa4] sm:$0xf]
        %v5516 = vld [vmem:[%s5487 + $0xa8] sm:$0xff]
        %v5517 = vld [vmem:[%s5487 + $0xb0] sm:$0xf]
        %v5518 = vld [vmem:[%s5487 + $0xb4] sm:$0xff]
        %v5519 = vld [vmem:[%s5487 + $0xbc] sm:$0xf]
        %s5520 = scalar_lea.vmem [#allocation8], 6
        %v5521 = vld [vmem:[%s5520] sm:$0x7]
        %v5523 = vlaneseq
        %v5524 = vshrl.u32 %v5523, 7
        %v5525 = vsub.s32 0, %v5524
        %v5526 = vrot.slane %v5521, %v5525
        %v5527 = vlaneseq
        %v5528 = vshrl.u32 %v5527, 7
        %v5529 = vsub.s32 1, %v5528
        %v5530 = vrot.slane %v5521, %v5529
        %v5531 = vlaneseq
        %v5532 = vshrl.u32 %v5531, 7
        %v5533 = vsub.s32 2, %v5532
        %v5534 = vrot.slane %v5521, %v5533
        %v5570 = vunpack.c.l.b16 %v5488
        %v5571 = vunpack.c.h.b16 %v5488
        %v5572 = vunpack.c.l.b16 %v5489
        %v5573 = vunpack.c.l.b16 %v5490
        %v5574 = vunpack.c.h.b16 %v5490
        %v5575 = vunpack.c.l.b16 %v5491
        %v5576 = vunpack.c.l.b16 %v5492
        %v5577 = vunpack.c.h.b16 %v5492
        %v5578 = vunpack.c.l.b16 %v5493
        %v5579 = vunpack.c.l.b16 %v5494
        %v5580 = vunpack.c.h.b16 %v5494
        %v5581 = vunpack.c.l.b16 %v5495
        %v5582 = vunpack.c.l.b16 %v5496
        %v5583 = vunpack.c.h.b16 %v5496
        %v5584 = vunpack.c.l.b16 %v5497
        %v5585 = vunpack.c.l.b16 %v5498
        %v5586 = vunpack.c.h.b16 %v5498
        %v5587 = vunpack.c.l.b16 %v5499
        %v5588 = vunpack.c.l.b16 %v5500
        %v5589 = vunpack.c.h.b16 %v5500
        %v5590 = vunpack.c.l.b16 %v5501
        %v5591 = vunpack.c.l.b16 %v5502
        %v5592 = vunpack.c.h.b16 %v5502
        %v5593 = vunpack.c.l.b16 %v5503
        %v5594 = vunpack.c.l.b16 %v5504
        %v5595 = vunpack.c.h.b16 %v5504
        %v5596 = vunpack.c.l.b16 %v5505
        %v5597 = vunpack.c.l.b16 %v5506
        %v5598 = vunpack.c.h.b16 %v5506
        %v5599 = vunpack.c.l.b16 %v5507
        %v5600 = vunpack.c.l.b16 %v5508
        %v5601 = vunpack.c.h.b16 %v5508
        %v5602 = vunpack.c.l.b16 %v5509
        %v5603 = vunpack.c.l.b16 %v5510
        %v5604 = vunpack.c.h.b16 %v5510
        %v5605 = vunpack.c.l.b16 %v5511
        %v5606 = vunpack.c.l.b16 %v5512
        %v5607 = vunpack.c.h.b16 %v5512
        %v5608 = vunpack.c.l.b16 %v5513
        %v5609 = vunpack.c.l.b16 %v5514
        %v5610 = vunpack.c.h.b16 %v5514
        %v5611 = vunpack.c.l.b16 %v5515
        %v5612 = vunpack.c.l.b16 %v5516
        %v5613 = vunpack.c.h.b16 %v5516
        %v5614 = vunpack.c.l.b16 %v5517
        %v5615 = vunpack.c.l.b16 %v5518
        %v5616 = vunpack.c.h.b16 %v5518
        %v5617 = vunpack.c.l.b16 %v5519
        %v5618 = vpack.c.b16 %v5573, %v5570
        %v5619 = vpack.c.b16 %v5574, %v5571
        %v5620 = vpack.c.b16 %v5575, %v5572
        %v5621 = vpack.c.b16 %v5579, %v5576
        %v5622 = vpack.c.b16 %v5580, %v5577
        %v5623 = vpack.c.b16 %v5581, %v5578
        %v5624 = vpack.c.b16 %v5585, %v5582
        %v5625 = vpack.c.b16 %v5586, %v5583
        %v5626 = vpack.c.b16 %v5587, %v5584
        %v5627 = vpack.c.b16 %v5591, %v5588
        %v5628 = vpack.c.b16 %v5592, %v5589
        %v5629 = vpack.c.b16 %v5593, %v5590
        %v5630 = vpack.c.b16 %v5597, %v5594
        %v5631 = vpack.c.b16 %v5598, %v5595
        %v5632 = vpack.c.b16 %v5599, %v5596
        %v5633 = vpack.c.b16 %v5603, %v5600
        %v5634 = vpack.c.b16 %v5604, %v5601
        %v5635 = vpack.c.b16 %v5605, %v5602
        %v5636 = vpack.c.b16 %v5609, %v5606
        %v5637 = vpack.c.b16 %v5610, %v5607
        %v5638 = vpack.c.b16 %v5611, %v5608
        %v5639 = vpack.c.b16 %v5615, %v5612
        %v5640 = vpack.c.b16 %v5616, %v5613
        %v5641 = vpack.c.b16 %v5617, %v5614
        %5666 = vmatprep.subr.bf16.mxu0 %v5619
        %5667 = vmatpush1.bf16.msra.mxu0 %v5618
        %5668 = vmatprep.subr.bf16.mxu0 %v5622
        %5669 = vmatpush1.bf16.msra.mxu0 %v5621
        %5670 = vmatprep.subr.bf16.mxu0 %v5625
        %5671 = vmatpush1.bf16.msra.mxu0 %v5624
        %5672 = vmatprep.subr.bf16.mxu0 %v5628
        %5673 = vmatpush1.bf16.msra.mxu0 %v5627
        %5674 = vmatprep.subr.bf16.mxu0 %v5631
        %5675 = vmatpush1.bf16.msra.mxu0 %v5630
        %5676 = vmatprep.subr.bf16.mxu0 %v5634
        %5677 = vmatpush1.bf16.msra.mxu0 %v5633
        %5678 = vmatprep.subr.bf16.mxu0 %v5637
        %5679 = vmatpush1.bf16.msra.mxu0 %v5636
        %5680 = vmatprep.subr.bf16.mxu0 %v5640
        %5681 = vmatpush1.bf16.msra.mxu0 %v5639
        %5682 = vmatprep.subr.bf16.mxu0 0
        %5683 = vmatpush1.bf16.msra.mxu0 0
        %5684 = vmatprep.subr.bf16.mxu0 0
        %5685 = vmatpush1.bf16.msra.mxu0 0
        %5686 = vmatprep.subr.bf16.mxu0 0
        %5687 = vmatpush1.bf16.msra.mxu0 0
        %5688 = vmatprep.subr.bf16.mxu0 0
        %5689 = vmatpush1.bf16.msra.mxu0 0
        %5690 = vmatprep.subr.bf16.mxu0 0
        %5691 = vmatpush1.bf16.msra.mxu0 0
        %5692 = vmatprep.subr.bf16.mxu0 0
        %5693 = vmatpush1.bf16.msra.mxu0 0
        %5694 = vmatprep.subr.bf16.mxu0 0
        %5695 = vmatpush1.bf16.msra.mxu0 0
        %5696 = vmatprep.subr.bf16.mxu0 0
        %5697 = vmatpush1.bf16.msra.mxu0 0
        %5698 = vmatprep.mubr.bf16.mxu0 0
        %5699 = vmatmul.mubr.bf16.gmra.mrb[0].mxu0 %v5485
        %v5700 = vpop.f32.mrb[0].mxu0
        %v5701 = vadd.f32 %v5526, %v5700
        %v5702 = vpop.f32.mrb[0].mxu0
        %v5703 = vadd.f32 %v5530, %v5702
        %v5704 = vpop.f32.mrb[0].mxu0
        %v5705 = vadd.f32 %v5526, %v5704
        %v5706 = vpop.f32.mrb[0].mxu0
        %v5707 = vadd.f32 %v5530, %v5706
        %5708 = vmatprep.mubr.bf16.mxu0 0
        %5709 = vmatmul.mubr.bf16.gmra.mrb[0].mxu0 %v5486
        %v5710 = vpop.f32.mrb[0].mxu0
        %v5711 = vadd.f32 %v5526, %v5710
        %v5712 = vpop.f32.mrb[0].mxu0
        %v5713 = vadd.f32 %v5530, %v5712
        %v5714 = vpop.f32.mrb[0].mxu0
        %v5715 = vadd.f32 %v5526, %v5714
        %v5716 = vpop.f32.mrb[0].mxu0
        %v5717 = vadd.f32 %v5530, %v5716
        %5718 = vdwg.mxu0
        %5719 = vmatprep.subr.bf16.mxu0 0
        %5720 = vmatpush1.bf16.msra.mxu0 %v5620
        %5721 = vmatprep.subr.bf16.mxu0 0
        %5722 = vmatpush1.bf16.msra.mxu0 %v5623
        %5723 = vmatprep.subr.bf16.mxu0 0
        %5724 = vmatpush1.bf16.msra.mxu0 %v5626
        %5725 = vmatprep.subr.bf16.mxu0 0
        %5726 = vmatpush1.bf16.msra.mxu0 %v5629
        %5727 = vmatprep.subr.bf16.mxu0 0
        %5728 = vmatpush1.bf16.msra.mxu0 %v5632
        %5729 = vmatprep.subr.bf16.mxu0 0
        %5730 = vmatpush1.bf16.msra.mxu0 %v5635
        %5731 = vmatprep.subr.bf16.mxu0 0
        %5732 = vmatpush1.bf16.msra.mxu0 %v5638
        %5733 = vmatprep.subr.bf16.mxu0 0
        %5734 = vmatpush1.bf16.msra.mxu0 %v5641
        %5735 = vmatprep.subr.bf16.mxu0 0
        %5736 = vmatpush1.bf16.msra.mxu0 0
        %5737 = vmatprep.subr.bf16.mxu0 0
        %5738 = vmatpush1.bf16.msra.mxu0 0
        %5739 = vmatprep.subr.bf16.mxu0 0
        %5740 = vmatpush1.bf16.msra.mxu0 0
        %5741 = vmatprep.subr.bf16.mxu0 0
        %5742 = vmatpush1.bf16.msra.mxu0 0
        %5743 = vmatprep.subr.bf16.mxu0 0
        %5744 = vmatpush1.bf16.msra.mxu0 0
        %5745 = vmatprep.subr.bf16.mxu0 0
        %5746 = vmatpush1.bf16.msra.mxu0 0
        %5747 = vmatprep.subr.bf16.mxu0 0
        %5748 = vmatpush1.bf16.msra.mxu0 0
        %5749 = vmatprep.subr.bf16.mxu0 0
        %5750 = vmatpush1.bf16.msra.mxu0 0
        %5751 = vmatprep.mubr.bf16.mxu0 0
        %5752 = vmatmul.mubr.bf16.gmra.mrb[0].mxu0 %v5485
        %v5753 = vpop.f32.mrb[0].mxu0
        %v5754 = vadd.f32 %v5534, %v5753
        %v5755 = vpop.f32.mrb[0].mxu0
        %v5756 = vpop.f32.mrb[0].mxu0
        %v5757 = vadd.f32 %v5534, %v5756
        %v5758 = vpop.f32.mrb[0].mxu0
        %5759 = vmatprep.mubr.bf16.mxu0 0
        %5760 = vmatmul.mubr.bf16.gmra.mrb[0].mxu0 %v5486
        %v5761 = vpop.f32.mrb[0].mxu0
        %v5762 = vadd.f32 %v5534, %v5761
        %v5763 = vpop.f32.mrb[0].mxu0
        %v5764 = vpop.f32.mrb[0].mxu0
        %v5765 = vadd.f32 %v5534, %v5764
        %v5766 = vpop.f32.mrb[0].mxu0
        %5767 = vdwg.mxu0
        %v5768 = vpack.c.bf16 %v5705, %v5701
        %v5769 = vpack.c.bf16 %v5715, %v5711
        %v5770 = vpack.c.bf16 %v5707, %v5703
        %v5771 = vpack.c.bf16 %v5717, %v5713
        %v5772 = vpack.c.bf16 %v5757, %v5754
        %v5773 = vpack.c.bf16 %v5765, %v5762
        %v5775 = vsel %vm834, %v5768, 0
        %v5778 = vsel %vm834, %v5769, 0
        %v5781 = vsel %vm834, %v5770, 0
        %v5784 = vsel %vm834, %v5771, 0
        %5786 = vmatprep.subr.bf16.mxu0 0
        %5787 = vmatpush1.bf16.xpose.msra.mxu0 %v5781
        %5788 = vmatprep.subr.bf16.mxu0 0
        %5789 = vmatpush1.bf16.xpose.msra.mxu0 %v5784
        %5790 = vmatprep.subr.bf16.mxu0 0
        %5791 = vmatpush1.bf16.xpose.msra.mxu0 0
        %5792 = vmatprep.subr.bf16.mxu0 0
        %5793 = vmatpush1.bf16.xpose.msra.mxu0 0
        %5794 = vmatprep.subr.bf16.mxu0 0
        %5795 = vmatpush1.bf16.xpose.msra.mxu0 0
        %5796 = vmatprep.subr.bf16.mxu0 0
        %5797 = vmatpush1.bf16.xpose.msra.mxu0 0
        %5798 = vmatprep.subr.bf16.mxu0 0
        %5799 = vmatpush1.bf16.xpose.msra.mxu0 0
        %5800 = vmatprep.subr.bf16.mxu0 0
        %5801 = vmatpush1.bf16.xpose.msra.mxu0 0
        %5802 = vmatprep.subr.bf16.mxu0 0
        %5803 = vmatpush1.bf16.xpose.msra.mxu0 0
        %5804 = vmatprep.subr.bf16.mxu0 0
        %5805 = vmatpush1.bf16.xpose.msra.mxu0 0
        %5806 = vmatprep.subr.bf16.mxu0 0
        %5807 = vmatpush1.bf16.xpose.msra.mxu0 0
        %5808 = vmatprep.subr.bf16.mxu0 0
        %5809 = vmatpush1.bf16.xpose.msra.mxu0 0
        %5810 = vmatprep.subr.bf16.mxu0 0
        %5811 = vmatpush1.bf16.xpose.msra.mxu0 0
        %5812 = vmatprep.subr.bf16.mxu0 0
        %5813 = vmatpush1.bf16.xpose.msra.mxu0 0
        %5814 = vmatprep.subr.bf16.mxu0 0
        %5815 = vmatpush1.bf16.xpose.msra.mxu0 0
        %5816 = vmatprep.subr.bf16.mxu0 0
        %5817 = vmatpush1.bf16.xpose.msra.mxu0 0
        %5818 = vmatprep.mubr.bf16.mxu0 0
        %5819 = vmatmul.mubr.bf16.gmra.mrb[0].mxu0 %v5775
        %v5820 = vpop.f32.mrb[0].mxu0
        %v5821 = vadd.f32 %v832, %v5820
        %v5822 = vpop.f32.mrb[0].mxu0
        %v5823 = vpop.f32.mrb[0].mxu0
        %v5824 = vadd.f32 %v832, %v5823
        %v5825 = vpop.f32.mrb[0].mxu0
        %5826 = vmatprep.mubr.bf16.mxu0 0
        %5827 = vmatmul.mubr.bf16.gmra.mrb[0].mxu0 %v5778
        %v5828 = vpop.f32.mrb[0].mxu0
        %v5829 = vadd.f32 %v832, %v5828
        %v5830 = vpop.f32.mrb[0].mxu0
        %v5831 = vpop.f32.mrb[0].mxu0
        %v5832 = vadd.f32 %v832, %v5831
        %v5833 = vpop.f32.mrb[0].mxu0
        %5834 = vdwg.mxu0
        %v5835 = vsel %vm896, %v5821, -inf
        %5836 = vmax.xlane.f32.xlu0 %v5835
        %v5837 = vpop.xlane.xlu0 %5836
        %v5838 = vsel %vm896, %v5824, -inf
        %5839 = vmax.xlane.f32.xlu0 %v5838
        %v5840 = vpop.xlane.xlu0 %5839
        %v5841 = vsel %vm896, %v5829, -inf
        %5842 = vmax.xlane.f32.xlu0 %v5841
        %v5843 = vpop.xlane.xlu0 %5842
        %v5844 = vsel %vm896, %v5832, -inf
        %5845 = vmax.xlane.f32.xlu0 %v5844
        %v5846 = vpop.xlane.xlu0 %5845
        %v5847 = vsub.f32 %v5821, %v5837
        %v5848 = vsub.f32 %v5824, %v5840
        %v5849 = vsub.f32 %v5829, %v5843
        %v5850 = vsub.f32 %v5832, %v5846
        %v5851 = vmul.f32 %v5847, 1.442695
        %v5852 = vpow.pop %v5851
        %v5853 = vmul.f32 %v5848, 1.442695
        %v5854 = vpow.pop %v5853
        %v5855 = vmul.f32 %v5849, 1.442695
        %v5856 = vpow.pop %v5855
        %v5857 = vmul.f32 %v5850, 1.442695
        %v5858 = vpow.pop %v5857
        %v5859 = vsel %vm896, %v5852, 0.0
        %5860 = vadd.xlane.f32.xlu0 %v5859
        %v5861 = vpop.xlane.xlu0 %5860
        %v5862 = vsel %vm896, %v5854, 0.0
        %5863 = vadd.xlane.f32.xlu0 %v5862
        %v5864 = vpop.xlane.xlu0 %5863
        %v5865 = vsel %vm896, %v5856, 0.0
        %5866 = vadd.xlane.f32.xlu0 %v5865
        %v5867 = vpop.xlane.xlu0 %5866
        %v5868 = vsel %vm896, %v5858, 0.0
        %5869 = vadd.xlane.f32.xlu0 %v5868
        %v5870 = vpop.xlane.xlu0 %5869
        %v5871 = vrcp.pop %v5861
        %v5872 = vrcp.pop %v5864
        %v5873 = vrcp.pop %v5867
        %v5874 = vrcp.pop %v5870
        %v5875 = vmul.f32 %v5852, %v5871
        %v5876 = vmul.f32 %v5854, %v5872
        %v5877 = vmul.f32 %v5856, %v5873
        %v5878 = vmul.f32 %v5858, %v5874
        %v5879 = vpack.c.bf16 %v5876, %v5875
        %v5880 = vpack.c.bf16 %v5878, %v5877
        %v5882 = vsel %vm896, %v5879, 0
        %v5885 = vsel %vm896, %v5880, 0
        %5887 = vmatprep.subr.bf16.mxu0 0
        %5888 = vmatpush1.bf16.msra.mxu0 %v5772
        %5889 = vmatprep.subr.bf16.mxu0 0
        %5890 = vmatpush1.bf16.msra.mxu0 %v5773
        %5891 = vmatprep.subr.bf16.mxu0 0
        %5892 = vmatpush1.bf16.msra.mxu0 0
        %5893 = vmatprep.subr.bf16.mxu0 0
        %5894 = vmatpush1.bf16.msra.mxu0 0
        %5895 = vmatprep.subr.bf16.mxu0 0
        %5896 = vmatpush1.bf16.msra.mxu0 0
        %5897 = vmatprep.subr.bf16.mxu0 0
        %5898 = vmatpush1.bf16.msra.mxu0 0
        %5899 = vmatprep.subr.bf16.mxu0 0
        %5900 = vmatpush1.bf16.msra.mxu0 0
        %5901 = vmatprep.subr.bf16.mxu0 0
        %5902 = vmatpush1.bf16.msra.mxu0 0
        %5903 = vmatprep.subr.bf16.mxu0 0
        %5904 = vmatpush1.bf16.msra.mxu0 0
        %5905 = vmatprep.subr.bf16.mxu0 0
        %5906 = vmatpush1.bf16.msra.mxu0 0
        %5907 = vmatprep.subr.bf16.mxu0 0
        %5908 = vmatpush1.bf16.msra.mxu0 0
        %5909 = vmatprep.subr.bf16.mxu0 0
        %5910 = vmatpush1.bf16.msra.mxu0 0
        %5911 = vmatprep.subr.bf16.mxu0 0
        %5912 = vmatpush1.bf16.msra.mxu0 0
        %5913 = vmatprep.subr.bf16.mxu0 0
        %5914 = vmatpush1.bf16.msra.mxu0 0
        %5915 = vmatprep.subr.bf16.mxu0 0
        %5916 = vmatpush1.bf16.msra.mxu0 0
        %5917 = vmatprep.subr.bf16.mxu0 0
        %5918 = vmatpush1.bf16.msra.mxu0 0
        %5919 = vmatprep.mubr.bf16.mxu0 0
        %5920 = vmatmul.mubr.bf16.gmra.mrb[0].mxu0 %v5882
        %v5921 = vpop.f32.mrb[0].mxu0
        %v5922 = vadd.f32 0.0, %v5921
        %v5923 = vpop.f32.mrb[0].mxu0
        %v5924 = vpop.f32.mrb[0].mxu0
        %v5925 = vadd.f32 0.0, %v5924
        %v5926 = vpop.f32.mrb[0].mxu0
        %5927 = vmatprep.mubr.bf16.mxu0 0
        %5928 = vmatmul.mubr.bf16.gmra.mrb[0].mxu0 %v5885
        %v5929 = vpop.f32.mrb[0].mxu0
        %v5930 = vadd.f32 0.0, %v5929
        %v5931 = vpop.f32.mrb[0].mxu0
        %v5932 = vpop.f32.mrb[0].mxu0
        %v5933 = vadd.f32 0.0, %v5932
        %v5934 = vpop.f32.mrb[0].mxu0
        %5935 = vdwg.mxu0
        %5936 = vst.msk [vmem:[#allocation2] sm:$0xff] %vm834, %v5922
        %5937 = vst.msk [vmem:[#allocation2 + $0x8] sm:$0xff] %vm834, %v5925
        %5938 = vst.msk [vmem:[#allocation2 + $0x10] sm:$0xff] %vm834, %v5930
        %5939 = vst.msk [vmem:[#allocation2 + $0x18] sm:$0xff] %vm834, %v5933
        %5942 = vrot.lane.b32.xlu0 %v5768, 112
        %v5943 = vpop.permute.xlu0 %5942
        %5944 = vrot.lane.b32.xlu0 %v5769, 112
        %v5945 = vpop.permute.xlu0 %5944
        %5948 = vrot.lane.b32.xlu0 %v5770, 112
        %v5949 = vpop.permute.xlu0 %5948
        %5950 = vrot.lane.b32.xlu0 %v5771, 112
        %v5951 = vpop.permute.xlu0 %5950
        %v5953 = vsel %vm834, %v5943, 0
        %v5956 = vsel %vm834, %v5945, 0
        %v5959 = vsel %vm834, %v5949, 0
        %v5962 = vsel %vm834, %v5951, 0
        %5964 = vmatprep.subr.bf16.mxu0 0
        %5965 = vmatpush1.bf16.xpose.msra.mxu0 %v5959
        %5966 = vmatprep.subr.bf16.mxu0 0
        %5967 = vmatpush1.bf16.xpose.msra.mxu0 %v5962
        %5968 = vmatprep.subr.bf16.mxu0 0
        %5969 = vmatpush1.bf16.xpose.msra.mxu0 0
        %5970 = vmatprep.subr.bf16.mxu0 0
        %5971 = vmatpush1.bf16.xpose.msra.mxu0 0
        %5972 = vmatprep.subr.bf16.mxu0 0
        %5973 = vmatpush1.bf16.xpose.msra.mxu0 0
        %5974 = vmatprep.subr.bf16.mxu0 0
        %5975 = vmatpush1.bf16.xpose.msra.mxu0 0
        %5976 = vmatprep.subr.bf16.mxu0 0
        %5977 = vmatpush1.bf16.xpose.msra.mxu0 0
        %5978 = vmatprep.subr.bf16.mxu0 0
        %5979 = vmatpush1.bf16.xpose.msra.mxu0 0
        %5980 = vmatprep.subr.bf16.mxu0 0
        %5981 = vmatpush1.bf16.xpose.msra.mxu0 0
        %5982 = vmatprep.subr.bf16.mxu0 0
        %5983 = vmatpush1.bf16.xpose.msra.mxu0 0
        %5984 = vmatprep.subr.bf16.mxu0 0
        %5985 = vmatpush1.bf16.xpose.msra.mxu0 0
        %5986 = vmatprep.subr.bf16.mxu0 0
        %5987 = vmatpush1.bf16.xpose.msra.mxu0 0
        %5988 = vmatprep.subr.bf16.mxu0 0
        %5989 = vmatpush1.bf16.xpose.msra.mxu0 0
        %5990 = vmatprep.subr.bf16.mxu0 0
        %5991 = vmatpush1.bf16.xpose.msra.mxu0 0
        %5992 = vmatprep.subr.bf16.mxu0 0
        %5993 = vmatpush1.bf16.xpose.msra.mxu0 0
        %5994 = vmatprep.subr.bf16.mxu0 0
        %5995 = vmatpush1.bf16.xpose.msra.mxu0 0
        %5996 = vmatprep.mubr.bf16.mxu0 0
        %5997 = vmatmul.mubr.bf16.gmra.mrb[0].mxu0 %v5953
        %v5998 = vpop.f32.mrb[0].mxu0
        %v5999 = vadd.f32 %v832, %v5998
        %v6000 = vpop.f32.mrb[0].mxu0
        %v6001 = vpop.f32.mrb[0].mxu0
        %v6002 = vadd.f32 %v832, %v6001
        %v6003 = vpop.f32.mrb[0].mxu0
        %6004 = vmatprep.mubr.bf16.mxu0 0
        %6005 = vmatmul.mubr.bf16.gmra.mrb[0].mxu0 %v5956
        %v6006 = vpop.f32.mrb[0].mxu0
        %v6007 = vadd.f32 %v832, %v6006
        %v6008 = vpop.f32.mrb[0].mxu0
        %v6009 = vpop.f32.mrb[0].mxu0
        %v6010 = vadd.f32 %v832, %v6009
        %v6011 = vpop.f32.mrb[0].mxu0
        %6012 = vdwg.mxu0
        %v6013 = vsel %vm896, %v5999, -inf
        %6014 = vmax.xlane.f32.xlu0 %v6013
        %v6015 = vpop.xlane.xlu0 %6014
        %v6016 = vsel %vm896, %v6002, -inf
        %6017 = vmax.xlane.f32.xlu0 %v6016
        %v6018 = vpop.xlane.xlu0 %6017
        %v6019 = vsel %vm896, %v6007, -inf
        %6020 = vmax.xlane.f32.xlu0 %v6019
        %v6021 = vpop.xlane.xlu0 %6020
        %v6022 = vsel %vm896, %v6010, -inf
        %6023 = vmax.xlane.f32.xlu0 %v6022
        %v6024 = vpop.xlane.xlu0 %6023
        %v6025 = vsub.f32 %v5999, %v6015
        %v6026 = vsub.f32 %v6002, %v6018
        %v6027 = vsub.f32 %v6007, %v6021
        %v6028 = vsub.f32 %v6010, %v6024
        %v6029 = vmul.f32 %v6025, 1.442695
        %v6030 = vpow.pop %v6029
        %v6031 = vmul.f32 %v6026, 1.442695
        %v6032 = vpow.pop %v6031
        %v6033 = vmul.f32 %v6027, 1.442695
        %v6034 = vpow.pop %v6033
        %v6035 = vmul.f32 %v6028, 1.442695
        %v6036 = vpow.pop %v6035
        %v6037 = vsel %vm896, %v6030, 0.0
        %6038 = vadd.xlane.f32.xlu0 %v6037
        %v6039 = vpop.xlane.xlu0 %6038
        %v6040 = vsel %vm896, %v6032, 0.0
        %6041 = vadd.xlane.f32.xlu0 %v6040
        %v6042 = vpop.xlane.xlu0 %6041
        %v6043 = vsel %vm896, %v6034, 0.0
        %6044 = vadd.xlane.f32.xlu0 %v6043
        %v6045 = vpop.xlane.xlu0 %6044
        %v6046 = vsel %vm896, %v6036, 0.0
        %6047 = vadd.xlane.f32.xlu0 %v6046
        %v6048 = vpop.xlane.xlu0 %6047
        %v6049 = vrcp.pop %v6039
        %v6050 = vrcp.pop %v6042
        %v6051 = vrcp.pop %v6045
        %v6052 = vrcp.pop %v6048
        %v6053 = vmul.f32 %v6030, %v6049
        %v6054 = vmul.f32 %v6032, %v6050
        %v6055 = vmul.f32 %v6034, %v6051
        %v6056 = vmul.f32 %v6036, %v6052
        %v6057 = vpack.c.bf16 %v6054, %v6053
        %v6058 = vpack.c.bf16 %v6056, %v6055
        %6061 = vrot.lane.b32.xlu0 %v5772, 112
        %v6062 = vpop.permute.xlu0 %6061
        %6063 = vrot.lane.b32.xlu0 %v5773, 112
        %v6064 = vpop.permute.xlu0 %6063
        %v6068 = vsel %vm896, %v6057, 0
        %v6071 = vsel %vm896, %v6058, 0
        %6073 = vmatprep.subr.bf16.mxu0 0
        %6074 = vmatpush1.bf16.msra.mxu0 %v6062
        %6075 = vmatprep.subr.bf16.mxu0 0
        %6076 = vmatpush1.bf16.msra.mxu0 %v6064
        %6077 = vmatprep.subr.bf16.mxu0 0
        %6078 = vmatpush1.bf16.msra.mxu0 0
        %6079 = vmatprep.subr.bf16.mxu0 0
        %6080 = vmatpush1.bf16.msra.mxu0 0
        %6081 = vmatprep.subr.bf16.mxu0 0
        %6082 = vmatpush1.bf16.msra.mxu0 0
        %6083 = vmatprep.subr.bf16.mxu0 0
        %6084 = vmatpush1.bf16.msra.mxu0 0
        %6085 = vmatprep.subr.bf16.mxu0 0
        %6086 = vmatpush1.bf16.msra.mxu0 0
        %6087 = vmatprep.subr.bf16.mxu0 0
        %6088 = vmatpush1.bf16.msra.mxu0 0
        %6089 = vmatprep.subr.bf16.mxu0 0
        %6090 = vmatpush1.bf16.msra.mxu0 0
        %6091 = vmatprep.subr.bf16.mxu0 0
        %6092 = vmatpush1.bf16.msra.mxu0 0
        %6093 = vmatprep.subr.bf16.mxu0 0
        %6094 = vmatpush1.bf16.msra.mxu0 0
        %6095 = vmatprep.subr.bf16.mxu0 0
        %6096 = vmatpush1.bf16.msra.mxu0 0
        %6097 = vmatprep.subr.bf16.mxu0 0
        %6098 = vmatpush1.bf16.msra.mxu0 0
        %6099 = vmatprep.subr.bf16.mxu0 0
        %6100 = vmatpush1.bf16.msra.mxu0 0
        %6101 = vmatprep.subr.bf16.mxu0 0
        %6102 = vmatpush1.bf16.msra.mxu0 0
        %6103 = vmatprep.subr.bf16.mxu0 0
        %6104 = vmatpush1.bf16.msra.mxu0 0
        %6105 = vmatprep.mubr.bf16.mxu0 0
        %6106 = vmatmul.mubr.bf16.gmra.mrb[0].mxu0 %v6068
        %v6107 = vpop.f32.mrb[0].mxu0
        %v6108 = vadd.f32 0.0, %v6107
        %v6109 = vpop.f32.mrb[0].mxu0
        %v6110 = vpop.f32.mrb[0].mxu0
        %v6111 = vadd.f32 0.0, %v6110
        %v6112 = vpop.f32.mrb[0].mxu0
        %6113 = vmatprep.mubr.bf16.mxu0 0
        %6114 = vmatmul.mubr.bf16.gmra.mrb[0].mxu0 %v6071
        %v6115 = vpop.f32.mrb[0].mxu0
        %v6116 = vadd.f32 0.0, %v6115
        %v6117 = vpop.f32.mrb[0].mxu0
        %v6118 = vpop.f32.mrb[0].mxu0
        %v6119 = vadd.f32 0.0, %v6118
        %v6120 = vpop.f32.mrb[0].mxu0
        %6121 = vdwg.mxu0
        %6126 = vrot.lane.b32.xlu0 %v6108, 16
        %v6127 = vpop.permute.xlu0 %6126
        %6128 = vrot.lane.b32.xlu0 %v6111, 16
        %v6129 = vpop.permute.xlu0 %6128
        %6130 = vrot.lane.b32.xlu0 %v6116, 16
        %v6131 = vpop.permute.xlu0 %6130
        %6132 = vrot.lane.b32.xlu0 %v6119, 16
        %v6133 = vpop.permute.xlu0 %6132
        %6138 = vst.msk [vmem:[#allocation2] sm:$0xff] %vm1200, %v6127
        %6139 = vst.msk [vmem:[#allocation2 + $0x8] sm:$0xff] %vm1200, %v6129
        %6140 = vst.msk [vmem:[#allocation2 + $0x10] sm:$0xff] %vm1200, %v6131
        %6141 = vst.msk [vmem:[#allocation2 + $0x18] sm:$0xff] %vm1200, %v6133
        %6142 = vrot.lane.b32.xlu0 %v5768, 96
        %v6143 = vpop.permute.xlu0 %6142
        %6144 = vrot.lane.b32.xlu0 %v5769, 96
        %v6145 = vpop.permute.xlu0 %6144
        %6146 = vrot.lane.b32.xlu0 %v5770, 96
        %v6147 = vpop.permute.xlu0 %6146
        %6148 = vrot.lane.b32.xlu0 %v5771, 96
        %v6149 = vpop.permute.xlu0 %6148
        %v6151 = vsel %vm834, %v6143, 0
        %v6154 = vsel %vm834, %v6145, 0
        %v6157 = vsel %vm834, %v6147, 0
        %v6160 = vsel %vm834, %v6149, 0
        %6162 = vmatprep.subr.bf16.mxu0 0
        %6163 = vmatpush1.bf16.xpose.msra.mxu0 %v6157
        %6164 = vmatprep.subr.bf16.mxu0 0
        %6165 = vmatpush1.bf16.xpose.msra.mxu0 %v6160
        %6166 = vmatprep.subr.bf16.mxu0 0
        %6167 = vmatpush1.bf16.xpose.msra.mxu0 0
        %6168 = vmatprep.subr.bf16.mxu0 0
        %6169 = vmatpush1.bf16.xpose.msra.mxu0 0
        %6170 = vmatprep.subr.bf16.mxu0 0
        %6171 = vmatpush1.bf16.xpose.msra.mxu0 0
        %6172 = vmatprep.subr.bf16.mxu0 0
        %6173 = vmatpush1.bf16.xpose.msra.mxu0 0
        %6174 = vmatprep.subr.bf16.mxu0 0
        %6175 = vmatpush1.bf16.xpose.msra.mxu0 0
        %6176 = vmatprep.subr.bf16.mxu0 0
        %6177 = vmatpush1.bf16.xpose.msra.mxu0 0
        %6178 = vmatprep.subr.bf16.mxu0 0
        %6179 = vmatpush1.bf16.xpose.msra.mxu0 0
        %6180 = vmatprep.subr.bf16.mxu0 0
        %6181 = vmatpush1.bf16.xpose.msra.mxu0 0
        %6182 = vmatprep.subr.bf16.mxu0 0
        %6183 = vmatpush1.bf16.xpose.msra.mxu0 0
        %6184 = vmatprep.subr.bf16.mxu0 0
        %6185 = vmatpush1.bf16.xpose.msra.mxu0 0
        %6186 = vmatprep.subr.bf16.mxu0 0
        %6187 = vmatpush1.bf16.xpose.msra.mxu0 0
        %6188 = vmatprep.subr.bf16.mxu0 0
        %6189 = vmatpush1.bf16.xpose.msra.mxu0 0
        %6190 = vmatprep.subr.bf16.mxu0 0
        %6191 = vmatpush1.bf16.xpose.msra.mxu0 0
        %6192 = vmatprep.subr.bf16.mxu0 0
        %6193 = vmatpush1.bf16.xpose.msra.mxu0 0
        %6194 = vmatprep.mubr.bf16.mxu0 0
        %6195 = vmatmul.mubr.bf16.gmra.mrb[0].mxu0 %v6151
        %v6196 = vpop.f32.mrb[0].mxu0
        %v6197 = vadd.f32 %v832, %v6196
        %v6198 = vpop.f32.mrb[0].mxu0
        %v6199 = vpop.f32.mrb[0].mxu0
        %v6200 = vadd.f32 %v832, %v6199
        %v6201 = vpop.f32.mrb[0].mxu0
        %6202 = vmatprep.mubr.bf16.mxu0 0
        %6203 = vmatmul.mubr.bf16.gmra.mrb[0].mxu0 %v6154
        %v6204 = vpop.f32.mrb[0].mxu0
        %v6205 = vadd.f32 %v832, %v6204
        %v6206 = vpop.f32.mrb[0].mxu0
        %v6207 = vpop.f32.mrb[0].mxu0
        %v6208 = vadd.f32 %v832, %v6207
        %v6209 = vpop.f32.mrb[0].mxu0
        %6210 = vdwg.mxu0
        %v6211 = vsel %vm896, %v6197, -inf
        %6212 = vmax.xlane.f32.xlu0 %v6211
        %v6213 = vpop.xlane.xlu0 %6212
        %v6214 = vsel %vm896, %v6200, -inf
        %6215 = vmax.xlane.f32.xlu0 %v6214
        %v6216 = vpop.xlane.xlu0 %6215
        %v6217 = vsel %vm896, %v6205, -inf
        %6218 = vmax.xlane.f32.xlu0 %v6217
        %v6219 = vpop.xlane.xlu0 %6218
        %v6220 = vsel %vm896, %v6208, -inf
        %6221 = vmax.xlane.f32.xlu0 %v6220
        %v6222 = vpop.xlane.xlu0 %6221
        %v6223 = vsub.f32 %v6197, %v6213
        %v6224 = vsub.f32 %v6200, %v6216
        %v6225 = vsub.f32 %v6205, %v6219
        %v6226 = vsub.f32 %v6208, %v6222
        %v6227 = vmul.f32 %v6223, 1.442695
        %v6228 = vpow.pop %v6227
        %v6229 = vmul.f32 %v6224, 1.442695
        %v6230 = vpow.pop %v6229
        %v6231 = vmul.f32 %v6225, 1.442695
        %v6232 = vpow.pop %v6231
        %v6233 = vmul.f32 %v6226, 1.442695
        %v6234 = vpow.pop %v6233
        %v6235 = vsel %vm896, %v6228, 0.0
        %6236 = vadd.xlane.f32.xlu0 %v6235
        %v6237 = vpop.xlane.xlu0 %6236
        %v6238 = vsel %vm896, %v6230, 0.0
        %6239 = vadd.xlane.f32.xlu0 %v6238
        %v6240 = vpop.xlane.xlu0 %6239
        %v6241 = vsel %vm896, %v6232, 0.0
        %6242 = vadd.xlane.f32.xlu0 %v6241
        %v6243 = vpop.xlane.xlu0 %6242
        %v6244 = vsel %vm896, %v6234, 0.0
        %6245 = vadd.xlane.f32.xlu0 %v6244
        %v6246 = vpop.xlane.xlu0 %6245
        %v6247 = vrcp.pop %v6237
        %v6248 = vrcp.pop %v6240
        %v6249 = vrcp.pop %v6243
        %v6250 = vrcp.pop %v6246
        %v6251 = vmul.f32 %v6228, %v6247
        %v6252 = vmul.f32 %v6230, %v6248
        %v6253 = vmul.f32 %v6232, %v6249
        %v6254 = vmul.f32 %v6234, %v6250
        %v6255 = vpack.c.bf16 %v6252, %v6251
        %v6256 = vpack.c.bf16 %v6254, %v6253
        %6257 = vrot.lane.b32.xlu0 %v5772, 96
        %v6258 = vpop.permute.xlu0 %6257
        %6259 = vrot.lane.b32.xlu0 %v5773, 96
        %v6260 = vpop.permute.xlu0 %6259
        %v6264 = vsel %vm896, %v6255, 0
        %v6267 = vsel %vm896, %v6256, 0
        %6269 = vmatprep.subr.bf16.mxu0 0
        %6270 = vmatpush1.bf16.msra.mxu0 %v6258
        %6271 = vmatprep.subr.bf16.mxu0 0
        %6272 = vmatpush1.bf16.msra.mxu0 %v6260
        %6273 = vmatprep.subr.bf16.mxu0 0
        %6274 = vmatpush1.bf16.msra.mxu0 0
        %6275 = vmatprep.subr.bf16.mxu0 0
        %6276 = vmatpush1.bf16.msra.mxu0 0
        %6277 = vmatprep.subr.bf16.mxu0 0
        %6278 = vmatpush1.bf16.msra.mxu0 0
        %6279 = vmatprep.subr.bf16.mxu0 0
        %6280 = vmatpush1.bf16.msra.mxu0 0
        %6281 = vmatprep.subr.bf16.mxu0 0
        %6282 = vmatpush1.bf16.msra.mxu0 0
        %6283 = vmatprep.subr.bf16.mxu0 0
        %6284 = vmatpush1.bf16.msra.mxu0 0
        %6285 = vmatprep.subr.bf16.mxu0 0
        %6286 = vmatpush1.bf16.msra.mxu0 0
        %6287 = vmatprep.subr.bf16.mxu0 0
        %6288 = vmatpush1.bf16.msra.mxu0 0
        %6289 = vmatprep.subr.bf16.mxu0 0
        %6290 = vmatpush1.bf16.msra.mxu0 0
        %6291 = vmatprep.subr.bf16.mxu0 0
        %6292 = vmatpush1.bf16.msra.mxu0 0
        %6293 = vmatprep.subr.bf16.mxu0 0
        %6294 = vmatpush1.bf16.msra.mxu0 0
        %6295 = vmatprep.subr.bf16.mxu0 0
        %6296 = vmatpush1.bf16.msra.mxu0 0
        %6297 = vmatprep.subr.bf16.mxu0 0
        %6298 = vmatpush1.bf16.msra.mxu0 0
        %6299 = vmatprep.subr.bf16.mxu0 0
        %6300 = vmatpush1.bf16.msra.mxu0 0
        %6301 = vmatprep.mubr.bf16.mxu0 0
        %6302 = vmatmul.mubr.bf16.gmra.mrb[0].mxu0 %v6264
        %v6303 = vpop.f32.mrb[0].mxu0
        %v6304 = vadd.f32 0.0, %v6303
        %v6305 = vpop.f32.mrb[0].mxu0
        %v6306 = vpop.f32.mrb[0].mxu0
        %v6307 = vadd.f32 0.0, %v6306
        %v6308 = vpop.f32.mrb[0].mxu0
        %6309 = vmatprep.mubr.bf16.mxu0 0
        %6310 = vmatmul.mubr.bf16.gmra.mrb[0].mxu0 %v6267
        %v6311 = vpop.f32.mrb[0].mxu0
        %v6312 = vadd.f32 0.0, %v6311
        %v6313 = vpop.f32.mrb[0].mxu0
        %v6314 = vpop.f32.mrb[0].mxu0
        %v6315 = vadd.f32 0.0, %v6314
        %v6316 = vpop.f32.mrb[0].mxu0
        %6317 = vdwg.mxu0
        %6322 = vrot.lane.b32.xlu0 %v6304, 32
        %v6323 = vpop.permute.xlu0 %6322
        %6324 = vrot.lane.b32.xlu0 %v6307, 32
        %v6325 = vpop.permute.xlu0 %6324
        %6326 = vrot.lane.b32.xlu0 %v6312, 32
        %v6327 = vpop.permute.xlu0 %6326
        %6328 = vrot.lane.b32.xlu0 %v6315, 32
        %v6329 = vpop.permute.xlu0 %6328
        %6334 = vst.msk [vmem:[#allocation2] sm:$0xff] %vm1397, %v6323
        %6335 = vst.msk [vmem:[#allocation2 + $0x8] sm:$0xff] %vm1397, %v6325
        %6336 = vst.msk [vmem:[#allocation2 + $0x10] sm:$0xff] %vm1397, %v6327
        %6337 = vst.msk [vmem:[#allocation2 + $0x18] sm:$0xff] %vm1397, %v6329
        %6338 = vrot.lane.b32.xlu0 %v5768, 80
        %v6339 = vpop.permute.xlu0 %6338
        %6340 = vrot.lane.b32.xlu0 %v5769, 80
        %v6341 = vpop.permute.xlu0 %6340
        %6342 = vrot.lane.b32.xlu0 %v5770, 80
        %v6343 = vpop.permute.xlu0 %6342
        %6344 = vrot.lane.b32.xlu0 %v5771, 80
        %v6345 = vpop.permute.xlu0 %6344
        %v6347 = vsel %vm834, %v6339, 0
        %v6350 = vsel %vm834, %v6341, 0
        %v6353 = vsel %vm834, %v6343, 0
        %v6356 = vsel %vm834, %v6345, 0
        %6358 = vmatprep.subr.bf16.mxu0 0
        %6359 = vmatpush1.bf16.xpose.msra.mxu0 %v6353
        %6360 = vmatprep.subr.bf16.mxu0 0
        %6361 = vmatpush1.bf16.xpose.msra.mxu0 %v6356
        %6362 = vmatprep.subr.bf16.mxu0 0
        %6363 = vmatpush1.bf16.xpose.msra.mxu0 0
        %6364 = vmatprep.subr.bf16.mxu0 0
        %6365 = vmatpush1.bf16.xpose.msra.mxu0 0
        %6366 = vmatprep.subr.bf16.mxu0 0
        %6367 = vmatpush1.bf16.xpose.msra.mxu0 0
        %6368 = vmatprep.subr.bf16.mxu0 0
        %6369 = vmatpush1.bf16.xpose.msra.mxu0 0
        %6370 = vmatprep.subr.bf16.mxu0 0
        %6371 = vmatpush1.bf16.xpose.msra.mxu0 0
        %6372 = vmatprep.subr.bf16.mxu0 0
        %6373 = vmatpush1.bf16.xpose.msra.mxu0 0
        %6374 = vmatprep.subr.bf16.mxu0 0
        %6375 = vmatpush1.bf16.xpose.msra.mxu0 0
        %6376 = vmatprep.subr.bf16.mxu0 0
        %6377 = vmatpush1.bf16.xpose.msra.mxu0 0
        %6378 = vmatprep.subr.bf16.mxu0 0
        %6379 = vmatpush1.bf16.xpose.msra.mxu0 0
        %6380 = vmatprep.subr.bf16.mxu0 0
        %6381 = vmatpush1.bf16.xpose.msra.mxu0 0
        %6382 = vmatprep.subr.bf16.mxu0 0
        %6383 = vmatpush1.bf16.xpose.msra.mxu0 0
        %6384 = vmatprep.subr.bf16.mxu0 0
        %6385 = vmatpush1.bf16.xpose.msra.mxu0 0
        %6386 = vmatprep.subr.bf16.mxu0 0
        %6387 = vmatpush1.bf16.xpose.msra.mxu0 0
        %6388 = vmatprep.subr.bf16.mxu0 0
        %6389 = vmatpush1.bf16.xpose.msra.mxu0 0
        %6390 = vmatprep.mubr.bf16.mxu0 0
        %6391 = vmatmul.mubr.bf16.gmra.mrb[0].mxu0 %v6347
        %v6392 = vpop.f32.mrb[0].mxu0
        %v6393 = vadd.f32 %v832, %v6392
        %v6394 = vpop.f32.mrb[0].mxu0
        %v6395 = vpop.f32.mrb[0].mxu0
        %v6396 = vadd.f32 %v832, %v6395
        %v6397 = vpop.f32.mrb[0].mxu0
        %6398 = vmatprep.mubr.bf16.mxu0 0
        %6399 = vmatmul.mubr.bf16.gmra.mrb[0].mxu0 %v6350
        %v6400 = vpop.f32.mrb[0].mxu0
        %v6401 = vadd.f32 %v832, %v6400
        %v6402 = vpop.f32.mrb[0].mxu0
        %v6403 = vpop.f32.mrb[0].mxu0
        %v6404 = vadd.f32 %v832, %v6403
        %v6405 = vpop.f32.mrb[0].mxu0
        %6406 = vdwg.mxu0
        %v6407 = vsel %vm896, %v6393, -inf
        %6408 = vmax.xlane.f32.xlu0 %v6407
        %v6409 = vpop.xlane.xlu0 %6408
        %v6410 = vsel %vm896, %v6396, -inf
        %6411 = vmax.xlane.f32.xlu0 %v6410
        %v6412 = vpop.xlane.xlu0 %6411
        %v6413 = vsel %vm896, %v6401, -inf
        %6414 = vmax.xlane.f32.xlu0 %v6413
        %v6415 = vpop.xlane.xlu0 %6414
        %v6416 = vsel %vm896, %v6404, -inf
        %6417 = vmax.xlane.f32.xlu0 %v6416
        %v6418 = vpop.xlane.xlu0 %6417
        %v6419 = vsub.f32 %v6393, %v6409
        %v6420 = vsub.f32 %v6396, %v6412
        %v6421 = vsub.f32 %v6401, %v6415
        %v6422 = vsub.f32 %v6404, %v6418
        %v6423 = vmul.f32 %v6419, 1.442695
        %v6424 = vpow.pop %v6423
        %v6425 = vmul.f32 %v6420, 1.442695
        %v6426 = vpow.pop %v6425
        %v6427 = vmul.f32 %v6421, 1.442695
        %v6428 = vpow.pop %v6427
        %v6429 = vmul.f32 %v6422, 1.442695
        %v6430 = vpow.pop %v6429
        %v6431 = vsel %vm896, %v6424, 0.0
        %6432 = vadd.xlane.f32.xlu0 %v6431
        %v6433 = vpop.xlane.xlu0 %6432
        %v6434 = vsel %vm896, %v6426, 0.0
        %6435 = vadd.xlane.f32.xlu0 %v6434
        %v6436 = vpop.xlane.xlu0 %6435
        %v6437 = vsel %vm896, %v6428, 0.0
        %6438 = vadd.xlane.f32.xlu0 %v6437
        %v6439 = vpop.xlane.xlu0 %6438
        %v6440 = vsel %vm896, %v6430, 0.0
        %6441 = vadd.xlane.f32.xlu0 %v6440
        %v6442 = vpop.xlane.xlu0 %6441
        %v6443 = vrcp.pop %v6433
        %v6444 = vrcp.pop %v6436
        %v6445 = vrcp.pop %v6439
        %v6446 = vrcp.pop %v6442
        %v6447 = vmul.f32 %v6424, %v6443
        %v6448 = vmul.f32 %v6426, %v6444
        %v6449 = vmul.f32 %v6428, %v6445
        %v6450 = vmul.f32 %v6430, %v6446
        %v6451 = vpack.c.bf16 %v6448, %v6447
        %v6452 = vpack.c.bf16 %v6450, %v6449
        %6453 = vrot.lane.b32.xlu0 %v5772, 80
        %v6454 = vpop.permute.xlu0 %6453
        %6455 = vrot.lane.b32.xlu0 %v5773, 80
        %v6456 = vpop.permute.xlu0 %6455
        %v6460 = vsel %vm896, %v6451, 0
        %v6463 = vsel %vm896, %v6452, 0
        %6465 = vmatprep.subr.bf16.mxu0 0
        %6466 = vmatpush1.bf16.msra.mxu0 %v6454
        %6467 = vmatprep.subr.bf16.mxu0 0
        %6468 = vmatpush1.bf16.msra.mxu0 %v6456
        %6469 = vmatprep.subr.bf16.mxu0 0
        %6470 = vmatpush1.bf16.msra.mxu0 0
        %6471 = vmatprep.subr.bf16.mxu0 0
        %6472 = vmatpush1.bf16.msra.mxu0 0
        %6473 = vmatprep.subr.bf16.mxu0 0
        %6474 = vmatpush1.bf16.msra.mxu0 0
        %6475 = vmatprep.subr.bf16.mxu0 0
        %6476 = vmatpush1.bf16.msra.mxu0 0
        %6477 = vmatprep.subr.bf16.mxu0 0
        %6478 = vmatpush1.bf16.msra.mxu0 0
        %6479 = vmatprep.subr.bf16.mxu0 0
        %6480 = vmatpush1.bf16.msra.mxu0 0
        %6481 = vmatprep.subr.bf16.mxu0 0
        %6482 = vmatpush1.bf16.msra.mxu0 0
        %6483 = vmatprep.subr.bf16.mxu0 0
        %6484 = vmatpush1.bf16.msra.mxu0 0
        %6485 = vmatprep.subr.bf16.mxu0 0
        %6486 = vmatpush1.bf16.msra.mxu0 0
        %6487 = vmatprep.subr.bf16.mxu0 0
        %6488 = vmatpush1.bf16.msra.mxu0 0
        %6489 = vmatprep.subr.bf16.mxu0 0
        %6490 = vmatpush1.bf16.msra.mxu0 0
        %6491 = vmatprep.subr.bf16.mxu0 0
        %6492 = vmatpush1.bf16.msra.mxu0 0
        %6493 = vmatprep.subr.bf16.mxu0 0
        %6494 = vmatpush1.bf16.msra.mxu0 0
        %6495 = vmatprep.subr.bf16.mxu0 0
        %6496 = vmatpush1.bf16.msra.mxu0 0
        %6497 = vmatprep.mubr.bf16.mxu0 0
        %6498 = vmatmul.mubr.bf16.gmra.mrb[0].mxu0 %v6460
        %v6499 = vpop.f32.mrb[0].mxu0
        %v6500 = vadd.f32 0.0, %v6499
        %v6501 = vpop.f32.mrb[0].mxu0
        %v6502 = vpop.f32.mrb[0].mxu0
        %v6503 = vadd.f32 0.0, %v6502
        %v6504 = vpop.f32.mrb[0].mxu0
        %6505 = vmatprep.mubr.bf16.mxu0 0
        %6506 = vmatmul.mubr.bf16.gmra.mrb[0].mxu0 %v6463
        %v6507 = vpop.f32.mrb[0].mxu0
        %v6508 = vadd.f32 0.0, %v6507
        %v6509 = vpop.f32.mrb[0].mxu0
        %v6510 = vpop.f32.mrb[0].mxu0
        %v6511 = vadd.f32 0.0, %v6510
        %v6512 = vpop.f32.mrb[0].mxu0
        %6513 = vdwg.mxu0
        %6518 = vrot.lane.b32.xlu0 %v6500, 48
        %v6519 = vpop.permute.xlu0 %6518
        %6520 = vrot.lane.b32.xlu0 %v6503, 48
        %v6521 = vpop.permute.xlu0 %6520
        %6522 = vrot.lane.b32.xlu0 %v6508, 48
        %v6523 = vpop.permute.xlu0 %6522
        %6524 = vrot.lane.b32.xlu0 %v6511, 48
        %v6525 = vpop.permute.xlu0 %6524
        %6530 = vst.msk [vmem:[#allocation2] sm:$0xff] %vm1594, %v6519
        %6531 = vst.msk [vmem:[#allocation2 + $0x8] sm:$0xff] %vm1594, %v6521
        %6532 = vst.msk [vmem:[#allocation2 + $0x10] sm:$0xff] %vm1594, %v6523
        %6533 = vst.msk [vmem:[#allocation2 + $0x18] sm:$0xff] %vm1594, %v6525
        %6534 = vrot.lane.b32.xlu0 %v5768, 64
        %v6535 = vpop.permute.xlu0 %6534
        %6536 = vrot.lane.b32.xlu0 %v5769, 64
        %v6537 = vpop.permute.xlu0 %6536
        %6538 = vrot.lane.b32.xlu0 %v5770, 64
        %v6539 = vpop.permute.xlu0 %6538
        %6540 = vrot.lane.b32.xlu0 %v5771, 64
        %v6541 = vpop.permute.xlu0 %6540
        %v6543 = vsel %vm834, %v6535, 0
        %v6546 = vsel %vm834, %v6537, 0
        %v6549 = vsel %vm834, %v6539, 0
        %v6552 = vsel %vm834, %v6541, 0
        %6554 = vmatprep.subr.bf16.mxu0 0
        %6555 = vmatpush1.bf16.xpose.msra.mxu0 %v6549
        %6556 = vmatprep.subr.bf16.mxu0 0
        %6557 = vmatpush1.bf16.xpose.msra.mxu0 %v6552
        %6558 = vmatprep.subr.bf16.mxu0 0
        %6559 = vmatpush1.bf16.xpose.msra.mxu0 0
        %6560 = vmatprep.subr.bf16.mxu0 0
        %6561 = vmatpush1.bf16.xpose.msra.mxu0 0
        %6562 = vmatprep.subr.bf16.mxu0 0
        %6563 = vmatpush1.bf16.xpose.msra.mxu0 0
        %6564 = vmatprep.subr.bf16.mxu0 0
        %6565 = vmatpush1.bf16.xpose.msra.mxu0 0
        %6566 = vmatprep.subr.bf16.mxu0 0
        %6567 = vmatpush1.bf16.xpose.msra.mxu0 0
        %6568 = vmatprep.subr.bf16.mxu0 0
        %6569 = vmatpush1.bf16.xpose.msra.mxu0 0
        %6570 = vmatprep.subr.bf16.mxu0 0
        %6571 = vmatpush1.bf16.xpose.msra.mxu0 0
        %6572 = vmatprep.subr.bf16.mxu0 0
        %6573 = vmatpush1.bf16.xpose.msra.mxu0 0
        %6574 = vmatprep.subr.bf16.mxu0 0
        %6575 = vmatpush1.bf16.xpose.msra.mxu0 0
        %6576 = vmatprep.subr.bf16.mxu0 0
        %6577 = vmatpush1.bf16.xpose.msra.mxu0 0
        %6578 = vmatprep.subr.bf16.mxu0 0
        %6579 = vmatpush1.bf16.xpose.msra.mxu0 0
        %6580 = vmatprep.subr.bf16.mxu0 0
        %6581 = vmatpush1.bf16.xpose.msra.mxu0 0
        %6582 = vmatprep.subr.bf16.mxu0 0
        %6583 = vmatpush1.bf16.xpose.msra.mxu0 0
        %6584 = vmatprep.subr.bf16.mxu0 0
        %6585 = vmatpush1.bf16.xpose.msra.mxu0 0
        %6586 = vmatprep.mubr.bf16.mxu0 0
        %6587 = vmatmul.mubr.bf16.gmra.mrb[0].mxu0 %v6543
        %v6588 = vpop.f32.mrb[0].mxu0
        %v6589 = vadd.f32 %v832, %v6588
        %v6590 = vpop.f32.mrb[0].mxu0
        %v6591 = vpop.f32.mrb[0].mxu0
        %v6592 = vadd.f32 %v832, %v6591
        %v6593 = vpop.f32.mrb[0].mxu0
        %6594 = vmatprep.mubr.bf16.mxu0 0
        %6595 = vmatmul.mubr.bf16.gmra.mrb[0].mxu0 %v6546
        %v6596 = vpop.f32.mrb[0].mxu0
        %v6597 = vadd.f32 %v832, %v6596
        %v6598 = vpop.f32.mrb[0].mxu0
        %v6599 = vpop.f32.mrb[0].mxu0
        %v6600 = vadd.f32 %v832, %v6599
        %v6601 = vpop.f32.mrb[0].mxu0
        %6602 = vdwg.mxu0
        %v6603 = vsel %vm896, %v6589, -inf
        %6604 = vmax.xlane.f32.xlu0 %v6603
        %v6605 = vpop.xlane.xlu0 %6604
        %v6606 = vsel %vm896, %v6592, -inf
        %6607 = vmax.xlane.f32.xlu0 %v6606
        %v6608 = vpop.xlane.xlu0 %6607
        %v6609 = vsel %vm896, %v6597, -inf
        %6610 = vmax.xlane.f32.xlu0 %v6609
        %v6611 = vpop.xlane.xlu0 %6610
        %v6612 = vsel %vm896, %v6600, -inf
        %6613 = vmax.xlane.f32.xlu0 %v6612
        %v6614 = vpop.xlane.xlu0 %6613
        %v6615 = vsub.f32 %v6589, %v6605
        %v6616 = vsub.f32 %v6592, %v6608
        %v6617 = vsub.f32 %v6597, %v6611
        %v6618 = vsub.f32 %v6600, %v6614
        %v6619 = vmul.f32 %v6615, 1.442695
        %v6620 = vpow.pop %v6619
        %v6621 = vmul.f32 %v6616, 1.442695
        %v6622 = vpow.pop %v6621
        %v6623 = vmul.f32 %v6617, 1.442695
        %v6624 = vpow.pop %v6623
        %v6625 = vmul.f32 %v6618, 1.442695
        %v6626 = vpow.pop %v6625
        %v6627 = vsel %vm896, %v6620, 0.0
        %6628 = vadd.xlane.f32.xlu0 %v6627
        %v6629 = vpop.xlane.xlu0 %6628
        %v6630 = vsel %vm896, %v6622, 0.0
        %6631 = vadd.xlane.f32.xlu0 %v6630
        %v6632 = vpop.xlane.xlu0 %6631
        %v6633 = vsel %vm896, %v6624, 0.0
        %6634 = vadd.xlane.f32.xlu0 %v6633
        %v6635 = vpop.xlane.xlu0 %6634
        %v6636 = vsel %vm896, %v6626, 0.0
        %6637 = vadd.xlane.f32.xlu0 %v6636
        %v6638 = vpop.xlane.xlu0 %6637
        %v6639 = vrcp.pop %v6629
        %v6640 = vrcp.pop %v6632
        %v6641 = vrcp.pop %v6635
        %v6642 = vrcp.pop %v6638
        %v6643 = vmul.f32 %v6620, %v6639
        %v6644 = vmul.f32 %v6622, %v6640
        %v6645 = vmul.f32 %v6624, %v6641
        %v6646 = vmul.f32 %v6626, %v6642
        %v6647 = vpack.c.bf16 %v6644, %v6643
        %v6648 = vpack.c.bf16 %v6646, %v6645
        %6649 = vrot.lane.b32.xlu0 %v5772, 64
        %v6650 = vpop.permute.xlu0 %6649
        %6651 = vrot.lane.b32.xlu0 %v5773, 64
        %v6652 = vpop.permute.xlu0 %6651
        %v6656 = vsel %vm896, %v6647, 0
        %v6659 = vsel %vm896, %v6648, 0
        %6661 = vmatprep.subr.bf16.mxu0 0
        %6662 = vmatpush1.bf16.msra.mxu0 %v6650
        %6663 = vmatprep.subr.bf16.mxu0 0
        %6664 = vmatpush1.bf16.msra.mxu0 %v6652
        %6665 = vmatprep.subr.bf16.mxu0 0
        %6666 = vmatpush1.bf16.msra.mxu0 0
        %6667 = vmatprep.subr.bf16.mxu0 0
        %6668 = vmatpush1.bf16.msra.mxu0 0
        %6669 = vmatprep.subr.bf16.mxu0 0
        %6670 = vmatpush1.bf16.msra.mxu0 0
        %6671 = vmatprep.subr.bf16.mxu0 0
        %6672 = vmatpush1.bf16.msra.mxu0 0
        %6673 = vmatprep.subr.bf16.mxu0 0
        %6674 = vmatpush1.bf16.msra.mxu0 0
        %6675 = vmatprep.subr.bf16.mxu0 0
        %6676 = vmatpush1.bf16.msra.mxu0 0
        %6677 = vmatprep.subr.bf16.mxu0 0
        %6678 = vmatpush1.bf16.msra.mxu0 0
        %6679 = vmatprep.subr.bf16.mxu0 0
        %6680 = vmatpush1.bf16.msra.mxu0 0
        %6681 = vmatprep.subr.bf16.mxu0 0
        %6682 = vmatpush1.bf16.msra.mxu0 0
        %6683 = vmatprep.subr.bf16.mxu0 0
        %6684 = vmatpush1.bf16.msra.mxu0 0
        %6685 = vmatprep.subr.bf16.mxu0 0
        %6686 = vmatpush1.bf16.msra.mxu0 0
        %6687 = vmatprep.subr.bf16.mxu0 0
        %6688 = vmatpush1.bf16.msra.mxu0 0
        %6689 = vmatprep.subr.bf16.mxu0 0
        %6690 = vmatpush1.bf16.msra.mxu0 0
        %6691 = vmatprep.subr.bf16.mxu0 0
        %6692 = vmatpush1.bf16.msra.mxu0 0
        %6693 = vmatprep.mubr.bf16.mxu0 0
        %6694 = vmatmul.mubr.bf16.gmra.mrb[0].mxu0 %v6656
        %v6695 = vpop.f32.mrb[0].mxu0
        %v6696 = vadd.f32 0.0, %v6695
        %v6697 = vpop.f32.mrb[0].mxu0
        %v6698 = vpop.f32.mrb[0].mxu0
        %v6699 = vadd.f32 0.0, %v6698
        %v6700 = vpop.f32.mrb[0].mxu0
        %6701 = vmatprep.mubr.bf16.mxu0 0
        %6702 = vmatmul.mubr.bf16.gmra.mrb[0].mxu0 %v6659
        %v6703 = vpop.f32.mrb[0].mxu0
        %v6704 = vadd.f32 0.0, %v6703
        %v6705 = vpop.f32.mrb[0].mxu0
        %v6706 = vpop.f32.mrb[0].mxu0
        %v6707 = vadd.f32 0.0, %v6706
        %v6708 = vpop.f32.mrb[0].mxu0
        %6709 = vdwg.mxu0
        %6714 = vrot.lane.b32.xlu0 %v6696, 64
        %v6715 = vpop.permute.xlu0 %6714
        %6716 = vrot.lane.b32.xlu0 %v6699, 64
        %v6717 = vpop.permute.xlu0 %6716
        %6718 = vrot.lane.b32.xlu0 %v6704, 64
        %v6719 = vpop.permute.xlu0 %6718
        %6720 = vrot.lane.b32.xlu0 %v6707, 64
        %v6721 = vpop.permute.xlu0 %6720
        %6726 = vst.msk [vmem:[#allocation2] sm:$0xff] %vm1791, %v6715
        %6727 = vst.msk [vmem:[#allocation2 + $0x8] sm:$0xff] %vm1791, %v6717
        %6728 = vst.msk [vmem:[#allocation2 + $0x10] sm:$0xff] %vm1791, %v6719
        %6729 = vst.msk [vmem:[#allocation2 + $0x18] sm:$0xff] %vm1791, %v6721
        %6730 = vrot.lane.b32.xlu0 %v5768, 48
        %v6731 = vpop.permute.xlu0 %6730
        %6732 = vrot.lane.b32.xlu0 %v5769, 48
        %v6733 = vpop.permute.xlu0 %6732
        %6734 = vrot.lane.b32.xlu0 %v5770, 48
        %v6735 = vpop.permute.xlu0 %6734
        %6736 = vrot.lane.b32.xlu0 %v5771, 48
        %v6737 = vpop.permute.xlu0 %6736
        %v6739 = vsel %vm834, %v6731, 0
        %v6742 = vsel %vm834, %v6733, 0
        %v6745 = vsel %vm834, %v6735, 0
        %v6748 = vsel %vm834, %v6737, 0
        %6750 = vmatprep.subr.bf16.mxu0 0
        %6751 = vmatpush1.bf16.xpose.msra.mxu0 %v6745
        %6752 = vmatprep.subr.bf16.mxu0 0
        %6753 = vmatpush1.bf16.xpose.msra.mxu0 %v6748
        %6754 = vmatprep.subr.bf16.mxu0 0
        %6755 = vmatpush1.bf16.xpose.msra.mxu0 0
        %6756 = vmatprep.subr.bf16.mxu0 0
        %6757 = vmatpush1.bf16.xpose.msra.mxu0 0
        %6758 = vmatprep.subr.bf16.mxu0 0
        %6759 = vmatpush1.bf16.xpose.msra.mxu0 0
        %6760 = vmatprep.subr.bf16.mxu0 0
        %6761 = vmatpush1.bf16.xpose.msra.mxu0 0
        %6762 = vmatprep.subr.bf16.mxu0 0
        %6763 = vmatpush1.bf16.xpose.msra.mxu0 0
        %6764 = vmatprep.subr.bf16.mxu0 0
        %6765 = vmatpush1.bf16.xpose.msra.mxu0 0
        %6766 = vmatprep.subr.bf16.mxu0 0
        %6767 = vmatpush1.bf16.xpose.msra.mxu0 0
        %6768 = vmatprep.subr.bf16.mxu0 0
        %6769 = vmatpush1.bf16.xpose.msra.mxu0 0
        %6770 = vmatprep.subr.bf16.mxu0 0
        %6771 = vmatpush1.bf16.xpose.msra.mxu0 0
        %6772 = vmatprep.subr.bf16.mxu0 0
        %6773 = vmatpush1.bf16.xpose.msra.mxu0 0
        %6774 = vmatprep.subr.bf16.mxu0 0
        %6775 = vmatpush1.bf16.xpose.msra.mxu0 0
        %6776 = vmatprep.subr.bf16.mxu0 0
        %6777 = vmatpush1.bf16.xpose.msra.mxu0 0
        %6778 = vmatprep.subr.bf16.mxu0 0
        %6779 = vmatpush1.bf16.xpose.msra.mxu0 0
        %6780 = vmatprep.subr.bf16.mxu0 0
        %6781 = vmatpush1.bf16.xpose.msra.mxu0 0
        %6782 = vmatprep.mubr.bf16.mxu0 0
        %6783 = vmatmul.mubr.bf16.gmra.mrb[0].mxu0 %v6739
        %v6784 = vpop.f32.mrb[0].mxu0
        %v6785 = vadd.f32 %v832, %v6784
        %v6786 = vpop.f32.mrb[0].mxu0
        %v6787 = vpop.f32.mrb[0].mxu0
        %v6788 = vadd.f32 %v832, %v6787
        %v6789 = vpop.f32.mrb[0].mxu0
        %6790 = vmatprep.mubr.bf16.mxu0 0
        %6791 = vmatmul.mubr.bf16.gmra.mrb[0].mxu0 %v6742
        %v6792 = vpop.f32.mrb[0].mxu0
        %v6793 = vadd.f32 %v832, %v6792
        %v6794 = vpop.f32.mrb[0].mxu0
        %v6795 = vpop.f32.mrb[0].mxu0
        %v6796 = vadd.f32 %v832, %v6795
        %v6797 = vpop.f32.mrb[0].mxu0
        %6798 = vdwg.mxu0
        %v6799 = vsel %vm896, %v6785, -inf
        %6800 = vmax.xlane.f32.xlu0 %v6799
        %v6801 = vpop.xlane.xlu0 %6800
        %v6802 = vsel %vm896, %v6788, -inf
        %6803 = vmax.xlane.f32.xlu0 %v6802
        %v6804 = vpop.xlane.xlu0 %6803
        %v6805 = vsel %vm896, %v6793, -inf
        %6806 = vmax.xlane.f32.xlu0 %v6805
        %v6807 = vpop.xlane.xlu0 %6806
        %v6808 = vsel %vm896, %v6796, -inf
        %6809 = vmax.xlane.f32.xlu0 %v6808
        %v6810 = vpop.xlane.xlu0 %6809
        %v6811 = vsub.f32 %v6785, %v6801
        %v6812 = vsub.f32 %v6788, %v6804
        %v6813 = vsub.f32 %v6793, %v6807
        %v6814 = vsub.f32 %v6796, %v6810
        %v6815 = vmul.f32 %v6811, 1.442695
        %v6816 = vpow.pop %v6815
        %v6817 = vmul.f32 %v6812, 1.442695
        %v6818 = vpow.pop %v6817
        %v6819 = vmul.f32 %v6813, 1.442695
        %v6820 = vpow.pop %v6819
        %v6821 = vmul.f32 %v6814, 1.442695
        %v6822 = vpow.pop %v6821
        %v6823 = vsel %vm896, %v6816, 0.0
        %6824 = vadd.xlane.f32.xlu0 %v6823
        %v6825 = vpop.xlane.xlu0 %6824
        %v6826 = vsel %vm896, %v6818, 0.0
        %6827 = vadd.xlane.f32.xlu0 %v6826
        %v6828 = vpop.xlane.xlu0 %6827
        %v6829 = vsel %vm896, %v6820, 0.0
        %6830 = vadd.xlane.f32.xlu0 %v6829
        %v6831 = vpop.xlane.xlu0 %6830
        %v6832 = vsel %vm896, %v6822, 0.0
        %6833 = vadd.xlane.f32.xlu0 %v6832
        %v6834 = vpop.xlane.xlu0 %6833
        %v6835 = vrcp.pop %v6825
        %v6836 = vrcp.pop %v6828
        %v6837 = vrcp.pop %v6831
        %v6838 = vrcp.pop %v6834
        %v6839 = vmul.f32 %v6816, %v6835
        %v6840 = vmul.f32 %v6818, %v6836
        %v6841 = vmul.f32 %v6820, %v6837
        %v6842 = vmul.f32 %v6822, %v6838
        %v6843 = vpack.c.bf16 %v6840, %v6839
        %v6844 = vpack.c.bf16 %v6842, %v6841
        %6845 = vrot.lane.b32.xlu0 %v5772, 48
        %v6846 = vpop.permute.xlu0 %6845
        %6847 = vrot.lane.b32.xlu0 %v5773, 48
        %v6848 = vpop.permute.xlu0 %6847
        %v6852 = vsel %vm896, %v6843, 0
        %v6855 = vsel %vm896, %v6844, 0
        %6857 = vmatprep.subr.bf16.mxu0 0
        %6858 = vmatpush1.bf16.msra.mxu0 %v6846
        %6859 = vmatprep.subr.bf16.mxu0 0
        %6860 = vmatpush1.bf16.msra.mxu0 %v6848
        %6861 = vmatprep.subr.bf16.mxu0 0
        %6862 = vmatpush1.bf16.msra.mxu0 0
        %6863 = vmatprep.subr.bf16.mxu0 0
        %6864 = vmatpush1.bf16.msra.mxu0 0
        %6865 = vmatprep.subr.bf16.mxu0 0
        %6866 = vmatpush1.bf16.msra.mxu0 0
        %6867 = vmatprep.subr.bf16.mxu0 0
        %6868 = vmatpush1.bf16.msra.mxu0 0
        %6869 = vmatprep.subr.bf16.mxu0 0
        %6870 = vmatpush1.bf16.msra.mxu0 0
        %6871 = vmatprep.subr.bf16.mxu0 0
        %6872 = vmatpush1.bf16.msra.mxu0 0
        %6873 = vmatprep.subr.bf16.mxu0 0
        %6874 = vmatpush1.bf16.msra.mxu0 0
        %6875 = vmatprep.subr.bf16.mxu0 0
        %6876 = vmatpush1.bf16.msra.mxu0 0
        %6877 = vmatprep.subr.bf16.mxu0 0
        %6878 = vmatpush1.bf16.msra.mxu0 0
        %6879 = vmatprep.subr.bf16.mxu0 0
        %6880 = vmatpush1.bf16.msra.mxu0 0
        %6881 = vmatprep.subr.bf16.mxu0 0
        %6882 = vmatpush1.bf16.msra.mxu0 0
        %6883 = vmatprep.subr.bf16.mxu0 0
        %6884 = vmatpush1.bf16.msra.mxu0 0
        %6885 = vmatprep.subr.bf16.mxu0 0
        %6886 = vmatpush1.bf16.msra.mxu0 0
        %6887 = vmatprep.subr.bf16.mxu0 0
        %6888 = vmatpush1.bf16.msra.mxu0 0
        %6889 = vmatprep.mubr.bf16.mxu0 0
        %6890 = vmatmul.mubr.bf16.gmra.mrb[0].mxu0 %v6852
        %v6891 = vpop.f32.mrb[0].mxu0
        %v6892 = vadd.f32 0.0, %v6891
        %v6893 = vpop.f32.mrb[0].mxu0
        %v6894 = vpop.f32.mrb[0].mxu0
        %v6895 = vadd.f32 0.0, %v6894
        %v6896 = vpop.f32.mrb[0].mxu0
        %6897 = vmatprep.mubr.bf16.mxu0 0
        %6898 = vmatmul.mubr.bf16.gmra.mrb[0].mxu0 %v6855
        %v6899 = vpop.f32.mrb[0].mxu0
        %v6900 = vadd.f32 0.0, %v6899
        %v6901 = vpop.f32.mrb[0].mxu0
        %v6902 = vpop.f32.mrb[0].mxu0
        %v6903 = vadd.f32 0.0, %v6902
        %v6904 = vpop.f32.mrb[0].mxu0
        %6905 = vdwg.mxu0
        %6910 = vrot.lane.b32.xlu0 %v6892, 80
        %v6911 = vpop.permute.xlu0 %6910
        %6912 = vrot.lane.b32.xlu0 %v6895, 80
        %v6913 = vpop.permute.xlu0 %6912
        %6914 = vrot.lane.b32.xlu0 %v6900, 80
        %v6915 = vpop.permute.xlu0 %6914
        %6916 = vrot.lane.b32.xlu0 %v6903, 80
        %v6917 = vpop.permute.xlu0 %6916
        %6922 = vst.msk [vmem:[#allocation2] sm:$0xff] %vm1988, %v6911
        %6923 = vst.msk [vmem:[#allocation2 + $0x8] sm:$0xff] %vm1988, %v6913
        %6924 = vst.msk [vmem:[#allocation2 + $0x10] sm:$0xff] %vm1988, %v6915
        %6925 = vst.msk [vmem:[#allocation2 + $0x18] sm:$0xff] %vm1988, %v6917
        %6926 = vrot.lane.b32.xlu0 %v5768, 32
        %v6927 = vpop.permute.xlu0 %6926
        %6928 = vrot.lane.b32.xlu0 %v5769, 32
        %v6929 = vpop.permute.xlu0 %6928
        %6930 = vrot.lane.b32.xlu0 %v5770, 32
        %v6931 = vpop.permute.xlu0 %6930
        %6932 = vrot.lane.b32.xlu0 %v5771, 32
        %v6933 = vpop.permute.xlu0 %6932
        %v6935 = vsel %vm834, %v6927, 0
        %v6938 = vsel %vm834, %v6929, 0
        %v6941 = vsel %vm834, %v6931, 0
        %v6944 = vsel %vm834, %v6933, 0
        %6946 = vmatprep.subr.bf16.mxu0 0
        %6947 = vmatpush1.bf16.xpose.msra.mxu0 %v6941
        %6948 = vmatprep.subr.bf16.mxu0 0
        %6949 = vmatpush1.bf16.xpose.msra.mxu0 %v6944
        %6950 = vmatprep.subr.bf16.mxu0 0
        %6951 = vmatpush1.bf16.xpose.msra.mxu0 0
        %6952 = vmatprep.subr.bf16.mxu0 0
        %6953 = vmatpush1.bf16.xpose.msra.mxu0 0
        %6954 = vmatprep.subr.bf16.mxu0 0
        %6955 = vmatpush1.bf16.xpose.msra.mxu0 0
        %6956 = vmatprep.subr.bf16.mxu0 0
        %6957 = vmatpush1.bf16.xpose.msra.mxu0 0
        %6958 = vmatprep.subr.bf16.mxu0 0
        %6959 = vmatpush1.bf16.xpose.msra.mxu0 0
        %6960 = vmatprep.subr.bf16.mxu0 0
        %6961 = vmatpush1.bf16.xpose.msra.mxu0 0
        %6962 = vmatprep.subr.bf16.mxu0 0
        %6963 = vmatpush1.bf16.xpose.msra.mxu0 0
        %6964 = vmatprep.subr.bf16.mxu0 0
        %6965 = vmatpush1.bf16.xpose.msra.mxu0 0
        %6966 = vmatprep.subr.bf16.mxu0 0
        %6967 = vmatpush1.bf16.xpose.msra.mxu0 0
        %6968 = vmatprep.subr.bf16.mxu0 0
        %6969 = vmatpush1.bf16.xpose.msra.mxu0 0
        %6970 = vmatprep.subr.bf16.mxu0 0
        %6971 = vmatpush1.bf16.xpose.msra.mxu0 0
        %6972 = vmatprep.subr.bf16.mxu0 0
        %6973 = vmatpush1.bf16.xpose.msra.mxu0 0
        %6974 = vmatprep.subr.bf16.mxu0 0
        %6975 = vmatpush1.bf16.xpose.msra.mxu0 0
        %6976 = vmatprep.subr.bf16.mxu0 0
        %6977 = vmatpush1.bf16.xpose.msra.mxu0 0
        %6978 = vmatprep.mubr.bf16.mxu0 0
        %6979 = vmatmul.mubr.bf16.gmra.mrb[0].mxu0 %v6935
        %v6980 = vpop.f32.mrb[0].mxu0
        %v6981 = vadd.f32 %v832, %v6980
        %v6982 = vpop.f32.mrb[0].mxu0
        %v6983 = vpop.f32.mrb[0].mxu0
        %v6984 = vadd.f32 %v832, %v6983
        %v6985 = vpop.f32.mrb[0].mxu0
        %6986 = vmatprep.mubr.bf16.mxu0 0
        %6987 = vmatmul.mubr.bf16.gmra.mrb[0].mxu0 %v6938
        %v6988 = vpop.f32.mrb[0].mxu0
        %v6989 = vadd.f32 %v832, %v6988
        %v6990 = vpop.f32.mrb[0].mxu0
        %v6991 = vpop.f32.mrb[0].mxu0
        %v6992 = vadd.f32 %v832, %v6991
        %v6993 = vpop.f32.mrb[0].mxu0
        %6994 = vdwg.mxu0
        %v6995 = vsel %vm896, %v6981, -inf
        %6996 = vmax.xlane.f32.xlu0 %v6995
        %v6997 = vpop.xlane.xlu0 %6996
        %v6998 = vsel %vm896, %v6984, -inf
        %6999 = vmax.xlane.f32.xlu0 %v6998
        %v7000 = vpop.xlane.xlu0 %6999
        %v7001 = vsel %vm896, %v6989, -inf
        %7002 = vmax.xlane.f32.xlu0 %v7001
        %v7003 = vpop.xlane.xlu0 %7002
        %v7004 = vsel %vm896, %v6992, -inf
        %7005 = vmax.xlane.f32.xlu0 %v7004
        %v7006 = vpop.xlane.xlu0 %7005
        %v7007 = vsub.f32 %v6981, %v6997
        %v7008 = vsub.f32 %v6984, %v7000
        %v7009 = vsub.f32 %v6989, %v7003
        %v7010 = vsub.f32 %v6992, %v7006
        %v7011 = vmul.f32 %v7007, 1.442695
        %v7012 = vpow.pop %v7011
        %v7013 = vmul.f32 %v7008, 1.442695
        %v7014 = vpow.pop %v7013
        %v7015 = vmul.f32 %v7009, 1.442695
        %v7016 = vpow.pop %v7015
        %v7017 = vmul.f32 %v7010, 1.442695
        %v7018 = vpow.pop %v7017
        %v7019 = vsel %vm896, %v7012, 0.0
        %7020 = vadd.xlane.f32.xlu0 %v7019
        %v7021 = vpop.xlane.xlu0 %7020
        %v7022 = vsel %vm896, %v7014, 0.0
        %7023 = vadd.xlane.f32.xlu0 %v7022
        %v7024 = vpop.xlane.xlu0 %7023
        %v7025 = vsel %vm896, %v7016, 0.0
        %7026 = vadd.xlane.f32.xlu0 %v7025
        %v7027 = vpop.xlane.xlu0 %7026
        %v7028 = vsel %vm896, %v7018, 0.0
        %7029 = vadd.xlane.f32.xlu0 %v7028
        %v7030 = vpop.xlane.xlu0 %7029
        %v7031 = vrcp.pop %v7021
        %v7032 = vrcp.pop %v7024
        %v7033 = vrcp.pop %v7027
        %v7034 = vrcp.pop %v7030
        %v7035 = vmul.f32 %v7012, %v7031
        %v7036 = vmul.f32 %v7014, %v7032
        %v7037 = vmul.f32 %v7016, %v7033
        %v7038 = vmul.f32 %v7018, %v7034
        %v7039 = vpack.c.bf16 %v7036, %v7035
        %v7040 = vpack.c.bf16 %v7038, %v7037
        %7041 = vrot.lane.b32.xlu0 %v5772, 32
        %v7042 = vpop.permute.xlu0 %7041
        %7043 = vrot.lane.b32.xlu0 %v5773, 32
        %v7044 = vpop.permute.xlu0 %7043
        %v7048 = vsel %vm896, %v7039, 0
        %v7051 = vsel %vm896, %v7040, 0
        %7053 = vmatprep.subr.bf16.mxu0 0
        %7054 = vmatpush1.bf16.msra.mxu0 %v7042
        %7055 = vmatprep.subr.bf16.mxu0 0
        %7056 = vmatpush1.bf16.msra.mxu0 %v7044
        %7057 = vmatprep.subr.bf16.mxu0 0
        %7058 = vmatpush1.bf16.msra.mxu0 0
        %7059 = vmatprep.subr.bf16.mxu0 0
        %7060 = vmatpush1.bf16.msra.mxu0 0
        %7061 = vmatprep.subr.bf16.mxu0 0
        %7062 = vmatpush1.bf16.msra.mxu0 0
        %7063 = vmatprep.subr.bf16.mxu0 0
        %7064 = vmatpush1.bf16.msra.mxu0 0
        %7065 = vmatprep.subr.bf16.mxu0 0
        %7066 = vmatpush1.bf16.msra.mxu0 0
        %7067 = vmatprep.subr.bf16.mxu0 0
        %7068 = vmatpush1.bf16.msra.mxu0 0
        %7069 = vmatprep.subr.bf16.mxu0 0
        %7070 = vmatpush1.bf16.msra.mxu0 0
        %7071 = vmatprep.subr.bf16.mxu0 0
        %7072 = vmatpush1.bf16.msra.mxu0 0
        %7073 = vmatprep.subr.bf16.mxu0 0
        %7074 = vmatpush1.bf16.msra.mxu0 0
        %7075 = vmatprep.subr.bf16.mxu0 0
        %7076 = vmatpush1.bf16.msra.mxu0 0
        %7077 = vmatprep.subr.bf16.mxu0 0
        %7078 = vmatpush1.bf16.msra.mxu0 0
        %7079 = vmatprep.subr.bf16.mxu0 0
        %7080 = vmatpush1.bf16.msra.mxu0 0
        %7081 = vmatprep.subr.bf16.mxu0 0
        %7082 = vmatpush1.bf16.msra.mxu0 0
        %7083 = vmatprep.subr.bf16.mxu0 0
        %7084 = vmatpush1.bf16.msra.mxu0 0
        %7085 = vmatprep.mubr.bf16.mxu0 0
        %7086 = vmatmul.mubr.bf16.gmra.mrb[0].mxu0 %v7048
        %v7087 = vpop.f32.mrb[0].mxu0
        %v7088 = vadd.f32 0.0, %v7087
        %v7089 = vpop.f32.mrb[0].mxu0
        %v7090 = vpop.f32.mrb[0].mxu0
        %v7091 = vadd.f32 0.0, %v7090
        %v7092 = vpop.f32.mrb[0].mxu0
        %7093 = vmatprep.mubr.bf16.mxu0 0
        %7094 = vmatmul.mubr.bf16.gmra.mrb[0].mxu0 %v7051
        %v7095 = vpop.f32.mrb[0].mxu0
        %v7096 = vadd.f32 0.0, %v7095
        %v7097 = vpop.f32.mrb[0].mxu0
        %v7098 = vpop.f32.mrb[0].mxu0
        %v7099 = vadd.f32 0.0, %v7098
        %v7100 = vpop.f32.mrb[0].mxu0
        %7101 = vdwg.mxu0
        %7106 = vrot.lane.b32.xlu0 %v7088, 96
        %v7107 = vpop.permute.xlu0 %7106
        %7108 = vrot.lane.b32.xlu0 %v7091, 96
        %v7109 = vpop.permute.xlu0 %7108
        %7110 = vrot.lane.b32.xlu0 %v7096, 96
        %v7111 = vpop.permute.xlu0 %7110
        %7112 = vrot.lane.b32.xlu0 %v7099, 96
        %v7113 = vpop.permute.xlu0 %7112
        %7118 = vst.msk [vmem:[#allocation2] sm:$0xff] %vm2185, %v7107
        %7119 = vst.msk [vmem:[#allocation2 + $0x8] sm:$0xff] %vm2185, %v7109
        %7120 = vst.msk [vmem:[#allocation2 + $0x10] sm:$0xff] %vm2185, %v7111
        %7121 = vst.msk [vmem:[#allocation2 + $0x18] sm:$0xff] %vm2185, %v7113
        %7122 = vrot.lane.b32.xlu0 %v5768, 16
        %v7123 = vpop.permute.xlu0 %7122
        %7124 = vrot.lane.b32.xlu0 %v5769, 16
        %v7125 = vpop.permute.xlu0 %7124
        %7126 = vrot.lane.b32.xlu0 %v5770, 16
        %v7127 = vpop.permute.xlu0 %7126
        %7128 = vrot.lane.b32.xlu0 %v5771, 16
        %v7129 = vpop.permute.xlu0 %7128
        %v7131 = vsel %vm834, %v7123, 0
        %v7134 = vsel %vm834, %v7125, 0
        %v7137 = vsel %vm834, %v7127, 0
        %v7140 = vsel %vm834, %v7129, 0
        %7142 = vmatprep.subr.bf16.mxu0 0
        %7143 = vmatpush1.bf16.xpose.msra.mxu0 %v7137
        %7144 = vmatprep.subr.bf16.mxu0 0
        %7145 = vmatpush1.bf16.xpose.msra.mxu0 %v7140
        %7146 = vmatprep.subr.bf16.mxu0 0
        %7147 = vmatpush1.bf16.xpose.msra.mxu0 0
        %7148 = vmatprep.subr.bf16.mxu0 0
        %7149 = vmatpush1.bf16.xpose.msra.mxu0 0
        %7150 = vmatprep.subr.bf16.mxu0 0
        %7151 = vmatpush1.bf16.xpose.msra.mxu0 0
        %7152 = vmatprep.subr.bf16.mxu0 0
        %7153 = vmatpush1.bf16.xpose.msra.mxu0 0
        %7154 = vmatprep.subr.bf16.mxu0 0
        %7155 = vmatpush1.bf16.xpose.msra.mxu0 0
        %7156 = vmatprep.subr.bf16.mxu0 0
        %7157 = vmatpush1.bf16.xpose.msra.mxu0 0
        %7158 = vmatprep.subr.bf16.mxu0 0
        %7159 = vmatpush1.bf16.xpose.msra.mxu0 0
        %7160 = vmatprep.subr.bf16.mxu0 0
        %7161 = vmatpush1.bf16.xpose.msra.mxu0 0
        %7162 = vmatprep.subr.bf16.mxu0 0
        %7163 = vmatpush1.bf16.xpose.msra.mxu0 0
        %7164 = vmatprep.subr.bf16.mxu0 0
        %7165 = vmatpush1.bf16.xpose.msra.mxu0 0
        %7166 = vmatprep.subr.bf16.mxu0 0
        %7167 = vmatpush1.bf16.xpose.msra.mxu0 0
        %7168 = vmatprep.subr.bf16.mxu0 0
        %7169 = vmatpush1.bf16.xpose.msra.mxu0 0
        %7170 = vmatprep.subr.bf16.mxu0 0
        %7171 = vmatpush1.bf16.xpose.msra.mxu0 0
        %7172 = vmatprep.subr.bf16.mxu0 0
        %7173 = vmatpush1.bf16.xpose.msra.mxu0 0
        %7174 = vmatprep.mubr.bf16.mxu0 0
        %7175 = vmatmul.mubr.bf16.gmra.mrb[0].mxu0 %v7131
        %v7176 = vpop.f32.mrb[0].mxu0
        %v7177 = vadd.f32 %v832, %v7176
        %v7178 = vpop.f32.mrb[0].mxu0
        %v7179 = vpop.f32.mrb[0].mxu0
        %v7180 = vadd.f32 %v832, %v7179
        %v7181 = vpop.f32.mrb[0].mxu0
        %7182 = vmatprep.mubr.bf16.mxu0 0
        %7183 = vmatmul.mubr.bf16.gmra.mrb[0].mxu0 %v7134
        %v7184 = vpop.f32.mrb[0].mxu0
        %v7185 = vadd.f32 %v832, %v7184
        %v7186 = vpop.f32.mrb[0].mxu0
        %v7187 = vpop.f32.mrb[0].mxu0
        %v7188 = vadd.f32 %v832, %v7187
        %v7189 = vpop.f32.mrb[0].mxu0
        %7190 = vdwg.mxu0
        %v7191 = vsel %vm896, %v7177, -inf
        %7192 = vmax.xlane.f32.xlu0 %v7191
        %v7193 = vpop.xlane.xlu0 %7192
        %v7194 = vsel %vm896, %v7180, -inf
        %7195 = vmax.xlane.f32.xlu0 %v7194
        %v7196 = vpop.xlane.xlu0 %7195
        %v7197 = vsel %vm896, %v7185, -inf
        %7198 = vmax.xlane.f32.xlu0 %v7197
        %v7199 = vpop.xlane.xlu0 %7198
        %v7200 = vsel %vm896, %v7188, -inf
        %7201 = vmax.xlane.f32.xlu0 %v7200
        %v7202 = vpop.xlane.xlu0 %7201
        %v7203 = vsub.f32 %v7177, %v7193
        %v7204 = vsub.f32 %v7180, %v7196
        %v7205 = vsub.f32 %v7185, %v7199
        %v7206 = vsub.f32 %v7188, %v7202
        %v7207 = vmul.f32 %v7203, 1.442695
        %v7208 = vpow.pop %v7207
        %v7209 = vmul.f32 %v7204, 1.442695
        %v7210 = vpow.pop %v7209
        %v7211 = vmul.f32 %v7205, 1.442695
        %v7212 = vpow.pop %v7211
        %v7213 = vmul.f32 %v7206, 1.442695
        %v7214 = vpow.pop %v7213
        %v7215 = vsel %vm896, %v7208, 0.0
        %7216 = vadd.xlane.f32.xlu0 %v7215
        %v7217 = vpop.xlane.xlu0 %7216
        %v7218 = vsel %vm896, %v7210, 0.0
        %7219 = vadd.xlane.f32.xlu0 %v7218
        %v7220 = vpop.xlane.xlu0 %7219
        %v7221 = vsel %vm896, %v7212, 0.0
        %7222 = vadd.xlane.f32.xlu0 %v7221
        %v7223 = vpop.xlane.xlu0 %7222
        %v7224 = vsel %vm896, %v7214, 0.0
        %7225 = vadd.xlane.f32.xlu0 %v7224
        %v7226 = vpop.xlane.xlu0 %7225
        %v7227 = vrcp.pop %v7217
        %v7228 = vrcp.pop %v7220
        %v7229 = vrcp.pop %v7223
        %v7230 = vrcp.pop %v7226
        %v7231 = vmul.f32 %v7208, %v7227
        %v7232 = vmul.f32 %v7210, %v7228
        %v7233 = vmul.f32 %v7212, %v7229
        %v7234 = vmul.f32 %v7214, %v7230
        %v7235 = vpack.c.bf16 %v7232, %v7231
        %v7236 = vpack.c.bf16 %v7234, %v7233
        %7237 = vrot.lane.b32.xlu0 %v5772, 16
        %v7238 = vpop.permute.xlu0 %7237
        %7239 = vrot.lane.b32.xlu0 %v5773, 16
        %v7240 = vpop.permute.xlu0 %7239
        %v7244 = vsel %vm896, %v7235, 0
        %v7247 = vsel %vm896, %v7236, 0
        %7249 = vmatprep.subr.bf16.mxu0 0
        %7250 = vmatpush1.bf16.msra.mxu0 %v7238
        %7251 = vmatprep.subr.bf16.mxu0 0
        %7252 = vmatpush1.bf16.msra.mxu0 %v7240
        %7253 = vmatprep.subr.bf16.mxu0 0
        %7254 = vmatpush1.bf16.msra.mxu0 0
        %7255 = vmatprep.subr.bf16.mxu0 0
        %7256 = vmatpush1.bf16.msra.mxu0 0
        %7257 = vmatprep.subr.bf16.mxu0 0
        %7258 = vmatpush1.bf16.msra.mxu0 0
        %7259 = vmatprep.subr.bf16.mxu0 0
        %7260 = vmatpush1.bf16.msra.mxu0 0
        %7261 = vmatprep.subr.bf16.mxu0 0
        %7262 = vmatpush1.bf16.msra.mxu0 0
        %7263 = vmatprep.subr.bf16.mxu0 0
        %7264 = vmatpush1.bf16.msra.mxu0 0
        %7265 = vmatprep.subr.bf16.mxu0 0
        %7266 = vmatpush1.bf16.msra.mxu0 0
        %7267 = vmatprep.subr.bf16.mxu0 0
        %7268 = vmatpush1.bf16.msra.mxu0 0
        %7269 = vmatprep.subr.bf16.mxu0 0
        %7270 = vmatpush1.bf16.msra.mxu0 0
        %7271 = vmatprep.subr.bf16.mxu0 0
        %7272 = vmatpush1.bf16.msra.mxu0 0
        %7273 = vmatprep.subr.bf16.mxu0 0
        %7274 = vmatpush1.bf16.msra.mxu0 0
        %7275 = vmatprep.subr.bf16.mxu0 0
        %7276 = vmatpush1.bf16.msra.mxu0 0
        %7277 = vmatprep.subr.bf16.mxu0 0
        %7278 = vmatpush1.bf16.msra.mxu0 0
        %7279 = vmatprep.subr.bf16.mxu0 0
        %7280 = vmatpush1.bf16.msra.mxu0 0
        %7281 = vmatprep.mubr.bf16.mxu0 0
        %7282 = vmatmul.mubr.bf16.gmra.mrb[0].mxu0 %v7244
        %v7283 = vpop.f32.mrb[0].mxu0
        %v7284 = vadd.f32 0.0, %v7283
        %v7285 = vpop.f32.mrb[0].mxu0
        %v7286 = vpop.f32.mrb[0].mxu0
        %v7287 = vadd.f32 0.0, %v7286
        %v7288 = vpop.f32.mrb[0].mxu0
        %7289 = vmatprep.mubr.bf16.mxu0 0
        %7290 = vmatmul.mubr.bf16.gmra.mrb[0].mxu0 %v7247
        %v7291 = vpop.f32.mrb[0].mxu0
        %v7292 = vadd.f32 0.0, %v7291
        %v7293 = vpop.f32.mrb[0].mxu0
        %v7294 = vpop.f32.mrb[0].mxu0
        %v7295 = vadd.f32 0.0, %v7294
        %v7296 = vpop.f32.mrb[0].mxu0
        %7297 = vdwg.mxu0
        %7302 = vrot.lane.b32.xlu0 %v7284, 112
        %v7303 = vpop.permute.xlu0 %7302
        %7304 = vrot.lane.b32.xlu0 %v7287, 112
        %v7305 = vpop.permute.xlu0 %7304
        %7306 = vrot.lane.b32.xlu0 %v7292, 112
        %v7307 = vpop.permute.xlu0 %7306
        %7308 = vrot.lane.b32.xlu0 %v7295, 112
        %v7309 = vpop.permute.xlu0 %7308
        %7314 = vst.msk [vmem:[#allocation2] sm:$0xff] %vm2382, %v7303
        %7315 = vst.msk [vmem:[#allocation2 + $0x8] sm:$0xff] %vm2382, %v7305
        %7316 = vst.msk [vmem:[#allocation2 + $0x10] sm:$0xff] %vm2382, %v7307
        %7317 = vst.msk [vmem:[#allocation2 + $0x18] sm:$0xff] %vm2382, %v7309
        %v7318 = vld [vmem:[#allocation2] sm:$0xff]
        %v7319 = vld [vmem:[#allocation2 + $0x8] sm:$0xff]
        %v7320 = vld [vmem:[#allocation2 + $0x10] sm:$0xff]
        %v7321 = vld [vmem:[#allocation2 + $0x18] sm:$0xff]
        %v7322 = vpack.c.bf16 %v7319, %v7318
        %v7323 = vpack.c.bf16 %v7321, %v7320
        %s7324 = scalar_lea.vmem [#allocation9], 128
        %v7325 = vld [vmem:[%s7324] sm:$0xf]
        %v7326 = vld [vmem:[%s7324 + $0x4] sm:$0xf]
        %v7327 = vld [vmem:[%s7324 + $0x8] sm:$0xf]
        %v7328 = vld [vmem:[%s7324 + $0xc] sm:$0xf]
        %v7329 = vld [vmem:[%s7324 + $0x10] sm:$0xf]
        %v7330 = vld [vmem:[%s7324 + $0x14] sm:$0xf]
        %v7331 = vld [vmem:[%s7324 + $0x18] sm:$0xf]
        %v7332 = vld [vmem:[%s7324 + $0x1c] sm:$0xf]
        %v7333 = vld [vmem:[%s7324 + $0x20] sm:$0xf]
        %v7334 = vld [vmem:[%s7324 + $0x24] sm:$0xf]
        %v7335 = vld [vmem:[%s7324 + $0x28] sm:$0xf]
        %v7336 = vld [vmem:[%s7324 + $0x2c] sm:$0xf]
        %v7337 = vld [vmem:[%s7324 + $0x30] sm:$0xf]
        %v7338 = vld [vmem:[%s7324 + $0x34] sm:$0xf]
        %v7339 = vld [vmem:[%s7324 + $0x38] sm:$0xf]
        %v7340 = vld [vmem:[%s7324 + $0x3c] sm:$0xf]
        %v7341 = vlaneseq
        %v7342 = vshrl.u32 %v7341, 7
        %v7343 = vsub.s32 0, %v7342
        %v7344 = vrot.slane %v5479, %v7343
        %v7361 = vunpack.c.l.b16 %v7325
        %v7362 = vunpack.c.l.b16 %v7326
        %v7363 = vunpack.c.l.b16 %v7327
        %v7364 = vunpack.c.l.b16 %v7328
        %v7365 = vunpack.c.l.b16 %v7329
        %v7366 = vunpack.c.l.b16 %v7330
        %v7367 = vunpack.c.l.b16 %v7331
        %v7368 = vunpack.c.l.b16 %v7332
        %v7369 = vunpack.c.l.b16 %v7333
        %v7370 = vunpack.c.l.b16 %v7334
        %v7371 = vunpack.c.l.b16 %v7335
        %v7372 = vunpack.c.l.b16 %v7336
        %v7373 = vunpack.c.l.b16 %v7337
        %v7374 = vunpack.c.l.b16 %v7338
        %v7375 = vunpack.c.l.b16 %v7339
        %v7376 = vunpack.c.l.b16 %v7340
        %v7377 = vpack.c.b16 %v7362, %v7361
        %v7378 = vpack.c.b16 %v7364, %v7363
        %v7379 = vpack.c.b16 %v7366, %v7365
        %v7380 = vpack.c.b16 %v7368, %v7367
        %v7381 = vpack.c.b16 %v7370, %v7369
        %v7382 = vpack.c.b16 %v7372, %v7371
        %v7383 = vpack.c.b16 %v7374, %v7373
        %v7384 = vpack.c.b16 %v7376, %v7375
        %7393 = vmatprep.subr.bf16.mxu0 0
        %7394 = vmatpush1.bf16.msra.mxu0 %v7377
        %7395 = vmatprep.subr.bf16.mxu0 0
        %7396 = vmatpush1.bf16.msra.mxu0 %v7378
        %7397 = vmatprep.subr.bf16.mxu0 0
        %7398 = vmatpush1.bf16.msra.mxu0 %v7379
        %7399 = vmatprep.subr.bf16.mxu0 0
        %7400 = vmatpush1.bf16.msra.mxu0 %v7380
        %7401 = vmatprep.subr.bf16.mxu0 0
        %7402 = vmatpush1.bf16.msra.mxu0 %v7381
        %7403 = vmatprep.subr.bf16.mxu0 0
        %7404 = vmatpush1.bf16.msra.mxu0 %v7382
        %7405 = vmatprep.subr.bf16.mxu0 0
        %7406 = vmatpush1.bf16.msra.mxu0 %v7383
        %7407 = vmatprep.subr.bf16.mxu0 0
        %7408 = vmatpush1.bf16.msra.mxu0 %v7384
        %7409 = vmatprep.subr.bf16.mxu0 0
        %7410 = vmatpush1.bf16.msra.mxu0 0
        %7411 = vmatprep.subr.bf16.mxu0 0
        %7412 = vmatpush1.bf16.msra.mxu0 0
        %7413 = vmatprep.subr.bf16.mxu0 0
        %7414 = vmatpush1.bf16.msra.mxu0 0
        %7415 = vmatprep.subr.bf16.mxu0 0
        %7416 = vmatpush1.bf16.msra.mxu0 0
        %7417 = vmatprep.subr.bf16.mxu0 0
        %7418 = vmatpush1.bf16.msra.mxu0 0
        %7419 = vmatprep.subr.bf16.mxu0 0
        %7420 = vmatpush1.bf16.msra.mxu0 0
        %7421 = vmatprep.subr.bf16.mxu0 0
        %7422 = vmatpush1.bf16.msra.mxu0 0
        %7423 = vmatprep.subr.bf16.mxu0 0
        %7424 = vmatpush1.bf16.msra.mxu0 0
        %7425 = vmatprep.mubr.bf16.mxu0 0
        %7426 = vmatmul.mubr.bf16.gmra.mrb[0].mxu0 %v7322
        %v7427 = vpop.f32.mrb[0].mxu0
        %v7428 = vadd.f32 %v7344, %v7427
        %v7429 = vpop.f32.mrb[0].mxu0
        %v7430 = vpop.f32.mrb[0].mxu0
        %v7431 = vadd.f32 %v7344, %v7430
        %v7432 = vpop.f32.mrb[0].mxu0
        %7433 = vmatprep.mubr.bf16.mxu0 0
        %7434 = vmatmul.mubr.bf16.gmra.mrb[0].mxu0 %v7323
        %v7435 = vpop.f32.mrb[0].mxu0
        %v7436 = vadd.f32 %v7344, %v7435
        %v7437 = vpop.f32.mrb[0].mxu0
        %v7438 = vpop.f32.mrb[0].mxu0
        %v7439 = vadd.f32 %v7344, %v7438
        %v7440 = vpop.f32.mrb[0].mxu0
        %7441 = vdwg.mxu0
        %v7442 = vadd.f32 %v5474, %v7428
        %v7443 = vadd.f32 %v5475, %v7431
        %v7444 = vadd.f32 %v5476, %v7436
        %v7445 = vadd.f32 %v5477, %v7439
        %7446 = vadd.xlane.f32.xlu0 %v7442
        %v7447 = vpop.xlane.xlu0 %7446
        %7448 = vadd.xlane.f32.xlu0 %v7443
        %v7449 = vpop.xlane.xlu0 %7448
        %7450 = vadd.xlane.f32.xlu0 %v7444
        %v7451 = vpop.xlane.xlu0 %7450
        %7452 = vadd.xlane.f32.xlu0 %v7445
        %v7453 = vpop.xlane.xlu0 %7452
        %v7454 = vmul.f32 %v7447, %v2522
        %v7455 = vmul.f32 %v7449, %v2522
        %v7456 = vmul.f32 %v7451, %v2522
        %v7457 = vmul.f32 %v7453, %v2522
        %v7458 = vmul.f32 %v7442, %v7442
        %v7459 = vmul.f32 %v7443, %v7443
        %v7460 = vmul.f32 %v7444, %v7444
        %v7461 = vmul.f32 %v7445, %v7445
        %7462 = vadd.xlane.f32.xlu0 %v7458
        %v7463 = vpop.xlane.xlu0 %7462
        %7464 = vadd.xlane.f32.xlu0 %v7459
        %v7465 = vpop.xlane.xlu0 %7464
        %7466 = vadd.xlane.f32.xlu0 %v7460
        %v7467 = vpop.xlane.xlu0 %7466
        %7468 = vadd.xlane.f32.xlu0 %v7461
        %v7469 = vpop.xlane.xlu0 %7468
        %v7470 = vmul.f32 %v7463, %v2522
        %v7471 = vmul.f32 %v7465, %v2522
        %v7472 = vmul.f32 %v7467, %v2522
        %v7473 = vmul.f32 %v7469, %v2522
        %v7474 = vmul.f32 %v7454, %v7454
        %v7475 = vmul.f32 %v7455, %v7455
        %v7476 = vmul.f32 %v7456, %v7456
        %v7477 = vmul.f32 %v7457, %v7457
        %v7478 = vsub.f32 %v7470, %v7474
        %v7479 = vsub.f32 %v7471, %v7475
        %v7480 = vsub.f32 %v7472, %v7476
        %v7481 = vsub.f32 %v7473, %v7477
        %v7482 = vsub.f32 %v7442, %v7454
        %v7483 = vsub.f32 %v7443, %v7455
        %v7484 = vsub.f32 %v7444, %v7456
        %v7485 = vsub.f32 %v7445, %v7457
        %v7486 = vadd.f32 %v7478, 1e-05
        %v7487 = vadd.f32 %v7479, 1e-05
        %v7488 = vadd.f32 %v7480, 1e-05
        %v7489 = vadd.f32 %v7481, 1e-05
        %v7490 = vrsqrt.pop %v7486
        %v7491 = vrsqrt.pop %v7487
        %v7492 = vrsqrt.pop %v7488
        %v7493 = vrsqrt.pop %v7489
        %v7494 = vmul.f32 %v7482, %v7490
        %v7495 = vmul.f32 %v7483, %v7491
        %v7496 = vmul.f32 %v7484, %v7492
        %v7497 = vmul.f32 %v7485, %v7493
        %v7498 = vlaneseq
        %v7499 = vshrl.u32 %v7498, 7
        %v7500 = vsub.s32 0, %v7499
        %v7501 = vrot.slane %v5481, %v7500
        %v7502 = vmul.f32 %v7494, %v7501
        %v7503 = vmul.f32 %v7495, %v7501
        %v7504 = vmul.f32 %v7496, %v7501
        %v7505 = vmul.f32 %v7497, %v7501
        %v7506 = vlaneseq
        %v7507 = vshrl.u32 %v7506, 7
        %v7508 = vsub.s32 0, %v7507
        %v7509 = vrot.slane %v5482, %v7508
        %v7510 = vadd.f32 %v7502, %v7509
        %v7511 = vadd.f32 %v7503, %v7509
        %v7512 = vadd.f32 %v7504, %v7509
        %v7513 = vadd.f32 %v7505, %v7509
        %v7514 = vpack.c.bf16 %v7511, %v7510
        %v7515 = vpack.c.bf16 %v7513, %v7512
        %s7516 = scalar_lea.vmem [#allocation11], 256
        %v7517 = vld [vmem:[%s7516] sm:$0xff]
        %v7518 = vld [vmem:[%s7516 + $0x8] sm:$0xff]
        %v7519 = vld [vmem:[%s7516 + $0x10] sm:$0xff]
        %v7520 = vld [vmem:[%s7516 + $0x18] sm:$0xff]
        %v7521 = vld [vmem:[%s7516 + $0x20] sm:$0xff]
        %v7522 = vld [vmem:[%s7516 + $0x28] sm:$0xff]
        %v7523 = vld [vmem:[%s7516 + $0x30] sm:$0xff]
        %v7524 = vld [vmem:[%s7516 + $0x38] sm:$0xff]
        %v7525 = vld [vmem:[%s7516 + $0x40] sm:$0xff]
        %v7526 = vld [vmem:[%s7516 + $0x48] sm:$0xff]
        %v7527 = vld [vmem:[%s7516 + $0x50] sm:$0xff]
        %v7528 = vld [vmem:[%s7516 + $0x58] sm:$0xff]
        %v7529 = vld [vmem:[%s7516 + $0x60] sm:$0xff]
        %v7530 = vld [vmem:[%s7516 + $0x68] sm:$0xff]
        %v7531 = vld [vmem:[%s7516 + $0x70] sm:$0xff]
        %v7532 = vld [vmem:[%s7516 + $0x78] sm:$0xff]
        %s7533 = scalar_lea.vmem %s8, 4
        %v7534 = vld [vmem:[%s7533] sm:$0x3]
        %v7536 = vlaneseq
        %v7537 = vshrl.u32 %v7536, 7
        %v7538 = vsub.s32 0, %v7537
        %v7539 = vrot.slane %v7534, %v7538
        %v7540 = vlaneseq
        %v7541 = vshrl.u32 %v7540, 7
        %v7542 = vsub.s32 1, %v7541
        %v7543 = vrot.slane %v7534, %v7542
        %v7562 = vunpack.c.l.b16 %v7517
        %v7563 = vunpack.c.h.b16 %v7517
        %v7564 = vunpack.c.l.b16 %v7518
        %v7565 = vunpack.c.h.b16 %v7518
        %v7566 = vunpack.c.l.b16 %v7519
        %v7567 = vunpack.c.h.b16 %v7519
        %v7568 = vunpack.c.l.b16 %v7520
        %v7569 = vunpack.c.h.b16 %v7520
        %v7570 = vunpack.c.l.b16 %v7521
        %v7571 = vunpack.c.h.b16 %v7521
        %v7572 = vunpack.c.l.b16 %v7522
        %v7573 = vunpack.c.h.b16 %v7522
        %v7574 = vunpack.c.l.b16 %v7523
        %v7575 = vunpack.c.h.b16 %v7523
        %v7576 = vunpack.c.l.b16 %v7524
        %v7577 = vunpack.c.h.b16 %v7524
        %v7578 = vunpack.c.l.b16 %v7525
        %v7579 = vunpack.c.h.b16 %v7525
        %v7580 = vunpack.c.l.b16 %v7526
        %v7581 = vunpack.c.h.b16 %v7526
        %v7582 = vunpack.c.l.b16 %v7527
        %v7583 = vunpack.c.h.b16 %v7527
        %v7584 = vunpack.c.l.b16 %v7528
        %v7585 = vunpack.c.h.b16 %v7528
        %v7586 = vunpack.c.l.b16 %v7529
        %v7587 = vunpack.c.h.b16 %v7529
        %v7588 = vunpack.c.l.b16 %v7530
        %v7589 = vunpack.c.h.b16 %v7530
        %v7590 = vunpack.c.l.b16 %v7531
        %v7591 = vunpack.c.h.b16 %v7531
        %v7592 = vunpack.c.l.b16 %v7532
        %v7593 = vunpack.c.h.b16 %v7532
        %v7594 = vpack.c.b16 %v7564, %v7562
        %v7595 = vpack.c.b16 %v7565, %v7563
        %v7596 = vpack.c.b16 %v7568, %v7566
        %v7597 = vpack.c.b16 %v7569, %v7567
        %v7598 = vpack.c.b16 %v7572, %v7570
        %v7599 = vpack.c.b16 %v7573, %v7571
        %v7600 = vpack.c.b16 %v7576, %v7574
        %v7601 = vpack.c.b16 %v7577, %v7575
        %v7602 = vpack.c.b16 %v7580, %v7578
        %v7603 = vpack.c.b16 %v7581, %v7579
        %v7604 = vpack.c.b16 %v7584, %v7582
        %v7605 = vpack.c.b16 %v7585, %v7583
        %v7606 = vpack.c.b16 %v7588, %v7586
        %v7607 = vpack.c.b16 %v7589, %v7587
        %v7608 = vpack.c.b16 %v7592, %v7590
        %v7609 = vpack.c.b16 %v7593, %v7591
        %7626 = vmatprep.subr.bf16.mxu0 %v7595
        %7627 = vmatpush1.bf16.msra.mxu0 %v7594
        %7628 = vmatprep.subr.bf16.mxu0 %v7597
        %7629 = vmatpush1.bf16.msra.mxu0 %v7596
        %7630 = vmatprep.subr.bf16.mxu0 %v7599
        %7631 = vmatpush1.bf16.msra.mxu0 %v7598
        %7632 = vmatprep.subr.bf16.mxu0 %v7601
        %7633 = vmatpush1.bf16.msra.mxu0 %v7600
        %7634 = vmatprep.subr.bf16.mxu0 %v7603
        %7635 = vmatpush1.bf16.msra.mxu0 %v7602
        %7636 = vmatprep.subr.bf16.mxu0 %v7605
        %7637 = vmatpush1.bf16.msra.mxu0 %v7604
        %7638 = vmatprep.subr.bf16.mxu0 %v7607
        %7639 = vmatpush1.bf16.msra.mxu0 %v7606
        %7640 = vmatprep.subr.bf16.mxu0 %v7609
        %7641 = vmatpush1.bf16.msra.mxu0 %v7608
        %7642 = vmatprep.subr.bf16.mxu0 0
        %7643 = vmatpush1.bf16.msra.mxu0 0
        %7644 = vmatprep.subr.bf16.mxu0 0
        %7645 = vmatpush1.bf16.msra.mxu0 0
        %7646 = vmatprep.subr.bf16.mxu0 0
        %7647 = vmatpush1.bf16.msra.mxu0 0
        %7648 = vmatprep.subr.bf16.mxu0 0
        %7649 = vmatpush1.bf16.msra.mxu0 0
        %7650 = vmatprep.subr.bf16.mxu0 0
        %7651 = vmatpush1.bf16.msra.mxu0 0
        %7652 = vmatprep.subr.bf16.mxu0 0
        %7653 = vmatpush1.bf16.msra.mxu0 0
        %7654 = vmatprep.subr.bf16.mxu0 0
        %7655 = vmatpush1.bf16.msra.mxu0 0
        %7656 = vmatprep.subr.bf16.mxu0 0
        %7657 = vmatpush1.bf16.msra.mxu0 0
        %7658 = vmatprep.mubr.bf16.mxu0 0
        %7659 = vmatmul.mubr.bf16.gmra.mrb[0].mxu0 %v7514
        %v7660 = vpop.f32.mrb[0].mxu0
        %v7661 = vadd.f32 %v7539, %v7660
        %v7662 = vpop.f32.mrb[0].mxu0
        %v7663 = vadd.f32 %v7543, %v7662
        %v7664 = vpop.f32.mrb[0].mxu0
        %v7665 = vadd.f32 %v7539, %v7664
        %v7666 = vpop.f32.mrb[0].mxu0
        %v7667 = vadd.f32 %v7543, %v7666
        %7668 = vmatprep.mubr.bf16.mxu0 0
        %7669 = vmatmul.mubr.bf16.gmra.mrb[0].mxu0 %v7515
        %v7670 = vpop.f32.mrb[0].mxu0
        %v7671 = vadd.f32 %v7539, %v7670
        %v7672 = vpop.f32.mrb[0].mxu0
        %v7673 = vadd.f32 %v7543, %v7672
        %v7674 = vpop.f32.mrb[0].mxu0
        %v7675 = vadd.f32 %v7539, %v7674
        %v7676 = vpop.f32.mrb[0].mxu0
        %v7677 = vadd.f32 %v7543, %v7676
        %7678 = vdwg.mxu0
        %v7679 = vmax.f32 %v7661, 0.0
        %v7680 = vmax.f32 %v7663, 0.0
        %v7681 = vmax.f32 %v7665, 0.0
        %v7682 = vmax.f32 %v7667, 0.0
        %v7683 = vmax.f32 %v7671, 0.0
        %v7684 = vmax.f32 %v7673, 0.0
        %v7685 = vmax.f32 %v7675, 0.0
        %v7686 = vmax.f32 %v7677, 0.0
        %v7687 = vpack.c.bf16 %v7681, %v7679
        %v7688 = vpack.c.bf16 %v7682, %v7680
        %v7689 = vpack.c.bf16 %v7685, %v7683
        %v7690 = vpack.c.bf16 %v7686, %v7684
        %s7691 = scalar_lea.vmem [#allocation12], 256
        %v7692 = vld [vmem:[%s7691] sm:$0xf]
        %v7693 = vld [vmem:[%s7691 + $0x4] sm:$0xf]
        %v7694 = vld [vmem:[%s7691 + $0x8] sm:$0xf]
        %v7695 = vld [vmem:[%s7691 + $0xc] sm:$0xf]
        %v7696 = vld [vmem:[%s7691 + $0x10] sm:$0xf]
        %v7697 = vld [vmem:[%s7691 + $0x14] sm:$0xf]
        %v7698 = vld [vmem:[%s7691 + $0x18] sm:$0xf]
        %v7699 = vld [vmem:[%s7691 + $0x1c] sm:$0xf]
        %v7700 = vld [vmem:[%s7691 + $0x20] sm:$0xf]
        %v7701 = vld [vmem:[%s7691 + $0x24] sm:$0xf]
        %v7702 = vld [vmem:[%s7691 + $0x28] sm:$0xf]
        %v7703 = vld [vmem:[%s7691 + $0x2c] sm:$0xf]
        %v7704 = vld [vmem:[%s7691 + $0x30] sm:$0xf]
        %v7705 = vld [vmem:[%s7691 + $0x34] sm:$0xf]
        %v7706 = vld [vmem:[%s7691 + $0x38] sm:$0xf]
        %v7707 = vld [vmem:[%s7691 + $0x3c] sm:$0xf]
        %v7708 = vld [vmem:[%s7691 + $0x40] sm:$0xf]
        %v7709 = vld [vmem:[%s7691 + $0x44] sm:$0xf]
        %v7710 = vld [vmem:[%s7691 + $0x48] sm:$0xf]
        %v7711 = vld [vmem:[%s7691 + $0x4c] sm:$0xf]
        %v7712 = vld [vmem:[%s7691 + $0x50] sm:$0xf]
        %v7713 = vld [vmem:[%s7691 + $0x54] sm:$0xf]
        %v7714 = vld [vmem:[%s7691 + $0x58] sm:$0xf]
        %v7715 = vld [vmem:[%s7691 + $0x5c] sm:$0xf]
        %v7716 = vld [vmem:[%s7691 + $0x60] sm:$0xf]
        %v7717 = vld [vmem:[%s7691 + $0x64] sm:$0xf]
        %v7718 = vld [vmem:[%s7691 + $0x68] sm:$0xf]
        %v7719 = vld [vmem:[%s7691 + $0x6c] sm:$0xf]
        %v7720 = vld [vmem:[%s7691 + $0x70] sm:$0xf]
        %v7721 = vld [vmem:[%s7691 + $0x74] sm:$0xf]
        %v7722 = vld [vmem:[%s7691 + $0x78] sm:$0xf]
        %v7723 = vld [vmem:[%s7691 + $0x7c] sm:$0xf]
        %v7724 = vlaneseq
        %v7725 = vshrl.u32 %v7724, 7
        %v7726 = vsub.s32 0, %v7725
        %v7727 = vrot.slane %v5480, %v7726
        %v7760 = vunpack.c.l.b16 %v7692
        %v7761 = vunpack.c.l.b16 %v7693
        %v7762 = vunpack.c.l.b16 %v7694
        %v7763 = vunpack.c.l.b16 %v7695
        %v7764 = vunpack.c.l.b16 %v7696
        %v7765 = vunpack.c.l.b16 %v7697
        %v7766 = vunpack.c.l.b16 %v7698
        %v7767 = vunpack.c.l.b16 %v7699
        %v7768 = vunpack.c.l.b16 %v7700
        %v7769 = vunpack.c.l.b16 %v7701
        %v7770 = vunpack.c.l.b16 %v7702
        %v7771 = vunpack.c.l.b16 %v7703
        %v7772 = vunpack.c.l.b16 %v7704
        %v7773 = vunpack.c.l.b16 %v7705
        %v7774 = vunpack.c.l.b16 %v7706
        %v7775 = vunpack.c.l.b16 %v7707
        %v7776 = vunpack.c.l.b16 %v7708
        %v7777 = vunpack.c.l.b16 %v7709
        %v7778 = vunpack.c.l.b16 %v7710
        %v7779 = vunpack.c.l.b16 %v7711
        %v7780 = vunpack.c.l.b16 %v7712
        %v7781 = vunpack.c.l.b16 %v7713
        %v7782 = vunpack.c.l.b16 %v7714
        %v7783 = vunpack.c.l.b16 %v7715
        %v7784 = vunpack.c.l.b16 %v7716
        %v7785 = vunpack.c.l.b16 %v7717
        %v7786 = vunpack.c.l.b16 %v7718
        %v7787 = vunpack.c.l.b16 %v7719
        %v7788 = vunpack.c.l.b16 %v7720
        %v7789 = vunpack.c.l.b16 %v7721
        %v7790 = vunpack.c.l.b16 %v7722
        %v7791 = vunpack.c.l.b16 %v7723
        %v7792 = vpack.c.b16 %v7761, %v7760
        %v7793 = vpack.c.b16 %v7763, %v7762
        %v7794 = vpack.c.b16 %v7765, %v7764
        %v7795 = vpack.c.b16 %v7767, %v7766
        %v7796 = vpack.c.b16 %v7769, %v7768
        %v7797 = vpack.c.b16 %v7771, %v7770
        %v7798 = vpack.c.b16 %v7773, %v7772
        %v7799 = vpack.c.b16 %v7775, %v7774
        %v7800 = vpack.c.b16 %v7777, %v7776
        %v7801 = vpack.c.b16 %v7779, %v7778
        %v7802 = vpack.c.b16 %v7781, %v7780
        %v7803 = vpack.c.b16 %v7783, %v7782
        %v7804 = vpack.c.b16 %v7785, %v7784
        %v7805 = vpack.c.b16 %v7787, %v7786
        %v7806 = vpack.c.b16 %v7789, %v7788
        %v7807 = vpack.c.b16 %v7791, %v7790
        %7824 = vmatprep.subr.bf16.mxu0 0
        %7825 = vmatpush1.bf16.msra.mxu0 %v7792
        %7826 = vmatprep.subr.bf16.mxu0 0
        %7827 = vmatpush1.bf16.msra.mxu0 %v7793
        %7828 = vmatprep.subr.bf16.mxu0 0
        %7829 = vmatpush1.bf16.msra.mxu0 %v7794
        %7830 = vmatprep.subr.bf16.mxu0 0
        %7831 = vmatpush1.bf16.msra.mxu0 %v7795
        %7832 = vmatprep.subr.bf16.mxu0 0
        %7833 = vmatpush1.bf16.msra.mxu0 %v7796
        %7834 = vmatprep.subr.bf16.mxu0 0
        %7835 = vmatpush1.bf16.msra.mxu0 %v7797
        %7836 = vmatprep.subr.bf16.mxu0 0
        %7837 = vmatpush1.bf16.msra.mxu0 %v7798
        %7838 = vmatprep.subr.bf16.mxu0 0
        %7839 = vmatpush1.bf16.msra.mxu0 %v7799
        %7840 = vmatprep.subr.bf16.mxu0 0
        %7841 = vmatpush1.bf16.msra.mxu0 %v7800
        %7842 = vmatprep.subr.bf16.mxu0 0
        %7843 = vmatpush1.bf16.msra.mxu0 %v7801
        %7844 = vmatprep.subr.bf16.mxu0 0
        %7845 = vmatpush1.bf16.msra.mxu0 %v7802
        %7846 = vmatprep.subr.bf16.mxu0 0
        %7847 = vmatpush1.bf16.msra.mxu0 %v7803
        %7848 = vmatprep.subr.bf16.mxu0 0
        %7849 = vmatpush1.bf16.msra.mxu0 %v7804
        %7850 = vmatprep.subr.bf16.mxu0 0
        %7851 = vmatpush1.bf16.msra.mxu0 %v7805
        %7852 = vmatprep.subr.bf16.mxu0 0
        %7853 = vmatpush1.bf16.msra.mxu0 %v7806
        %7854 = vmatprep.subr.bf16.mxu0 0
        %7855 = vmatpush1.bf16.msra.mxu0 %v7807
        %7856 = vmatprep.mubr.bf16.mxu0 %v7688
        %7857 = vmatmul.mubr.bf16.gmra.mrb[0].mxu0 %v7687
        %v7858 = vpop.f32.mrb[0].mxu0
        %v7859 = vadd.f32 %v7727, %v7858
        %v7860 = vpop.f32.mrb[0].mxu0
        %v7861 = vpop.f32.mrb[0].mxu0
        %v7862 = vadd.f32 %v7727, %v7861
        %v7863 = vpop.f32.mrb[0].mxu0
        %7864 = vmatprep.mubr.bf16.mxu0 %v7690
        %7865 = vmatmul.mubr.bf16.gmra.mrb[0].mxu0 %v7689
        %v7866 = vpop.f32.mrb[0].mxu0
        %v7867 = vadd.f32 %v7727, %v7866
        %v7868 = vpop.f32.mrb[0].mxu0
        %v7869 = vpop.f32.mrb[0].mxu0
        %v7870 = vadd.f32 %v7727, %v7869
        %v7871 = vpop.f32.mrb[0].mxu0
        %7872 = vdwg.mxu0
        %v7873 = vadd.f32 %v7510, %v7859
        %v7874 = vadd.f32 %v7511, %v7862
        %v7875 = vadd.f32 %v7512, %v7867
        %v7876 = vadd.f32 %v7513, %v7870
        %7877 = vadd.xlane.f32.xlu0 %v7873
        %v7878 = vpop.xlane.xlu0 %7877
        %7879 = vadd.xlane.f32.xlu0 %v7874
        %v7880 = vpop.xlane.xlu0 %7879
        %7881 = vadd.xlane.f32.xlu0 %v7875
        %v7882 = vpop.xlane.xlu0 %7881
        %7883 = vadd.xlane.f32.xlu0 %v7876
        %v7884 = vpop.xlane.xlu0 %7883
        %v7885 = vmul.f32 %v7878, %v2522
        %v7886 = vmul.f32 %v7880, %v2522
        %v7887 = vmul.f32 %v7882, %v2522
        %v7888 = vmul.f32 %v7884, %v2522
        %v7889 = vmul.f32 %v7873, %v7873
        %v7890 = vmul.f32 %v7874, %v7874
        %v7891 = vmul.f32 %v7875, %v7875
        %v7892 = vmul.f32 %v7876, %v7876
        %7893 = vadd.xlane.f32.xlu0 %v7889
        %v7894 = vpop.xlane.xlu0 %7893
        %7895 = vadd.xlane.f32.xlu0 %v7890
        %v7896 = vpop.xlane.xlu0 %7895
        %7897 = vadd.xlane.f32.xlu0 %v7891
        %v7898 = vpop.xlane.xlu0 %7897
        %7899 = vadd.xlane.f32.xlu0 %v7892
        %v7900 = vpop.xlane.xlu0 %7899
        %v7901 = vmul.f32 %v7894, %v2522
        %v7902 = vmul.f32 %v7896, %v2522
        %v7903 = vmul.f32 %v7898, %v2522
        %v7904 = vmul.f32 %v7900, %v2522
        %v7905 = vmul.f32 %v7885, %v7885
        %v7906 = vmul.f32 %v7886, %v7886
        %v7907 = vmul.f32 %v7887, %v7887
        %v7908 = vmul.f32 %v7888, %v7888
        %v7909 = vsub.f32 %v7901, %v7905
        %v7910 = vsub.f32 %v7902, %v7906
        %v7911 = vsub.f32 %v7903, %v7907
        %v7912 = vsub.f32 %v7904, %v7908
        %v7913 = vsub.f32 %v7873, %v7885
        %v7914 = vsub.f32 %v7874, %v7886
        %v7915 = vsub.f32 %v7875, %v7887
        %v7916 = vsub.f32 %v7876, %v7888
        %v7917 = vadd.f32 %v7909, 1e-05
        %v7918 = vadd.f32 %v7910, 1e-05
        %v7919 = vadd.f32 %v7911, 1e-05
        %v7920 = vadd.f32 %v7912, 1e-05
        %v7921 = vrsqrt.pop %v7917
        %v7922 = vrsqrt.pop %v7918
        %v7923 = vrsqrt.pop %v7919
        %v7924 = vrsqrt.pop %v7920
        %v7925 = vmul.f32 %v7913, %v7921
        %v7926 = vmul.f32 %v7914, %v7922
        %v7927 = vmul.f32 %v7915, %v7923
        %v7928 = vmul.f32 %v7916, %v7924
        %v7929 = vlaneseq
        %v7930 = vshrl.u32 %v7929, 7
        %v7931 = vsub.s32 0, %v7930
        %v7932 = vrot.slane %v5483, %v7931
        %v7933 = vmul.f32 %v7925, %v7932
        %v7934 = vmul.f32 %v7926, %v7932
        %v7935 = vmul.f32 %v7927, %v7932
        %v7936 = vmul.f32 %v7928, %v7932
        %v7937 = vlaneseq
        %v7938 = vshrl.u32 %v7937, 7
        %v7939 = vsub.s32 0, %v7938
        %v7940 = vrot.slane %v5484, %v7939
        %v7941 = vadd.f32 %v7933, %v7940
        %v7942 = vadd.f32 %v7934, %v7940
        %v7943 = vadd.f32 %v7935, %v7940
        %v7944 = vadd.f32 %v7936, %v7940
        %v7945 = vld [vmem:[%s524] sm:$0xff]
        %v7946 = vld [vmem:[%s524 + $0x8] sm:$0xff]
        %v7947 = vld [vmem:[%s524 + $0x10] sm:$0xff]
        %v7948 = vld [vmem:[%s524 + $0x18] sm:$0xff]
        %7950 = vset.pattern.permute.xlu0 0
        %7951 = vperm.xlu0 %7950, %v7945
        %v7952 = vpop.permute.xlu0 %7951
        %7955 = vset.pattern.permute.xlu0 0
        %7956 = vperm.xlu0 %7955, %v7946
        %v7957 = vpop.permute.xlu0 %7956
        %7960 = vset.pattern.permute.xlu0 0
        %7961 = vperm.xlu0 %7960, %v7947
        %v7962 = vpop.permute.xlu0 %7961
        %7965 = vset.pattern.permute.xlu0 0
        %7966 = vperm.xlu0 %7965, %v7948
        %v7967 = vpop.permute.xlu0 %7966
        %v7969 = vmul.f32 %v7941, %v7952
        %v7970 = vmul.f32 %v7942, %v7957
        %v7971 = vmul.f32 %v7943, %v7962
        %v7972 = vmul.f32 %v7944, %v7967
        %v7973 = vadd.f32 %v7969, %v7970
        %v7974 = vadd.f32 %v7973, %v7971
        %v7975 = vadd.f32 %v7974, %v7972
        %v7976 = vrot.slane %v7975, 4
        %v7977 = vadd.f32 %v7975, %v7976
        %v7978 = vrot.slane %v7977, 2
        %v7979 = vadd.f32 %v7977, %v7978
        %v7980 = vrot.slane %v7979, 1
        %v7981 = vadd.f32 %v7979, %v7980
        %v7982 = vld [vmem:[%s528] sm:$0x1]
        %7984 = vset.pattern.permute.xlu0 0
        %7985 = vperm.xlu0 %7984, %v7982
        %v7986 = vpop.permute.xlu0 %7985
        %v7988 = vlaneseq
        %v7989 = vshrl.u32 %v7988, 7
        %v7990 = vsub.s32 0, %v7989
        %v7991 = vrot.slane %v7986, %v7990
        %v7992 = vmul.f32 %v7981, %v7991
        %7993 = vst [vmem:[%s513] sm:$0x1] %v7992
        %s7994 = sand.u32 %s290, 1
        %s7995 = scalar_lea.sflag [#allocation5], %s7994
        %s7996 = sand.u32 %s290, 1
        %s7997 = scalar_lea.vmem [#allocation14], %s7996
        // Predicated region
        $region89: #{tpu_custom_call.1} parent=63 // pred_check
          %p7998 = pneg %p300
        $region90: #{tpu_custom_call.1} parent=63 // pred_check_branch
          %8000 = sbr.rel (%p7998) target = $region92
        $region91: #{tpu_custom_call.1} parent=63 // pred_region
          %s8002 = ssub.s32 16, 16
          %8003 = vsyncadd %s7995, %s8002
          %s8004 = smul.addr %s31, 16
          %s8005 = scalar_lea.hbm %s11, %s8004
          %s8007 = sshll.u32 %s7997, 4
          %s8008 = int_to_ptr.vmem [resolvable:$true] %s8007
          %8010 = dma.vmem_to_hbm [thread:$0]  %s8008, 16, %s8005, %s7995
        $region92: #{tpu_custom_call.1} parent=63 // pred_fallthru
          _
      $region64: #{tpu_custom_call.1} parent=5 // pred_fallthru
        _
      %p8011 = scmp.le.s32.totalorder 2, %s26
      // Predicated region
      $region93: #{tpu_custom_call.1} parent=5 // pred_check
        %p8012 = pneg %p8011
      $region94: #{tpu_custom_call.1} parent=5 // pred_check_branch
        %8014 = sbr.rel (%p8012) target = $region96
      $region95: #{tpu_custom_call.1} parent=5 // pred_region
        %s8015 = ssub.s32 %s26, 2
        // Predicated region
        $region97: #{tpu_custom_call.1} parent=95 // pred_check
          %p8016 = pneg %p306
        $region98: #{tpu_custom_call.1} parent=95 // pred_check_branch
          %8018 = sbr.rel (%p8016) target = $region100
        $region99: #{tpu_custom_call.1} parent=95 // pred_region
          %s8019 = sand.u32 %s291, 1
          %s8020 = scalar_lea.sflag [#allocation5], %s8019
          %s8021 = sand.u32 %s291, 1
          %s8022 = scalar_lea.vmem [#allocation14], %s8021
          %8023 = dma.done %s8020, 16
        $region100: #{tpu_custom_call.1} parent=95 // pred_fallthru
          _
      $region96: #{tpu_custom_call.1} parent=5 // pred_fallthru
        _
    $region6: #{tpu_custom_call.1} parent=1 // loop_footer
      %s30 = sadd.s32 1, %s26
    $region7: #{tpu_custom_call.1} parent=1 // loop_footer_branch
      %25 = sbr.rel target = $region3
    $region8: #{tpu_custom_call.1} parent=1 // loop_exit
      _
    %8024 = vsyncpa [#allocation4], 1
    %s8025 = scalar_lea.sflag [#allocation4], 1
    %8026 = vsyncpa %s8025, 1
    %8027 = vsyncpa [#allocation7], 1
    %8028 = vsyncpa [#allocation10], 1
    %8029 = vsyncpa [#allocation13], 1
    %8030 = vsyncpa [#allocation5], 1
    %s8031 = scalar_lea.sflag [#allocation5], 1
    %8032 = vsyncpa %s8031, 1

</llo_original>
